<compile_context>
chip_gen: v7x
topology: tpu7x:2x2x1
jax: 0.10.0
libtpu: 0.0.40
codegen_flags: <defaults>
</compile_context>

<pallas_src>
import itertools

import jax
import jax.numpy as jnp
from jax.experimental import pallas as pl
from jax.experimental.pallas import tpu as pltpu

ACT_DTYPE = jnp.bfloat16          # inter-layer activations & matmul operands
_EPS = 1e-5
_VMEM_LIMIT = 40 * 1024 * 1024    # explicit scoped-VMEM limit (< v7x 64 MiB)
_CONV_VMEM_BUDGET = 12 * 1024 * 1024
_NORM_BLOCK_BYTES = 2 * 1024 * 1024


# ---------------------------------------------------------------------------
# helpers
# ---------------------------------------------------------------------------
def _largest_divisor(n, limit):
    limit = max(1, min(n, limit))
    for d in range(limit, 0, -1):
        if n % d == 0:
            return d
    return 1


def _conv_bytes_per_depth_row(p, hq, wq, cin, ho, wo, cout):
    lane = lambda c: -(-c // 128) * 128
    sub = lambda s: -(-s // 8) * 8
    slab = p * hq * sub(wq) * lane(cin) * 2      # bf16 halo slab
    outb = ho * sub(wo) * lane(cout) * 2         # bf16 output block
    accb = ho * wo * lane(cout) * 4              # f32 accumulator scratch
    return 2 * (slab + outb) + accb              # x2: double buffering


# ---------------------------------------------------------------------------
# Pallas kernel 1: 3-D conv over a halo D-slab (all k^3 taps reduced in-kernel)
# ---------------------------------------------------------------------------
def _make_conv_kernel(taps, td, ho, wo, cin, cout):
    m = td * ho * wo

    def kernel(x_ref, w_ref, b_ref, o_ref, s_ref, acc_ref):
        # x_ref : (1, P*(td+halo), Ho+halo, Wo+halo, Cin)  bf16 halo slab
        # w_ref : (KK, Cin, Cout)  bf16, resident in VMEM across the grid
        # b_ref : (1, Cout)        f32,  resident in VMEM across the grid
        # o_ref : (1, td, Ho, Wo, Cout)
        # s_ref : (1, 2, Cout)     f32 partial (sum, sum of squares)
        # acc_ref: (td*Ho*Wo, Cout) f32 VMEM accumulator
        acc_ref[...] = jnp.broadcast_to(b_ref[...], (m, cout)).astype(jnp.float32)
        for k, (r0, h0, w0) in enumerate(taps):
            patch = x_ref[0, r0:r0 + td, h0:h0 + ho, w0:w0 + wo, :]
            acc_ref[...] += jnp.dot(patch.reshape(m, cin), w_ref[k],
                                    preferred_element_type=jnp.float32)
        acc = acc_ref[...]
        o_ref[0] = acc.reshape(td, ho, wo, cout).astype(o_ref.dtype)
        s_ref[0, 0:1, :] = jnp.sum(acc, axis=0, keepdims=True)
        s_ref[0, 1:2, :] = jnp.sum(acc * acc, axis=0, keepdims=True)

    return kernel


def conv3d_ndhwc(x, w, b, *, ksize, stride):
    """Channels-last 3-D convolution (padding = ksize // 2).

    x: (N, D, H, W, Cin); w: (KK, Cin, Cout), KK = ksize**3 ordered (kd, kh, kw);
    b: (Cout,).  Returns (y, sum, sumsq): y (N,Do,Ho,Wo,Cout) in ACT_DTYPE plus
    per-(sample, channel) f32 statistics for the fused InstanceNorm.
    """
    N, D, H, W, Cin = x.shape
    KK, _, Cout = w.shape
    pad = ksize // 2
    Do = (D + 2 * pad - ksize) // stride + 1
    Ho = (H + 2 * pad - ksize) // stride + 1
    Wo = (W + 2 * pad - ksize) // stride + 1
    halo = (ksize - 1) // stride

    # --- padded, phase-decomposed input (one cheap XLA-side HBM copy) --------
    if stride == 1:
        xph = jnp.pad(x, ((0, 0), (pad, pad), (pad, pad), (pad, pad), (0, 0)))
        xph = xph[:, None]                         # (N, 1, Do+halo, ..., Cin)
        taps = [(0, kd, kh, kw)
                for kd, kh, kw in itertools.product(range(ksize), repeat=3)]
    elif stride == 2 and ksize == 3:
        xp = jnp.pad(x, ((0, 0), (pad, pad), (pad, pad), (pad, pad), (0, 0)))
        Dq, Hq, Wq = Do + 1, Ho + 1, Wo + 1
        xp = jnp.pad(xp, ((0, 0),
                          (0, 2 * Dq - xp.shape[1]),
                          (0, 2 * Hq - xp.shape[2]),
                          (0, 2 * Wq - xp.shape[3]),
                          (0, 0)))
        xph = xp.reshape(N, Dq, 2, Hq, 2, Wq, 2, Cin)
        xph = xph.transpose(0, 2, 4, 6, 1, 3, 5, 7).reshape(N, 8, Dq, Hq, Wq, Cin)
        taps = [((kd % 2) * 4 + (kh % 2) * 2 + (kw % 2),
                 kd // 2, kh // 2, kw // 2)
                for kd, kh, kw in itertools.product(range(ksize), repeat=3)]
    else:
        raise NotImplementedError("only stride-1 / stride-2 convolutions are used")

    xph = xph.astype(ACT_DTYPE)
    P, Dq, Hq, Wq = xph.shape[1], xph.shape[2], xph.shape[3], xph.shape[4]
    assert Dq == Do + halo and Hq == Ho + halo and Wq == Wo + halo

    # --- D tiling: halo rows replicated host-side so blocks never overlap ----
    row_bytes = _conv_bytes_per_depth_row(P, Hq, Wq, Cin, Ho, Wo, Cout)
    td_cap = max(1, _CONV_VMEM_BUDGET // row_bytes)
    td_target = Do // 2 if Do >= 8 else Do     # >=2 parallel steps when possible
    Td = _largest_divisor(Do, min(td_target, td_cap))
    nDt = Do // Td
    slab_d = Td + halo
    slabs = jnp.stack(
        [xph[:, :, t * Td:t * Td + slab_d] for t in range(nDt)], axis=1)
    NT = N * nDt
    slabs = slabs.reshape(NT, P * slab_d, Hq, Wq, Cin)   # fold phase into rows

    row_taps = [(p * slab_d + d0, h0, w0) for (p, d0, h0, w0) in taps]
    w_b = w.astype(ACT_DTYPE)
    b2 = b.reshape(1, Cout).astype(jnp.float32)
    kernel = _make_conv_kernel(row_taps, Td, Ho, Wo, Cin, Cout)

    y, stats = pl.pallas_call(
        kernel,
        out_shape=(jax.ShapeDtypeStruct((NT, Td, Ho, Wo, Cout), ACT_DTYPE),
                   jax.ShapeDtypeStruct((NT, 2, Cout), jnp.float32)),
        grid_spec=pltpu.PrefetchScalarGridSpec(
            num_scalar_prefetch=0,
            grid=(NT,),
            in_specs=[
                pl.BlockSpec((1, P * slab_d, Hq, Wq, Cin),
                             lambda i: (i, 0, 0, 0, 0)),
                pl.BlockSpec((KK, Cin, Cout), lambda i: (0, 0, 0)),   # resident
                pl.BlockSpec((1, Cout), lambda i: (0, 0)),            # resident
            ],
            out_specs=[
                pl.BlockSpec((1, Td, Ho, Wo, Cout), lambda i: (i, 0, 0, 0, 0)),
                pl.BlockSpec((1, 2, Cout), lambda i: (i, 0, 0)),
            ],
            scratch_shapes=[pltpu.VMEM((Td * Ho * Wo, Cout), jnp.float32)],
        ),
        compiler_params=pltpu.CompilerParams(
            dimension_semantics=("parallel",),
            vmem_limit_bytes=_VMEM_LIMIT),
    )(slabs, w_b, b2)

    y = y.reshape(N, nDt * Td, Ho, Wo, Cout)
    st = stats.reshape(N, nDt, 2, Cout).sum(axis=1)
    return y, st[:, 0], st[:, 1]


# ---------------------------------------------------------------------------
# Pallas kernel 2: InstanceNorm3d (affine=False) + ReLU from fused conv stats.
# Tiled over rows, lane-dense layout (last dim = W*C).
# ---------------------------------------------------------------------------
def _norm_relu_kernel(y_ref, sc_ref, sh_ref, o_ref):
    y = y_ref[0].astype(jnp.float32)                         # (Rt, W*C)
    out = jnp.maximum(y * sc_ref[0, 0:1, :] + sh_ref[0, 0:1, :], 0.0)
    o_ref[0] = out.astype(o_ref.dtype)


def instance_norm_relu(y, ssum, ssq):
    """InstanceNorm3d(affine=False, eps=1e-5) + ReLU using precomputed stats."""
    N, Do, Ho, Wo, C = y.shape
    Mo = Do * Ho * Wo
    mean = ssum / Mo
    var = jnp.maximum(ssq / Mo - mean * mean, 0.0)           # biased variance
    scale_c = jax.lax.rsqrt(var + _EPS)                      # (N, C)
    shift_c = -mean * scale_c

    R, L = Do * Ho, Wo * C                                   # lane-dense layout
    # per-channel affine, replicated along W once on the host side -> (N, 1, L)
    scale = jnp.tile(scale_c, (1, Wo))[:, None, :]
    shift = jnp.tile(shift_c, (1, Wo))[:, None, :]

    target = min(max(8, _NORM_BLOCK_BYTES // max(1, 2 * L)), max(8, R // 2))
    Rt = R
    if R > target:
        for d in range(int(target), 0, -1):
            if R % d == 0 and d % 8 == 0:
                Rt = d
                break

    out = pl.pallas_call(
        _norm_relu_kernel,
        out_shape=jax.ShapeDtypeStruct((N, R, L), y.dtype),
        grid_spec=pltpu.PrefetchScalarGridSpec(
            num_scalar_prefetch=0,
            grid=(N, R // Rt),
            in_specs=[pl.BlockSpec((1, Rt, L), lambda n, r: (n, r, 0)),
                      pl.BlockSpec((1, 1, L), lambda n, r: (n, 0, 0)),
                      pl.BlockSpec((1, 1, L), lambda n, r: (n, 0, 0))],
            out_specs=pl.BlockSpec((1, Rt, L), lambda n, r: (n, r, 0)),
        ),
        compiler_params=pltpu.CompilerParams(
            dimension_semantics=("parallel", "parallel"),
            vmem_limit_bytes=_VMEM_LIMIT),
    )(y.reshape(N, R, L), scale.astype(jnp.float32), shift.astype(jnp.float32))
    return out.reshape(N, Do, Ho, Wo, C)


# ---------------------------------------------------------------------------
# ConvBlock3d (assumed) + parameter construction + module
# ---------------------------------------------------------------------------
def _apply_conv_block(x, p):
    y, ssum, ssq = conv3d_ndhwc(x, p["w"], p["b"],
                                ksize=p["ksize"], stride=p["stride"])
    if p["only_conv"]:
        return y
    return instance_norm_relu(y, ssum, ssq)


def _init_conv_block(key, cin, cout, *, ksize=3, scale=1.0, groups=1,
                     only_conv=False):
    kw, kb = jax.random.split(key)
    KK = ksize ** 3
    cin_g, cout_g = cin // groups, cout // groups
    fan_in = cin_g * KK
    w = jax.random.normal(kw, (KK, cin, cout), jnp.float32) / jnp.sqrt(float(fan_in))
    if groups > 1:
        ci = jnp.arange(cin)[:, None] // cin_g
        co = jnp.arange(cout)[None, :] // cout_g
        w = w * (ci == co).astype(jnp.float32)[None]   # block-diag == grouped conv
        # TODO(synk): block-diagonal dense grouped conv wastes MXU FLOPs on the
        # zero blocks; acceptable while these layers remain memory-bound.
    b = jax.random.normal(kb, (cout,), jnp.float32) * 0.01
    stride = int(round(1.0 / scale)) if scale < 1.0 else 1
    return {"w": w.astype(ACT_DTYPE), "b": b, "ksize": ksize, "stride": stride,
            "only_conv": only_conv}


class UnetEncoder3dPallas:
    def __init__(self, key, in_channels, scale=1, n_features=16, n_blocks=5,
                 n_layers_per_block=4, feature_scale="linear64",
                 use_dropout=False):
        if feature_scale == "exponential":
            nfpd = [min(256, n_features * 2 ** i) for i in range(n_blocks + 1)]
        elif feature_scale == "linear":
            nfpd = [min(256, n_features * (i + 1)) for i in range(n_blocks + 1)]
        else:  # 'linear64'
            nfpd = [min(64, n_features * (i + 1)) for i in range(n_blocks + 1)]
        self.n_features_per_depth = nfpd

        n_keys = 1 + n_layers_per_block + n_blocks * n_layers_per_block + 8
        keys = iter(jax.random.split(key, n_keys))

        ib = [_init_conv_block(next(keys), in_channels, n_features, ksize=1,
                               only_conv=True),
              _init_conv_block(next(keys), n_features, n_features, ksize=3,
                               scale=1.0 / scale)]
        for _ in range(n_layers_per_block - 1):
            ib.append(_init_conv_block(next(keys), n_features, n_features, ksize=3))
        self.input_block = ib

        self.down_blocks = []
        for depth in range(n_blocks):
            n_in, n_out = nfpd[depth], nfpd[depth + 1]
            blk = [_init_conv_block(next(keys), n_in, n_out, ksize=3,
                                    groups=n_features, scale=0.5)]
            for _ in range(n_layers_per_block - 1):
                blk.append(_init_conv_block(next(keys), n_out, n_out, ksize=3,
                                            groups=n_features))
            self.down_blocks.append(blk)

    def forward(self, x):
        feats = []
        for p in self.input_block:
            x = _apply_conv_block(x, p)
        feats.append(x)
        for blk in self.down_blocks:
            for p in blk:
                x = _apply_conv_block(x, p)
            feats.append(x)
        return feats


# ---------------------------------------------------------------------------
# Pure-XLA reference (same bf16 rounding points, f32 accumulation) for checking
# ---------------------------------------------------------------------------
def _reference_forward(x, enc):
    def conv_ref(xx, p):
        ks, s = p["ksize"], p["stride"]
        xf = xx.astype(ACT_DTYPE).astype(jnp.float32)
        w = p["w"].astype(jnp.float32).reshape(ks, ks, ks, xx.shape[-1], -1)
        y = jax.lax.conv_general_dilated(
            xf, w, window_strides=(s, s, s),
            padding=[(ks // 2, ks // 2)] * 3,
            dimension_numbers=("NDHWC", "DHWIO", "NDHWC"),
            precision=jax.lax.Precision.HIGHEST)
        return y + p["b"].astype(jnp.float32)

    def block_ref(xx, p):
        y = conv_ref(xx, p)
        if p["only_conv"]:
            return y.astype(ACT_DTYPE)
        mo = y.shape[1] * y.shape[2] * y.shape[3]
        ssum = jnp.sum(y, axis=(1, 2, 3))
        ssq = jnp.sum(y * y, axis=(1, 2, 3))
        mean = ssum / mo
        var = jnp.maximum(ssq / mo - mean * mean, 0.0)
        scale = jax.lax.rsqrt(var + _EPS)
        shift = -mean * scale
        yb = y.astype(ACT_DTYPE).astype(jnp.float32)
        out = jnp.maximum(yb * scale[:, None, None, None, :]
                          + shift[:, None, None, None, :], 0.0)
        return out.astype(ACT_DTYPE)

    feats, cur = [], x
    for p in enc.input_block:
        cur = block_ref(cur, p)
    feats.append(cur)
    for blk in enc.down_blocks:
        for p in blk:
            cur = block_ref(cur, p)
        feats.append(cur)
    return feats


if __name__ == "__main__":
    key = jax.random.PRNGKey(0)
    kparams, kx = jax.random.split(key)

    # Small, forward-consistent shapes: batch=1, in_channels=2, spatial=16^3.
    N, C, S = 1, 2, 16
    x = jax.random.normal(kx, (N, S, S, S, C), jnp.float32)

    enc = UnetEncoder3dPallas(kparams, in_channels=C, scale=1, n_features=8,
                              n_blocks=2, n_layers_per_block=2)
    feats = enc.forward(x)
    for f in feats:
        jax.block_until_ready(f)

    assert feats[0].shape == (N, 16, 16, 16, 8)
    assert feats[1].shape == (N, 8, 8, 8, 16)
    assert feats[2].shape == (N, 4, 4, 4, 24)

    # numerical sanity vs a pure-XLA reference of the same (assumed) ConvBlock
    refs = _reference_forward(x, enc)
    for f, r in zip(feats, refs):
        df = f.astype(jnp.float32) - r.astype(jnp.float32)
        rel = jnp.linalg.norm(df) / (jnp.linalg.norm(r.astype(jnp.float32)) + 1e-6)
        assert float(rel) < 2e-2, f"relative error too large: {float(rel)}"

    print("KERNEL_OK")
</pallas_src>

<mosaic_0001>
module attributes {stable_mosaic.version = 11 : i64} {
  func.func @kernel(%arg0: i32, %arg1: memref<1x8x16x16x2xbf16, #tpu.memory_space<vmem>>, %arg2: memref<1x2x8xbf16, #tpu.memory_space<vmem>>, %arg3: memref<1x8xf32, #tpu.memory_space<vmem>>, %arg4: memref<1x8x16x16x8xbf16, #tpu.memory_space<vmem>>, %arg5: memref<1x2x8xf32, #tpu.memory_space<vmem>>, %arg6: memref<2048x8xf32, #tpu.memory_space<vmem>>) attributes {dimension_semantics = [#tpu.dimension_semantics<parallel>], iteration_bounds = array<i64: 2>, scalar_prefetch = 0 : i64, scratch_operands = 1 : i64, tpu.core_type = #tpu.core_type<tc>, window_params = [{transform_indices = @transform_0, window_bounds = array<i64: 1, 8, 16, 16, 2>}, {pipeline_mode = #tpu.pipeline_mode<synchronous>, transform_indices = @transform_1, window_bounds = array<i64: 1, 2, 8>}, {pipeline_mode = #tpu.pipeline_mode<synchronous>, transform_indices = @transform_2, window_bounds = array<i64: 1, 8>}, {transform_indices = @transform_3, window_bounds = array<i64: 1, 8, 16, 16, 8>}, {transform_indices = @transform_4, window_bounds = array<i64: 1, 2, 8>}]} {
    %c0 = arith.constant 0 : index
    %c0_0 = arith.constant 0 : index
    %0 = vector.load %arg3[%c0, %c0_0] : memref<1x8xf32, #tpu.memory_space<vmem>>, vector<1x8xf32>
    %1 = vector.shape_cast %0 : vector<1x8xf32> to vector<1x8xf32>
    %2 = vector.broadcast %1 : vector<1x8xf32> to vector<2048x8xf32>
    %c0_1 = arith.constant 0 : index
    %c0_2 = arith.constant 0 : index
    %3 = vector.load %arg6[%c0_1, %c0_2] : memref<2048x8xf32, #tpu.memory_space<vmem>>, vector<2048x8xf32>
    tpu.vector_store %arg6[%c0_1, %c0_2], %2 {strides = array<i32>} : memref<2048x8xf32, #tpu.memory_space<vmem>>, vector<2048x8xf32>,
    %c0_3 = arith.constant 0 : index
    %c0_4 = arith.constant 0 : index
    %c0_5 = arith.constant 0 : index
    %c0_6 = arith.constant 0 : index
    %c0_7 = arith.constant 0 : index
    %4 = vector.load %arg1[%c0_3, %c0_4, %c0_5, %c0_6, %c0_7] : memref<1x8x16x16x2xbf16, #tpu.memory_space<vmem>>, vector<1x8x16x16x2xbf16>
    %5 = vector.shape_cast %4 : vector<1x8x16x16x2xbf16> to vector<8x16x16x2xbf16>
    %c0_8 = arith.constant 0 : index
    %c0_9 = arith.constant 0 : index
    %6 = vector.load %arg6[%c0_8, %c0_9] : memref<2048x8xf32, #tpu.memory_space<vmem>>, vector<2048x8xf32>
    %7 = vector.shape_cast %5 : vector<8x16x16x2xbf16> to vector<2048x2xbf16>
    %c0_10 = arith.constant 0 : index
    %c0_11 = arith.constant 0 : index
    %c0_12 = arith.constant 0 : index
    %8 = vector.load %arg2[%c0_10, %c0_11, %c0_12] : memref<1x2x8xbf16, #tpu.memory_space<vmem>>, vector<1x2x8xbf16>
    %9 = vector.shape_cast %8 : vector<1x2x8xbf16> to vector<2x8xbf16>
    %cst = arith.constant dense<0.000000e+00> : vector<2048x8xf32>
    %10 = tpu.matmul %7, %9, %cst {dimension_numbers = #tpu.dot_dimension_numbers<[1], [0], [0], [1], [0, 0, 1, 1], [], []>} : vector<2048x2xbf16>, vector<2x8xbf16>, vector<2048x8xf32> -> vector<2048x8xf32>
    %11 = arith.addf %6, %10 : vector<2048x8xf32>
    %c0_13 = arith.constant 0 : index
    %c0_14 = arith.constant 0 : index
    %12 = vector.load %arg6[%c0_13, %c0_14] : memref<2048x8xf32, #tpu.memory_space<vmem>>, vector<2048x8xf32>
    tpu.vector_store %arg6[%c0_13, %c0_14], %11 {strides = array<i32>} : memref<2048x8xf32, #tpu.memory_space<vmem>>, vector<2048x8xf32>,
    %c0_15 = arith.constant 0 : index
    %c0_16 = arith.constant 0 : index
    %13 = vector.load %arg6[%c0_15, %c0_16] : memref<2048x8xf32, #tpu.memory_space<vmem>>, vector<2048x8xf32>
    %14 = vector.shape_cast %13 : vector<2048x8xf32> to vector<8x16x16x8xf32>
    %15 = arith.truncf %14 : vector<8x16x16x8xf32> to vector<8x16x16x8xbf16>
    %c0_17 = arith.constant 0 : index
    %c0_18 = arith.constant 0 : index
    %c0_19 = arith.constant 0 : index
    %c0_20 = arith.constant 0 : index
    %c0_21 = arith.constant 0 : index
    %16 = vector.load %arg4[%c0_17, %c0_18, %c0_19, %c0_20, %c0_21] : memref<1x8x16x16x8xbf16, #tpu.memory_space<vmem>>, vector<1x8x16x16x8xbf16>
    %17 = vector.shape_cast %16 : vector<1x8x16x16x8xbf16> to vector<8x16x16x8xbf16>
    %18 = vector.shape_cast %15 : vector<8x16x16x8xbf16> to vector<1x8x16x16x8xbf16>
    tpu.vector_store %arg4[%c0_17, %c0_18, %c0_19, %c0_20, %c0_21], %18 {strides = array<i32>} : memref<1x8x16x16x8xbf16, #tpu.memory_space<vmem>>, vector<1x8x16x16x8xbf16>,
    %cst_22 = arith.constant dense<0.000000e+00> : vector<8xf32>
    %19 = vector.multi_reduction <add>, %13, %cst_22 [0] : vector<2048x8xf32> to vector<8xf32>
    %20 = vector.shape_cast %19 : vector<8xf32> to vector<1x8xf32>
    %c0_23 = arith.constant 0 : index
    %c0_24 = arith.constant 0 : index
    %c0_25 = arith.constant 0 : index
    %21 = vector.load %arg5[%c0_23, %c0_24, %c0_25] : memref<1x2x8xf32, #tpu.memory_space<vmem>>, vector<1x1x8xf32>
    %22 = vector.shape_cast %21 : vector<1x1x8xf32> to vector<1x8xf32>
    %23 = vector.shape_cast %20 : vector<1x8xf32> to vector<1x1x8xf32>
    tpu.vector_store %arg5[%c0_23, %c0_24, %c0_25], %23 {strides = array<i32>} : memref<1x2x8xf32, #tpu.memory_space<vmem>>, vector<1x1x8xf32>,
    %24 = arith.mulf %13, %13 : vector<2048x8xf32>
    %cst_26 = arith.constant dense<0.000000e+00> : vector<8xf32>
    %25 = vector.multi_reduction <add>, %24, %cst_26 [0] : vector<2048x8xf32> to vector<8xf32>
    %26 = vector.shape_cast %25 : vector<8xf32> to vector<1x8xf32>
    %c0_27 = arith.constant 0 : index
    %c1 = arith.constant 1 : index
    %c0_28 = arith.constant 0 : index
    %27 = vector.load %arg5[%c0_27, %c1, %c0_28] : memref<1x2x8xf32, #tpu.memory_space<vmem>>, vector<1x1x8xf32>
    %28 = vector.shape_cast %27 : vector<1x1x8xf32> to vector<1x8xf32>
    %29 = vector.shape_cast %26 : vector<1x8xf32> to vector<1x1x8xf32>
    tpu.vector_store %arg5[%c0_27, %c1, %c0_28], %29 {strides = array<i32>} : memref<1x2x8xf32, #tpu.memory_space<vmem>>, vector<1x1x8xf32>,
    return
  }
  func.func @transform_0(%arg0: i32) -> (i32, i32, i32, i32, i32) {
    %c0_i32 = arith.constant 0 : i32
    %c0_i32_0 = arith.constant 0 : i32
    %c0_i32_1 = arith.constant 0 : i32
    %c0_i32_2 = arith.constant 0 : i32
    %c0_i32_3 = arith.constant 0 : i32
    return %arg0, %c0_i32, %c0_i32_0, %c0_i32_1, %c0_i32_2 : i32, i32, i32, i32, i32
  }
  func.func @transform_1(%arg0: i32) -> (i32, i32, i32) {
    %c0_i32 = arith.constant 0 : i32
    %c0_i32_0 = arith.constant 0 : i32
    %c0_i32_1 = arith.constant 0 : i32
    %c0_i32_2 = arith.constant 0 : i32
    return %c0_i32, %c0_i32_0, %c0_i32_1 : i32, i32, i32
  }
  func.func @transform_2(%arg0: i32) -> (i32, i32) {
    %c0_i32 = arith.constant 0 : i32
    %c0_i32_0 = arith.constant 0 : i32
    %c0_i32_1 = arith.constant 0 : i32
    return %c0_i32, %c0_i32_0 : i32, i32
  }
  func.func @transform_3(%arg0: i32) -> (i32, i32, i32, i32, i32) {
    %c0_i32 = arith.constant 0 : i32
    %c0_i32_0 = arith.constant 0 : i32
    %c0_i32_1 = arith.constant 0 : i32
    %c0_i32_2 = arith.constant 0 : i32
    %c0_i32_3 = arith.constant 0 : i32
    return %arg0, %c0_i32, %c0_i32_0, %c0_i32_1, %c0_i32_2 : i32, i32, i32, i32, i32
  }
  func.func @transform_4(%arg0: i32) -> (i32, i32, i32) {
    %c0_i32 = arith.constant 0 : i32
    %c0_i32_0 = arith.constant 0 : i32
    %c0_i32_1 = arith.constant 0 : i32
    return %arg0, %c0_i32, %c0_i32_0 : i32, i32, i32
  }
}

</mosaic_0001>

<llo_original>
// kernel: tpu_custom_call.1
$region0: #{tpu_custom_call.1}
  #allocation0 [shape = 'u32[]', space=smem, size = 0x4, offset = 0x4, fixed_abs, tag = 'smem constant byte address 0x4 - core index']
  #allocation1 [shape = 'u32[144,128]{1,0:T(1,128)}', space=vmem, size = 0x12000, scoped, tag = 'internal scratch']
  #allocation2 [shape = 'f32[2048,8]{1,0:T(8,128)}', space=vmem, size = 0x100000, scoped, tag = 'scratch operand']
  %s0 = inlined_call_operand.vmem [shape: bf16[2,8,16,16,2], index: 0, kind: input, shape index: {}]
  %s1 = inlined_call_operand.vmem [shape: bf16[1,2,8], index: 1, kind: input, shape index: {}]
  %s2 = inlined_call_operand.vmem [shape: f32[1,8], index: 2, kind: input, shape index: {}]
  %s3 = inlined_call_operand.vmem [shape: bf16[2,8,16,16,8], index: 3, kind: output, shape index: {0}]
  %s4 = inlined_call_operand.hbm [shape: f32[2,2,8], index: 4, kind: output, shape index: {1}]
  %5 = xla_tuple %s3, %s4
  %s6 = sld [smem:[#allocation0]]
  $region53: #{tpu_custom_call.1} parent=0
    _
  %s8 = ssub.s32 1, %s6
  %s9 = scalar_select 0, %s8, %s6
  $region1: #{tpu_custom_call.1} parent=0
    #allocation3 [shape = 'u8[2048]{0}', space=vmem, size = 0x800, scoped, tag = 'output window, operand 1']
    #allocation4 [shape = 's32[2]{0}', space=sflag, size = 0x8, scoped, tag = 'scoped memory for tpu_custom_call.1']
    %10 = vsyncpa [#allocation4], 0
    %s11 = scalar_lea.sflag [#allocation4], 1
    %12 = vsyncpa %s11, 0
    loop: start=0, step=1, limit=4
    $region2: #{tpu_custom_call.1} parent=1 // loop_pre_header
      _
    $region3: #{tpu_custom_call.1} parent=1 // loop_header
      %s14 = sphi 0, %s18
      %p15 = scmp.ge.s32.totalorder %s14, 4
      %s24 = sphi 0, %s26
      %s27 = sphi 0, %s24
      %s28 = sphi 0, %s27
      %s44 = sphi 0, %s28
      %s48 = sphi 0, %s48
      %s50 = sphi 0, %s48
      %s51 = sphi 0, %s50
      %s65 = sphi 0, %s51
      %s69 = sphi 0, %s69
      %s71 = sphi 0, %s69
      %s72 = sphi 0, %s71
      %s86 = sphi 0, %s72
      %s92 = sphi 0, %s94
      %s95 = sphi 0, %s92
      %s96 = sphi 0, %s95
      %s112 = sphi 0, %s96
      %s118 = sphi 0, %s120
      %s121 = sphi 0, %s118
      %s122 = sphi 0, %s121
      %s138 = sphi 0, %s122
    $region4: #{tpu_custom_call.1} parent=1 // loop_header_branch
      %17 = sbr.rel (%p15) target = $region8
    $region5: #{tpu_custom_call.1} parent=1 // loop_body
      %s19 = ssub.s32 %s14, 1
      %s20 = ssub.s32 %s14, 2
      %s21 = sadd.s32 %s14, 1
      %s22 = ssub.s32 %s14, %s21
      %p23 = scmp.eq.s32.totalorder %s22, 0
      %s25 = sadd.s32 %s24, 1
      %s26 = scalar_select %p23, %s24, %s25
      %p29 = pneg %p23
      %p30 = scmp.eq.s32.totalorder %s14, 1
      %p31 = por %p29, %p30
      %p32 = scmp.ne.s32.totalorder %s24, %s27
      %p33 = scmp.eq.s32.totalorder %s14, 0
      %p34 = por %p32, %p33
      %p35 = scmp.ne.s32.totalorder %s24, %s27
      %p36 = scmp.eq.s32.totalorder %s19, 1
      %p37 = por %p35, %p36
      %p38 = scmp.ne.s32.totalorder %s27, %s28
      %p39 = scmp.eq.s32.totalorder %s19, 0
      %p40 = por %p38, %p39
      %p41 = scmp.ne.s32.totalorder %s27, %s28
      %p42 = scmp.eq.s32.totalorder %s20, 1
      %p43 = por %p41, %p42
      %p45 = scmp.ne.s32.totalorder %s28, %s44
      %p46 = scmp.eq.s32.totalorder %s20, 0
      %p47 = por %p45, %p46
      %s49 = sadd.s32 %s48, 1
      %p52 = scmp.eq.s32.totalorder %s14, 1
      %p53 = scmp.ne.s32.totalorder %s48, %s50
      %p54 = scmp.eq.s32.totalorder %s14, 0
      %p55 = por %p53, %p54
      %p56 = scmp.ne.s32.totalorder %s48, %s50
      %p57 = scmp.eq.s32.totalorder %s19, 1
      %p58 = por %p56, %p57
      %p59 = scmp.ne.s32.totalorder %s50, %s51
      %p60 = scmp.eq.s32.totalorder %s19, 0
      %p61 = por %p59, %p60
      %p62 = scmp.ne.s32.totalorder %s50, %s51
      %p63 = scmp.eq.s32.totalorder %s20, 1
      %p64 = por %p62, %p63
      %p66 = scmp.ne.s32.totalorder %s51, %s65
      %p67 = scmp.eq.s32.totalorder %s20, 0
      %p68 = por %p66, %p67
      %s70 = sadd.s32 %s69, 1
      %p73 = scmp.eq.s32.totalorder %s14, 1
      %p74 = scmp.ne.s32.totalorder %s69, %s71
      %p75 = scmp.eq.s32.totalorder %s14, 0
      %p76 = por %p74, %p75
      %p77 = scmp.ne.s32.totalorder %s69, %s71
      %p78 = scmp.eq.s32.totalorder %s19, 1
      %p79 = por %p77, %p78
      %p80 = scmp.ne.s32.totalorder %s71, %s72
      %p81 = scmp.eq.s32.totalorder %s19, 0
      %p82 = por %p80, %p81
      %p83 = scmp.ne.s32.totalorder %s71, %s72
      %p84 = scmp.eq.s32.totalorder %s20, 1
      %p85 = por %p83, %p84
      %p87 = scmp.ne.s32.totalorder %s72, %s86
      %p88 = scmp.eq.s32.totalorder %s20, 0
      %p89 = por %p87, %p88
      %s90 = ssub.s32 %s14, %s21
      %p91 = scmp.eq.s32.totalorder %s90, 0
      %s93 = sadd.s32 %s92, 1
      %s94 = scalar_select %p91, %s92, %s93
      %p97 = pneg %p91
      %p98 = scmp.eq.s32.totalorder %s14, 1
      %p99 = por %p97, %p98
      %p100 = scmp.ne.s32.totalorder %s92, %s95
      %p101 = scmp.eq.s32.totalorder %s14, 0
      %p102 = por %p100, %p101
      %p103 = scmp.ne.s32.totalorder %s92, %s95
      %p104 = scmp.eq.s32.totalorder %s19, 1
      %p105 = por %p103, %p104
      %p106 = scmp.ne.s32.totalorder %s95, %s96
      %p107 = scmp.eq.s32.totalorder %s19, 0
      %p108 = por %p106, %p107
      %p109 = scmp.ne.s32.totalorder %s95, %s96
      %p110 = scmp.eq.s32.totalorder %s20, 1
      %p111 = por %p109, %p110
      %p113 = scmp.ne.s32.totalorder %s96, %s112
      %p114 = scmp.eq.s32.totalorder %s20, 0
      %p115 = por %p113, %p114
      %s116 = ssub.s32 %s14, %s21
      %p117 = scmp.eq.s32.totalorder %s116, 0
      %s119 = sadd.s32 %s118, 1
      %s120 = scalar_select %p117, %s118, %s119
      %p123 = pneg %p117
      %p124 = scmp.eq.s32.totalorder %s14, 1
      %p125 = por %p123, %p124
      %p126 = scmp.ne.s32.totalorder %s118, %s121
      %p127 = scmp.eq.s32.totalorder %s14, 0
      %p128 = por %p126, %p127
      %p129 = scmp.ne.s32.totalorder %s118, %s121
      %p130 = scmp.eq.s32.totalorder %s19, 1
      %p131 = por %p129, %p130
      %p132 = scmp.ne.s32.totalorder %s121, %s122
      %p133 = scmp.eq.s32.totalorder %s19, 0
      %p134 = por %p132, %p133
      %p135 = scmp.ne.s32.totalorder %s121, %s122
      %p136 = scmp.eq.s32.totalorder %s20, 1
      %p137 = por %p135, %p136
      %p139 = scmp.ne.s32.totalorder %s122, %s138
      %p140 = scmp.eq.s32.totalorder %s20, 0
      %p141 = por %p139, %p140
      %p142 = scmp.le.s32.totalorder 1, %s14
      %p143 = scmp.lt.s32.totalorder %s14, 3
      %p144 = pnand %p142, %p143
      %p145 = pneg %p144
      // Predicated region
      $region9: #{tpu_custom_call.1} parent=5 // pred_check
        _
      $region10: #{tpu_custom_call.1} parent=5 // pred_check_branch
        %147 = sbr.rel (%p144) target = $region12
      $region11: #{tpu_custom_call.1} parent=5 // pred_region
        %s148 = ssub.s32 %s14, 1
        // Predicated region
        $region13: #{tpu_custom_call.1} parent=11 // pred_check
          %p149 = pneg %p61
        $region14: #{tpu_custom_call.1} parent=11 // pred_check_branch
          %151 = sbr.rel (%p149) target = $region16
        $region15: #{tpu_custom_call.1} parent=11 // pred_region
          _
        $region16: #{tpu_custom_call.1} parent=11 // pred_fallthru
          _
        // Predicated region
        $region17: #{tpu_custom_call.1} parent=11 // pred_check
          %p152 = pneg %p82
        $region18: #{tpu_custom_call.1} parent=11 // pred_check_branch
          %154 = sbr.rel (%p152) target = $region20
        $region19: #{tpu_custom_call.1} parent=11 // pred_region
          _
        $region20: #{tpu_custom_call.1} parent=11 // pred_fallthru
          _
      $region12: #{tpu_custom_call.1} parent=5 // pred_fallthru
        _
      %p155 = scmp.lt.s32.totalorder %s14, 2
      // Predicated region
      $region21: #{tpu_custom_call.1} parent=5 // pred_check
        %p156 = pneg %p155
      $region22: #{tpu_custom_call.1} parent=5 // pred_check_branch
        %158 = sbr.rel (%p156) target = $region24
      $region23: #{tpu_custom_call.1} parent=5 // pred_region
        // Predicated region
        $region25: #{tpu_custom_call.1} parent=23 // pred_check
          %p159 = pneg %p34
        $region26: #{tpu_custom_call.1} parent=23 // pred_check_branch
          %161 = sbr.rel (%p159) target = $region28
        $region27: #{tpu_custom_call.1} parent=23 // pred_region
          %p162 = scmp.lt.s32.totalorder %s14, 1
          %s163 = scalar_select %p162, %s14, 1
          %s164 = smul.addr %s163, 256
          %s165 = smul.addr %s164, 4
          %s166 = scalar_lea.vmem %s0, %s165
        $region28: #{tpu_custom_call.1} parent=23 // pred_fallthru
          _
      $region24: #{tpu_custom_call.1} parent=5 // pred_fallthru
        _
      %p167 = scmp.le.s32.totalorder 1, %s14
      %p168 = scmp.lt.s32.totalorder %s14, 3
      %p169 = pnand %p167, %p168
      %p170 = pneg %p169
      // Predicated region
      $region29: #{tpu_custom_call.1} parent=5 // pred_check
        _
      $region30: #{tpu_custom_call.1} parent=5 // pred_check_branch
        %172 = sbr.rel (%p169) target = $region32
      $region31: #{tpu_custom_call.1} parent=5 // pred_region
        %s173 = ssub.s32 %s14, 1
        %p174 = scmp.lt.s32.totalorder %s19, 1
        %s175 = scalar_select %p174, %s19, 1
        %s176 = smul.addr %s175, 256
        %s177 = smul.addr %s176, 4
        %s178 = scalar_lea.vmem %s0, %s177
        %p179 = pneg %p40
        %p180 = pneg %p37
        %p181 = pneg %p61
        %p182 = pneg %p58
        %p183 = pneg %p82
        %p184 = pneg %p79
        %p185 = pneg %p108
        %p186 = pneg %p105
        %p187 = scmp.lt.s32.totalorder %s19, 1
        %s188 = scalar_select %p187, %s19, 1
        %s189 = smul.addr %s188, 256
        %s190 = smul.addr %s189, 4
        %s191 = scalar_lea.vmem %s3, %s190
        %p192 = pneg %p134
        %p193 = pneg %p131
        %s194 = sand.u32 %s121, 1
        %s195 = scalar_lea.sflag [#allocation4], %s194
        %s196 = sand.u32 %s121, 1
        %s197 = smul.addr %s196, 2
        %s198 = scalar_lea.vmem [#allocation3], %s197
        %p199 = scmp.lt.s32.totalorder %s19, 1
        %s200 = scalar_select %p199, %s19, 1
        %s201 = smul.addr %s200, 256
        %s202 = smul.addr %s201, 4
        %s203 = scalar_lea.vmem %s0, %s202
        %p204 = scmp.lt.s32.totalorder %s19, 1
        %s205 = scalar_select %p204, %s19, 1
        %s206 = smul.addr %s205, 256
        %s207 = smul.addr %s206, 4
        %s208 = scalar_lea.vmem %s3, %s207
        %v210 = vld [vmem:[%s2] sm:$0x1]
        %v212 = vlaneseq
        %v213 = vshrl.u32 %v212, 7
        %v214 = vsub.s32 0, %v213
        %v215 = vrot.slane %v210, %v214
        %vm217 = vcmask 64512
        %218 = vst.msk [vmem:[#allocation2] sm:$0xff] %vm217, %v215
        %219 = vst.msk [vmem:[#allocation2 + $0x8] sm:$0xff] %vm217, %v215
        %220 = vst.msk [vmem:[#allocation2 + $0x10] sm:$0xff] %vm217, %v215
        %221 = vst.msk [vmem:[#allocation2 + $0x18] sm:$0xff] %vm217, %v215
        %222 = vst.msk [vmem:[#allocation2 + $0x20] sm:$0xff] %vm217, %v215
        %223 = vst.msk [vmem:[#allocation2 + $0x28] sm:$0xff] %vm217, %v215
        %224 = vst.msk [vmem:[#allocation2 + $0x30] sm:$0xff] %vm217, %v215
        %225 = vst.msk [vmem:[#allocation2 + $0x38] sm:$0xff] %vm217, %v215
        %226 = vst.msk [vmem:[#allocation2 + $0x40] sm:$0xff] %vm217, %v215
        %227 = vst.msk [vmem:[#allocation2 + $0x48] sm:$0xff] %vm217, %v215
        %228 = vst.msk [vmem:[#allocation2 + $0x50] sm:$0xff] %vm217, %v215
        %229 = vst.msk [vmem:[#allocation2 + $0x58] sm:$0xff] %vm217, %v215
        %230 = vst.msk [vmem:[#allocation2 + $0x60] sm:$0xff] %vm217, %v215
        %231 = vst.msk [vmem:[#allocation2 + $0x68] sm:$0xff] %vm217, %v215
        %232 = vst.msk [vmem:[#allocation2 + $0x70] sm:$0xff] %vm217, %v215
        %233 = vst.msk [vmem:[#allocation2 + $0x78] sm:$0xff] %vm217, %v215
        %234 = vst.msk [vmem:[#allocation2 + $0x80] sm:$0xff] %vm217, %v215
        %235 = vst.msk [vmem:[#allocation2 + $0x88] sm:$0xff] %vm217, %v215
        %236 = vst.msk [vmem:[#allocation2 + $0x90] sm:$0xff] %vm217, %v215
        %237 = vst.msk [vmem:[#allocation2 + $0x98] sm:$0xff] %vm217, %v215
        %238 = vst.msk [vmem:[#allocation2 + $0xa0] sm:$0xff] %vm217, %v215
        %239 = vst.msk [vmem:[#allocation2 + $0xa8] sm:$0xff] %vm217, %v215
        %240 = vst.msk [vmem:[#allocation2 + $0xb0] sm:$0xff] %vm217, %v215
        %241 = vst.msk [vmem:[#allocation2 + $0xb8] sm:$0xff] %vm217, %v215
        %242 = vst.msk [vmem:[#allocation2 + $0xc0] sm:$0xff] %vm217, %v215
        %243 = vst.msk [vmem:[#allocation2 + $0xc8] sm:$0xff] %vm217, %v215
        %244 = vst.msk [vmem:[#allocation2 + $0xd0] sm:$0xff] %vm217, %v215
        %245 = vst.msk [vmem:[#allocation2 + $0xd8] sm:$0xff] %vm217, %v215
        %246 = vst.msk [vmem:[#allocation2 + $0xe0] sm:$0xff] %vm217, %v215
        %247 = vst.msk [vmem:[#allocation2 + $0xe8] sm:$0xff] %vm217, %v215
        %248 = vst.msk [vmem:[#allocation2 + $0xf0] sm:$0xff] %vm217, %v215
        %249 = vst.msk [vmem:[#allocation2 + $0xf8] sm:$0xff] %vm217, %v215
        %250 = vst.msk [vmem:[#allocation2 + $0x100] sm:$0xff] %vm217, %v215
        %251 = vst.msk [vmem:[#allocation2 + $0x108] sm:$0xff] %vm217, %v215
        %252 = vst.msk [vmem:[#allocation2 + $0x110] sm:$0xff] %vm217, %v215
        %253 = vst.msk [vmem:[#allocation2 + $0x118] sm:$0xff] %vm217, %v215
        %254 = vst.msk [vmem:[#allocation2 + $0x120] sm:$0xff] %vm217, %v215
        %255 = vst.msk [vmem:[#allocation2 + $0x128] sm:$0xff] %vm217, %v215
        %256 = vst.msk [vmem:[#allocation2 + $0x130] sm:$0xff] %vm217, %v215
        %257 = vst.msk [vmem:[#allocation2 + $0x138] sm:$0xff] %vm217, %v215
        %258 = vst.msk [vmem:[#allocation2 + $0x140] sm:$0xff] %vm217, %v215
        %259 = vst.msk [vmem:[#allocation2 + $0x148] sm:$0xff] %vm217, %v215
        %260 = vst.msk [vmem:[#allocation2 + $0x150] sm:$0xff] %vm217, %v215
        %261 = vst.msk [vmem:[#allocation2 + $0x158] sm:$0xff] %vm217, %v215
        %262 = vst.msk [vmem:[#allocation2 + $0x160] sm:$0xff] %vm217, %v215
        %263 = vst.msk [vmem:[#allocation2 + $0x168] sm:$0xff] %vm217, %v215
        %264 = vst.msk [vmem:[#allocation2 + $0x170] sm:$0xff] %vm217, %v215
        %265 = vst.msk [vmem:[#allocation2 + $0x178] sm:$0xff] %vm217, %v215
        %266 = vst.msk [vmem:[#allocation2 + $0x180] sm:$0xff] %vm217, %v215
        %267 = vst.msk [vmem:[#allocation2 + $0x188] sm:$0xff] %vm217, %v215
        %268 = vst.msk [vmem:[#allocation2 + $0x190] sm:$0xff] %vm217, %v215
        %269 = vst.msk [vmem:[#allocation2 + $0x198] sm:$0xff] %vm217, %v215
        %270 = vst.msk [vmem:[#allocation2 + $0x1a0] sm:$0xff] %vm217, %v215
        %271 = vst.msk [vmem:[#allocation2 + $0x1a8] sm:$0xff] %vm217, %v215
        %272 = vst.msk [vmem:[#allocation2 + $0x1b0] sm:$0xff] %vm217, %v215
        %273 = vst.msk [vmem:[#allocation2 + $0x1b8] sm:$0xff] %vm217, %v215
        %274 = vst.msk [vmem:[#allocation2 + $0x1c0] sm:$0xff] %vm217, %v215
        %275 = vst.msk [vmem:[#allocation2 + $0x1c8] sm:$0xff] %vm217, %v215
        %276 = vst.msk [vmem:[#allocation2 + $0x1d0] sm:$0xff] %vm217, %v215
        %277 = vst.msk [vmem:[#allocation2 + $0x1d8] sm:$0xff] %vm217, %v215
        %278 = vst.msk [vmem:[#allocation2 + $0x1e0] sm:$0xff] %vm217, %v215
        %279 = vst.msk [vmem:[#allocation2 + $0x1e8] sm:$0xff] %vm217, %v215
        %280 = vst.msk [vmem:[#allocation2 + $0x1f0] sm:$0xff] %vm217, %v215
        %281 = vst.msk [vmem:[#allocation2 + $0x1f8] sm:$0xff] %vm217, %v215
        %282 = vst.msk [vmem:[#allocation2 + $0x200] sm:$0xff] %vm217, %v215
        %283 = vst.msk [vmem:[#allocation2 + $0x208] sm:$0xff] %vm217, %v215
        %284 = vst.msk [vmem:[#allocation2 + $0x210] sm:$0xff] %vm217, %v215
        %285 = vst.msk [vmem:[#allocation2 + $0x218] sm:$0xff] %vm217, %v215
        %286 = vst.msk [vmem:[#allocation2 + $0x220] sm:$0xff] %vm217, %v215
        %287 = vst.msk [vmem:[#allocation2 + $0x228] sm:$0xff] %vm217, %v215
        %288 = vst.msk [vmem:[#allocation2 + $0x230] sm:$0xff] %vm217, %v215
        %289 = vst.msk [vmem:[#allocation2 + $0x238] sm:$0xff] %vm217, %v215
        %290 = vst.msk [vmem:[#allocation2 + $0x240] sm:$0xff] %vm217, %v215
        %291 = vst.msk [vmem:[#allocation2 + $0x248] sm:$0xff] %vm217, %v215
        %292 = vst.msk [vmem:[#allocation2 + $0x250] sm:$0xff] %vm217, %v215
        %293 = vst.msk [vmem:[#allocation2 + $0x258] sm:$0xff] %vm217, %v215
        %294 = vst.msk [vmem:[#allocation2 + $0x260] sm:$0xff] %vm217, %v215
        %295 = vst.msk [vmem:[#allocation2 + $0x268] sm:$0xff] %vm217, %v215
        %296 = vst.msk [vmem:[#allocation2 + $0x270] sm:$0xff] %vm217, %v215
        %297 = vst.msk [vmem:[#allocation2 + $0x278] sm:$0xff] %vm217, %v215
        %298 = vst.msk [vmem:[#allocation2 + $0x280] sm:$0xff] %vm217, %v215
        %299 = vst.msk [vmem:[#allocation2 + $0x288] sm:$0xff] %vm217, %v215
        %300 = vst.msk [vmem:[#allocation2 + $0x290] sm:$0xff] %vm217, %v215
        %301 = vst.msk [vmem:[#allocation2 + $0x298] sm:$0xff] %vm217, %v215
        %302 = vst.msk [vmem:[#allocation2 + $0x2a0] sm:$0xff] %vm217, %v215
        %303 = vst.msk [vmem:[#allocation2 + $0x2a8] sm:$0xff] %vm217, %v215
        %304 = vst.msk [vmem:[#allocation2 + $0x2b0] sm:$0xff] %vm217, %v215
        %305 = vst.msk [vmem:[#allocation2 + $0x2b8] sm:$0xff] %vm217, %v215
        %306 = vst.msk [vmem:[#allocation2 + $0x2c0] sm:$0xff] %vm217, %v215
        %307 = vst.msk [vmem:[#allocation2 + $0x2c8] sm:$0xff] %vm217, %v215
        %308 = vst.msk [vmem:[#allocation2 + $0x2d0] sm:$0xff] %vm217, %v215
        %309 = vst.msk [vmem:[#allocation2 + $0x2d8] sm:$0xff] %vm217, %v215
        %310 = vst.msk [vmem:[#allocation2 + $0x2e0] sm:$0xff] %vm217, %v215
        %311 = vst.msk [vmem:[#allocation2 + $0x2e8] sm:$0xff] %vm217, %v215
        %312 = vst.msk [vmem:[#allocation2 + $0x2f0] sm:$0xff] %vm217, %v215
        %313 = vst.msk [vmem:[#allocation2 + $0x2f8] sm:$0xff] %vm217, %v215
        %314 = vst.msk [vmem:[#allocation2 + $0x300] sm:$0xff] %vm217, %v215
        %315 = vst.msk [vmem:[#allocation2 + $0x308] sm:$0xff] %vm217, %v215
        %316 = vst.msk [vmem:[#allocation2 + $0x310] sm:$0xff] %vm217, %v215
        %317 = vst.msk [vmem:[#allocation2 + $0x318] sm:$0xff] %vm217, %v215
        %318 = vst.msk [vmem:[#allocation2 + $0x320] sm:$0xff] %vm217, %v215
        %319 = vst.msk [vmem:[#allocation2 + $0x328] sm:$0xff] %vm217, %v215
        %320 = vst.msk [vmem:[#allocation2 + $0x330] sm:$0xff] %vm217, %v215
        %321 = vst.msk [vmem:[#allocation2 + $0x338] sm:$0xff] %vm217, %v215
        %322 = vst.msk [vmem:[#allocation2 + $0x340] sm:$0xff] %vm217, %v215
        %323 = vst.msk [vmem:[#allocation2 + $0x348] sm:$0xff] %vm217, %v215
        %324 = vst.msk [vmem:[#allocation2 + $0x350] sm:$0xff] %vm217, %v215
        %325 = vst.msk [vmem:[#allocation2 + $0x358] sm:$0xff] %vm217, %v215
        %326 = vst.msk [vmem:[#allocation2 + $0x360] sm:$0xff] %vm217, %v215
        %327 = vst.msk [vmem:[#allocation2 + $0x368] sm:$0xff] %vm217, %v215
        %328 = vst.msk [vmem:[#allocation2 + $0x370] sm:$0xff] %vm217, %v215
        %329 = vst.msk [vmem:[#allocation2 + $0x378] sm:$0xff] %vm217, %v215
        %330 = vst.msk [vmem:[#allocation2 + $0x380] sm:$0xff] %vm217, %v215
        %331 = vst.msk [vmem:[#allocation2 + $0x388] sm:$0xff] %vm217, %v215
        %332 = vst.msk [vmem:[#allocation2 + $0x390] sm:$0xff] %vm217, %v215
        %333 = vst.msk [vmem:[#allocation2 + $0x398] sm:$0xff] %vm217, %v215
        %334 = vst.msk [vmem:[#allocation2 + $0x3a0] sm:$0xff] %vm217, %v215
        %335 = vst.msk [vmem:[#allocation2 + $0x3a8] sm:$0xff] %vm217, %v215
        %336 = vst.msk [vmem:[#allocation2 + $0x3b0] sm:$0xff] %vm217, %v215
        %337 = vst.msk [vmem:[#allocation2 + $0x3b8] sm:$0xff] %vm217, %v215
        %338 = vst.msk [vmem:[#allocation2 + $0x3c0] sm:$0xff] %vm217, %v215
        %339 = vst.msk [vmem:[#allocation2 + $0x3c8] sm:$0xff] %vm217, %v215
        %340 = vst.msk [vmem:[#allocation2 + $0x3d0] sm:$0xff] %vm217, %v215
        %341 = vst.msk [vmem:[#allocation2 + $0x3d8] sm:$0xff] %vm217, %v215
        %342 = vst.msk [vmem:[#allocation2 + $0x3e0] sm:$0xff] %vm217, %v215
        %343 = vst.msk [vmem:[#allocation2 + $0x3e8] sm:$0xff] %vm217, %v215
        %344 = vst.msk [vmem:[#allocation2 + $0x3f0] sm:$0xff] %vm217, %v215
        %345 = vst.msk [vmem:[#allocation2 + $0x3f8] sm:$0xff] %vm217, %v215
        %346 = vst.msk [vmem:[#allocation2 + $0x400] sm:$0xff] %vm217, %v215
        %347 = vst.msk [vmem:[#allocation2 + $0x408] sm:$0xff] %vm217, %v215
        %348 = vst.msk [vmem:[#allocation2 + $0x410] sm:$0xff] %vm217, %v215
        %349 = vst.msk [vmem:[#allocation2 + $0x418] sm:$0xff] %vm217, %v215
        %350 = vst.msk [vmem:[#allocation2 + $0x420] sm:$0xff] %vm217, %v215
        %351 = vst.msk [vmem:[#allocation2 + $0x428] sm:$0xff] %vm217, %v215
        %352 = vst.msk [vmem:[#allocation2 + $0x430] sm:$0xff] %vm217, %v215
        %353 = vst.msk [vmem:[#allocation2 + $0x438] sm:$0xff] %vm217, %v215
        %354 = vst.msk [vmem:[#allocation2 + $0x440] sm:$0xff] %vm217, %v215
        %355 = vst.msk [vmem:[#allocation2 + $0x448] sm:$0xff] %vm217, %v215
        %356 = vst.msk [vmem:[#allocation2 + $0x450] sm:$0xff] %vm217, %v215
        %357 = vst.msk [vmem:[#allocation2 + $0x458] sm:$0xff] %vm217, %v215
        %358 = vst.msk [vmem:[#allocation2 + $0x460] sm:$0xff] %vm217, %v215
        %359 = vst.msk [vmem:[#allocation2 + $0x468] sm:$0xff] %vm217, %v215
        %360 = vst.msk [vmem:[#allocation2 + $0x470] sm:$0xff] %vm217, %v215
        %361 = vst.msk [vmem:[#allocation2 + $0x478] sm:$0xff] %vm217, %v215
        %362 = vst.msk [vmem:[#allocation2 + $0x480] sm:$0xff] %vm217, %v215
        %363 = vst.msk [vmem:[#allocation2 + $0x488] sm:$0xff] %vm217, %v215
        %364 = vst.msk [vmem:[#allocation2 + $0x490] sm:$0xff] %vm217, %v215
        %365 = vst.msk [vmem:[#allocation2 + $0x498] sm:$0xff] %vm217, %v215
        %366 = vst.msk [vmem:[#allocation2 + $0x4a0] sm:$0xff] %vm217, %v215
        %367 = vst.msk [vmem:[#allocation2 + $0x4a8] sm:$0xff] %vm217, %v215
        %368 = vst.msk [vmem:[#allocation2 + $0x4b0] sm:$0xff] %vm217, %v215
        %369 = vst.msk [vmem:[#allocation2 + $0x4b8] sm:$0xff] %vm217, %v215
        %370 = vst.msk [vmem:[#allocation2 + $0x4c0] sm:$0xff] %vm217, %v215
        %371 = vst.msk [vmem:[#allocation2 + $0x4c8] sm:$0xff] %vm217, %v215
        %372 = vst.msk [vmem:[#allocation2 + $0x4d0] sm:$0xff] %vm217, %v215
        %373 = vst.msk [vmem:[#allocation2 + $0x4d8] sm:$0xff] %vm217, %v215
        %374 = vst.msk [vmem:[#allocation2 + $0x4e0] sm:$0xff] %vm217, %v215
        %375 = vst.msk [vmem:[#allocation2 + $0x4e8] sm:$0xff] %vm217, %v215
        %376 = vst.msk [vmem:[#allocation2 + $0x4f0] sm:$0xff] %vm217, %v215
        %377 = vst.msk [vmem:[#allocation2 + $0x4f8] sm:$0xff] %vm217, %v215
        %378 = vst.msk [vmem:[#allocation2 + $0x500] sm:$0xff] %vm217, %v215
        %379 = vst.msk [vmem:[#allocation2 + $0x508] sm:$0xff] %vm217, %v215
        %380 = vst.msk [vmem:[#allocation2 + $0x510] sm:$0xff] %vm217, %v215
        %381 = vst.msk [vmem:[#allocation2 + $0x518] sm:$0xff] %vm217, %v215
        %382 = vst.msk [vmem:[#allocation2 + $0x520] sm:$0xff] %vm217, %v215
        %383 = vst.msk [vmem:[#allocation2 + $0x528] sm:$0xff] %vm217, %v215
        %384 = vst.msk [vmem:[#allocation2 + $0x530] sm:$0xff] %vm217, %v215
        %385 = vst.msk [vmem:[#allocation2 + $0x538] sm:$0xff] %vm217, %v215
        %386 = vst.msk [vmem:[#allocation2 + $0x540] sm:$0xff] %vm217, %v215
        %387 = vst.msk [vmem:[#allocation2 + $0x548] sm:$0xff] %vm217, %v215
        %388 = vst.msk [vmem:[#allocation2 + $0x550] sm:$0xff] %vm217, %v215
        %389 = vst.msk [vmem:[#allocation2 + $0x558] sm:$0xff] %vm217, %v215
        %390 = vst.msk [vmem:[#allocation2 + $0x560] sm:$0xff] %vm217, %v215
        %391 = vst.msk [vmem:[#allocation2 + $0x568] sm:$0xff] %vm217, %v215
        %392 = vst.msk [vmem:[#allocation2 + $0x570] sm:$0xff] %vm217, %v215
        %393 = vst.msk [vmem:[#allocation2 + $0x578] sm:$0xff] %vm217, %v215
        %394 = vst.msk [vmem:[#allocation2 + $0x580] sm:$0xff] %vm217, %v215
        %395 = vst.msk [vmem:[#allocation2 + $0x588] sm:$0xff] %vm217, %v215
        %396 = vst.msk [vmem:[#allocation2 + $0x590] sm:$0xff] %vm217, %v215
        %397 = vst.msk [vmem:[#allocation2 + $0x598] sm:$0xff] %vm217, %v215
        %398 = vst.msk [vmem:[#allocation2 + $0x5a0] sm:$0xff] %vm217, %v215
        %399 = vst.msk [vmem:[#allocation2 + $0x5a8] sm:$0xff] %vm217, %v215
        %400 = vst.msk [vmem:[#allocation2 + $0x5b0] sm:$0xff] %vm217, %v215
        %401 = vst.msk [vmem:[#allocation2 + $0x5b8] sm:$0xff] %vm217, %v215
        %402 = vst.msk [vmem:[#allocation2 + $0x5c0] sm:$0xff] %vm217, %v215
        %403 = vst.msk [vmem:[#allocation2 + $0x5c8] sm:$0xff] %vm217, %v215
        %404 = vst.msk [vmem:[#allocation2 + $0x5d0] sm:$0xff] %vm217, %v215
        %405 = vst.msk [vmem:[#allocation2 + $0x5d8] sm:$0xff] %vm217, %v215
        %406 = vst.msk [vmem:[#allocation2 + $0x5e0] sm:$0xff] %vm217, %v215
        %407 = vst.msk [vmem:[#allocation2 + $0x5e8] sm:$0xff] %vm217, %v215
        %408 = vst.msk [vmem:[#allocation2 + $0x5f0] sm:$0xff] %vm217, %v215
        %409 = vst.msk [vmem:[#allocation2 + $0x5f8] sm:$0xff] %vm217, %v215
        %410 = vst.msk [vmem:[#allocation2 + $0x600] sm:$0xff] %vm217, %v215
        %411 = vst.msk [vmem:[#allocation2 + $0x608] sm:$0xff] %vm217, %v215
        %412 = vst.msk [vmem:[#allocation2 + $0x610] sm:$0xff] %vm217, %v215
        %413 = vst.msk [vmem:[#allocation2 + $0x618] sm:$0xff] %vm217, %v215
        %414 = vst.msk [vmem:[#allocation2 + $0x620] sm:$0xff] %vm217, %v215
        %415 = vst.msk [vmem:[#allocation2 + $0x628] sm:$0xff] %vm217, %v215
        %416 = vst.msk [vmem:[#allocation2 + $0x630] sm:$0xff] %vm217, %v215
        %417 = vst.msk [vmem:[#allocation2 + $0x638] sm:$0xff] %vm217, %v215
        %418 = vst.msk [vmem:[#allocation2 + $0x640] sm:$0xff] %vm217, %v215
        %419 = vst.msk [vmem:[#allocation2 + $0x648] sm:$0xff] %vm217, %v215
        %420 = vst.msk [vmem:[#allocation2 + $0x650] sm:$0xff] %vm217, %v215
        %421 = vst.msk [vmem:[#allocation2 + $0x658] sm:$0xff] %vm217, %v215
        %422 = vst.msk [vmem:[#allocation2 + $0x660] sm:$0xff] %vm217, %v215
        %423 = vst.msk [vmem:[#allocation2 + $0x668] sm:$0xff] %vm217, %v215
        %424 = vst.msk [vmem:[#allocation2 + $0x670] sm:$0xff] %vm217, %v215
        %425 = vst.msk [vmem:[#allocation2 + $0x678] sm:$0xff] %vm217, %v215
        %426 = vst.msk [vmem:[#allocation2 + $0x680] sm:$0xff] %vm217, %v215
        %427 = vst.msk [vmem:[#allocation2 + $0x688] sm:$0xff] %vm217, %v215
        %428 = vst.msk [vmem:[#allocation2 + $0x690] sm:$0xff] %vm217, %v215
        %429 = vst.msk [vmem:[#allocation2 + $0x698] sm:$0xff] %vm217, %v215
        %430 = vst.msk [vmem:[#allocation2 + $0x6a0] sm:$0xff] %vm217, %v215
        %431 = vst.msk [vmem:[#allocation2 + $0x6a8] sm:$0xff] %vm217, %v215
        %432 = vst.msk [vmem:[#allocation2 + $0x6b0] sm:$0xff] %vm217, %v215
        %433 = vst.msk [vmem:[#allocation2 + $0x6b8] sm:$0xff] %vm217, %v215
        %434 = vst.msk [vmem:[#allocation2 + $0x6c0] sm:$0xff] %vm217, %v215
        %435 = vst.msk [vmem:[#allocation2 + $0x6c8] sm:$0xff] %vm217, %v215
        %436 = vst.msk [vmem:[#allocation2 + $0x6d0] sm:$0xff] %vm217, %v215
        %437 = vst.msk [vmem:[#allocation2 + $0x6d8] sm:$0xff] %vm217, %v215
        %438 = vst.msk [vmem:[#allocation2 + $0x6e0] sm:$0xff] %vm217, %v215
        %439 = vst.msk [vmem:[#allocation2 + $0x6e8] sm:$0xff] %vm217, %v215
        %440 = vst.msk [vmem:[#allocation2 + $0x6f0] sm:$0xff] %vm217, %v215
        %441 = vst.msk [vmem:[#allocation2 + $0x6f8] sm:$0xff] %vm217, %v215
        %442 = vst.msk [vmem:[#allocation2 + $0x700] sm:$0xff] %vm217, %v215
        %443 = vst.msk [vmem:[#allocation2 + $0x708] sm:$0xff] %vm217, %v215
        %444 = vst.msk [vmem:[#allocation2 + $0x710] sm:$0xff] %vm217, %v215
        %445 = vst.msk [vmem:[#allocation2 + $0x718] sm:$0xff] %vm217, %v215
        %446 = vst.msk [vmem:[#allocation2 + $0x720] sm:$0xff] %vm217, %v215
        %447 = vst.msk [vmem:[#allocation2 + $0x728] sm:$0xff] %vm217, %v215
        %448 = vst.msk [vmem:[#allocation2 + $0x730] sm:$0xff] %vm217, %v215
        %449 = vst.msk [vmem:[#allocation2 + $0x738] sm:$0xff] %vm217, %v215
        %450 = vst.msk [vmem:[#allocation2 + $0x740] sm:$0xff] %vm217, %v215
        %451 = vst.msk [vmem:[#allocation2 + $0x748] sm:$0xff] %vm217, %v215
        %452 = vst.msk [vmem:[#allocation2 + $0x750] sm:$0xff] %vm217, %v215
        %453 = vst.msk [vmem:[#allocation2 + $0x758] sm:$0xff] %vm217, %v215
        %454 = vst.msk [vmem:[#allocation2 + $0x760] sm:$0xff] %vm217, %v215
        %455 = vst.msk [vmem:[#allocation2 + $0x768] sm:$0xff] %vm217, %v215
        %456 = vst.msk [vmem:[#allocation2 + $0x770] sm:$0xff] %vm217, %v215
        %457 = vst.msk [vmem:[#allocation2 + $0x778] sm:$0xff] %vm217, %v215
        %458 = vst.msk [vmem:[#allocation2 + $0x780] sm:$0xff] %vm217, %v215
        %459 = vst.msk [vmem:[#allocation2 + $0x788] sm:$0xff] %vm217, %v215
        %460 = vst.msk [vmem:[#allocation2 + $0x790] sm:$0xff] %vm217, %v215
        %461 = vst.msk [vmem:[#allocation2 + $0x798] sm:$0xff] %vm217, %v215
        %462 = vst.msk [vmem:[#allocation2 + $0x7a0] sm:$0xff] %vm217, %v215
        %463 = vst.msk [vmem:[#allocation2 + $0x7a8] sm:$0xff] %vm217, %v215
        %464 = vst.msk [vmem:[#allocation2 + $0x7b0] sm:$0xff] %vm217, %v215
        %465 = vst.msk [vmem:[#allocation2 + $0x7b8] sm:$0xff] %vm217, %v215
        %466 = vst.msk [vmem:[#allocation2 + $0x7c0] sm:$0xff] %vm217, %v215
        %467 = vst.msk [vmem:[#allocation2 + $0x7c8] sm:$0xff] %vm217, %v215
        %468 = vst.msk [vmem:[#allocation2 + $0x7d0] sm:$0xff] %vm217, %v215
        %469 = vst.msk [vmem:[#allocation2 + $0x7d8] sm:$0xff] %vm217, %v215
        %470 = vst.msk [vmem:[#allocation2 + $0x7e0] sm:$0xff] %vm217, %v215
        %471 = vst.msk [vmem:[#allocation2 + $0x7e8] sm:$0xff] %vm217, %v215
        %472 = vst.msk [vmem:[#allocation2 + $0x7f0] sm:$0xff] %vm217, %v215
        %473 = vst.msk [vmem:[#allocation2 + $0x7f8] sm:$0xff] %vm217, %v215
        %v474 = vld [vmem:[%s203] sm:$0xf]
        %v475 = vld [vmem:[%s203 + $0x4] sm:$0xf]
        %v476 = vld [vmem:[%s203 + $0x8] sm:$0xf]
        %v477 = vld [vmem:[%s203 + $0xc] sm:$0xf]
        %v478 = vld [vmem:[%s203 + $0x10] sm:$0xf]
        %v479 = vld [vmem:[%s203 + $0x14] sm:$0xf]
        %v480 = vld [vmem:[%s203 + $0x18] sm:$0xf]
        %v481 = vld [vmem:[%s203 + $0x1c] sm:$0xf]
        %v482 = vld [vmem:[%s203 + $0x20] sm:$0xf]
        %v483 = vld [vmem:[%s203 + $0x24] sm:$0xf]
        %v484 = vld [vmem:[%s203 + $0x28] sm:$0xf]
        %v485 = vld [vmem:[%s203 + $0x2c] sm:$0xf]
        %v486 = vld [vmem:[%s203 + $0x30] sm:$0xf]
        %v487 = vld [vmem:[%s203 + $0x34] sm:$0xf]
        %v488 = vld [vmem:[%s203 + $0x38] sm:$0xf]
        %v489 = vld [vmem:[%s203 + $0x3c] sm:$0xf]
        %v490 = vld [vmem:[%s203 + $0x40] sm:$0xf]
        %v491 = vld [vmem:[%s203 + $0x44] sm:$0xf]
        %v492 = vld [vmem:[%s203 + $0x48] sm:$0xf]
        %v493 = vld [vmem:[%s203 + $0x4c] sm:$0xf]
        %v494 = vld [vmem:[%s203 + $0x50] sm:$0xf]
        %v495 = vld [vmem:[%s203 + $0x54] sm:$0xf]
        %v496 = vld [vmem:[%s203 + $0x58] sm:$0xf]
        %v497 = vld [vmem:[%s203 + $0x5c] sm:$0xf]
        %v498 = vld [vmem:[%s203 + $0x60] sm:$0xf]
        %v499 = vld [vmem:[%s203 + $0x64] sm:$0xf]
        %v500 = vld [vmem:[%s203 + $0x68] sm:$0xf]
        %v501 = vld [vmem:[%s203 + $0x6c] sm:$0xf]
        %v502 = vld [vmem:[%s203 + $0x70] sm:$0xf]
        %v503 = vld [vmem:[%s203 + $0x74] sm:$0xf]
        %v504 = vld [vmem:[%s203 + $0x78] sm:$0xf]
        %v505 = vld [vmem:[%s203 + $0x7c] sm:$0xf]
        %v506 = vld [vmem:[%s203 + $0x80] sm:$0xf]
        %v507 = vld [vmem:[%s203 + $0x84] sm:$0xf]
        %v508 = vld [vmem:[%s203 + $0x88] sm:$0xf]
        %v509 = vld [vmem:[%s203 + $0x8c] sm:$0xf]
        %v510 = vld [vmem:[%s203 + $0x90] sm:$0xf]
        %v511 = vld [vmem:[%s203 + $0x94] sm:$0xf]
        %v512 = vld [vmem:[%s203 + $0x98] sm:$0xf]
        %v513 = vld [vmem:[%s203 + $0x9c] sm:$0xf]
        %v514 = vld [vmem:[%s203 + $0xa0] sm:$0xf]
        %v515 = vld [vmem:[%s203 + $0xa4] sm:$0xf]
        %v516 = vld [vmem:[%s203 + $0xa8] sm:$0xf]
        %v517 = vld [vmem:[%s203 + $0xac] sm:$0xf]
        %v518 = vld [vmem:[%s203 + $0xb0] sm:$0xf]
        %v519 = vld [vmem:[%s203 + $0xb4] sm:$0xf]
        %v520 = vld [vmem:[%s203 + $0xb8] sm:$0xf]
        %v521 = vld [vmem:[%s203 + $0xbc] sm:$0xf]
        %v522 = vld [vmem:[%s203 + $0xc0] sm:$0xf]
        %v523 = vld [vmem:[%s203 + $0xc4] sm:$0xf]
        %v524 = vld [vmem:[%s203 + $0xc8] sm:$0xf]
        %v525 = vld [vmem:[%s203 + $0xcc] sm:$0xf]
        %v526 = vld [vmem:[%s203 + $0xd0] sm:$0xf]
        %v527 = vld [vmem:[%s203 + $0xd4] sm:$0xf]
        %v528 = vld [vmem:[%s203 + $0xd8] sm:$0xf]
        %v529 = vld [vmem:[%s203 + $0xdc] sm:$0xf]
        %v530 = vld [vmem:[%s203 + $0xe0] sm:$0xf]
        %v531 = vld [vmem:[%s203 + $0xe4] sm:$0xf]
        %v532 = vld [vmem:[%s203 + $0xe8] sm:$0xf]
        %v533 = vld [vmem:[%s203 + $0xec] sm:$0xf]
        %v534 = vld [vmem:[%s203 + $0xf0] sm:$0xf]
        %v535 = vld [vmem:[%s203 + $0xf4] sm:$0xf]
        %v536 = vld [vmem:[%s203 + $0xf8] sm:$0xf]
        %v537 = vld [vmem:[%s203 + $0xfc] sm:$0xf]
        %v538 = vld [vmem:[%s203 + $0x100] sm:$0xf]
        %v539 = vld [vmem:[%s203 + $0x104] sm:$0xf]
        %v540 = vld [vmem:[%s203 + $0x108] sm:$0xf]
        %v541 = vld [vmem:[%s203 + $0x10c] sm:$0xf]
        %v542 = vld [vmem:[%s203 + $0x110] sm:$0xf]
        %v543 = vld [vmem:[%s203 + $0x114] sm:$0xf]
        %v544 = vld [vmem:[%s203 + $0x118] sm:$0xf]
        %v545 = vld [vmem:[%s203 + $0x11c] sm:$0xf]
        %v546 = vld [vmem:[%s203 + $0x120] sm:$0xf]
        %v547 = vld [vmem:[%s203 + $0x124] sm:$0xf]
        %v548 = vld [vmem:[%s203 + $0x128] sm:$0xf]
        %v549 = vld [vmem:[%s203 + $0x12c] sm:$0xf]
        %v550 = vld [vmem:[%s203 + $0x130] sm:$0xf]
        %v551 = vld [vmem:[%s203 + $0x134] sm:$0xf]
        %v552 = vld [vmem:[%s203 + $0x138] sm:$0xf]
        %v553 = vld [vmem:[%s203 + $0x13c] sm:$0xf]
        %v554 = vld [vmem:[%s203 + $0x140] sm:$0xf]
        %v555 = vld [vmem:[%s203 + $0x144] sm:$0xf]
        %v556 = vld [vmem:[%s203 + $0x148] sm:$0xf]
        %v557 = vld [vmem:[%s203 + $0x14c] sm:$0xf]
        %v558 = vld [vmem:[%s203 + $0x150] sm:$0xf]
        %v559 = vld [vmem:[%s203 + $0x154] sm:$0xf]
        %v560 = vld [vmem:[%s203 + $0x158] sm:$0xf]
        %v561 = vld [vmem:[%s203 + $0x15c] sm:$0xf]
        %v562 = vld [vmem:[%s203 + $0x160] sm:$0xf]
        %v563 = vld [vmem:[%s203 + $0x164] sm:$0xf]
        %v564 = vld [vmem:[%s203 + $0x168] sm:$0xf]
        %v565 = vld [vmem:[%s203 + $0x16c] sm:$0xf]
        %v566 = vld [vmem:[%s203 + $0x170] sm:$0xf]
        %v567 = vld [vmem:[%s203 + $0x174] sm:$0xf]
        %v568 = vld [vmem:[%s203 + $0x178] sm:$0xf]
        %v569 = vld [vmem:[%s203 + $0x17c] sm:$0xf]
        %v570 = vld [vmem:[%s203 + $0x180] sm:$0xf]
        %v571 = vld [vmem:[%s203 + $0x184] sm:$0xf]
        %v572 = vld [vmem:[%s203 + $0x188] sm:$0xf]
        %v573 = vld [vmem:[%s203 + $0x18c] sm:$0xf]
        %v574 = vld [vmem:[%s203 + $0x190] sm:$0xf]
        %v575 = vld [vmem:[%s203 + $0x194] sm:$0xf]
        %v576 = vld [vmem:[%s203 + $0x198] sm:$0xf]
        %v577 = vld [vmem:[%s203 + $0x19c] sm:$0xf]
        %v578 = vld [vmem:[%s203 + $0x1a0] sm:$0xf]
        %v579 = vld [vmem:[%s203 + $0x1a4] sm:$0xf]
        %v580 = vld [vmem:[%s203 + $0x1a8] sm:$0xf]
        %v581 = vld [vmem:[%s203 + $0x1ac] sm:$0xf]
        %v582 = vld [vmem:[%s203 + $0x1b0] sm:$0xf]
        %v583 = vld [vmem:[%s203 + $0x1b4] sm:$0xf]
        %v584 = vld [vmem:[%s203 + $0x1b8] sm:$0xf]
        %v585 = vld [vmem:[%s203 + $0x1bc] sm:$0xf]
        %v586 = vld [vmem:[%s203 + $0x1c0] sm:$0xf]
        %v587 = vld [vmem:[%s203 + $0x1c4] sm:$0xf]
        %v588 = vld [vmem:[%s203 + $0x1c8] sm:$0xf]
        %v589 = vld [vmem:[%s203 + $0x1cc] sm:$0xf]
        %v590 = vld [vmem:[%s203 + $0x1d0] sm:$0xf]
        %v591 = vld [vmem:[%s203 + $0x1d4] sm:$0xf]
        %v592 = vld [vmem:[%s203 + $0x1d8] sm:$0xf]
        %v593 = vld [vmem:[%s203 + $0x1dc] sm:$0xf]
        %v594 = vld [vmem:[%s203 + $0x1e0] sm:$0xf]
        %v595 = vld [vmem:[%s203 + $0x1e4] sm:$0xf]
        %v596 = vld [vmem:[%s203 + $0x1e8] sm:$0xf]
        %v597 = vld [vmem:[%s203 + $0x1ec] sm:$0xf]
        %v598 = vld [vmem:[%s203 + $0x1f0] sm:$0xf]
        %v599 = vld [vmem:[%s203 + $0x1f4] sm:$0xf]
        %v600 = vld [vmem:[%s203 + $0x1f8] sm:$0xf]
        %v601 = vld [vmem:[%s203 + $0x1fc] sm:$0xf]
        %v602 = vld [vmem:[%s203 + $0x200] sm:$0xf]
        %v603 = vld [vmem:[%s203 + $0x204] sm:$0xf]
        %v604 = vld [vmem:[%s203 + $0x208] sm:$0xf]
        %v605 = vld [vmem:[%s203 + $0x20c] sm:$0xf]
        %v606 = vld [vmem:[%s203 + $0x210] sm:$0xf]
        %v607 = vld [vmem:[%s203 + $0x214] sm:$0xf]
        %v608 = vld [vmem:[%s203 + $0x218] sm:$0xf]
        %v609 = vld [vmem:[%s203 + $0x21c] sm:$0xf]
        %v610 = vld [vmem:[%s203 + $0x220] sm:$0xf]
        %v611 = vld [vmem:[%s203 + $0x224] sm:$0xf]
        %v612 = vld [vmem:[%s203 + $0x228] sm:$0xf]
        %v613 = vld [vmem:[%s203 + $0x22c] sm:$0xf]
        %v614 = vld [vmem:[%s203 + $0x230] sm:$0xf]
        %v615 = vld [vmem:[%s203 + $0x234] sm:$0xf]
        %v616 = vld [vmem:[%s203 + $0x238] sm:$0xf]
        %v617 = vld [vmem:[%s203 + $0x23c] sm:$0xf]
        %v618 = vld [vmem:[%s203 + $0x240] sm:$0xf]
        %v619 = vld [vmem:[%s203 + $0x244] sm:$0xf]
        %v620 = vld [vmem:[%s203 + $0x248] sm:$0xf]
        %v621 = vld [vmem:[%s203 + $0x24c] sm:$0xf]
        %v622 = vld [vmem:[%s203 + $0x250] sm:$0xf]
        %v623 = vld [vmem:[%s203 + $0x254] sm:$0xf]
        %v624 = vld [vmem:[%s203 + $0x258] sm:$0xf]
        %v625 = vld [vmem:[%s203 + $0x25c] sm:$0xf]
        %v626 = vld [vmem:[%s203 + $0x260] sm:$0xf]
        %v627 = vld [vmem:[%s203 + $0x264] sm:$0xf]
        %v628 = vld [vmem:[%s203 + $0x268] sm:$0xf]
        %v629 = vld [vmem:[%s203 + $0x26c] sm:$0xf]
        %v630 = vld [vmem:[%s203 + $0x270] sm:$0xf]
        %v631 = vld [vmem:[%s203 + $0x274] sm:$0xf]
        %v632 = vld [vmem:[%s203 + $0x278] sm:$0xf]
        %v633 = vld [vmem:[%s203 + $0x27c] sm:$0xf]
        %v634 = vld [vmem:[%s203 + $0x280] sm:$0xf]
        %v635 = vld [vmem:[%s203 + $0x284] sm:$0xf]
        %v636 = vld [vmem:[%s203 + $0x288] sm:$0xf]
        %v637 = vld [vmem:[%s203 + $0x28c] sm:$0xf]
        %v638 = vld [vmem:[%s203 + $0x290] sm:$0xf]
        %v639 = vld [vmem:[%s203 + $0x294] sm:$0xf]
        %v640 = vld [vmem:[%s203 + $0x298] sm:$0xf]
        %v641 = vld [vmem:[%s203 + $0x29c] sm:$0xf]
        %v642 = vld [vmem:[%s203 + $0x2a0] sm:$0xf]
        %v643 = vld [vmem:[%s203 + $0x2a4] sm:$0xf]
        %v644 = vld [vmem:[%s203 + $0x2a8] sm:$0xf]
        %v645 = vld [vmem:[%s203 + $0x2ac] sm:$0xf]
        %v646 = vld [vmem:[%s203 + $0x2b0] sm:$0xf]
        %v647 = vld [vmem:[%s203 + $0x2b4] sm:$0xf]
        %v648 = vld [vmem:[%s203 + $0x2b8] sm:$0xf]
        %v649 = vld [vmem:[%s203 + $0x2bc] sm:$0xf]
        %v650 = vld [vmem:[%s203 + $0x2c0] sm:$0xf]
        %v651 = vld [vmem:[%s203 + $0x2c4] sm:$0xf]
        %v652 = vld [vmem:[%s203 + $0x2c8] sm:$0xf]
        %v653 = vld [vmem:[%s203 + $0x2cc] sm:$0xf]
        %v654 = vld [vmem:[%s203 + $0x2d0] sm:$0xf]
        %v655 = vld [vmem:[%s203 + $0x2d4] sm:$0xf]
        %v656 = vld [vmem:[%s203 + $0x2d8] sm:$0xf]
        %v657 = vld [vmem:[%s203 + $0x2dc] sm:$0xf]
        %v658 = vld [vmem:[%s203 + $0x2e0] sm:$0xf]
        %v659 = vld [vmem:[%s203 + $0x2e4] sm:$0xf]
        %v660 = vld [vmem:[%s203 + $0x2e8] sm:$0xf]
        %v661 = vld [vmem:[%s203 + $0x2ec] sm:$0xf]
        %v662 = vld [vmem:[%s203 + $0x2f0] sm:$0xf]
        %v663 = vld [vmem:[%s203 + $0x2f4] sm:$0xf]
        %v664 = vld [vmem:[%s203 + $0x2f8] sm:$0xf]
        %v665 = vld [vmem:[%s203 + $0x2fc] sm:$0xf]
        %v666 = vld [vmem:[%s203 + $0x300] sm:$0xf]
        %v667 = vld [vmem:[%s203 + $0x304] sm:$0xf]
        %v668 = vld [vmem:[%s203 + $0x308] sm:$0xf]
        %v669 = vld [vmem:[%s203 + $0x30c] sm:$0xf]
        %v670 = vld [vmem:[%s203 + $0x310] sm:$0xf]
        %v671 = vld [vmem:[%s203 + $0x314] sm:$0xf]
        %v672 = vld [vmem:[%s203 + $0x318] sm:$0xf]
        %v673 = vld [vmem:[%s203 + $0x31c] sm:$0xf]
        %v674 = vld [vmem:[%s203 + $0x320] sm:$0xf]
        %v675 = vld [vmem:[%s203 + $0x324] sm:$0xf]
        %v676 = vld [vmem:[%s203 + $0x328] sm:$0xf]
        %v677 = vld [vmem:[%s203 + $0x32c] sm:$0xf]
        %v678 = vld [vmem:[%s203 + $0x330] sm:$0xf]
        %v679 = vld [vmem:[%s203 + $0x334] sm:$0xf]
        %v680 = vld [vmem:[%s203 + $0x338] sm:$0xf]
        %v681 = vld [vmem:[%s203 + $0x33c] sm:$0xf]
        %v682 = vld [vmem:[%s203 + $0x340] sm:$0xf]
        %v683 = vld [vmem:[%s203 + $0x344] sm:$0xf]
        %v684 = vld [vmem:[%s203 + $0x348] sm:$0xf]
        %v685 = vld [vmem:[%s203 + $0x34c] sm:$0xf]
        %v686 = vld [vmem:[%s203 + $0x350] sm:$0xf]
        %v687 = vld [vmem:[%s203 + $0x354] sm:$0xf]
        %v688 = vld [vmem:[%s203 + $0x358] sm:$0xf]
        %v689 = vld [vmem:[%s203 + $0x35c] sm:$0xf]
        %v690 = vld [vmem:[%s203 + $0x360] sm:$0xf]
        %v691 = vld [vmem:[%s203 + $0x364] sm:$0xf]
        %v692 = vld [vmem:[%s203 + $0x368] sm:$0xf]
        %v693 = vld [vmem:[%s203 + $0x36c] sm:$0xf]
        %v694 = vld [vmem:[%s203 + $0x370] sm:$0xf]
        %v695 = vld [vmem:[%s203 + $0x374] sm:$0xf]
        %v696 = vld [vmem:[%s203 + $0x378] sm:$0xf]
        %v697 = vld [vmem:[%s203 + $0x37c] sm:$0xf]
        %v698 = vld [vmem:[%s203 + $0x380] sm:$0xf]
        %v699 = vld [vmem:[%s203 + $0x384] sm:$0xf]
        %v700 = vld [vmem:[%s203 + $0x388] sm:$0xf]
        %v701 = vld [vmem:[%s203 + $0x38c] sm:$0xf]
        %v702 = vld [vmem:[%s203 + $0x390] sm:$0xf]
        %v703 = vld [vmem:[%s203 + $0x394] sm:$0xf]
        %v704 = vld [vmem:[%s203 + $0x398] sm:$0xf]
        %v705 = vld [vmem:[%s203 + $0x39c] sm:$0xf]
        %v706 = vld [vmem:[%s203 + $0x3a0] sm:$0xf]
        %v707 = vld [vmem:[%s203 + $0x3a4] sm:$0xf]
        %v708 = vld [vmem:[%s203 + $0x3a8] sm:$0xf]
        %v709 = vld [vmem:[%s203 + $0x3ac] sm:$0xf]
        %v710 = vld [vmem:[%s203 + $0x3b0] sm:$0xf]
        %v711 = vld [vmem:[%s203 + $0x3b4] sm:$0xf]
        %v712 = vld [vmem:[%s203 + $0x3b8] sm:$0xf]
        %v713 = vld [vmem:[%s203 + $0x3bc] sm:$0xf]
        %v714 = vld [vmem:[%s203 + $0x3c0] sm:$0xf]
        %v715 = vld [vmem:[%s203 + $0x3c4] sm:$0xf]
        %v716 = vld [vmem:[%s203 + $0x3c8] sm:$0xf]
        %v717 = vld [vmem:[%s203 + $0x3cc] sm:$0xf]
        %v718 = vld [vmem:[%s203 + $0x3d0] sm:$0xf]
        %v719 = vld [vmem:[%s203 + $0x3d4] sm:$0xf]
        %v720 = vld [vmem:[%s203 + $0x3d8] sm:$0xf]
        %v721 = vld [vmem:[%s203 + $0x3dc] sm:$0xf]
        %v722 = vld [vmem:[%s203 + $0x3e0] sm:$0xf]
        %v723 = vld [vmem:[%s203 + $0x3e4] sm:$0xf]
        %v724 = vld [vmem:[%s203 + $0x3e8] sm:$0xf]
        %v725 = vld [vmem:[%s203 + $0x3ec] sm:$0xf]
        %v726 = vld [vmem:[%s203 + $0x3f0] sm:$0xf]
        %v727 = vld [vmem:[%s203 + $0x3f4] sm:$0xf]
        %v728 = vld [vmem:[%s203 + $0x3f8] sm:$0xf]
        %v729 = vld [vmem:[%s203 + $0x3fc] sm:$0xf]
        %v730 = vld [vmem:[#allocation2] sm:$0xff]
        %v731 = vld [vmem:[#allocation2 + $0x8] sm:$0xff]
        %v732 = vld [vmem:[#allocation2 + $0x10] sm:$0xff]
        %v733 = vld [vmem:[#allocation2 + $0x18] sm:$0xff]
        %v734 = vld [vmem:[#allocation2 + $0x20] sm:$0xff]
        %v735 = vld [vmem:[#allocation2 + $0x28] sm:$0xff]
        %v736 = vld [vmem:[#allocation2 + $0x30] sm:$0xff]
        %v737 = vld [vmem:[#allocation2 + $0x38] sm:$0xff]
        %v738 = vld [vmem:[#allocation2 + $0x40] sm:$0xff]
        %v739 = vld [vmem:[#allocation2 + $0x48] sm:$0xff]
        %v740 = vld [vmem:[#allocation2 + $0x50] sm:$0xff]
        %v741 = vld [vmem:[#allocation2 + $0x58] sm:$0xff]
        %v742 = vld [vmem:[#allocation2 + $0x60] sm:$0xff]
        %v743 = vld [vmem:[#allocation2 + $0x68] sm:$0xff]
        %v744 = vld [vmem:[#allocation2 + $0x70] sm:$0xff]
        %v745 = vld [vmem:[#allocation2 + $0x78] sm:$0xff]
        %v746 = vld [vmem:[#allocation2 + $0x80] sm:$0xff]
        %v747 = vld [vmem:[#allocation2 + $0x88] sm:$0xff]
        %v748 = vld [vmem:[#allocation2 + $0x90] sm:$0xff]
        %v749 = vld [vmem:[#allocation2 + $0x98] sm:$0xff]
        %v750 = vld [vmem:[#allocation2 + $0xa0] sm:$0xff]
        %v751 = vld [vmem:[#allocation2 + $0xa8] sm:$0xff]
        %v752 = vld [vmem:[#allocation2 + $0xb0] sm:$0xff]
        %v753 = vld [vmem:[#allocation2 + $0xb8] sm:$0xff]
        %v754 = vld [vmem:[#allocation2 + $0xc0] sm:$0xff]
        %v755 = vld [vmem:[#allocation2 + $0xc8] sm:$0xff]
        %v756 = vld [vmem:[#allocation2 + $0xd0] sm:$0xff]
        %v757 = vld [vmem:[#allocation2 + $0xd8] sm:$0xff]
        %v758 = vld [vmem:[#allocation2 + $0xe0] sm:$0xff]
        %v759 = vld [vmem:[#allocation2 + $0xe8] sm:$0xff]
        %v760 = vld [vmem:[#allocation2 + $0xf0] sm:$0xff]
        %v761 = vld [vmem:[#allocation2 + $0xf8] sm:$0xff]
        %v762 = vld [vmem:[#allocation2 + $0x100] sm:$0xff]
        %v763 = vld [vmem:[#allocation2 + $0x108] sm:$0xff]
        %v764 = vld [vmem:[#allocation2 + $0x110] sm:$0xff]
        %v765 = vld [vmem:[#allocation2 + $0x118] sm:$0xff]
        %v766 = vld [vmem:[#allocation2 + $0x120] sm:$0xff]
        %v767 = vld [vmem:[#allocation2 + $0x128] sm:$0xff]
        %v768 = vld [vmem:[#allocation2 + $0x130] sm:$0xff]
        %v769 = vld [vmem:[#allocation2 + $0x138] sm:$0xff]
        %v770 = vld [vmem:[#allocation2 + $0x140] sm:$0xff]
        %v771 = vld [vmem:[#allocation2 + $0x148] sm:$0xff]
        %v772 = vld [vmem:[#allocation2 + $0x150] sm:$0xff]
        %v773 = vld [vmem:[#allocation2 + $0x158] sm:$0xff]
        %v774 = vld [vmem:[#allocation2 + $0x160] sm:$0xff]
        %v775 = vld [vmem:[#allocation2 + $0x168] sm:$0xff]
        %v776 = vld [vmem:[#allocation2 + $0x170] sm:$0xff]
        %v777 = vld [vmem:[#allocation2 + $0x178] sm:$0xff]
        %v778 = vld [vmem:[#allocation2 + $0x180] sm:$0xff]
        %v779 = vld [vmem:[#allocation2 + $0x188] sm:$0xff]
        %v780 = vld [vmem:[#allocation2 + $0x190] sm:$0xff]
        %v781 = vld [vmem:[#allocation2 + $0x198] sm:$0xff]
        %v782 = vld [vmem:[#allocation2 + $0x1a0] sm:$0xff]
        %v783 = vld [vmem:[#allocation2 + $0x1a8] sm:$0xff]
        %v784 = vld [vmem:[#allocation2 + $0x1b0] sm:$0xff]
        %v785 = vld [vmem:[#allocation2 + $0x1b8] sm:$0xff]
        %v786 = vld [vmem:[#allocation2 + $0x1c0] sm:$0xff]
        %v787 = vld [vmem:[#allocation2 + $0x1c8] sm:$0xff]
        %v788 = vld [vmem:[#allocation2 + $0x1d0] sm:$0xff]
        %v789 = vld [vmem:[#allocation2 + $0x1d8] sm:$0xff]
        %v790 = vld [vmem:[#allocation2 + $0x1e0] sm:$0xff]
        %v791 = vld [vmem:[#allocation2 + $0x1e8] sm:$0xff]
        %v792 = vld [vmem:[#allocation2 + $0x1f0] sm:$0xff]
        %v793 = vld [vmem:[#allocation2 + $0x1f8] sm:$0xff]
        %v794 = vld [vmem:[#allocation2 + $0x200] sm:$0xff]
        %v795 = vld [vmem:[#allocation2 + $0x208] sm:$0xff]
        %v796 = vld [vmem:[#allocation2 + $0x210] sm:$0xff]
        %v797 = vld [vmem:[#allocation2 + $0x218] sm:$0xff]
        %v798 = vld [vmem:[#allocation2 + $0x220] sm:$0xff]
        %v799 = vld [vmem:[#allocation2 + $0x228] sm:$0xff]
        %v800 = vld [vmem:[#allocation2 + $0x230] sm:$0xff]
        %v801 = vld [vmem:[#allocation2 + $0x238] sm:$0xff]
        %v802 = vld [vmem:[#allocation2 + $0x240] sm:$0xff]
        %v803 = vld [vmem:[#allocation2 + $0x248] sm:$0xff]
        %v804 = vld [vmem:[#allocation2 + $0x250] sm:$0xff]
        %v805 = vld [vmem:[#allocation2 + $0x258] sm:$0xff]
        %v806 = vld [vmem:[#allocation2 + $0x260] sm:$0xff]
        %v807 = vld [vmem:[#allocation2 + $0x268] sm:$0xff]
        %v808 = vld [vmem:[#allocation2 + $0x270] sm:$0xff]
        %v809 = vld [vmem:[#allocation2 + $0x278] sm:$0xff]
        %v810 = vld [vmem:[#allocation2 + $0x280] sm:$0xff]
        %v811 = vld [vmem:[#allocation2 + $0x288] sm:$0xff]
        %v812 = vld [vmem:[#allocation2 + $0x290] sm:$0xff]
        %v813 = vld [vmem:[#allocation2 + $0x298] sm:$0xff]
        %v814 = vld [vmem:[#allocation2 + $0x2a0] sm:$0xff]
        %v815 = vld [vmem:[#allocation2 + $0x2a8] sm:$0xff]
        %v816 = vld [vmem:[#allocation2 + $0x2b0] sm:$0xff]
        %v817 = vld [vmem:[#allocation2 + $0x2b8] sm:$0xff]
        %v818 = vld [vmem:[#allocation2 + $0x2c0] sm:$0xff]
        %v819 = vld [vmem:[#allocation2 + $0x2c8] sm:$0xff]
        %v820 = vld [vmem:[#allocation2 + $0x2d0] sm:$0xff]
        %v821 = vld [vmem:[#allocation2 + $0x2d8] sm:$0xff]
        %v822 = vld [vmem:[#allocation2 + $0x2e0] sm:$0xff]
        %v823 = vld [vmem:[#allocation2 + $0x2e8] sm:$0xff]
        %v824 = vld [vmem:[#allocation2 + $0x2f0] sm:$0xff]
        %v825 = vld [vmem:[#allocation2 + $0x2f8] sm:$0xff]
        %v826 = vld [vmem:[#allocation2 + $0x300] sm:$0xff]
        %v827 = vld [vmem:[#allocation2 + $0x308] sm:$0xff]
        %v828 = vld [vmem:[#allocation2 + $0x310] sm:$0xff]
        %v829 = vld [vmem:[#allocation2 + $0x318] sm:$0xff]
        %v830 = vld [vmem:[#allocation2 + $0x320] sm:$0xff]
        %v831 = vld [vmem:[#allocation2 + $0x328] sm:$0xff]
        %v832 = vld [vmem:[#allocation2 + $0x330] sm:$0xff]
        %v833 = vld [vmem:[#allocation2 + $0x338] sm:$0xff]
        %v834 = vld [vmem:[#allocation2 + $0x340] sm:$0xff]
        %v835 = vld [vmem:[#allocation2 + $0x348] sm:$0xff]
        %v836 = vld [vmem:[#allocation2 + $0x350] sm:$0xff]
        %v837 = vld [vmem:[#allocation2 + $0x358] sm:$0xff]
        %v838 = vld [vmem:[#allocation2 + $0x360] sm:$0xff]
        %v839 = vld [vmem:[#allocation2 + $0x368] sm:$0xff]
        %v840 = vld [vmem:[#allocation2 + $0x370] sm:$0xff]
        %v841 = vld [vmem:[#allocation2 + $0x378] sm:$0xff]
        %v842 = vld [vmem:[#allocation2 + $0x380] sm:$0xff]
        %v843 = vld [vmem:[#allocation2 + $0x388] sm:$0xff]
        %v844 = vld [vmem:[#allocation2 + $0x390] sm:$0xff]
        %v845 = vld [vmem:[#allocation2 + $0x398] sm:$0xff]
        %v846 = vld [vmem:[#allocation2 + $0x3a0] sm:$0xff]
        %v847 = vld [vmem:[#allocation2 + $0x3a8] sm:$0xff]
        %v848 = vld [vmem:[#allocation2 + $0x3b0] sm:$0xff]
        %v849 = vld [vmem:[#allocation2 + $0x3b8] sm:$0xff]
        %v850 = vld [vmem:[#allocation2 + $0x3c0] sm:$0xff]
        %v851 = vld [vmem:[#allocation2 + $0x3c8] sm:$0xff]
        %v852 = vld [vmem:[#allocation2 + $0x3d0] sm:$0xff]
        %v853 = vld [vmem:[#allocation2 + $0x3d8] sm:$0xff]
        %v854 = vld [vmem:[#allocation2 + $0x3e0] sm:$0xff]
        %v855 = vld [vmem:[#allocation2 + $0x3e8] sm:$0xff]
        %v856 = vld [vmem:[#allocation2 + $0x3f0] sm:$0xff]
        %v857 = vld [vmem:[#allocation2 + $0x3f8] sm:$0xff]
        %v858 = vld [vmem:[#allocation2 + $0x400] sm:$0xff]
        %v859 = vld [vmem:[#allocation2 + $0x408] sm:$0xff]
        %v860 = vld [vmem:[#allocation2 + $0x410] sm:$0xff]
        %v861 = vld [vmem:[#allocation2 + $0x418] sm:$0xff]
        %v862 = vld [vmem:[#allocation2 + $0x420] sm:$0xff]
        %v863 = vld [vmem:[#allocation2 + $0x428] sm:$0xff]
        %v864 = vld [vmem:[#allocation2 + $0x430] sm:$0xff]
        %v865 = vld [vmem:[#allocation2 + $0x438] sm:$0xff]
        %v866 = vld [vmem:[#allocation2 + $0x440] sm:$0xff]
        %v867 = vld [vmem:[#allocation2 + $0x448] sm:$0xff]
        %v868 = vld [vmem:[#allocation2 + $0x450] sm:$0xff]
        %v869 = vld [vmem:[#allocation2 + $0x458] sm:$0xff]
        %v870 = vld [vmem:[#allocation2 + $0x460] sm:$0xff]
        %v871 = vld [vmem:[#allocation2 + $0x468] sm:$0xff]
        %v872 = vld [vmem:[#allocation2 + $0x470] sm:$0xff]
        %v873 = vld [vmem:[#allocation2 + $0x478] sm:$0xff]
        %v874 = vld [vmem:[#allocation2 + $0x480] sm:$0xff]
        %v875 = vld [vmem:[#allocation2 + $0x488] sm:$0xff]
        %v876 = vld [vmem:[#allocation2 + $0x490] sm:$0xff]
        %v877 = vld [vmem:[#allocation2 + $0x498] sm:$0xff]
        %v878 = vld [vmem:[#allocation2 + $0x4a0] sm:$0xff]
        %v879 = vld [vmem:[#allocation2 + $0x4a8] sm:$0xff]
        %v880 = vld [vmem:[#allocation2 + $0x4b0] sm:$0xff]
        %v881 = vld [vmem:[#allocation2 + $0x4b8] sm:$0xff]
        %v882 = vld [vmem:[#allocation2 + $0x4c0] sm:$0xff]
        %v883 = vld [vmem:[#allocation2 + $0x4c8] sm:$0xff]
        %v884 = vld [vmem:[#allocation2 + $0x4d0] sm:$0xff]
        %v885 = vld [vmem:[#allocation2 + $0x4d8] sm:$0xff]
        %v886 = vld [vmem:[#allocation2 + $0x4e0] sm:$0xff]
        %v887 = vld [vmem:[#allocation2 + $0x4e8] sm:$0xff]
        %v888 = vld [vmem:[#allocation2 + $0x4f0] sm:$0xff]
        %v889 = vld [vmem:[#allocation2 + $0x4f8] sm:$0xff]
        %v890 = vld [vmem:[#allocation2 + $0x500] sm:$0xff]
        %v891 = vld [vmem:[#allocation2 + $0x508] sm:$0xff]
        %v892 = vld [vmem:[#allocation2 + $0x510] sm:$0xff]
        %v893 = vld [vmem:[#allocation2 + $0x518] sm:$0xff]
        %v894 = vld [vmem:[#allocation2 + $0x520] sm:$0xff]
        %v895 = vld [vmem:[#allocation2 + $0x528] sm:$0xff]
        %v896 = vld [vmem:[#allocation2 + $0x530] sm:$0xff]
        %v897 = vld [vmem:[#allocation2 + $0x538] sm:$0xff]
        %v898 = vld [vmem:[#allocation2 + $0x540] sm:$0xff]
        %v899 = vld [vmem:[#allocation2 + $0x548] sm:$0xff]
        %v900 = vld [vmem:[#allocation2 + $0x550] sm:$0xff]
        %v901 = vld [vmem:[#allocation2 + $0x558] sm:$0xff]
        %v902 = vld [vmem:[#allocation2 + $0x560] sm:$0xff]
        %v903 = vld [vmem:[#allocation2 + $0x568] sm:$0xff]
        %v904 = vld [vmem:[#allocation2 + $0x570] sm:$0xff]
        %v905 = vld [vmem:[#allocation2 + $0x578] sm:$0xff]
        %v906 = vld [vmem:[#allocation2 + $0x580] sm:$0xff]
        %v907 = vld [vmem:[#allocation2 + $0x588] sm:$0xff]
        %v908 = vld [vmem:[#allocation2 + $0x590] sm:$0xff]
        %v909 = vld [vmem:[#allocation2 + $0x598] sm:$0xff]
        %v910 = vld [vmem:[#allocation2 + $0x5a0] sm:$0xff]
        %v911 = vld [vmem:[#allocation2 + $0x5a8] sm:$0xff]
        %v912 = vld [vmem:[#allocation2 + $0x5b0] sm:$0xff]
        %v913 = vld [vmem:[#allocation2 + $0x5b8] sm:$0xff]
        %v914 = vld [vmem:[#allocation2 + $0x5c0] sm:$0xff]
        %v915 = vld [vmem:[#allocation2 + $0x5c8] sm:$0xff]
        %v916 = vld [vmem:[#allocation2 + $0x5d0] sm:$0xff]
        %v917 = vld [vmem:[#allocation2 + $0x5d8] sm:$0xff]
        %v918 = vld [vmem:[#allocation2 + $0x5e0] sm:$0xff]
        %v919 = vld [vmem:[#allocation2 + $0x5e8] sm:$0xff]
        %v920 = vld [vmem:[#allocation2 + $0x5f0] sm:$0xff]
        %v921 = vld [vmem:[#allocation2 + $0x5f8] sm:$0xff]
        %v922 = vld [vmem:[#allocation2 + $0x600] sm:$0xff]
        %v923 = vld [vmem:[#allocation2 + $0x608] sm:$0xff]
        %v924 = vld [vmem:[#allocation2 + $0x610] sm:$0xff]
        %v925 = vld [vmem:[#allocation2 + $0x618] sm:$0xff]
        %v926 = vld [vmem:[#allocation2 + $0x620] sm:$0xff]
        %v927 = vld [vmem:[#allocation2 + $0x628] sm:$0xff]
        %v928 = vld [vmem:[#allocation2 + $0x630] sm:$0xff]
        %v929 = vld [vmem:[#allocation2 + $0x638] sm:$0xff]
        %v930 = vld [vmem:[#allocation2 + $0x640] sm:$0xff]
        %v931 = vld [vmem:[#allocation2 + $0x648] sm:$0xff]
        %v932 = vld [vmem:[#allocation2 + $0x650] sm:$0xff]
        %v933 = vld [vmem:[#allocation2 + $0x658] sm:$0xff]
        %v934 = vld [vmem:[#allocation2 + $0x660] sm:$0xff]
        %v935 = vld [vmem:[#allocation2 + $0x668] sm:$0xff]
        %v936 = vld [vmem:[#allocation2 + $0x670] sm:$0xff]
        %v937 = vld [vmem:[#allocation2 + $0x678] sm:$0xff]
        %v938 = vld [vmem:[#allocation2 + $0x680] sm:$0xff]
        %v939 = vld [vmem:[#allocation2 + $0x688] sm:$0xff]
        %v940 = vld [vmem:[#allocation2 + $0x690] sm:$0xff]
        %v941 = vld [vmem:[#allocation2 + $0x698] sm:$0xff]
        %v942 = vld [vmem:[#allocation2 + $0x6a0] sm:$0xff]
        %v943 = vld [vmem:[#allocation2 + $0x6a8] sm:$0xff]
        %v944 = vld [vmem:[#allocation2 + $0x6b0] sm:$0xff]
        %v945 = vld [vmem:[#allocation2 + $0x6b8] sm:$0xff]
        %v946 = vld [vmem:[#allocation2 + $0x6c0] sm:$0xff]
        %v947 = vld [vmem:[#allocation2 + $0x6c8] sm:$0xff]
        %v948 = vld [vmem:[#allocation2 + $0x6d0] sm:$0xff]
        %v949 = vld [vmem:[#allocation2 + $0x6d8] sm:$0xff]
        %v950 = vld [vmem:[#allocation2 + $0x6e0] sm:$0xff]
        %v951 = vld [vmem:[#allocation2 + $0x6e8] sm:$0xff]
        %v952 = vld [vmem:[#allocation2 + $0x6f0] sm:$0xff]
        %v953 = vld [vmem:[#allocation2 + $0x6f8] sm:$0xff]
        %v954 = vld [vmem:[#allocation2 + $0x700] sm:$0xff]
        %v955 = vld [vmem:[#allocation2 + $0x708] sm:$0xff]
        %v956 = vld [vmem:[#allocation2 + $0x710] sm:$0xff]
        %v957 = vld [vmem:[#allocation2 + $0x718] sm:$0xff]
        %v958 = vld [vmem:[#allocation2 + $0x720] sm:$0xff]
        %v959 = vld [vmem:[#allocation2 + $0x728] sm:$0xff]
        %v960 = vld [vmem:[#allocation2 + $0x730] sm:$0xff]
        %v961 = vld [vmem:[#allocation2 + $0x738] sm:$0xff]
        %v962 = vld [vmem:[#allocation2 + $0x740] sm:$0xff]
        %v963 = vld [vmem:[#allocation2 + $0x748] sm:$0xff]
        %v964 = vld [vmem:[#allocation2 + $0x750] sm:$0xff]
        %v965 = vld [vmem:[#allocation2 + $0x758] sm:$0xff]
        %v966 = vld [vmem:[#allocation2 + $0x760] sm:$0xff]
        %v967 = vld [vmem:[#allocation2 + $0x768] sm:$0xff]
        %v968 = vld [vmem:[#allocation2 + $0x770] sm:$0xff]
        %v969 = vld [vmem:[#allocation2 + $0x778] sm:$0xff]
        %v970 = vld [vmem:[#allocation2 + $0x780] sm:$0xff]
        %v971 = vld [vmem:[#allocation2 + $0x788] sm:$0xff]
        %v972 = vld [vmem:[#allocation2 + $0x790] sm:$0xff]
        %v973 = vld [vmem:[#allocation2 + $0x798] sm:$0xff]
        %v974 = vld [vmem:[#allocation2 + $0x7a0] sm:$0xff]
        %v975 = vld [vmem:[#allocation2 + $0x7a8] sm:$0xff]
        %v976 = vld [vmem:[#allocation2 + $0x7b0] sm:$0xff]
        %v977 = vld [vmem:[#allocation2 + $0x7b8] sm:$0xff]
        %v978 = vld [vmem:[#allocation2 + $0x7c0] sm:$0xff]
        %v979 = vld [vmem:[#allocation2 + $0x7c8] sm:$0xff]
        %v980 = vld [vmem:[#allocation2 + $0x7d0] sm:$0xff]
        %v981 = vld [vmem:[#allocation2 + $0x7d8] sm:$0xff]
        %v982 = vld [vmem:[#allocation2 + $0x7e0] sm:$0xff]
        %v983 = vld [vmem:[#allocation2 + $0x7e8] sm:$0xff]
        %v984 = vld [vmem:[#allocation2 + $0x7f0] sm:$0xff]
        %v985 = vld [vmem:[#allocation2 + $0x7f8] sm:$0xff]
        %v986 = vld [vmem:[%s1] sm:$0x1]
        %v1243 = vunpack.c.l.b16 %v474
        %v1244 = vunpack.c.l.b16 %v475
        %v1245 = vunpack.c.l.b16 %v476
        %v1246 = vunpack.c.l.b16 %v477
        %v1247 = vunpack.c.l.b16 %v478
        %v1248 = vunpack.c.l.b16 %v479
        %v1249 = vunpack.c.l.b16 %v480
        %v1250 = vunpack.c.l.b16 %v481
        %v1251 = vunpack.c.l.b16 %v482
        %v1252 = vunpack.c.l.b16 %v483
        %v1253 = vunpack.c.l.b16 %v484
        %v1254 = vunpack.c.l.b16 %v485
        %v1255 = vunpack.c.l.b16 %v486
        %v1256 = vunpack.c.l.b16 %v487
        %v1257 = vunpack.c.l.b16 %v488
        %v1258 = vunpack.c.l.b16 %v489
        %v1259 = vunpack.c.l.b16 %v490
        %v1260 = vunpack.c.l.b16 %v491
        %v1261 = vunpack.c.l.b16 %v492
        %v1262 = vunpack.c.l.b16 %v493
        %v1263 = vunpack.c.l.b16 %v494
        %v1264 = vunpack.c.l.b16 %v495
        %v1265 = vunpack.c.l.b16 %v496
        %v1266 = vunpack.c.l.b16 %v497
        %v1267 = vunpack.c.l.b16 %v498
        %v1268 = vunpack.c.l.b16 %v499
        %v1269 = vunpack.c.l.b16 %v500
        %v1270 = vunpack.c.l.b16 %v501
        %v1271 = vunpack.c.l.b16 %v502
        %v1272 = vunpack.c.l.b16 %v503
        %v1273 = vunpack.c.l.b16 %v504
        %v1274 = vunpack.c.l.b16 %v505
        %v1275 = vunpack.c.l.b16 %v506
        %v1276 = vunpack.c.l.b16 %v507
        %v1277 = vunpack.c.l.b16 %v508
        %v1278 = vunpack.c.l.b16 %v509
        %v1279 = vunpack.c.l.b16 %v510
        %v1280 = vunpack.c.l.b16 %v511
        %v1281 = vunpack.c.l.b16 %v512
        %v1282 = vunpack.c.l.b16 %v513
        %v1283 = vunpack.c.l.b16 %v514
        %v1284 = vunpack.c.l.b16 %v515
        %v1285 = vunpack.c.l.b16 %v516
        %v1286 = vunpack.c.l.b16 %v517
        %v1287 = vunpack.c.l.b16 %v518
        %v1288 = vunpack.c.l.b16 %v519
        %v1289 = vunpack.c.l.b16 %v520
        %v1290 = vunpack.c.l.b16 %v521
        %v1291 = vunpack.c.l.b16 %v522
        %v1292 = vunpack.c.l.b16 %v523
        %v1293 = vunpack.c.l.b16 %v524
        %v1294 = vunpack.c.l.b16 %v525
        %v1295 = vunpack.c.l.b16 %v526
        %v1296 = vunpack.c.l.b16 %v527
        %v1297 = vunpack.c.l.b16 %v528
        %v1298 = vunpack.c.l.b16 %v529
        %v1299 = vunpack.c.l.b16 %v530
        %v1300 = vunpack.c.l.b16 %v531
        %v1301 = vunpack.c.l.b16 %v532
        %v1302 = vunpack.c.l.b16 %v533
        %v1303 = vunpack.c.l.b16 %v534
        %v1304 = vunpack.c.l.b16 %v535
        %v1305 = vunpack.c.l.b16 %v536
        %v1306 = vunpack.c.l.b16 %v537
        %v1307 = vunpack.c.l.b16 %v538
        %v1308 = vunpack.c.l.b16 %v539
        %v1309 = vunpack.c.l.b16 %v540
        %v1310 = vunpack.c.l.b16 %v541
        %v1311 = vunpack.c.l.b16 %v542
        %v1312 = vunpack.c.l.b16 %v543
        %v1313 = vunpack.c.l.b16 %v544
        %v1314 = vunpack.c.l.b16 %v545
        %v1315 = vunpack.c.l.b16 %v546
        %v1316 = vunpack.c.l.b16 %v547
        %v1317 = vunpack.c.l.b16 %v548
        %v1318 = vunpack.c.l.b16 %v549
        %v1319 = vunpack.c.l.b16 %v550
        %v1320 = vunpack.c.l.b16 %v551
        %v1321 = vunpack.c.l.b16 %v552
        %v1322 = vunpack.c.l.b16 %v553
        %v1323 = vunpack.c.l.b16 %v554
        %v1324 = vunpack.c.l.b16 %v555
        %v1325 = vunpack.c.l.b16 %v556
        %v1326 = vunpack.c.l.b16 %v557
        %v1327 = vunpack.c.l.b16 %v558
        %v1328 = vunpack.c.l.b16 %v559
        %v1329 = vunpack.c.l.b16 %v560
        %v1330 = vunpack.c.l.b16 %v561
        %v1331 = vunpack.c.l.b16 %v562
        %v1332 = vunpack.c.l.b16 %v563
        %v1333 = vunpack.c.l.b16 %v564
        %v1334 = vunpack.c.l.b16 %v565
        %v1335 = vunpack.c.l.b16 %v566
        %v1336 = vunpack.c.l.b16 %v567
        %v1337 = vunpack.c.l.b16 %v568
        %v1338 = vunpack.c.l.b16 %v569
        %v1339 = vunpack.c.l.b16 %v570
        %v1340 = vunpack.c.l.b16 %v571
        %v1341 = vunpack.c.l.b16 %v572
        %v1342 = vunpack.c.l.b16 %v573
        %v1343 = vunpack.c.l.b16 %v574
        %v1344 = vunpack.c.l.b16 %v575
        %v1345 = vunpack.c.l.b16 %v576
        %v1346 = vunpack.c.l.b16 %v577
        %v1347 = vunpack.c.l.b16 %v578
        %v1348 = vunpack.c.l.b16 %v579
        %v1349 = vunpack.c.l.b16 %v580
        %v1350 = vunpack.c.l.b16 %v581
        %v1351 = vunpack.c.l.b16 %v582
        %v1352 = vunpack.c.l.b16 %v583
        %v1353 = vunpack.c.l.b16 %v584
        %v1354 = vunpack.c.l.b16 %v585
        %v1355 = vunpack.c.l.b16 %v586
        %v1356 = vunpack.c.l.b16 %v587
        %v1357 = vunpack.c.l.b16 %v588
        %v1358 = vunpack.c.l.b16 %v589
        %v1359 = vunpack.c.l.b16 %v590
        %v1360 = vunpack.c.l.b16 %v591
        %v1361 = vunpack.c.l.b16 %v592
        %v1362 = vunpack.c.l.b16 %v593
        %v1363 = vunpack.c.l.b16 %v594
        %v1364 = vunpack.c.l.b16 %v595
        %v1365 = vunpack.c.l.b16 %v596
        %v1366 = vunpack.c.l.b16 %v597
        %v1367 = vunpack.c.l.b16 %v598
        %v1368 = vunpack.c.l.b16 %v599
        %v1369 = vunpack.c.l.b16 %v600
        %v1370 = vunpack.c.l.b16 %v601
        %v1371 = vunpack.c.l.b16 %v602
        %v1372 = vunpack.c.l.b16 %v603
        %v1373 = vunpack.c.l.b16 %v604
        %v1374 = vunpack.c.l.b16 %v605
        %v1375 = vunpack.c.l.b16 %v606
        %v1376 = vunpack.c.l.b16 %v607
        %v1377 = vunpack.c.l.b16 %v608
        %v1378 = vunpack.c.l.b16 %v609
        %v1379 = vunpack.c.l.b16 %v610
        %v1380 = vunpack.c.l.b16 %v611
        %v1381 = vunpack.c.l.b16 %v612
        %v1382 = vunpack.c.l.b16 %v613
        %v1383 = vunpack.c.l.b16 %v614
        %v1384 = vunpack.c.l.b16 %v615
        %v1385 = vunpack.c.l.b16 %v616
        %v1386 = vunpack.c.l.b16 %v617
        %v1387 = vunpack.c.l.b16 %v618
        %v1388 = vunpack.c.l.b16 %v619
        %v1389 = vunpack.c.l.b16 %v620
        %v1390 = vunpack.c.l.b16 %v621
        %v1391 = vunpack.c.l.b16 %v622
        %v1392 = vunpack.c.l.b16 %v623
        %v1393 = vunpack.c.l.b16 %v624
        %v1394 = vunpack.c.l.b16 %v625
        %v1395 = vunpack.c.l.b16 %v626
        %v1396 = vunpack.c.l.b16 %v627
        %v1397 = vunpack.c.l.b16 %v628
        %v1398 = vunpack.c.l.b16 %v629
        %v1399 = vunpack.c.l.b16 %v630
        %v1400 = vunpack.c.l.b16 %v631
        %v1401 = vunpack.c.l.b16 %v632
        %v1402 = vunpack.c.l.b16 %v633
        %v1403 = vunpack.c.l.b16 %v634
        %v1404 = vunpack.c.l.b16 %v635
        %v1405 = vunpack.c.l.b16 %v636
        %v1406 = vunpack.c.l.b16 %v637
        %v1407 = vunpack.c.l.b16 %v638
        %v1408 = vunpack.c.l.b16 %v639
        %v1409 = vunpack.c.l.b16 %v640
        %v1410 = vunpack.c.l.b16 %v641
        %v1411 = vunpack.c.l.b16 %v642
        %v1412 = vunpack.c.l.b16 %v643
        %v1413 = vunpack.c.l.b16 %v644
        %v1414 = vunpack.c.l.b16 %v645
        %v1415 = vunpack.c.l.b16 %v646
        %v1416 = vunpack.c.l.b16 %v647
        %v1417 = vunpack.c.l.b16 %v648
        %v1418 = vunpack.c.l.b16 %v649
        %v1419 = vunpack.c.l.b16 %v650
        %v1420 = vunpack.c.l.b16 %v651
        %v1421 = vunpack.c.l.b16 %v652
        %v1422 = vunpack.c.l.b16 %v653
        %v1423 = vunpack.c.l.b16 %v654
        %v1424 = vunpack.c.l.b16 %v655
        %v1425 = vunpack.c.l.b16 %v656
        %v1426 = vunpack.c.l.b16 %v657
        %v1427 = vunpack.c.l.b16 %v658
        %v1428 = vunpack.c.l.b16 %v659
        %v1429 = vunpack.c.l.b16 %v660
        %v1430 = vunpack.c.l.b16 %v661
        %v1431 = vunpack.c.l.b16 %v662
        %v1432 = vunpack.c.l.b16 %v663
        %v1433 = vunpack.c.l.b16 %v664
        %v1434 = vunpack.c.l.b16 %v665
        %v1435 = vunpack.c.l.b16 %v666
        %v1436 = vunpack.c.l.b16 %v667
        %v1437 = vunpack.c.l.b16 %v668
        %v1438 = vunpack.c.l.b16 %v669
        %v1439 = vunpack.c.l.b16 %v670
        %v1440 = vunpack.c.l.b16 %v671
        %v1441 = vunpack.c.l.b16 %v672
        %v1442 = vunpack.c.l.b16 %v673
        %v1443 = vunpack.c.l.b16 %v674
        %v1444 = vunpack.c.l.b16 %v675
        %v1445 = vunpack.c.l.b16 %v676
        %v1446 = vunpack.c.l.b16 %v677
        %v1447 = vunpack.c.l.b16 %v678
        %v1448 = vunpack.c.l.b16 %v679
        %v1449 = vunpack.c.l.b16 %v680
        %v1450 = vunpack.c.l.b16 %v681
        %v1451 = vunpack.c.l.b16 %v682
        %v1452 = vunpack.c.l.b16 %v683
        %v1453 = vunpack.c.l.b16 %v684
        %v1454 = vunpack.c.l.b16 %v685
        %v1455 = vunpack.c.l.b16 %v686
        %v1456 = vunpack.c.l.b16 %v687
        %v1457 = vunpack.c.l.b16 %v688
        %v1458 = vunpack.c.l.b16 %v689
        %v1459 = vunpack.c.l.b16 %v690
        %v1460 = vunpack.c.l.b16 %v691
        %v1461 = vunpack.c.l.b16 %v692
        %v1462 = vunpack.c.l.b16 %v693
        %v1463 = vunpack.c.l.b16 %v694
        %v1464 = vunpack.c.l.b16 %v695
        %v1465 = vunpack.c.l.b16 %v696
        %v1466 = vunpack.c.l.b16 %v697
        %v1467 = vunpack.c.l.b16 %v698
        %v1468 = vunpack.c.l.b16 %v699
        %v1469 = vunpack.c.l.b16 %v700
        %v1470 = vunpack.c.l.b16 %v701
        %v1471 = vunpack.c.l.b16 %v702
        %v1472 = vunpack.c.l.b16 %v703
        %v1473 = vunpack.c.l.b16 %v704
        %v1474 = vunpack.c.l.b16 %v705
        %v1475 = vunpack.c.l.b16 %v706
        %v1476 = vunpack.c.l.b16 %v707
        %v1477 = vunpack.c.l.b16 %v708
        %v1478 = vunpack.c.l.b16 %v709
        %v1479 = vunpack.c.l.b16 %v710
        %v1480 = vunpack.c.l.b16 %v711
        %v1481 = vunpack.c.l.b16 %v712
        %v1482 = vunpack.c.l.b16 %v713
        %v1483 = vunpack.c.l.b16 %v714
        %v1484 = vunpack.c.l.b16 %v715
        %v1485 = vunpack.c.l.b16 %v716
        %v1486 = vunpack.c.l.b16 %v717
        %v1487 = vunpack.c.l.b16 %v718
        %v1488 = vunpack.c.l.b16 %v719
        %v1489 = vunpack.c.l.b16 %v720
        %v1490 = vunpack.c.l.b16 %v721
        %v1491 = vunpack.c.l.b16 %v722
        %v1492 = vunpack.c.l.b16 %v723
        %v1493 = vunpack.c.l.b16 %v724
        %v1494 = vunpack.c.l.b16 %v725
        %v1495 = vunpack.c.l.b16 %v726
        %v1496 = vunpack.c.l.b16 %v727
        %v1497 = vunpack.c.l.b16 %v728
        %v1498 = vunpack.c.l.b16 %v729
        %v1499 = vpack.c.b16 %v1244, %v1243
        %v1500 = vpack.c.b16 %v1246, %v1245
        %v1501 = vpack.c.b16 %v1248, %v1247
        %v1502 = vpack.c.b16 %v1250, %v1249
        %v1503 = vpack.c.b16 %v1252, %v1251
        %v1504 = vpack.c.b16 %v1254, %v1253
        %v1505 = vpack.c.b16 %v1256, %v1255
        %v1506 = vpack.c.b16 %v1258, %v1257
        %v1507 = vpack.c.b16 %v1260, %v1259
        %v1508 = vpack.c.b16 %v1262, %v1261
        %v1509 = vpack.c.b16 %v1264, %v1263
        %v1510 = vpack.c.b16 %v1266, %v1265
        %v1511 = vpack.c.b16 %v1268, %v1267
        %v1512 = vpack.c.b16 %v1270, %v1269
        %v1513 = vpack.c.b16 %v1272, %v1271
        %v1514 = vpack.c.b16 %v1274, %v1273
        %v1515 = vpack.c.b16 %v1276, %v1275
        %v1516 = vpack.c.b16 %v1278, %v1277
        %v1517 = vpack.c.b16 %v1280, %v1279
        %v1518 = vpack.c.b16 %v1282, %v1281
        %v1519 = vpack.c.b16 %v1284, %v1283
        %v1520 = vpack.c.b16 %v1286, %v1285
        %v1521 = vpack.c.b16 %v1288, %v1287
        %v1522 = vpack.c.b16 %v1290, %v1289
        %v1523 = vpack.c.b16 %v1292, %v1291
        %v1524 = vpack.c.b16 %v1294, %v1293
        %v1525 = vpack.c.b16 %v1296, %v1295
        %v1526 = vpack.c.b16 %v1298, %v1297
        %v1527 = vpack.c.b16 %v1300, %v1299
        %v1528 = vpack.c.b16 %v1302, %v1301
        %v1529 = vpack.c.b16 %v1304, %v1303
        %v1530 = vpack.c.b16 %v1306, %v1305
        %v1531 = vpack.c.b16 %v1308, %v1307
        %v1532 = vpack.c.b16 %v1310, %v1309
        %v1533 = vpack.c.b16 %v1312, %v1311
        %v1534 = vpack.c.b16 %v1314, %v1313
        %v1535 = vpack.c.b16 %v1316, %v1315
        %v1536 = vpack.c.b16 %v1318, %v1317
        %v1537 = vpack.c.b16 %v1320, %v1319
        %v1538 = vpack.c.b16 %v1322, %v1321
        %v1539 = vpack.c.b16 %v1324, %v1323
        %v1540 = vpack.c.b16 %v1326, %v1325
        %v1541 = vpack.c.b16 %v1328, %v1327
        %v1542 = vpack.c.b16 %v1330, %v1329
        %v1543 = vpack.c.b16 %v1332, %v1331
        %v1544 = vpack.c.b16 %v1334, %v1333
        %v1545 = vpack.c.b16 %v1336, %v1335
        %v1546 = vpack.c.b16 %v1338, %v1337
        %v1547 = vpack.c.b16 %v1340, %v1339
        %v1548 = vpack.c.b16 %v1342, %v1341
        %v1549 = vpack.c.b16 %v1344, %v1343
        %v1550 = vpack.c.b16 %v1346, %v1345
        %v1551 = vpack.c.b16 %v1348, %v1347
        %v1552 = vpack.c.b16 %v1350, %v1349
        %v1553 = vpack.c.b16 %v1352, %v1351
        %v1554 = vpack.c.b16 %v1354, %v1353
        %v1555 = vpack.c.b16 %v1356, %v1355
        %v1556 = vpack.c.b16 %v1358, %v1357
        %v1557 = vpack.c.b16 %v1360, %v1359
        %v1558 = vpack.c.b16 %v1362, %v1361
        %v1559 = vpack.c.b16 %v1364, %v1363
        %v1560 = vpack.c.b16 %v1366, %v1365
        %v1561 = vpack.c.b16 %v1368, %v1367
        %v1562 = vpack.c.b16 %v1370, %v1369
        %v1563 = vpack.c.b16 %v1372, %v1371
        %v1564 = vpack.c.b16 %v1374, %v1373
        %v1565 = vpack.c.b16 %v1376, %v1375
        %v1566 = vpack.c.b16 %v1378, %v1377
        %v1567 = vpack.c.b16 %v1380, %v1379
        %v1568 = vpack.c.b16 %v1382, %v1381
        %v1569 = vpack.c.b16 %v1384, %v1383
        %v1570 = vpack.c.b16 %v1386, %v1385
        %v1571 = vpack.c.b16 %v1388, %v1387
        %v1572 = vpack.c.b16 %v1390, %v1389
        %v1573 = vpack.c.b16 %v1392, %v1391
        %v1574 = vpack.c.b16 %v1394, %v1393
        %v1575 = vpack.c.b16 %v1396, %v1395
        %v1576 = vpack.c.b16 %v1398, %v1397
        %v1577 = vpack.c.b16 %v1400, %v1399
        %v1578 = vpack.c.b16 %v1402, %v1401
        %v1579 = vpack.c.b16 %v1404, %v1403
        %v1580 = vpack.c.b16 %v1406, %v1405
        %v1581 = vpack.c.b16 %v1408, %v1407
        %v1582 = vpack.c.b16 %v1410, %v1409
        %v1583 = vpack.c.b16 %v1412, %v1411
        %v1584 = vpack.c.b16 %v1414, %v1413
        %v1585 = vpack.c.b16 %v1416, %v1415
        %v1586 = vpack.c.b16 %v1418, %v1417
        %v1587 = vpack.c.b16 %v1420, %v1419
        %v1588 = vpack.c.b16 %v1422, %v1421
        %v1589 = vpack.c.b16 %v1424, %v1423
        %v1590 = vpack.c.b16 %v1426, %v1425
        %v1591 = vpack.c.b16 %v1428, %v1427
        %v1592 = vpack.c.b16 %v1430, %v1429
        %v1593 = vpack.c.b16 %v1432, %v1431
        %v1594 = vpack.c.b16 %v1434, %v1433
        %v1595 = vpack.c.b16 %v1436, %v1435
        %v1596 = vpack.c.b16 %v1438, %v1437
        %v1597 = vpack.c.b16 %v1440, %v1439
        %v1598 = vpack.c.b16 %v1442, %v1441
        %v1599 = vpack.c.b16 %v1444, %v1443
        %v1600 = vpack.c.b16 %v1446, %v1445
        %v1601 = vpack.c.b16 %v1448, %v1447
        %v1602 = vpack.c.b16 %v1450, %v1449
        %v1603 = vpack.c.b16 %v1452, %v1451
        %v1604 = vpack.c.b16 %v1454, %v1453
        %v1605 = vpack.c.b16 %v1456, %v1455
        %v1606 = vpack.c.b16 %v1458, %v1457
        %v1607 = vpack.c.b16 %v1460, %v1459
        %v1608 = vpack.c.b16 %v1462, %v1461
        %v1609 = vpack.c.b16 %v1464, %v1463
        %v1610 = vpack.c.b16 %v1466, %v1465
        %v1611 = vpack.c.b16 %v1468, %v1467
        %v1612 = vpack.c.b16 %v1470, %v1469
        %v1613 = vpack.c.b16 %v1472, %v1471
        %v1614 = vpack.c.b16 %v1474, %v1473
        %v1615 = vpack.c.b16 %v1476, %v1475
        %v1616 = vpack.c.b16 %v1478, %v1477
        %v1617 = vpack.c.b16 %v1480, %v1479
        %v1618 = vpack.c.b16 %v1482, %v1481
        %v1619 = vpack.c.b16 %v1484, %v1483
        %v1620 = vpack.c.b16 %v1486, %v1485
        %v1621 = vpack.c.b16 %v1488, %v1487
        %v1622 = vpack.c.b16 %v1490, %v1489
        %v1623 = vpack.c.b16 %v1492, %v1491
        %v1624 = vpack.c.b16 %v1494, %v1493
        %v1625 = vpack.c.b16 %v1496, %v1495
        %v1626 = vpack.c.b16 %v1498, %v1497
        %vm1627 = vcmask 15360
        %v1629 = vsel %vm1627, %v1499, 0
        %v1632 = vsel %vm1627, %v1500, 0
        %v1635 = vsel %vm1627, %v1501, 0
        %v1638 = vsel %vm1627, %v1502, 0
        %v1641 = vsel %vm1627, %v1503, 0
        %v1644 = vsel %vm1627, %v1504, 0
        %v1647 = vsel %vm1627, %v1505, 0
        %v1650 = vsel %vm1627, %v1506, 0
        %v1653 = vsel %vm1627, %v1507, 0
        %v1656 = vsel %vm1627, %v1508, 0
        %v1659 = vsel %vm1627, %v1509, 0
        %v1662 = vsel %vm1627, %v1510, 0
        %v1665 = vsel %vm1627, %v1511, 0
        %v1668 = vsel %vm1627, %v1512, 0
        %v1671 = vsel %vm1627, %v1513, 0
        %v1674 = vsel %vm1627, %v1514, 0
        %v1677 = vsel %vm1627, %v1515, 0
        %v1680 = vsel %vm1627, %v1516, 0
        %v1683 = vsel %vm1627, %v1517, 0
        %v1686 = vsel %vm1627, %v1518, 0
        %v1689 = vsel %vm1627, %v1519, 0
        %v1692 = vsel %vm1627, %v1520, 0
        %v1695 = vsel %vm1627, %v1521, 0
        %v1698 = vsel %vm1627, %v1522, 0
        %v1701 = vsel %vm1627, %v1523, 0
        %v1704 = vsel %vm1627, %v1524, 0
        %v1707 = vsel %vm1627, %v1525, 0
        %v1710 = vsel %vm1627, %v1526, 0
        %v1713 = vsel %vm1627, %v1527, 0
        %v1716 = vsel %vm1627, %v1528, 0
        %v1719 = vsel %vm1627, %v1529, 0
        %v1722 = vsel %vm1627, %v1530, 0
        %v1725 = vsel %vm1627, %v1531, 0
        %v1728 = vsel %vm1627, %v1532, 0
        %v1731 = vsel %vm1627, %v1533, 0
        %v1734 = vsel %vm1627, %v1534, 0
        %v1737 = vsel %vm1627, %v1535, 0
        %v1740 = vsel %vm1627, %v1536, 0
        %v1743 = vsel %vm1627, %v1537, 0
        %v1746 = vsel %vm1627, %v1538, 0
        %v1749 = vsel %vm1627, %v1539, 0
        %v1752 = vsel %vm1627, %v1540, 0
        %v1755 = vsel %vm1627, %v1541, 0
        %v1758 = vsel %vm1627, %v1542, 0
        %v1761 = vsel %vm1627, %v1543, 0
        %v1764 = vsel %vm1627, %v1544, 0
        %v1767 = vsel %vm1627, %v1545, 0
        %v1770 = vsel %vm1627, %v1546, 0
        %v1773 = vsel %vm1627, %v1547, 0
        %v1776 = vsel %vm1627, %v1548, 0
        %v1779 = vsel %vm1627, %v1549, 0
        %v1782 = vsel %vm1627, %v1550, 0
        %v1785 = vsel %vm1627, %v1551, 0
        %v1788 = vsel %vm1627, %v1552, 0
        %v1791 = vsel %vm1627, %v1553, 0
        %v1794 = vsel %vm1627, %v1554, 0
        %v1797 = vsel %vm1627, %v1555, 0
        %v1800 = vsel %vm1627, %v1556, 0
        %v1803 = vsel %vm1627, %v1557, 0
        %v1806 = vsel %vm1627, %v1558, 0
        %v1809 = vsel %vm1627, %v1559, 0
        %v1812 = vsel %vm1627, %v1560, 0
        %v1815 = vsel %vm1627, %v1561, 0
        %v1818 = vsel %vm1627, %v1562, 0
        %v1821 = vsel %vm1627, %v1563, 0
        %v1824 = vsel %vm1627, %v1564, 0
        %v1827 = vsel %vm1627, %v1565, 0
        %v1830 = vsel %vm1627, %v1566, 0
        %v1833 = vsel %vm1627, %v1567, 0
        %v1836 = vsel %vm1627, %v1568, 0
        %v1839 = vsel %vm1627, %v1569, 0
        %v1842 = vsel %vm1627, %v1570, 0
        %v1845 = vsel %vm1627, %v1571, 0
        %v1848 = vsel %vm1627, %v1572, 0
        %v1851 = vsel %vm1627, %v1573, 0
        %v1854 = vsel %vm1627, %v1574, 0
        %v1857 = vsel %vm1627, %v1575, 0
        %v1860 = vsel %vm1627, %v1576, 0
        %v1863 = vsel %vm1627, %v1577, 0
        %v1866 = vsel %vm1627, %v1578, 0
        %v1869 = vsel %vm1627, %v1579, 0
        %v1872 = vsel %vm1627, %v1580, 0
        %v1875 = vsel %vm1627, %v1581, 0
        %v1878 = vsel %vm1627, %v1582, 0
        %v1881 = vsel %vm1627, %v1583, 0
        %v1884 = vsel %vm1627, %v1584, 0
        %v1887 = vsel %vm1627, %v1585, 0
        %v1890 = vsel %vm1627, %v1586, 0
        %v1893 = vsel %vm1627, %v1587, 0
        %v1896 = vsel %vm1627, %v1588, 0
        %v1899 = vsel %vm1627, %v1589, 0
        %v1902 = vsel %vm1627, %v1590, 0
        %v1905 = vsel %vm1627, %v1591, 0
        %v1908 = vsel %vm1627, %v1592, 0
        %v1911 = vsel %vm1627, %v1593, 0
        %v1914 = vsel %vm1627, %v1594, 0
        %v1917 = vsel %vm1627, %v1595, 0
        %v1920 = vsel %vm1627, %v1596, 0
        %v1923 = vsel %vm1627, %v1597, 0
        %v1926 = vsel %vm1627, %v1598, 0
        %v1929 = vsel %vm1627, %v1599, 0
        %v1932 = vsel %vm1627, %v1600, 0
        %v1935 = vsel %vm1627, %v1601, 0
        %v1938 = vsel %vm1627, %v1602, 0
        %v1941 = vsel %vm1627, %v1603, 0
        %v1944 = vsel %vm1627, %v1604, 0
        %v1947 = vsel %vm1627, %v1605, 0
        %v1950 = vsel %vm1627, %v1606, 0
        %v1953 = vsel %vm1627, %v1607, 0
        %v1956 = vsel %vm1627, %v1608, 0
        %v1959 = vsel %vm1627, %v1609, 0
        %v1962 = vsel %vm1627, %v1610, 0
        %v1965 = vsel %vm1627, %v1611, 0
        %v1968 = vsel %vm1627, %v1612, 0
        %v1971 = vsel %vm1627, %v1613, 0
        %v1974 = vsel %vm1627, %v1614, 0
        %v1977 = vsel %vm1627, %v1615, 0
        %v1980 = vsel %vm1627, %v1616, 0
        %v1983 = vsel %vm1627, %v1617, 0
        %v1986 = vsel %vm1627, %v1618, 0
        %v1989 = vsel %vm1627, %v1619, 0
        %v1992 = vsel %vm1627, %v1620, 0
        %v1995 = vsel %vm1627, %v1621, 0
        %v1998 = vsel %vm1627, %v1622, 0
        %v2001 = vsel %vm1627, %v1623, 0
        %v2004 = vsel %vm1627, %v1624, 0
        %v2007 = vsel %vm1627, %v1625, 0
        %v2010 = vsel %vm1627, %v1626, 0
        %vm2012 = vcmask 1040384
        %v2014 = vsel %vm2012, %v986, 0
        %2016 = vmatprep.subr.bf16.mxu0 0
        %2017 = vmatpush1.bf16.msra.mxu0 %v2014
        %2018 = vmatprep.subr.bf16.mxu0 0
        %2019 = vmatpush1.bf16.msra.mxu0 0
        %2020 = vmatprep.subr.bf16.mxu0 0
        %2021 = vmatpush1.bf16.msra.mxu0 0
        %2022 = vmatprep.subr.bf16.mxu0 0
        %2023 = vmatpush1.bf16.msra.mxu0 0
        %2024 = vmatprep.subr.bf16.mxu0 0
        %2025 = vmatpush1.bf16.msra.mxu0 0
        %2026 = vmatprep.subr.bf16.mxu0 0
        %2027 = vmatpush1.bf16.msra.mxu0 0
        %2028 = vmatprep.subr.bf16.mxu0 0
        %2029 = vmatpush1.bf16.msra.mxu0 0
        %2030 = vmatprep.subr.bf16.mxu0 0
        %2031 = vmatpush1.bf16.msra.mxu0 0
        %2032 = vmatprep.subr.bf16.mxu0 0
        %2033 = vmatpush1.bf16.msra.mxu0 0
        %2034 = vmatprep.subr.bf16.mxu0 0
        %2035 = vmatpush1.bf16.msra.mxu0 0
        %2036 = vmatprep.subr.bf16.mxu0 0
        %2037 = vmatpush1.bf16.msra.mxu0 0
        %2038 = vmatprep.subr.bf16.mxu0 0
        %2039 = vmatpush1.bf16.msra.mxu0 0
        %2040 = vmatprep.subr.bf16.mxu0 0
        %2041 = vmatpush1.bf16.msra.mxu0 0
        %2042 = vmatprep.subr.bf16.mxu0 0
        %2043 = vmatpush1.bf16.msra.mxu0 0
        %2044 = vmatprep.subr.bf16.mxu0 0
        %2045 = vmatpush1.bf16.msra.mxu0 0
        %2046 = vmatprep.subr.bf16.mxu0 0
        %2047 = vmatpush1.bf16.msra.mxu0 0
        %2048 = vmatprep.mubr.bf16.mxu0 0
        %2049 = vmatmul.mubr.bf16.gmra.mrb[0].mxu0 %v1629
        %v2050 = vpop.f32.mrb[0].mxu0
        %v2051 = vadd.f32 0.0, %v2050
        %v2052 = vpop.f32.mrb[0].mxu0
        %v2053 = vpop.f32.mrb[0].mxu0
        %v2054 = vadd.f32 0.0, %v2053
        %v2055 = vpop.f32.mrb[0].mxu0
        %2056 = vmatprep.mubr.bf16.mxu0 0
        %2057 = vmatmul.mubr.bf16.gmra.mrb[0].mxu0 %v1632
        %v2058 = vpop.f32.mrb[0].mxu0
        %v2059 = vadd.f32 0.0, %v2058
        %v2060 = vpop.f32.mrb[0].mxu0
        %v2061 = vpop.f32.mrb[0].mxu0
        %v2062 = vadd.f32 0.0, %v2061
        %v2063 = vpop.f32.mrb[0].mxu0
        %2064 = vmatprep.mubr.bf16.mxu0 0
        %2065 = vmatmul.mubr.bf16.gmra.mrb[0].mxu0 %v1635
        %v2066 = vpop.f32.mrb[0].mxu0
        %v2067 = vadd.f32 0.0, %v2066
        %v2068 = vpop.f32.mrb[0].mxu0
        %v2069 = vpop.f32.mrb[0].mxu0
        %v2070 = vadd.f32 0.0, %v2069
        %v2071 = vpop.f32.mrb[0].mxu0
        %2072 = vmatprep.mubr.bf16.mxu0 0
        %2073 = vmatmul.mubr.bf16.gmra.mrb[0].mxu0 %v1638
        %v2074 = vpop.f32.mrb[0].mxu0
        %v2075 = vadd.f32 0.0, %v2074
        %v2076 = vpop.f32.mrb[0].mxu0
        %v2077 = vpop.f32.mrb[0].mxu0
        %v2078 = vadd.f32 0.0, %v2077
        %v2079 = vpop.f32.mrb[0].mxu0
        %2080 = vmatprep.mubr.bf16.mxu0 0
        %2081 = vmatmul.mubr.bf16.gmra.mrb[0].mxu0 %v1641
        %v2082 = vpop.f32.mrb[0].mxu0
        %v2083 = vadd.f32 0.0, %v2082
        %v2084 = vpop.f32.mrb[0].mxu0
        %v2085 = vpop.f32.mrb[0].mxu0
        %v2086 = vadd.f32 0.0, %v2085
        %v2087 = vpop.f32.mrb[0].mxu0
        %2088 = vmatprep.mubr.bf16.mxu0 0
        %2089 = vmatmul.mubr.bf16.gmra.mrb[0].mxu0 %v1644
        %v2090 = vpop.f32.mrb[0].mxu0
        %v2091 = vadd.f32 0.0, %v2090
        %v2092 = vpop.f32.mrb[0].mxu0
        %v2093 = vpop.f32.mrb[0].mxu0
        %v2094 = vadd.f32 0.0, %v2093
        %v2095 = vpop.f32.mrb[0].mxu0
        %2096 = vmatprep.mubr.bf16.mxu0 0
        %2097 = vmatmul.mubr.bf16.gmra.mrb[0].mxu0 %v1647
        %v2098 = vpop.f32.mrb[0].mxu0
        %v2099 = vadd.f32 0.0, %v2098
        %v2100 = vpop.f32.mrb[0].mxu0
        %v2101 = vpop.f32.mrb[0].mxu0
        %v2102 = vadd.f32 0.0, %v2101
        %v2103 = vpop.f32.mrb[0].mxu0
        %2104 = vmatprep.mubr.bf16.mxu0 0
        %2105 = vmatmul.mubr.bf16.gmra.mrb[0].mxu0 %v1650
        %v2106 = vpop.f32.mrb[0].mxu0
        %v2107 = vadd.f32 0.0, %v2106
        %v2108 = vpop.f32.mrb[0].mxu0
        %v2109 = vpop.f32.mrb[0].mxu0
        %v2110 = vadd.f32 0.0, %v2109
        %v2111 = vpop.f32.mrb[0].mxu0
        %2112 = vmatprep.mubr.bf16.mxu0 0
        %2113 = vmatmul.mubr.bf16.gmra.mrb[0].mxu0 %v1653
        %v2114 = vpop.f32.mrb[0].mxu0
        %v2115 = vadd.f32 0.0, %v2114
        %v2116 = vpop.f32.mrb[0].mxu0
        %v2117 = vpop.f32.mrb[0].mxu0
        %v2118 = vadd.f32 0.0, %v2117
        %v2119 = vpop.f32.mrb[0].mxu0
        %2120 = vmatprep.mubr.bf16.mxu0 0
        %2121 = vmatmul.mubr.bf16.gmra.mrb[0].mxu0 %v1656
        %v2122 = vpop.f32.mrb[0].mxu0
        %v2123 = vadd.f32 0.0, %v2122
        %v2124 = vpop.f32.mrb[0].mxu0
        %v2125 = vpop.f32.mrb[0].mxu0
        %v2126 = vadd.f32 0.0, %v2125
        %v2127 = vpop.f32.mrb[0].mxu0
        %2128 = vmatprep.mubr.bf16.mxu0 0
        %2129 = vmatmul.mubr.bf16.gmra.mrb[0].mxu0 %v1659
        %v2130 = vpop.f32.mrb[0].mxu0
        %v2131 = vadd.f32 0.0, %v2130
        %v2132 = vpop.f32.mrb[0].mxu0
        %v2133 = vpop.f32.mrb[0].mxu0
        %v2134 = vadd.f32 0.0, %v2133
        %v2135 = vpop.f32.mrb[0].mxu0
        %2136 = vmatprep.mubr.bf16.mxu0 0
        %2137 = vmatmul.mubr.bf16.gmra.mrb[0].mxu0 %v1662
        %v2138 = vpop.f32.mrb[0].mxu0
        %v2139 = vadd.f32 0.0, %v2138
        %v2140 = vpop.f32.mrb[0].mxu0
        %v2141 = vpop.f32.mrb[0].mxu0
        %v2142 = vadd.f32 0.0, %v2141
        %v2143 = vpop.f32.mrb[0].mxu0
        %2144 = vmatprep.mubr.bf16.mxu0 0
        %2145 = vmatmul.mubr.bf16.gmra.mrb[0].mxu0 %v1665
        %v2146 = vpop.f32.mrb[0].mxu0
        %v2147 = vadd.f32 0.0, %v2146
        %v2148 = vpop.f32.mrb[0].mxu0
        %v2149 = vpop.f32.mrb[0].mxu0
        %v2150 = vadd.f32 0.0, %v2149
        %v2151 = vpop.f32.mrb[0].mxu0
        %2152 = vmatprep.mubr.bf16.mxu0 0
        %2153 = vmatmul.mubr.bf16.gmra.mrb[0].mxu0 %v1668
        %v2154 = vpop.f32.mrb[0].mxu0
        %v2155 = vadd.f32 0.0, %v2154
        %v2156 = vpop.f32.mrb[0].mxu0
        %v2157 = vpop.f32.mrb[0].mxu0
        %v2158 = vadd.f32 0.0, %v2157
        %v2159 = vpop.f32.mrb[0].mxu0
        %2160 = vmatprep.mubr.bf16.mxu0 0
        %2161 = vmatmul.mubr.bf16.gmra.mrb[0].mxu0 %v1671
        %v2162 = vpop.f32.mrb[0].mxu0
        %v2163 = vadd.f32 0.0, %v2162
        %v2164 = vpop.f32.mrb[0].mxu0
        %v2165 = vpop.f32.mrb[0].mxu0
        %v2166 = vadd.f32 0.0, %v2165
        %v2167 = vpop.f32.mrb[0].mxu0
        %2168 = vmatprep.mubr.bf16.mxu0 0
        %2169 = vmatmul.mubr.bf16.gmra.mrb[0].mxu0 %v1674
        %v2170 = vpop.f32.mrb[0].mxu0
        %v2171 = vadd.f32 0.0, %v2170
        %v2172 = vpop.f32.mrb[0].mxu0
        %v2173 = vpop.f32.mrb[0].mxu0
        %v2174 = vadd.f32 0.0, %v2173
        %v2175 = vpop.f32.mrb[0].mxu0
        %2176 = vmatprep.mubr.bf16.mxu0 0
        %2177 = vmatmul.mubr.bf16.gmra.mrb[0].mxu0 %v1677
        %v2178 = vpop.f32.mrb[0].mxu0
        %v2179 = vadd.f32 0.0, %v2178
        %v2180 = vpop.f32.mrb[0].mxu0
        %v2181 = vpop.f32.mrb[0].mxu0
        %v2182 = vadd.f32 0.0, %v2181
        %v2183 = vpop.f32.mrb[0].mxu0
        %2184 = vmatprep.mubr.bf16.mxu0 0
        %2185 = vmatmul.mubr.bf16.gmra.mrb[0].mxu0 %v1680
        %v2186 = vpop.f32.mrb[0].mxu0
        %v2187 = vadd.f32 0.0, %v2186
        %v2188 = vpop.f32.mrb[0].mxu0
        %v2189 = vpop.f32.mrb[0].mxu0
        %v2190 = vadd.f32 0.0, %v2189
        %v2191 = vpop.f32.mrb[0].mxu0
        %2192 = vmatprep.mubr.bf16.mxu0 0
        %2193 = vmatmul.mubr.bf16.gmra.mrb[0].mxu0 %v1683
        %v2194 = vpop.f32.mrb[0].mxu0
        %v2195 = vadd.f32 0.0, %v2194
        %v2196 = vpop.f32.mrb[0].mxu0
        %v2197 = vpop.f32.mrb[0].mxu0
        %v2198 = vadd.f32 0.0, %v2197
        %v2199 = vpop.f32.mrb[0].mxu0
        %2200 = vmatprep.mubr.bf16.mxu0 0
        %2201 = vmatmul.mubr.bf16.gmra.mrb[0].mxu0 %v1686
        %v2202 = vpop.f32.mrb[0].mxu0
        %v2203 = vadd.f32 0.0, %v2202
        %v2204 = vpop.f32.mrb[0].mxu0
        %v2205 = vpop.f32.mrb[0].mxu0
        %v2206 = vadd.f32 0.0, %v2205
        %v2207 = vpop.f32.mrb[0].mxu0
        %2208 = vmatprep.mubr.bf16.mxu0 0
        %2209 = vmatmul.mubr.bf16.gmra.mrb[0].mxu0 %v1689
        %v2210 = vpop.f32.mrb[0].mxu0
        %v2211 = vadd.f32 0.0, %v2210
        %v2212 = vpop.f32.mrb[0].mxu0
        %v2213 = vpop.f32.mrb[0].mxu0
        %v2214 = vadd.f32 0.0, %v2213
        %v2215 = vpop.f32.mrb[0].mxu0
        %2216 = vmatprep.mubr.bf16.mxu0 0
        %2217 = vmatmul.mubr.bf16.gmra.mrb[0].mxu0 %v1692
        %v2218 = vpop.f32.mrb[0].mxu0
        %v2219 = vadd.f32 0.0, %v2218
        %v2220 = vpop.f32.mrb[0].mxu0
        %v2221 = vpop.f32.mrb[0].mxu0
        %v2222 = vadd.f32 0.0, %v2221
        %v2223 = vpop.f32.mrb[0].mxu0
        %2224 = vmatprep.mubr.bf16.mxu0 0
        %2225 = vmatmul.mubr.bf16.gmra.mrb[0].mxu0 %v1695
        %v2226 = vpop.f32.mrb[0].mxu0
        %v2227 = vadd.f32 0.0, %v2226
        %v2228 = vpop.f32.mrb[0].mxu0
        %v2229 = vpop.f32.mrb[0].mxu0
        %v2230 = vadd.f32 0.0, %v2229
        %v2231 = vpop.f32.mrb[0].mxu0
        %2232 = vmatprep.mubr.bf16.mxu0 0
        %2233 = vmatmul.mubr.bf16.gmra.mrb[0].mxu0 %v1698
        %v2234 = vpop.f32.mrb[0].mxu0
        %v2235 = vadd.f32 0.0, %v2234
        %v2236 = vpop.f32.mrb[0].mxu0
        %v2237 = vpop.f32.mrb[0].mxu0
        %v2238 = vadd.f32 0.0, %v2237
        %v2239 = vpop.f32.mrb[0].mxu0
        %2240 = vmatprep.mubr.bf16.mxu0 0
        %2241 = vmatmul.mubr.bf16.gmra.mrb[0].mxu0 %v1701
        %v2242 = vpop.f32.mrb[0].mxu0
        %v2243 = vadd.f32 0.0, %v2242
        %v2244 = vpop.f32.mrb[0].mxu0
        %v2245 = vpop.f32.mrb[0].mxu0
        %v2246 = vadd.f32 0.0, %v2245
        %v2247 = vpop.f32.mrb[0].mxu0
        %2248 = vmatprep.mubr.bf16.mxu0 0
        %2249 = vmatmul.mubr.bf16.gmra.mrb[0].mxu0 %v1704
        %v2250 = vpop.f32.mrb[0].mxu0
        %v2251 = vadd.f32 0.0, %v2250
        %v2252 = vpop.f32.mrb[0].mxu0
        %v2253 = vpop.f32.mrb[0].mxu0
        %v2254 = vadd.f32 0.0, %v2253
        %v2255 = vpop.f32.mrb[0].mxu0
        %2256 = vmatprep.mubr.bf16.mxu0 0
        %2257 = vmatmul.mubr.bf16.gmra.mrb[0].mxu0 %v1707
        %v2258 = vpop.f32.mrb[0].mxu0
        %v2259 = vadd.f32 0.0, %v2258
        %v2260 = vpop.f32.mrb[0].mxu0
        %v2261 = vpop.f32.mrb[0].mxu0
        %v2262 = vadd.f32 0.0, %v2261
        %v2263 = vpop.f32.mrb[0].mxu0
        %2264 = vmatprep.mubr.bf16.mxu0 0
        %2265 = vmatmul.mubr.bf16.gmra.mrb[0].mxu0 %v1710
        %v2266 = vpop.f32.mrb[0].mxu0
        %v2267 = vadd.f32 0.0, %v2266
        %v2268 = vpop.f32.mrb[0].mxu0
        %v2269 = vpop.f32.mrb[0].mxu0
        %v2270 = vadd.f32 0.0, %v2269
        %v2271 = vpop.f32.mrb[0].mxu0
        %2272 = vmatprep.mubr.bf16.mxu0 0
        %2273 = vmatmul.mubr.bf16.gmra.mrb[0].mxu0 %v1713
        %v2274 = vpop.f32.mrb[0].mxu0
        %v2275 = vadd.f32 0.0, %v2274
        %v2276 = vpop.f32.mrb[0].mxu0
        %v2277 = vpop.f32.mrb[0].mxu0
        %v2278 = vadd.f32 0.0, %v2277
        %v2279 = vpop.f32.mrb[0].mxu0
        %2280 = vmatprep.mubr.bf16.mxu0 0
        %2281 = vmatmul.mubr.bf16.gmra.mrb[0].mxu0 %v1716
        %v2282 = vpop.f32.mrb[0].mxu0
        %v2283 = vadd.f32 0.0, %v2282
        %v2284 = vpop.f32.mrb[0].mxu0
        %v2285 = vpop.f32.mrb[0].mxu0
        %v2286 = vadd.f32 0.0, %v2285
        %v2287 = vpop.f32.mrb[0].mxu0
        %2288 = vmatprep.mubr.bf16.mxu0 0
        %2289 = vmatmul.mubr.bf16.gmra.mrb[0].mxu0 %v1719
        %v2290 = vpop.f32.mrb[0].mxu0
        %v2291 = vadd.f32 0.0, %v2290
        %v2292 = vpop.f32.mrb[0].mxu0
        %v2293 = vpop.f32.mrb[0].mxu0
        %v2294 = vadd.f32 0.0, %v2293
        %v2295 = vpop.f32.mrb[0].mxu0
        %2296 = vmatprep.mubr.bf16.mxu0 0
        %2297 = vmatmul.mubr.bf16.gmra.mrb[0].mxu0 %v1722
        %v2298 = vpop.f32.mrb[0].mxu0
        %v2299 = vadd.f32 0.0, %v2298
        %v2300 = vpop.f32.mrb[0].mxu0
        %v2301 = vpop.f32.mrb[0].mxu0
        %v2302 = vadd.f32 0.0, %v2301
        %v2303 = vpop.f32.mrb[0].mxu0
        %2304 = vmatprep.mubr.bf16.mxu0 0
        %2305 = vmatmul.mubr.bf16.gmra.mrb[0].mxu0 %v1725
        %v2306 = vpop.f32.mrb[0].mxu0
        %v2307 = vadd.f32 0.0, %v2306
        %v2308 = vpop.f32.mrb[0].mxu0
        %v2309 = vpop.f32.mrb[0].mxu0
        %v2310 = vadd.f32 0.0, %v2309
        %v2311 = vpop.f32.mrb[0].mxu0
        %2312 = vmatprep.mubr.bf16.mxu0 0
        %2313 = vmatmul.mubr.bf16.gmra.mrb[0].mxu0 %v1728
        %v2314 = vpop.f32.mrb[0].mxu0
        %v2315 = vadd.f32 0.0, %v2314
        %v2316 = vpop.f32.mrb[0].mxu0
        %v2317 = vpop.f32.mrb[0].mxu0
        %v2318 = vadd.f32 0.0, %v2317
        %v2319 = vpop.f32.mrb[0].mxu0
        %2320 = vmatprep.mubr.bf16.mxu0 0
        %2321 = vmatmul.mubr.bf16.gmra.mrb[0].mxu0 %v1731
        %v2322 = vpop.f32.mrb[0].mxu0
        %v2323 = vadd.f32 0.0, %v2322
        %v2324 = vpop.f32.mrb[0].mxu0
        %v2325 = vpop.f32.mrb[0].mxu0
        %v2326 = vadd.f32 0.0, %v2325
        %v2327 = vpop.f32.mrb[0].mxu0
        %2328 = vmatprep.mubr.bf16.mxu0 0
        %2329 = vmatmul.mubr.bf16.gmra.mrb[0].mxu0 %v1734
        %v2330 = vpop.f32.mrb[0].mxu0
        %v2331 = vadd.f32 0.0, %v2330
        %v2332 = vpop.f32.mrb[0].mxu0
        %v2333 = vpop.f32.mrb[0].mxu0
        %v2334 = vadd.f32 0.0, %v2333
        %v2335 = vpop.f32.mrb[0].mxu0
        %2336 = vmatprep.mubr.bf16.mxu0 0
        %2337 = vmatmul.mubr.bf16.gmra.mrb[0].mxu0 %v1737
        %v2338 = vpop.f32.mrb[0].mxu0
        %v2339 = vadd.f32 0.0, %v2338
        %v2340 = vpop.f32.mrb[0].mxu0
        %v2341 = vpop.f32.mrb[0].mxu0
        %v2342 = vadd.f32 0.0, %v2341
        %v2343 = vpop.f32.mrb[0].mxu0
        %2344 = vmatprep.mubr.bf16.mxu0 0
        %2345 = vmatmul.mubr.bf16.gmra.mrb[0].mxu0 %v1740
        %v2346 = vpop.f32.mrb[0].mxu0
        %v2347 = vadd.f32 0.0, %v2346
        %v2348 = vpop.f32.mrb[0].mxu0
        %v2349 = vpop.f32.mrb[0].mxu0
        %v2350 = vadd.f32 0.0, %v2349
        %v2351 = vpop.f32.mrb[0].mxu0
        %2352 = vmatprep.mubr.bf16.mxu0 0
        %2353 = vmatmul.mubr.bf16.gmra.mrb[0].mxu0 %v1743
        %v2354 = vpop.f32.mrb[0].mxu0
        %v2355 = vadd.f32 0.0, %v2354
        %v2356 = vpop.f32.mrb[0].mxu0
        %v2357 = vpop.f32.mrb[0].mxu0
        %v2358 = vadd.f32 0.0, %v2357
        %v2359 = vpop.f32.mrb[0].mxu0
        %2360 = vmatprep.mubr.bf16.mxu0 0
        %2361 = vmatmul.mubr.bf16.gmra.mrb[0].mxu0 %v1746
        %v2362 = vpop.f32.mrb[0].mxu0
        %v2363 = vadd.f32 0.0, %v2362
        %v2364 = vpop.f32.mrb[0].mxu0
        %v2365 = vpop.f32.mrb[0].mxu0
        %v2366 = vadd.f32 0.0, %v2365
        %v2367 = vpop.f32.mrb[0].mxu0
        %2368 = vmatprep.mubr.bf16.mxu0 0
        %2369 = vmatmul.mubr.bf16.gmra.mrb[0].mxu0 %v1749
        %v2370 = vpop.f32.mrb[0].mxu0
        %v2371 = vadd.f32 0.0, %v2370
        %v2372 = vpop.f32.mrb[0].mxu0
        %v2373 = vpop.f32.mrb[0].mxu0
        %v2374 = vadd.f32 0.0, %v2373
        %v2375 = vpop.f32.mrb[0].mxu0
        %2376 = vmatprep.mubr.bf16.mxu0 0
        %2377 = vmatmul.mubr.bf16.gmra.mrb[0].mxu0 %v1752
        %v2378 = vpop.f32.mrb[0].mxu0
        %v2379 = vadd.f32 0.0, %v2378
        %v2380 = vpop.f32.mrb[0].mxu0
        %v2381 = vpop.f32.mrb[0].mxu0
        %v2382 = vadd.f32 0.0, %v2381
        %v2383 = vpop.f32.mrb[0].mxu0
        %2384 = vmatprep.mubr.bf16.mxu0 0
        %2385 = vmatmul.mubr.bf16.gmra.mrb[0].mxu0 %v1755
        %v2386 = vpop.f32.mrb[0].mxu0
        %v2387 = vadd.f32 0.0, %v2386
        %v2388 = vpop.f32.mrb[0].mxu0
        %v2389 = vpop.f32.mrb[0].mxu0
        %v2390 = vadd.f32 0.0, %v2389
        %v2391 = vpop.f32.mrb[0].mxu0
        %2392 = vmatprep.mubr.bf16.mxu0 0
        %2393 = vmatmul.mubr.bf16.gmra.mrb[0].mxu0 %v1758
        %v2394 = vpop.f32.mrb[0].mxu0
        %v2395 = vadd.f32 0.0, %v2394
        %v2396 = vpop.f32.mrb[0].mxu0
        %v2397 = vpop.f32.mrb[0].mxu0
        %v2398 = vadd.f32 0.0, %v2397
        %v2399 = vpop.f32.mrb[0].mxu0
        %2400 = vmatprep.mubr.bf16.mxu0 0
        %2401 = vmatmul.mubr.bf16.gmra.mrb[0].mxu0 %v1761
        %v2402 = vpop.f32.mrb[0].mxu0
        %v2403 = vadd.f32 0.0, %v2402
        %v2404 = vpop.f32.mrb[0].mxu0
        %v2405 = vpop.f32.mrb[0].mxu0
        %v2406 = vadd.f32 0.0, %v2405
        %v2407 = vpop.f32.mrb[0].mxu0
        %2408 = vmatprep.mubr.bf16.mxu0 0
        %2409 = vmatmul.mubr.bf16.gmra.mrb[0].mxu0 %v1764
        %v2410 = vpop.f32.mrb[0].mxu0
        %v2411 = vadd.f32 0.0, %v2410
        %v2412 = vpop.f32.mrb[0].mxu0
        %v2413 = vpop.f32.mrb[0].mxu0
        %v2414 = vadd.f32 0.0, %v2413
        %v2415 = vpop.f32.mrb[0].mxu0
        %2416 = vmatprep.mubr.bf16.mxu0 0
        %2417 = vmatmul.mubr.bf16.gmra.mrb[0].mxu0 %v1767
        %v2418 = vpop.f32.mrb[0].mxu0
        %v2419 = vadd.f32 0.0, %v2418
        %v2420 = vpop.f32.mrb[0].mxu0
        %v2421 = vpop.f32.mrb[0].mxu0
        %v2422 = vadd.f32 0.0, %v2421
        %v2423 = vpop.f32.mrb[0].mxu0
        %2424 = vmatprep.mubr.bf16.mxu0 0
        %2425 = vmatmul.mubr.bf16.gmra.mrb[0].mxu0 %v1770
        %v2426 = vpop.f32.mrb[0].mxu0
        %v2427 = vadd.f32 0.0, %v2426
        %v2428 = vpop.f32.mrb[0].mxu0
        %v2429 = vpop.f32.mrb[0].mxu0
        %v2430 = vadd.f32 0.0, %v2429
        %v2431 = vpop.f32.mrb[0].mxu0
        %2432 = vmatprep.mubr.bf16.mxu0 0
        %2433 = vmatmul.mubr.bf16.gmra.mrb[0].mxu0 %v1773
        %v2434 = vpop.f32.mrb[0].mxu0
        %v2435 = vadd.f32 0.0, %v2434
        %v2436 = vpop.f32.mrb[0].mxu0
        %v2437 = vpop.f32.mrb[0].mxu0
        %v2438 = vadd.f32 0.0, %v2437
        %v2439 = vpop.f32.mrb[0].mxu0
        %2440 = vmatprep.mubr.bf16.mxu0 0
        %2441 = vmatmul.mubr.bf16.gmra.mrb[0].mxu0 %v1776
        %v2442 = vpop.f32.mrb[0].mxu0
        %v2443 = vadd.f32 0.0, %v2442
        %v2444 = vpop.f32.mrb[0].mxu0
        %v2445 = vpop.f32.mrb[0].mxu0
        %v2446 = vadd.f32 0.0, %v2445
        %v2447 = vpop.f32.mrb[0].mxu0
        %2448 = vmatprep.mubr.bf16.mxu0 0
        %2449 = vmatmul.mubr.bf16.gmra.mrb[0].mxu0 %v1779
        %v2450 = vpop.f32.mrb[0].mxu0
        %v2451 = vadd.f32 0.0, %v2450
        %v2452 = vpop.f32.mrb[0].mxu0
        %v2453 = vpop.f32.mrb[0].mxu0
        %v2454 = vadd.f32 0.0, %v2453
        %v2455 = vpop.f32.mrb[0].mxu0
        %2456 = vmatprep.mubr.bf16.mxu0 0
        %2457 = vmatmul.mubr.bf16.gmra.mrb[0].mxu0 %v1782
        %v2458 = vpop.f32.mrb[0].mxu0
        %v2459 = vadd.f32 0.0, %v2458
        %v2460 = vpop.f32.mrb[0].mxu0
        %v2461 = vpop.f32.mrb[0].mxu0
        %v2462 = vadd.f32 0.0, %v2461
        %v2463 = vpop.f32.mrb[0].mxu0
        %2464 = vmatprep.mubr.bf16.mxu0 0
        %2465 = vmatmul.mubr.bf16.gmra.mrb[0].mxu0 %v1785
        %v2466 = vpop.f32.mrb[0].mxu0
        %v2467 = vadd.f32 0.0, %v2466
        %v2468 = vpop.f32.mrb[0].mxu0
        %v2469 = vpop.f32.mrb[0].mxu0
        %v2470 = vadd.f32 0.0, %v2469
        %v2471 = vpop.f32.mrb[0].mxu0
        %2472 = vmatprep.mubr.bf16.mxu0 0
        %2473 = vmatmul.mubr.bf16.gmra.mrb[0].mxu0 %v1788
        %v2474 = vpop.f32.mrb[0].mxu0
        %v2475 = vadd.f32 0.0, %v2474
        %v2476 = vpop.f32.mrb[0].mxu0
        %v2477 = vpop.f32.mrb[0].mxu0
        %v2478 = vadd.f32 0.0, %v2477
        %v2479 = vpop.f32.mrb[0].mxu0
        %2480 = vmatprep.mubr.bf16.mxu0 0
        %2481 = vmatmul.mubr.bf16.gmra.mrb[0].mxu0 %v1791
        %v2482 = vpop.f32.mrb[0].mxu0
        %v2483 = vadd.f32 0.0, %v2482
        %v2484 = vpop.f32.mrb[0].mxu0
        %v2485 = vpop.f32.mrb[0].mxu0
        %v2486 = vadd.f32 0.0, %v2485
        %v2487 = vpop.f32.mrb[0].mxu0
        %2488 = vmatprep.mubr.bf16.mxu0 0
        %2489 = vmatmul.mubr.bf16.gmra.mrb[0].mxu0 %v1794
        %v2490 = vpop.f32.mrb[0].mxu0
        %v2491 = vadd.f32 0.0, %v2490
        %v2492 = vpop.f32.mrb[0].mxu0
        %v2493 = vpop.f32.mrb[0].mxu0
        %v2494 = vadd.f32 0.0, %v2493
        %v2495 = vpop.f32.mrb[0].mxu0
        %2496 = vmatprep.mubr.bf16.mxu0 0
        %2497 = vmatmul.mubr.bf16.gmra.mrb[0].mxu0 %v1797
        %v2498 = vpop.f32.mrb[0].mxu0
        %v2499 = vadd.f32 0.0, %v2498
        %v2500 = vpop.f32.mrb[0].mxu0
        %v2501 = vpop.f32.mrb[0].mxu0
        %v2502 = vadd.f32 0.0, %v2501
        %v2503 = vpop.f32.mrb[0].mxu0
        %2504 = vmatprep.mubr.bf16.mxu0 0
        %2505 = vmatmul.mubr.bf16.gmra.mrb[0].mxu0 %v1800
        %v2506 = vpop.f32.mrb[0].mxu0
        %v2507 = vadd.f32 0.0, %v2506
        %v2508 = vpop.f32.mrb[0].mxu0
        %v2509 = vpop.f32.mrb[0].mxu0
        %v2510 = vadd.f32 0.0, %v2509
        %v2511 = vpop.f32.mrb[0].mxu0
        %2512 = vmatprep.mubr.bf16.mxu0 0
        %2513 = vmatmul.mubr.bf16.gmra.mrb[0].mxu0 %v1803
        %v2514 = vpop.f32.mrb[0].mxu0
        %v2515 = vadd.f32 0.0, %v2514
        %v2516 = vpop.f32.mrb[0].mxu0
        %v2517 = vpop.f32.mrb[0].mxu0
        %v2518 = vadd.f32 0.0, %v2517
        %v2519 = vpop.f32.mrb[0].mxu0
        %2520 = vmatprep.mubr.bf16.mxu0 0
        %2521 = vmatmul.mubr.bf16.gmra.mrb[0].mxu0 %v1806
        %v2522 = vpop.f32.mrb[0].mxu0
        %v2523 = vadd.f32 0.0, %v2522
        %v2524 = vpop.f32.mrb[0].mxu0
        %v2525 = vpop.f32.mrb[0].mxu0
        %v2526 = vadd.f32 0.0, %v2525
        %v2527 = vpop.f32.mrb[0].mxu0
        %2528 = vmatprep.mubr.bf16.mxu0 0
        %2529 = vmatmul.mubr.bf16.gmra.mrb[0].mxu0 %v1809
        %v2530 = vpop.f32.mrb[0].mxu0
        %v2531 = vadd.f32 0.0, %v2530
        %v2532 = vpop.f32.mrb[0].mxu0
        %v2533 = vpop.f32.mrb[0].mxu0
        %v2534 = vadd.f32 0.0, %v2533
        %v2535 = vpop.f32.mrb[0].mxu0
        %2536 = vmatprep.mubr.bf16.mxu0 0
        %2537 = vmatmul.mubr.bf16.gmra.mrb[0].mxu0 %v1812
        %v2538 = vpop.f32.mrb[0].mxu0
        %v2539 = vadd.f32 0.0, %v2538
        %v2540 = vpop.f32.mrb[0].mxu0
        %v2541 = vpop.f32.mrb[0].mxu0
        %v2542 = vadd.f32 0.0, %v2541
        %v2543 = vpop.f32.mrb[0].mxu0
        %2544 = vmatprep.mubr.bf16.mxu0 0
        %2545 = vmatmul.mubr.bf16.gmra.mrb[0].mxu0 %v1815
        %v2546 = vpop.f32.mrb[0].mxu0
        %v2547 = vadd.f32 0.0, %v2546
        %v2548 = vpop.f32.mrb[0].mxu0
        %v2549 = vpop.f32.mrb[0].mxu0
        %v2550 = vadd.f32 0.0, %v2549
        %v2551 = vpop.f32.mrb[0].mxu0
        %2552 = vmatprep.mubr.bf16.mxu0 0
        %2553 = vmatmul.mubr.bf16.gmra.mrb[0].mxu0 %v1818
        %v2554 = vpop.f32.mrb[0].mxu0
        %v2555 = vadd.f32 0.0, %v2554
        %v2556 = vpop.f32.mrb[0].mxu0
        %v2557 = vpop.f32.mrb[0].mxu0
        %v2558 = vadd.f32 0.0, %v2557
        %v2559 = vpop.f32.mrb[0].mxu0
        %2560 = vmatprep.mubr.bf16.mxu0 0
        %2561 = vmatmul.mubr.bf16.gmra.mrb[0].mxu0 %v1821
        %v2562 = vpop.f32.mrb[0].mxu0
        %v2563 = vadd.f32 0.0, %v2562
        %v2564 = vpop.f32.mrb[0].mxu0
        %v2565 = vpop.f32.mrb[0].mxu0
        %v2566 = vadd.f32 0.0, %v2565
        %v2567 = vpop.f32.mrb[0].mxu0
        %2568 = vmatprep.mubr.bf16.mxu0 0
        %2569 = vmatmul.mubr.bf16.gmra.mrb[0].mxu0 %v1824
        %v2570 = vpop.f32.mrb[0].mxu0
        %v2571 = vadd.f32 0.0, %v2570
        %v2572 = vpop.f32.mrb[0].mxu0
        %v2573 = vpop.f32.mrb[0].mxu0
        %v2574 = vadd.f32 0.0, %v2573
        %v2575 = vpop.f32.mrb[0].mxu0
        %2576 = vmatprep.mubr.bf16.mxu0 0
        %2577 = vmatmul.mubr.bf16.gmra.mrb[0].mxu0 %v1827
        %v2578 = vpop.f32.mrb[0].mxu0
        %v2579 = vadd.f32 0.0, %v2578
        %v2580 = vpop.f32.mrb[0].mxu0
        %v2581 = vpop.f32.mrb[0].mxu0
        %v2582 = vadd.f32 0.0, %v2581
        %v2583 = vpop.f32.mrb[0].mxu0
        %2584 = vmatprep.mubr.bf16.mxu0 0
        %2585 = vmatmul.mubr.bf16.gmra.mrb[0].mxu0 %v1830
        %v2586 = vpop.f32.mrb[0].mxu0
        %v2587 = vadd.f32 0.0, %v2586
        %v2588 = vpop.f32.mrb[0].mxu0
        %v2589 = vpop.f32.mrb[0].mxu0
        %v2590 = vadd.f32 0.0, %v2589
        %v2591 = vpop.f32.mrb[0].mxu0
        %2592 = vmatprep.mubr.bf16.mxu0 0
        %2593 = vmatmul.mubr.bf16.gmra.mrb[0].mxu0 %v1833
        %v2594 = vpop.f32.mrb[0].mxu0
        %v2595 = vadd.f32 0.0, %v2594
        %v2596 = vpop.f32.mrb[0].mxu0
        %v2597 = vpop.f32.mrb[0].mxu0
        %v2598 = vadd.f32 0.0, %v2597
        %v2599 = vpop.f32.mrb[0].mxu0
        %2600 = vmatprep.mubr.bf16.mxu0 0
        %2601 = vmatmul.mubr.bf16.gmra.mrb[0].mxu0 %v1836
        %v2602 = vpop.f32.mrb[0].mxu0
        %v2603 = vadd.f32 0.0, %v2602
        %v2604 = vpop.f32.mrb[0].mxu0
        %v2605 = vpop.f32.mrb[0].mxu0
        %v2606 = vadd.f32 0.0, %v2605
        %v2607 = vpop.f32.mrb[0].mxu0
        %2608 = vmatprep.mubr.bf16.mxu0 0
        %2609 = vmatmul.mubr.bf16.gmra.mrb[0].mxu0 %v1839
        %v2610 = vpop.f32.mrb[0].mxu0
        %v2611 = vadd.f32 0.0, %v2610
        %v2612 = vpop.f32.mrb[0].mxu0
        %v2613 = vpop.f32.mrb[0].mxu0
        %v2614 = vadd.f32 0.0, %v2613
        %v2615 = vpop.f32.mrb[0].mxu0
        %2616 = vmatprep.mubr.bf16.mxu0 0
        %2617 = vmatmul.mubr.bf16.gmra.mrb[0].mxu0 %v1842
        %v2618 = vpop.f32.mrb[0].mxu0
        %v2619 = vadd.f32 0.0, %v2618
        %v2620 = vpop.f32.mrb[0].mxu0
        %v2621 = vpop.f32.mrb[0].mxu0
        %v2622 = vadd.f32 0.0, %v2621
        %v2623 = vpop.f32.mrb[0].mxu0
        %2624 = vmatprep.mubr.bf16.mxu0 0
        %2625 = vmatmul.mubr.bf16.gmra.mrb[0].mxu0 %v1845
        %v2626 = vpop.f32.mrb[0].mxu0
        %v2627 = vadd.f32 0.0, %v2626
        %v2628 = vpop.f32.mrb[0].mxu0
        %v2629 = vpop.f32.mrb[0].mxu0
        %v2630 = vadd.f32 0.0, %v2629
        %v2631 = vpop.f32.mrb[0].mxu0
        %2632 = vmatprep.mubr.bf16.mxu0 0
        %2633 = vmatmul.mubr.bf16.gmra.mrb[0].mxu0 %v1848
        %v2634 = vpop.f32.mrb[0].mxu0
        %v2635 = vadd.f32 0.0, %v2634
        %v2636 = vpop.f32.mrb[0].mxu0
        %v2637 = vpop.f32.mrb[0].mxu0
        %v2638 = vadd.f32 0.0, %v2637
        %v2639 = vpop.f32.mrb[0].mxu0
        %2640 = vmatprep.mubr.bf16.mxu0 0
        %2641 = vmatmul.mubr.bf16.gmra.mrb[0].mxu0 %v1851
        %v2642 = vpop.f32.mrb[0].mxu0
        %v2643 = vadd.f32 0.0, %v2642
        %v2644 = vpop.f32.mrb[0].mxu0
        %v2645 = vpop.f32.mrb[0].mxu0
        %v2646 = vadd.f32 0.0, %v2645
        %v2647 = vpop.f32.mrb[0].mxu0
        %2648 = vmatprep.mubr.bf16.mxu0 0
        %2649 = vmatmul.mubr.bf16.gmra.mrb[0].mxu0 %v1854
        %v2650 = vpop.f32.mrb[0].mxu0
        %v2651 = vadd.f32 0.0, %v2650
        %v2652 = vpop.f32.mrb[0].mxu0
        %v2653 = vpop.f32.mrb[0].mxu0
        %v2654 = vadd.f32 0.0, %v2653
        %v2655 = vpop.f32.mrb[0].mxu0
        %2656 = vmatprep.mubr.bf16.mxu0 0
        %2657 = vmatmul.mubr.bf16.gmra.mrb[0].mxu0 %v1857
        %v2658 = vpop.f32.mrb[0].mxu0
        %v2659 = vadd.f32 0.0, %v2658
        %v2660 = vpop.f32.mrb[0].mxu0
        %v2661 = vpop.f32.mrb[0].mxu0
        %v2662 = vadd.f32 0.0, %v2661
        %v2663 = vpop.f32.mrb[0].mxu0
        %2664 = vmatprep.mubr.bf16.mxu0 0
        %2665 = vmatmul.mubr.bf16.gmra.mrb[0].mxu0 %v1860
        %v2666 = vpop.f32.mrb[0].mxu0
        %v2667 = vadd.f32 0.0, %v2666
        %v2668 = vpop.f32.mrb[0].mxu0
        %v2669 = vpop.f32.mrb[0].mxu0
        %v2670 = vadd.f32 0.0, %v2669
        %v2671 = vpop.f32.mrb[0].mxu0
        %2672 = vmatprep.mubr.bf16.mxu0 0
        %2673 = vmatmul.mubr.bf16.gmra.mrb[0].mxu0 %v1863
        %v2674 = vpop.f32.mrb[0].mxu0
        %v2675 = vadd.f32 0.0, %v2674
        %v2676 = vpop.f32.mrb[0].mxu0
        %v2677 = vpop.f32.mrb[0].mxu0
        %v2678 = vadd.f32 0.0, %v2677
        %v2679 = vpop.f32.mrb[0].mxu0
        %2680 = vmatprep.mubr.bf16.mxu0 0
        %2681 = vmatmul.mubr.bf16.gmra.mrb[0].mxu0 %v1866
        %v2682 = vpop.f32.mrb[0].mxu0
        %v2683 = vadd.f32 0.0, %v2682
        %v2684 = vpop.f32.mrb[0].mxu0
        %v2685 = vpop.f32.mrb[0].mxu0
        %v2686 = vadd.f32 0.0, %v2685
        %v2687 = vpop.f32.mrb[0].mxu0
        %2688 = vmatprep.mubr.bf16.mxu0 0
        %2689 = vmatmul.mubr.bf16.gmra.mrb[0].mxu0 %v1869
        %v2690 = vpop.f32.mrb[0].mxu0
        %v2691 = vadd.f32 0.0, %v2690
        %v2692 = vpop.f32.mrb[0].mxu0
        %v2693 = vpop.f32.mrb[0].mxu0
        %v2694 = vadd.f32 0.0, %v2693
        %v2695 = vpop.f32.mrb[0].mxu0
        %2696 = vmatprep.mubr.bf16.mxu0 0
        %2697 = vmatmul.mubr.bf16.gmra.mrb[0].mxu0 %v1872
        %v2698 = vpop.f32.mrb[0].mxu0
        %v2699 = vadd.f32 0.0, %v2698
        %v2700 = vpop.f32.mrb[0].mxu0
        %v2701 = vpop.f32.mrb[0].mxu0
        %v2702 = vadd.f32 0.0, %v2701
        %v2703 = vpop.f32.mrb[0].mxu0
        %2704 = vmatprep.mubr.bf16.mxu0 0
        %2705 = vmatmul.mubr.bf16.gmra.mrb[0].mxu0 %v1875
        %v2706 = vpop.f32.mrb[0].mxu0
        %v2707 = vadd.f32 0.0, %v2706
        %v2708 = vpop.f32.mrb[0].mxu0
        %v2709 = vpop.f32.mrb[0].mxu0
        %v2710 = vadd.f32 0.0, %v2709
        %v2711 = vpop.f32.mrb[0].mxu0
        %2712 = vmatprep.mubr.bf16.mxu0 0
        %2713 = vmatmul.mubr.bf16.gmra.mrb[0].mxu0 %v1878
        %v2714 = vpop.f32.mrb[0].mxu0
        %v2715 = vadd.f32 0.0, %v2714
        %v2716 = vpop.f32.mrb[0].mxu0
        %v2717 = vpop.f32.mrb[0].mxu0
        %v2718 = vadd.f32 0.0, %v2717
        %v2719 = vpop.f32.mrb[0].mxu0
        %2720 = vmatprep.mubr.bf16.mxu0 0
        %2721 = vmatmul.mubr.bf16.gmra.mrb[0].mxu0 %v1881
        %v2722 = vpop.f32.mrb[0].mxu0
        %v2723 = vadd.f32 0.0, %v2722
        %v2724 = vpop.f32.mrb[0].mxu0
        %v2725 = vpop.f32.mrb[0].mxu0
        %v2726 = vadd.f32 0.0, %v2725
        %v2727 = vpop.f32.mrb[0].mxu0
        %2728 = vmatprep.mubr.bf16.mxu0 0
        %2729 = vmatmul.mubr.bf16.gmra.mrb[0].mxu0 %v1884
        %v2730 = vpop.f32.mrb[0].mxu0
        %v2731 = vadd.f32 0.0, %v2730
        %v2732 = vpop.f32.mrb[0].mxu0
        %v2733 = vpop.f32.mrb[0].mxu0
        %v2734 = vadd.f32 0.0, %v2733
        %v2735 = vpop.f32.mrb[0].mxu0
        %2736 = vmatprep.mubr.bf16.mxu0 0
        %2737 = vmatmul.mubr.bf16.gmra.mrb[0].mxu0 %v1887
        %v2738 = vpop.f32.mrb[0].mxu0
        %v2739 = vadd.f32 0.0, %v2738
        %v2740 = vpop.f32.mrb[0].mxu0
        %v2741 = vpop.f32.mrb[0].mxu0
        %v2742 = vadd.f32 0.0, %v2741
        %v2743 = vpop.f32.mrb[0].mxu0
        %2744 = vmatprep.mubr.bf16.mxu0 0
        %2745 = vmatmul.mubr.bf16.gmra.mrb[0].mxu0 %v1890
        %v2746 = vpop.f32.mrb[0].mxu0
        %v2747 = vadd.f32 0.0, %v2746
        %v2748 = vpop.f32.mrb[0].mxu0
        %v2749 = vpop.f32.mrb[0].mxu0
        %v2750 = vadd.f32 0.0, %v2749
        %v2751 = vpop.f32.mrb[0].mxu0
        %2752 = vmatprep.mubr.bf16.mxu0 0
        %2753 = vmatmul.mubr.bf16.gmra.mrb[0].mxu0 %v1893
        %v2754 = vpop.f32.mrb[0].mxu0
        %v2755 = vadd.f32 0.0, %v2754
        %v2756 = vpop.f32.mrb[0].mxu0
        %v2757 = vpop.f32.mrb[0].mxu0
        %v2758 = vadd.f32 0.0, %v2757
        %v2759 = vpop.f32.mrb[0].mxu0
        %2760 = vmatprep.mubr.bf16.mxu0 0
        %2761 = vmatmul.mubr.bf16.gmra.mrb[0].mxu0 %v1896
        %v2762 = vpop.f32.mrb[0].mxu0
        %v2763 = vadd.f32 0.0, %v2762
        %v2764 = vpop.f32.mrb[0].mxu0
        %v2765 = vpop.f32.mrb[0].mxu0
        %v2766 = vadd.f32 0.0, %v2765
        %v2767 = vpop.f32.mrb[0].mxu0
        %2768 = vmatprep.mubr.bf16.mxu0 0
        %2769 = vmatmul.mubr.bf16.gmra.mrb[0].mxu0 %v1899
        %v2770 = vpop.f32.mrb[0].mxu0
        %v2771 = vadd.f32 0.0, %v2770
        %v2772 = vpop.f32.mrb[0].mxu0
        %v2773 = vpop.f32.mrb[0].mxu0
        %v2774 = vadd.f32 0.0, %v2773
        %v2775 = vpop.f32.mrb[0].mxu0
        %2776 = vmatprep.mubr.bf16.mxu0 0
        %2777 = vmatmul.mubr.bf16.gmra.mrb[0].mxu0 %v1902
        %v2778 = vpop.f32.mrb[0].mxu0
        %v2779 = vadd.f32 0.0, %v2778
        %v2780 = vpop.f32.mrb[0].mxu0
        %v2781 = vpop.f32.mrb[0].mxu0
        %v2782 = vadd.f32 0.0, %v2781
        %v2783 = vpop.f32.mrb[0].mxu0
        %2784 = vmatprep.mubr.bf16.mxu0 0
        %2785 = vmatmul.mubr.bf16.gmra.mrb[0].mxu0 %v1905
        %v2786 = vpop.f32.mrb[0].mxu0
        %v2787 = vadd.f32 0.0, %v2786
        %v2788 = vpop.f32.mrb[0].mxu0
        %v2789 = vpop.f32.mrb[0].mxu0
        %v2790 = vadd.f32 0.0, %v2789
        %v2791 = vpop.f32.mrb[0].mxu0
        %2792 = vmatprep.mubr.bf16.mxu0 0
        %2793 = vmatmul.mubr.bf16.gmra.mrb[0].mxu0 %v1908
        %v2794 = vpop.f32.mrb[0].mxu0
        %v2795 = vadd.f32 0.0, %v2794
        %v2796 = vpop.f32.mrb[0].mxu0
        %v2797 = vpop.f32.mrb[0].mxu0
        %v2798 = vadd.f32 0.0, %v2797
        %v2799 = vpop.f32.mrb[0].mxu0
        %2800 = vmatprep.mubr.bf16.mxu0 0
        %2801 = vmatmul.mubr.bf16.gmra.mrb[0].mxu0 %v1911
        %v2802 = vpop.f32.mrb[0].mxu0
        %v2803 = vadd.f32 0.0, %v2802
        %v2804 = vpop.f32.mrb[0].mxu0
        %v2805 = vpop.f32.mrb[0].mxu0
        %v2806 = vadd.f32 0.0, %v2805
        %v2807 = vpop.f32.mrb[0].mxu0
        %2808 = vmatprep.mubr.bf16.mxu0 0
        %2809 = vmatmul.mubr.bf16.gmra.mrb[0].mxu0 %v1914
        %v2810 = vpop.f32.mrb[0].mxu0
        %v2811 = vadd.f32 0.0, %v2810
        %v2812 = vpop.f32.mrb[0].mxu0
        %v2813 = vpop.f32.mrb[0].mxu0
        %v2814 = vadd.f32 0.0, %v2813
        %v2815 = vpop.f32.mrb[0].mxu0
        %2816 = vmatprep.mubr.bf16.mxu0 0
        %2817 = vmatmul.mubr.bf16.gmra.mrb[0].mxu0 %v1917
        %v2818 = vpop.f32.mrb[0].mxu0
        %v2819 = vadd.f32 0.0, %v2818
        %v2820 = vpop.f32.mrb[0].mxu0
        %v2821 = vpop.f32.mrb[0].mxu0
        %v2822 = vadd.f32 0.0, %v2821
        %v2823 = vpop.f32.mrb[0].mxu0
        %2824 = vmatprep.mubr.bf16.mxu0 0
        %2825 = vmatmul.mubr.bf16.gmra.mrb[0].mxu0 %v1920
        %v2826 = vpop.f32.mrb[0].mxu0
        %v2827 = vadd.f32 0.0, %v2826
        %v2828 = vpop.f32.mrb[0].mxu0
        %v2829 = vpop.f32.mrb[0].mxu0
        %v2830 = vadd.f32 0.0, %v2829
        %v2831 = vpop.f32.mrb[0].mxu0
        %2832 = vmatprep.mubr.bf16.mxu0 0
        %2833 = vmatmul.mubr.bf16.gmra.mrb[0].mxu0 %v1923
        %v2834 = vpop.f32.mrb[0].mxu0
        %v2835 = vadd.f32 0.0, %v2834
        %v2836 = vpop.f32.mrb[0].mxu0
        %v2837 = vpop.f32.mrb[0].mxu0
        %v2838 = vadd.f32 0.0, %v2837
        %v2839 = vpop.f32.mrb[0].mxu0
        %2840 = vmatprep.mubr.bf16.mxu0 0
        %2841 = vmatmul.mubr.bf16.gmra.mrb[0].mxu0 %v1926
        %v2842 = vpop.f32.mrb[0].mxu0
        %v2843 = vadd.f32 0.0, %v2842
        %v2844 = vpop.f32.mrb[0].mxu0
        %v2845 = vpop.f32.mrb[0].mxu0
        %v2846 = vadd.f32 0.0, %v2845
        %v2847 = vpop.f32.mrb[0].mxu0
        %2848 = vmatprep.mubr.bf16.mxu0 0
        %2849 = vmatmul.mubr.bf16.gmra.mrb[0].mxu0 %v1929
        %v2850 = vpop.f32.mrb[0].mxu0
        %v2851 = vadd.f32 0.0, %v2850
        %v2852 = vpop.f32.mrb[0].mxu0
        %v2853 = vpop.f32.mrb[0].mxu0
        %v2854 = vadd.f32 0.0, %v2853
        %v2855 = vpop.f32.mrb[0].mxu0
        %2856 = vmatprep.mubr.bf16.mxu0 0
        %2857 = vmatmul.mubr.bf16.gmra.mrb[0].mxu0 %v1932
        %v2858 = vpop.f32.mrb[0].mxu0
        %v2859 = vadd.f32 0.0, %v2858
        %v2860 = vpop.f32.mrb[0].mxu0
        %v2861 = vpop.f32.mrb[0].mxu0
        %v2862 = vadd.f32 0.0, %v2861
        %v2863 = vpop.f32.mrb[0].mxu0
        %2864 = vmatprep.mubr.bf16.mxu0 0
        %2865 = vmatmul.mubr.bf16.gmra.mrb[0].mxu0 %v1935
        %v2866 = vpop.f32.mrb[0].mxu0
        %v2867 = vadd.f32 0.0, %v2866
        %v2868 = vpop.f32.mrb[0].mxu0
        %v2869 = vpop.f32.mrb[0].mxu0
        %v2870 = vadd.f32 0.0, %v2869
        %v2871 = vpop.f32.mrb[0].mxu0
        %2872 = vmatprep.mubr.bf16.mxu0 0
        %2873 = vmatmul.mubr.bf16.gmra.mrb[0].mxu0 %v1938
        %v2874 = vpop.f32.mrb[0].mxu0
        %v2875 = vadd.f32 0.0, %v2874
        %v2876 = vpop.f32.mrb[0].mxu0
        %v2877 = vpop.f32.mrb[0].mxu0
        %v2878 = vadd.f32 0.0, %v2877
        %v2879 = vpop.f32.mrb[0].mxu0
        %2880 = vmatprep.mubr.bf16.mxu0 0
        %2881 = vmatmul.mubr.bf16.gmra.mrb[0].mxu0 %v1941
        %v2882 = vpop.f32.mrb[0].mxu0
        %v2883 = vadd.f32 0.0, %v2882
        %v2884 = vpop.f32.mrb[0].mxu0
        %v2885 = vpop.f32.mrb[0].mxu0
        %v2886 = vadd.f32 0.0, %v2885
        %v2887 = vpop.f32.mrb[0].mxu0
        %2888 = vmatprep.mubr.bf16.mxu0 0
        %2889 = vmatmul.mubr.bf16.gmra.mrb[0].mxu0 %v1944
        %v2890 = vpop.f32.mrb[0].mxu0
        %v2891 = vadd.f32 0.0, %v2890
        %v2892 = vpop.f32.mrb[0].mxu0
        %v2893 = vpop.f32.mrb[0].mxu0
        %v2894 = vadd.f32 0.0, %v2893
        %v2895 = vpop.f32.mrb[0].mxu0
        %2896 = vmatprep.mubr.bf16.mxu0 0
        %2897 = vmatmul.mubr.bf16.gmra.mrb[0].mxu0 %v1947
        %v2898 = vpop.f32.mrb[0].mxu0
        %v2899 = vadd.f32 0.0, %v2898
        %v2900 = vpop.f32.mrb[0].mxu0
        %v2901 = vpop.f32.mrb[0].mxu0
        %v2902 = vadd.f32 0.0, %v2901
        %v2903 = vpop.f32.mrb[0].mxu0
        %2904 = vmatprep.mubr.bf16.mxu0 0
        %2905 = vmatmul.mubr.bf16.gmra.mrb[0].mxu0 %v1950
        %v2906 = vpop.f32.mrb[0].mxu0
        %v2907 = vadd.f32 0.0, %v2906
        %v2908 = vpop.f32.mrb[0].mxu0
        %v2909 = vpop.f32.mrb[0].mxu0
        %v2910 = vadd.f32 0.0, %v2909
        %v2911 = vpop.f32.mrb[0].mxu0
        %2912 = vmatprep.mubr.bf16.mxu0 0
        %2913 = vmatmul.mubr.bf16.gmra.mrb[0].mxu0 %v1953
        %v2914 = vpop.f32.mrb[0].mxu0
        %v2915 = vadd.f32 0.0, %v2914
        %v2916 = vpop.f32.mrb[0].mxu0
        %v2917 = vpop.f32.mrb[0].mxu0
        %v2918 = vadd.f32 0.0, %v2917
        %v2919 = vpop.f32.mrb[0].mxu0
        %2920 = vmatprep.mubr.bf16.mxu0 0
        %2921 = vmatmul.mubr.bf16.gmra.mrb[0].mxu0 %v1956
        %v2922 = vpop.f32.mrb[0].mxu0
        %v2923 = vadd.f32 0.0, %v2922
        %v2924 = vpop.f32.mrb[0].mxu0
        %v2925 = vpop.f32.mrb[0].mxu0
        %v2926 = vadd.f32 0.0, %v2925
        %v2927 = vpop.f32.mrb[0].mxu0
        %2928 = vmatprep.mubr.bf16.mxu0 0
        %2929 = vmatmul.mubr.bf16.gmra.mrb[0].mxu0 %v1959
        %v2930 = vpop.f32.mrb[0].mxu0
        %v2931 = vadd.f32 0.0, %v2930
        %v2932 = vpop.f32.mrb[0].mxu0
        %v2933 = vpop.f32.mrb[0].mxu0
        %v2934 = vadd.f32 0.0, %v2933
        %v2935 = vpop.f32.mrb[0].mxu0
        %2936 = vmatprep.mubr.bf16.mxu0 0
        %2937 = vmatmul.mubr.bf16.gmra.mrb[0].mxu0 %v1962
        %v2938 = vpop.f32.mrb[0].mxu0
        %v2939 = vadd.f32 0.0, %v2938
        %v2940 = vpop.f32.mrb[0].mxu0
        %v2941 = vpop.f32.mrb[0].mxu0
        %v2942 = vadd.f32 0.0, %v2941
        %v2943 = vpop.f32.mrb[0].mxu0
        %2944 = vmatprep.mubr.bf16.mxu0 0
        %2945 = vmatmul.mubr.bf16.gmra.mrb[0].mxu0 %v1965
        %v2946 = vpop.f32.mrb[0].mxu0
        %v2947 = vadd.f32 0.0, %v2946
        %v2948 = vpop.f32.mrb[0].mxu0
        %v2949 = vpop.f32.mrb[0].mxu0
        %v2950 = vadd.f32 0.0, %v2949
        %v2951 = vpop.f32.mrb[0].mxu0
        %2952 = vmatprep.mubr.bf16.mxu0 0
        %2953 = vmatmul.mubr.bf16.gmra.mrb[0].mxu0 %v1968
        %v2954 = vpop.f32.mrb[0].mxu0
        %v2955 = vadd.f32 0.0, %v2954
        %v2956 = vpop.f32.mrb[0].mxu0
        %v2957 = vpop.f32.mrb[0].mxu0
        %v2958 = vadd.f32 0.0, %v2957
        %v2959 = vpop.f32.mrb[0].mxu0
        %2960 = vmatprep.mubr.bf16.mxu0 0
        %2961 = vmatmul.mubr.bf16.gmra.mrb[0].mxu0 %v1971
        %v2962 = vpop.f32.mrb[0].mxu0
        %v2963 = vadd.f32 0.0, %v2962
        %v2964 = vpop.f32.mrb[0].mxu0
        %v2965 = vpop.f32.mrb[0].mxu0
        %v2966 = vadd.f32 0.0, %v2965
        %v2967 = vpop.f32.mrb[0].mxu0
        %2968 = vmatprep.mubr.bf16.mxu0 0
        %2969 = vmatmul.mubr.bf16.gmra.mrb[0].mxu0 %v1974
        %v2970 = vpop.f32.mrb[0].mxu0
        %v2971 = vadd.f32 0.0, %v2970
        %v2972 = vpop.f32.mrb[0].mxu0
        %v2973 = vpop.f32.mrb[0].mxu0
        %v2974 = vadd.f32 0.0, %v2973
        %v2975 = vpop.f32.mrb[0].mxu0
        %2976 = vmatprep.mubr.bf16.mxu0 0
        %2977 = vmatmul.mubr.bf16.gmra.mrb[0].mxu0 %v1977
        %v2978 = vpop.f32.mrb[0].mxu0
        %v2979 = vadd.f32 0.0, %v2978
        %v2980 = vpop.f32.mrb[0].mxu0
        %v2981 = vpop.f32.mrb[0].mxu0
        %v2982 = vadd.f32 0.0, %v2981
        %v2983 = vpop.f32.mrb[0].mxu0
        %2984 = vmatprep.mubr.bf16.mxu0 0
        %2985 = vmatmul.mubr.bf16.gmra.mrb[0].mxu0 %v1980
        %v2986 = vpop.f32.mrb[0].mxu0
        %v2987 = vadd.f32 0.0, %v2986
        %v2988 = vpop.f32.mrb[0].mxu0
        %v2989 = vpop.f32.mrb[0].mxu0
        %v2990 = vadd.f32 0.0, %v2989
        %v2991 = vpop.f32.mrb[0].mxu0
        %2992 = vmatprep.mubr.bf16.mxu0 0
        %2993 = vmatmul.mubr.bf16.gmra.mrb[0].mxu0 %v1983
        %v2994 = vpop.f32.mrb[0].mxu0
        %v2995 = vadd.f32 0.0, %v2994
        %v2996 = vpop.f32.mrb[0].mxu0
        %v2997 = vpop.f32.mrb[0].mxu0
        %v2998 = vadd.f32 0.0, %v2997
        %v2999 = vpop.f32.mrb[0].mxu0
        %3000 = vmatprep.mubr.bf16.mxu0 0
        %3001 = vmatmul.mubr.bf16.gmra.mrb[0].mxu0 %v1986
        %v3002 = vpop.f32.mrb[0].mxu0
        %v3003 = vadd.f32 0.0, %v3002
        %v3004 = vpop.f32.mrb[0].mxu0
        %v3005 = vpop.f32.mrb[0].mxu0
        %v3006 = vadd.f32 0.0, %v3005
        %v3007 = vpop.f32.mrb[0].mxu0
        %3008 = vmatprep.mubr.bf16.mxu0 0
        %3009 = vmatmul.mubr.bf16.gmra.mrb[0].mxu0 %v1989
        %v3010 = vpop.f32.mrb[0].mxu0
        %v3011 = vadd.f32 0.0, %v3010
        %v3012 = vpop.f32.mrb[0].mxu0
        %v3013 = vpop.f32.mrb[0].mxu0
        %v3014 = vadd.f32 0.0, %v3013
        %v3015 = vpop.f32.mrb[0].mxu0
        %3016 = vmatprep.mubr.bf16.mxu0 0
        %3017 = vmatmul.mubr.bf16.gmra.mrb[0].mxu0 %v1992
        %v3018 = vpop.f32.mrb[0].mxu0
        %v3019 = vadd.f32 0.0, %v3018
        %v3020 = vpop.f32.mrb[0].mxu0
        %v3021 = vpop.f32.mrb[0].mxu0
        %v3022 = vadd.f32 0.0, %v3021
        %v3023 = vpop.f32.mrb[0].mxu0
        %3024 = vmatprep.mubr.bf16.mxu0 0
        %3025 = vmatmul.mubr.bf16.gmra.mrb[0].mxu0 %v1995
        %v3026 = vpop.f32.mrb[0].mxu0
        %v3027 = vadd.f32 0.0, %v3026
        %v3028 = vpop.f32.mrb[0].mxu0
        %v3029 = vpop.f32.mrb[0].mxu0
        %v3030 = vadd.f32 0.0, %v3029
        %v3031 = vpop.f32.mrb[0].mxu0
        %3032 = vmatprep.mubr.bf16.mxu0 0
        %3033 = vmatmul.mubr.bf16.gmra.mrb[0].mxu0 %v1998
        %v3034 = vpop.f32.mrb[0].mxu0
        %v3035 = vadd.f32 0.0, %v3034
        %v3036 = vpop.f32.mrb[0].mxu0
        %v3037 = vpop.f32.mrb[0].mxu0
        %v3038 = vadd.f32 0.0, %v3037
        %v3039 = vpop.f32.mrb[0].mxu0
        %3040 = vmatprep.mubr.bf16.mxu0 0
        %3041 = vmatmul.mubr.bf16.gmra.mrb[0].mxu0 %v2001
        %v3042 = vpop.f32.mrb[0].mxu0
        %v3043 = vadd.f32 0.0, %v3042
        %v3044 = vpop.f32.mrb[0].mxu0
        %v3045 = vpop.f32.mrb[0].mxu0
        %v3046 = vadd.f32 0.0, %v3045
        %v3047 = vpop.f32.mrb[0].mxu0
        %3048 = vmatprep.mubr.bf16.mxu0 0
        %3049 = vmatmul.mubr.bf16.gmra.mrb[0].mxu0 %v2004
        %v3050 = vpop.f32.mrb[0].mxu0
        %v3051 = vadd.f32 0.0, %v3050
        %v3052 = vpop.f32.mrb[0].mxu0
        %v3053 = vpop.f32.mrb[0].mxu0
        %v3054 = vadd.f32 0.0, %v3053
        %v3055 = vpop.f32.mrb[0].mxu0
        %3056 = vmatprep.mubr.bf16.mxu0 0
        %3057 = vmatmul.mubr.bf16.gmra.mrb[0].mxu0 %v2007
        %v3058 = vpop.f32.mrb[0].mxu0
        %v3059 = vadd.f32 0.0, %v3058
        %v3060 = vpop.f32.mrb[0].mxu0
        %v3061 = vpop.f32.mrb[0].mxu0
        %v3062 = vadd.f32 0.0, %v3061
        %v3063 = vpop.f32.mrb[0].mxu0
        %3064 = vmatprep.mubr.bf16.mxu0 0
        %3065 = vmatmul.mubr.bf16.gmra.mrb[0].mxu0 %v2010
        %v3066 = vpop.f32.mrb[0].mxu0
        %v3067 = vadd.f32 0.0, %v3066
        %v3068 = vpop.f32.mrb[0].mxu0
        %v3069 = vpop.f32.mrb[0].mxu0
        %v3070 = vadd.f32 0.0, %v3069
        %v3071 = vpop.f32.mrb[0].mxu0
        %3072 = vdwg.mxu0
        %v3073 = vadd.f32 %v730, %v2051
        %v3074 = vadd.f32 %v731, %v2054
        %v3075 = vadd.f32 %v732, %v2059
        %v3076 = vadd.f32 %v733, %v2062
        %v3077 = vadd.f32 %v734, %v2067
        %v3078 = vadd.f32 %v735, %v2070
        %v3079 = vadd.f32 %v736, %v2075
        %v3080 = vadd.f32 %v737, %v2078
        %v3081 = vadd.f32 %v738, %v2083
        %v3082 = vadd.f32 %v739, %v2086
        %v3083 = vadd.f32 %v740, %v2091
        %v3084 = vadd.f32 %v741, %v2094
        %v3085 = vadd.f32 %v742, %v2099
        %v3086 = vadd.f32 %v743, %v2102
        %v3087 = vadd.f32 %v744, %v2107
        %v3088 = vadd.f32 %v745, %v2110
        %v3089 = vadd.f32 %v746, %v2115
        %v3090 = vadd.f32 %v747, %v2118
        %v3091 = vadd.f32 %v748, %v2123
        %v3092 = vadd.f32 %v749, %v2126
        %v3093 = vadd.f32 %v750, %v2131
        %v3094 = vadd.f32 %v751, %v2134
        %v3095 = vadd.f32 %v752, %v2139
        %v3096 = vadd.f32 %v753, %v2142
        %v3097 = vadd.f32 %v754, %v2147
        %v3098 = vadd.f32 %v755, %v2150
        %v3099 = vadd.f32 %v756, %v2155
        %v3100 = vadd.f32 %v757, %v2158
        %v3101 = vadd.f32 %v758, %v2163
        %v3102 = vadd.f32 %v759, %v2166
        %v3103 = vadd.f32 %v760, %v2171
        %v3104 = vadd.f32 %v761, %v2174
        %v3105 = vadd.f32 %v762, %v2179
        %v3106 = vadd.f32 %v763, %v2182
        %v3107 = vadd.f32 %v764, %v2187
        %v3108 = vadd.f32 %v765, %v2190
        %v3109 = vadd.f32 %v766, %v2195
        %v3110 = vadd.f32 %v767, %v2198
        %v3111 = vadd.f32 %v768, %v2203
        %v3112 = vadd.f32 %v769, %v2206
        %v3113 = vadd.f32 %v770, %v2211
        %v3114 = vadd.f32 %v771, %v2214
        %v3115 = vadd.f32 %v772, %v2219
        %v3116 = vadd.f32 %v773, %v2222
        %v3117 = vadd.f32 %v774, %v2227
        %v3118 = vadd.f32 %v775, %v2230
        %v3119 = vadd.f32 %v776, %v2235
        %v3120 = vadd.f32 %v777, %v2238
        %v3121 = vadd.f32 %v778, %v2243
        %v3122 = vadd.f32 %v779, %v2246
        %v3123 = vadd.f32 %v780, %v2251
        %v3124 = vadd.f32 %v781, %v2254
        %v3125 = vadd.f32 %v782, %v2259
        %v3126 = vadd.f32 %v783, %v2262
        %v3127 = vadd.f32 %v784, %v2267
        %v3128 = vadd.f32 %v785, %v2270
        %v3129 = vadd.f32 %v786, %v2275
        %v3130 = vadd.f32 %v787, %v2278
        %v3131 = vadd.f32 %v788, %v2283
        %v3132 = vadd.f32 %v789, %v2286
        %v3133 = vadd.f32 %v790, %v2291
        %v3134 = vadd.f32 %v791, %v2294
        %v3135 = vadd.f32 %v792, %v2299
        %v3136 = vadd.f32 %v793, %v2302
        %v3137 = vadd.f32 %v794, %v2307
        %v3138 = vadd.f32 %v795, %v2310
        %v3139 = vadd.f32 %v796, %v2315
        %v3140 = vadd.f32 %v797, %v2318
        %v3141 = vadd.f32 %v798, %v2323
        %v3142 = vadd.f32 %v799, %v2326
        %v3143 = vadd.f32 %v800, %v2331
        %v3144 = vadd.f32 %v801, %v2334
        %v3145 = vadd.f32 %v802, %v2339
        %v3146 = vadd.f32 %v803, %v2342
        %v3147 = vadd.f32 %v804, %v2347
        %v3148 = vadd.f32 %v805, %v2350
        %v3149 = vadd.f32 %v806, %v2355
        %v3150 = vadd.f32 %v807, %v2358
        %v3151 = vadd.f32 %v808, %v2363
        %v3152 = vadd.f32 %v809, %v2366
        %v3153 = vadd.f32 %v810, %v2371
        %v3154 = vadd.f32 %v811, %v2374
        %v3155 = vadd.f32 %v812, %v2379
        %v3156 = vadd.f32 %v813, %v2382
        %v3157 = vadd.f32 %v814, %v2387
        %v3158 = vadd.f32 %v815, %v2390
        %v3159 = vadd.f32 %v816, %v2395
        %v3160 = vadd.f32 %v817, %v2398
        %v3161 = vadd.f32 %v818, %v2403
        %v3162 = vadd.f32 %v819, %v2406
        %v3163 = vadd.f32 %v820, %v2411
        %v3164 = vadd.f32 %v821, %v2414
        %v3165 = vadd.f32 %v822, %v2419
        %v3166 = vadd.f32 %v823, %v2422
        %v3167 = vadd.f32 %v824, %v2427
        %v3168 = vadd.f32 %v825, %v2430
        %v3169 = vadd.f32 %v826, %v2435
        %v3170 = vadd.f32 %v827, %v2438
        %v3171 = vadd.f32 %v828, %v2443
        %v3172 = vadd.f32 %v829, %v2446
        %v3173 = vadd.f32 %v830, %v2451
        %v3174 = vadd.f32 %v831, %v2454
        %v3175 = vadd.f32 %v832, %v2459
        %v3176 = vadd.f32 %v833, %v2462
        %v3177 = vadd.f32 %v834, %v2467
        %v3178 = vadd.f32 %v835, %v2470
        %v3179 = vadd.f32 %v836, %v2475
        %v3180 = vadd.f32 %v837, %v2478
        %v3181 = vadd.f32 %v838, %v2483
        %v3182 = vadd.f32 %v839, %v2486
        %v3183 = vadd.f32 %v840, %v2491
        %v3184 = vadd.f32 %v841, %v2494
        %v3185 = vadd.f32 %v842, %v2499
        %v3186 = vadd.f32 %v843, %v2502
        %v3187 = vadd.f32 %v844, %v2507
        %v3188 = vadd.f32 %v845, %v2510
        %v3189 = vadd.f32 %v846, %v2515
        %v3190 = vadd.f32 %v847, %v2518
        %v3191 = vadd.f32 %v848, %v2523
        %v3192 = vadd.f32 %v849, %v2526
        %v3193 = vadd.f32 %v850, %v2531
        %v3194 = vadd.f32 %v851, %v2534
        %v3195 = vadd.f32 %v852, %v2539
        %v3196 = vadd.f32 %v853, %v2542
        %v3197 = vadd.f32 %v854, %v2547
        %v3198 = vadd.f32 %v855, %v2550
        %v3199 = vadd.f32 %v856, %v2555
        %v3200 = vadd.f32 %v857, %v2558
        %v3201 = vadd.f32 %v858, %v2563
        %v3202 = vadd.f32 %v859, %v2566
        %v3203 = vadd.f32 %v860, %v2571
        %v3204 = vadd.f32 %v861, %v2574
        %v3205 = vadd.f32 %v862, %v2579
        %v3206 = vadd.f32 %v863, %v2582
        %v3207 = vadd.f32 %v864, %v2587
        %v3208 = vadd.f32 %v865, %v2590
        %v3209 = vadd.f32 %v866, %v2595
        %v3210 = vadd.f32 %v867, %v2598
        %v3211 = vadd.f32 %v868, %v2603
        %v3212 = vadd.f32 %v869, %v2606
        %v3213 = vadd.f32 %v870, %v2611
        %v3214 = vadd.f32 %v871, %v2614
        %v3215 = vadd.f32 %v872, %v2619
        %v3216 = vadd.f32 %v873, %v2622
        %v3217 = vadd.f32 %v874, %v2627
        %v3218 = vadd.f32 %v875, %v2630
        %v3219 = vadd.f32 %v876, %v2635
        %v3220 = vadd.f32 %v877, %v2638
        %v3221 = vadd.f32 %v878, %v2643
        %v3222 = vadd.f32 %v879, %v2646
        %v3223 = vadd.f32 %v880, %v2651
        %v3224 = vadd.f32 %v881, %v2654
        %v3225 = vadd.f32 %v882, %v2659
        %v3226 = vadd.f32 %v883, %v2662
        %v3227 = vadd.f32 %v884, %v2667
        %v3228 = vadd.f32 %v885, %v2670
        %v3229 = vadd.f32 %v886, %v2675
        %v3230 = vadd.f32 %v887, %v2678
        %v3231 = vadd.f32 %v888, %v2683
        %v3232 = vadd.f32 %v889, %v2686
        %v3233 = vadd.f32 %v890, %v2691
        %v3234 = vadd.f32 %v891, %v2694
        %v3235 = vadd.f32 %v892, %v2699
        %v3236 = vadd.f32 %v893, %v2702
        %v3237 = vadd.f32 %v894, %v2707
        %v3238 = vadd.f32 %v895, %v2710
        %v3239 = vadd.f32 %v896, %v2715
        %v3240 = vadd.f32 %v897, %v2718
        %v3241 = vadd.f32 %v898, %v2723
        %v3242 = vadd.f32 %v899, %v2726
        %v3243 = vadd.f32 %v900, %v2731
        %v3244 = vadd.f32 %v901, %v2734
        %v3245 = vadd.f32 %v902, %v2739
        %v3246 = vadd.f32 %v903, %v2742
        %v3247 = vadd.f32 %v904, %v2747
        %v3248 = vadd.f32 %v905, %v2750
        %v3249 = vadd.f32 %v906, %v2755
        %v3250 = vadd.f32 %v907, %v2758
        %v3251 = vadd.f32 %v908, %v2763
        %v3252 = vadd.f32 %v909, %v2766
        %v3253 = vadd.f32 %v910, %v2771
        %v3254 = vadd.f32 %v911, %v2774
        %v3255 = vadd.f32 %v912, %v2779
        %v3256 = vadd.f32 %v913, %v2782
        %v3257 = vadd.f32 %v914, %v2787
        %v3258 = vadd.f32 %v915, %v2790
        %v3259 = vadd.f32 %v916, %v2795
        %v3260 = vadd.f32 %v917, %v2798
        %v3261 = vadd.f32 %v918, %v2803
        %v3262 = vadd.f32 %v919, %v2806
        %v3263 = vadd.f32 %v920, %v2811
        %v3264 = vadd.f32 %v921, %v2814
        %v3265 = vadd.f32 %v922, %v2819
        %v3266 = vadd.f32 %v923, %v2822
        %v3267 = vadd.f32 %v924, %v2827
        %v3268 = vadd.f32 %v925, %v2830
        %v3269 = vadd.f32 %v926, %v2835
        %v3270 = vadd.f32 %v927, %v2838
        %v3271 = vadd.f32 %v928, %v2843
        %v3272 = vadd.f32 %v929, %v2846
        %v3273 = vadd.f32 %v930, %v2851
        %v3274 = vadd.f32 %v931, %v2854
        %v3275 = vadd.f32 %v932, %v2859
        %v3276 = vadd.f32 %v933, %v2862
        %v3277 = vadd.f32 %v934, %v2867
        %v3278 = vadd.f32 %v935, %v2870
        %v3279 = vadd.f32 %v936, %v2875
        %v3280 = vadd.f32 %v937, %v2878
        %v3281 = vadd.f32 %v938, %v2883
        %v3282 = vadd.f32 %v939, %v2886
        %v3283 = vadd.f32 %v940, %v2891
        %v3284 = vadd.f32 %v941, %v2894
        %v3285 = vadd.f32 %v942, %v2899
        %v3286 = vadd.f32 %v943, %v2902
        %v3287 = vadd.f32 %v944, %v2907
        %v3288 = vadd.f32 %v945, %v2910
        %v3289 = vadd.f32 %v946, %v2915
        %v3290 = vadd.f32 %v947, %v2918
        %v3291 = vadd.f32 %v948, %v2923
        %v3292 = vadd.f32 %v949, %v2926
        %v3293 = vadd.f32 %v950, %v2931
        %v3294 = vadd.f32 %v951, %v2934
        %v3295 = vadd.f32 %v952, %v2939
        %v3296 = vadd.f32 %v953, %v2942
        %v3297 = vadd.f32 %v954, %v2947
        %v3298 = vadd.f32 %v955, %v2950
        %v3299 = vadd.f32 %v956, %v2955
        %v3300 = vadd.f32 %v957, %v2958
        %v3301 = vadd.f32 %v958, %v2963
        %v3302 = vadd.f32 %v959, %v2966
        %v3303 = vadd.f32 %v960, %v2971
        %v3304 = vadd.f32 %v961, %v2974
        %v3305 = vadd.f32 %v962, %v2979
        %v3306 = vadd.f32 %v963, %v2982
        %v3307 = vadd.f32 %v964, %v2987
        %v3308 = vadd.f32 %v965, %v2990
        %v3309 = vadd.f32 %v966, %v2995
        %v3310 = vadd.f32 %v967, %v2998
        %v3311 = vadd.f32 %v968, %v3003
        %v3312 = vadd.f32 %v969, %v3006
        %v3313 = vadd.f32 %v970, %v3011
        %v3314 = vadd.f32 %v971, %v3014
        %v3315 = vadd.f32 %v972, %v3019
        %v3316 = vadd.f32 %v973, %v3022
        %v3317 = vadd.f32 %v974, %v3027
        %v3318 = vadd.f32 %v975, %v3030
        %v3319 = vadd.f32 %v976, %v3035
        %v3320 = vadd.f32 %v977, %v3038
        %v3321 = vadd.f32 %v978, %v3043
        %v3322 = vadd.f32 %v979, %v3046
        %v3323 = vadd.f32 %v980, %v3051
        %v3324 = vadd.f32 %v981, %v3054
        %v3325 = vadd.f32 %v982, %v3059
        %v3326 = vadd.f32 %v983, %v3062
        %v3327 = vadd.f32 %v984, %v3067
        %v3328 = vadd.f32 %v985, %v3070
        %3329 = vst.msk [vmem:[#allocation2] sm:$0xff] %vm217, %v3073
        %3330 = vst.msk [vmem:[#allocation2 + $0x8] sm:$0xff] %vm217, %v3074
        %3331 = vst.msk [vmem:[#allocation2 + $0x10] sm:$0xff] %vm217, %v3075
        %3332 = vst.msk [vmem:[#allocation2 + $0x18] sm:$0xff] %vm217, %v3076
        %3333 = vst.msk [vmem:[#allocation2 + $0x20] sm:$0xff] %vm217, %v3077
        %3334 = vst.msk [vmem:[#allocation2 + $0x28] sm:$0xff] %vm217, %v3078
        %3335 = vst.msk [vmem:[#allocation2 + $0x30] sm:$0xff] %vm217, %v3079
        %3336 = vst.msk [vmem:[#allocation2 + $0x38] sm:$0xff] %vm217, %v3080
        %3337 = vst.msk [vmem:[#allocation2 + $0x40] sm:$0xff] %vm217, %v3081
        %3338 = vst.msk [vmem:[#allocation2 + $0x48] sm:$0xff] %vm217, %v3082
        %3339 = vst.msk [vmem:[#allocation2 + $0x50] sm:$0xff] %vm217, %v3083
        %3340 = vst.msk [vmem:[#allocation2 + $0x58] sm:$0xff] %vm217, %v3084
        %3341 = vst.msk [vmem:[#allocation2 + $0x60] sm:$0xff] %vm217, %v3085
        %3342 = vst.msk [vmem:[#allocation2 + $0x68] sm:$0xff] %vm217, %v3086
        %3343 = vst.msk [vmem:[#allocation2 + $0x70] sm:$0xff] %vm217, %v3087
        %3344 = vst.msk [vmem:[#allocation2 + $0x78] sm:$0xff] %vm217, %v3088
        %3345 = vst.msk [vmem:[#allocation2 + $0x80] sm:$0xff] %vm217, %v3089
        %3346 = vst.msk [vmem:[#allocation2 + $0x88] sm:$0xff] %vm217, %v3090
        %3347 = vst.msk [vmem:[#allocation2 + $0x90] sm:$0xff] %vm217, %v3091
        %3348 = vst.msk [vmem:[#allocation2 + $0x98] sm:$0xff] %vm217, %v3092
        %3349 = vst.msk [vmem:[#allocation2 + $0xa0] sm:$0xff] %vm217, %v3093
        %3350 = vst.msk [vmem:[#allocation2 + $0xa8] sm:$0xff] %vm217, %v3094
        %3351 = vst.msk [vmem:[#allocation2 + $0xb0] sm:$0xff] %vm217, %v3095
        %3352 = vst.msk [vmem:[#allocation2 + $0xb8] sm:$0xff] %vm217, %v3096
        %3353 = vst.msk [vmem:[#allocation2 + $0xc0] sm:$0xff] %vm217, %v3097
        %3354 = vst.msk [vmem:[#allocation2 + $0xc8] sm:$0xff] %vm217, %v3098
        %3355 = vst.msk [vmem:[#allocation2 + $0xd0] sm:$0xff] %vm217, %v3099
        %3356 = vst.msk [vmem:[#allocation2 + $0xd8] sm:$0xff] %vm217, %v3100
        %3357 = vst.msk [vmem:[#allocation2 + $0xe0] sm:$0xff] %vm217, %v3101
        %3358 = vst.msk [vmem:[#allocation2 + $0xe8] sm:$0xff] %vm217, %v3102
        %3359 = vst.msk [vmem:[#allocation2 + $0xf0] sm:$0xff] %vm217, %v3103
        %3360 = vst.msk [vmem:[#allocation2 + $0xf8] sm:$0xff] %vm217, %v3104
        %3361 = vst.msk [vmem:[#allocation2 + $0x100] sm:$0xff] %vm217, %v3105
        %3362 = vst.msk [vmem:[#allocation2 + $0x108] sm:$0xff] %vm217, %v3106
        %3363 = vst.msk [vmem:[#allocation2 + $0x110] sm:$0xff] %vm217, %v3107
        %3364 = vst.msk [vmem:[#allocation2 + $0x118] sm:$0xff] %vm217, %v3108
        %3365 = vst.msk [vmem:[#allocation2 + $0x120] sm:$0xff] %vm217, %v3109
        %3366 = vst.msk [vmem:[#allocation2 + $0x128] sm:$0xff] %vm217, %v3110
        %3367 = vst.msk [vmem:[#allocation2 + $0x130] sm:$0xff] %vm217, %v3111
        %3368 = vst.msk [vmem:[#allocation2 + $0x138] sm:$0xff] %vm217, %v3112
        %3369 = vst.msk [vmem:[#allocation2 + $0x140] sm:$0xff] %vm217, %v3113
        %3370 = vst.msk [vmem:[#allocation2 + $0x148] sm:$0xff] %vm217, %v3114
        %3371 = vst.msk [vmem:[#allocation2 + $0x150] sm:$0xff] %vm217, %v3115
        %3372 = vst.msk [vmem:[#allocation2 + $0x158] sm:$0xff] %vm217, %v3116
        %3373 = vst.msk [vmem:[#allocation2 + $0x160] sm:$0xff] %vm217, %v3117
        %3374 = vst.msk [vmem:[#allocation2 + $0x168] sm:$0xff] %vm217, %v3118
        %3375 = vst.msk [vmem:[#allocation2 + $0x170] sm:$0xff] %vm217, %v3119
        %3376 = vst.msk [vmem:[#allocation2 + $0x178] sm:$0xff] %vm217, %v3120
        %3377 = vst.msk [vmem:[#allocation2 + $0x180] sm:$0xff] %vm217, %v3121
        %3378 = vst.msk [vmem:[#allocation2 + $0x188] sm:$0xff] %vm217, %v3122
        %3379 = vst.msk [vmem:[#allocation2 + $0x190] sm:$0xff] %vm217, %v3123
        %3380 = vst.msk [vmem:[#allocation2 + $0x198] sm:$0xff] %vm217, %v3124
        %3381 = vst.msk [vmem:[#allocation2 + $0x1a0] sm:$0xff] %vm217, %v3125
        %3382 = vst.msk [vmem:[#allocation2 + $0x1a8] sm:$0xff] %vm217, %v3126
        %3383 = vst.msk [vmem:[#allocation2 + $0x1b0] sm:$0xff] %vm217, %v3127
        %3384 = vst.msk [vmem:[#allocation2 + $0x1b8] sm:$0xff] %vm217, %v3128
        %3385 = vst.msk [vmem:[#allocation2 + $0x1c0] sm:$0xff] %vm217, %v3129
        %3386 = vst.msk [vmem:[#allocation2 + $0x1c8] sm:$0xff] %vm217, %v3130
        %3387 = vst.msk [vmem:[#allocation2 + $0x1d0] sm:$0xff] %vm217, %v3131
        %3388 = vst.msk [vmem:[#allocation2 + $0x1d8] sm:$0xff] %vm217, %v3132
        %3389 = vst.msk [vmem:[#allocation2 + $0x1e0] sm:$0xff] %vm217, %v3133
        %3390 = vst.msk [vmem:[#allocation2 + $0x1e8] sm:$0xff] %vm217, %v3134
        %3391 = vst.msk [vmem:[#allocation2 + $0x1f0] sm:$0xff] %vm217, %v3135
        %3392 = vst.msk [vmem:[#allocation2 + $0x1f8] sm:$0xff] %vm217, %v3136
        %3393 = vst.msk [vmem:[#allocation2 + $0x200] sm:$0xff] %vm217, %v3137
        %3394 = vst.msk [vmem:[#allocation2 + $0x208] sm:$0xff] %vm217, %v3138
        %3395 = vst.msk [vmem:[#allocation2 + $0x210] sm:$0xff] %vm217, %v3139
        %3396 = vst.msk [vmem:[#allocation2 + $0x218] sm:$0xff] %vm217, %v3140
        %3397 = vst.msk [vmem:[#allocation2 + $0x220] sm:$0xff] %vm217, %v3141
        %3398 = vst.msk [vmem:[#allocation2 + $0x228] sm:$0xff] %vm217, %v3142
        %3399 = vst.msk [vmem:[#allocation2 + $0x230] sm:$0xff] %vm217, %v3143
        %3400 = vst.msk [vmem:[#allocation2 + $0x238] sm:$0xff] %vm217, %v3144
        %3401 = vst.msk [vmem:[#allocation2 + $0x240] sm:$0xff] %vm217, %v3145
        %3402 = vst.msk [vmem:[#allocation2 + $0x248] sm:$0xff] %vm217, %v3146
        %3403 = vst.msk [vmem:[#allocation2 + $0x250] sm:$0xff] %vm217, %v3147
        %3404 = vst.msk [vmem:[#allocation2 + $0x258] sm:$0xff] %vm217, %v3148
        %3405 = vst.msk [vmem:[#allocation2 + $0x260] sm:$0xff] %vm217, %v3149
        %3406 = vst.msk [vmem:[#allocation2 + $0x268] sm:$0xff] %vm217, %v3150
        %3407 = vst.msk [vmem:[#allocation2 + $0x270] sm:$0xff] %vm217, %v3151
        %3408 = vst.msk [vmem:[#allocation2 + $0x278] sm:$0xff] %vm217, %v3152
        %3409 = vst.msk [vmem:[#allocation2 + $0x280] sm:$0xff] %vm217, %v3153
        %3410 = vst.msk [vmem:[#allocation2 + $0x288] sm:$0xff] %vm217, %v3154
        %3411 = vst.msk [vmem:[#allocation2 + $0x290] sm:$0xff] %vm217, %v3155
        %3412 = vst.msk [vmem:[#allocation2 + $0x298] sm:$0xff] %vm217, %v3156
        %3413 = vst.msk [vmem:[#allocation2 + $0x2a0] sm:$0xff] %vm217, %v3157
        %3414 = vst.msk [vmem:[#allocation2 + $0x2a8] sm:$0xff] %vm217, %v3158
        %3415 = vst.msk [vmem:[#allocation2 + $0x2b0] sm:$0xff] %vm217, %v3159
        %3416 = vst.msk [vmem:[#allocation2 + $0x2b8] sm:$0xff] %vm217, %v3160
        %3417 = vst.msk [vmem:[#allocation2 + $0x2c0] sm:$0xff] %vm217, %v3161
        %3418 = vst.msk [vmem:[#allocation2 + $0x2c8] sm:$0xff] %vm217, %v3162
        %3419 = vst.msk [vmem:[#allocation2 + $0x2d0] sm:$0xff] %vm217, %v3163
        %3420 = vst.msk [vmem:[#allocation2 + $0x2d8] sm:$0xff] %vm217, %v3164
        %3421 = vst.msk [vmem:[#allocation2 + $0x2e0] sm:$0xff] %vm217, %v3165
        %3422 = vst.msk [vmem:[#allocation2 + $0x2e8] sm:$0xff] %vm217, %v3166
        %3423 = vst.msk [vmem:[#allocation2 + $0x2f0] sm:$0xff] %vm217, %v3167
        %3424 = vst.msk [vmem:[#allocation2 + $0x2f8] sm:$0xff] %vm217, %v3168
        %3425 = vst.msk [vmem:[#allocation2 + $0x300] sm:$0xff] %vm217, %v3169
        %3426 = vst.msk [vmem:[#allocation2 + $0x308] sm:$0xff] %vm217, %v3170
        %3427 = vst.msk [vmem:[#allocation2 + $0x310] sm:$0xff] %vm217, %v3171
        %3428 = vst.msk [vmem:[#allocation2 + $0x318] sm:$0xff] %vm217, %v3172
        %3429 = vst.msk [vmem:[#allocation2 + $0x320] sm:$0xff] %vm217, %v3173
        %3430 = vst.msk [vmem:[#allocation2 + $0x328] sm:$0xff] %vm217, %v3174
        %3431 = vst.msk [vmem:[#allocation2 + $0x330] sm:$0xff] %vm217, %v3175
        %3432 = vst.msk [vmem:[#allocation2 + $0x338] sm:$0xff] %vm217, %v3176
        %3433 = vst.msk [vmem:[#allocation2 + $0x340] sm:$0xff] %vm217, %v3177
        %3434 = vst.msk [vmem:[#allocation2 + $0x348] sm:$0xff] %vm217, %v3178
        %3435 = vst.msk [vmem:[#allocation2 + $0x350] sm:$0xff] %vm217, %v3179
        %3436 = vst.msk [vmem:[#allocation2 + $0x358] sm:$0xff] %vm217, %v3180
        %3437 = vst.msk [vmem:[#allocation2 + $0x360] sm:$0xff] %vm217, %v3181
        %3438 = vst.msk [vmem:[#allocation2 + $0x368] sm:$0xff] %vm217, %v3182
        %3439 = vst.msk [vmem:[#allocation2 + $0x370] sm:$0xff] %vm217, %v3183
        %3440 = vst.msk [vmem:[#allocation2 + $0x378] sm:$0xff] %vm217, %v3184
        %3441 = vst.msk [vmem:[#allocation2 + $0x380] sm:$0xff] %vm217, %v3185
        %3442 = vst.msk [vmem:[#allocation2 + $0x388] sm:$0xff] %vm217, %v3186
        %3443 = vst.msk [vmem:[#allocation2 + $0x390] sm:$0xff] %vm217, %v3187
        %3444 = vst.msk [vmem:[#allocation2 + $0x398] sm:$0xff] %vm217, %v3188
        %3445 = vst.msk [vmem:[#allocation2 + $0x3a0] sm:$0xff] %vm217, %v3189
        %3446 = vst.msk [vmem:[#allocation2 + $0x3a8] sm:$0xff] %vm217, %v3190
        %3447 = vst.msk [vmem:[#allocation2 + $0x3b0] sm:$0xff] %vm217, %v3191
        %3448 = vst.msk [vmem:[#allocation2 + $0x3b8] sm:$0xff] %vm217, %v3192
        %3449 = vst.msk [vmem:[#allocation2 + $0x3c0] sm:$0xff] %vm217, %v3193
        %3450 = vst.msk [vmem:[#allocation2 + $0x3c8] sm:$0xff] %vm217, %v3194
        %3451 = vst.msk [vmem:[#allocation2 + $0x3d0] sm:$0xff] %vm217, %v3195
        %3452 = vst.msk [vmem:[#allocation2 + $0x3d8] sm:$0xff] %vm217, %v3196
        %3453 = vst.msk [vmem:[#allocation2 + $0x3e0] sm:$0xff] %vm217, %v3197
        %3454 = vst.msk [vmem:[#allocation2 + $0x3e8] sm:$0xff] %vm217, %v3198
        %3455 = vst.msk [vmem:[#allocation2 + $0x3f0] sm:$0xff] %vm217, %v3199
        %3456 = vst.msk [vmem:[#allocation2 + $0x3f8] sm:$0xff] %vm217, %v3200
        %3457 = vst.msk [vmem:[#allocation2 + $0x400] sm:$0xff] %vm217, %v3201
        %3458 = vst.msk [vmem:[#allocation2 + $0x408] sm:$0xff] %vm217, %v3202
        %3459 = vst.msk [vmem:[#allocation2 + $0x410] sm:$0xff] %vm217, %v3203
        %3460 = vst.msk [vmem:[#allocation2 + $0x418] sm:$0xff] %vm217, %v3204
        %3461 = vst.msk [vmem:[#allocation2 + $0x420] sm:$0xff] %vm217, %v3205
        %3462 = vst.msk [vmem:[#allocation2 + $0x428] sm:$0xff] %vm217, %v3206
        %3463 = vst.msk [vmem:[#allocation2 + $0x430] sm:$0xff] %vm217, %v3207
        %3464 = vst.msk [vmem:[#allocation2 + $0x438] sm:$0xff] %vm217, %v3208
        %3465 = vst.msk [vmem:[#allocation2 + $0x440] sm:$0xff] %vm217, %v3209
        %3466 = vst.msk [vmem:[#allocation2 + $0x448] sm:$0xff] %vm217, %v3210
        %3467 = vst.msk [vmem:[#allocation2 + $0x450] sm:$0xff] %vm217, %v3211
        %3468 = vst.msk [vmem:[#allocation2 + $0x458] sm:$0xff] %vm217, %v3212
        %3469 = vst.msk [vmem:[#allocation2 + $0x460] sm:$0xff] %vm217, %v3213
        %3470 = vst.msk [vmem:[#allocation2 + $0x468] sm:$0xff] %vm217, %v3214
        %3471 = vst.msk [vmem:[#allocation2 + $0x470] sm:$0xff] %vm217, %v3215
        %3472 = vst.msk [vmem:[#allocation2 + $0x478] sm:$0xff] %vm217, %v3216
        %3473 = vst.msk [vmem:[#allocation2 + $0x480] sm:$0xff] %vm217, %v3217
        %3474 = vst.msk [vmem:[#allocation2 + $0x488] sm:$0xff] %vm217, %v3218
        %3475 = vst.msk [vmem:[#allocation2 + $0x490] sm:$0xff] %vm217, %v3219
        %3476 = vst.msk [vmem:[#allocation2 + $0x498] sm:$0xff] %vm217, %v3220
        %3477 = vst.msk [vmem:[#allocation2 + $0x4a0] sm:$0xff] %vm217, %v3221
        %3478 = vst.msk [vmem:[#allocation2 + $0x4a8] sm:$0xff] %vm217, %v3222
        %3479 = vst.msk [vmem:[#allocation2 + $0x4b0] sm:$0xff] %vm217, %v3223
        %3480 = vst.msk [vmem:[#allocation2 + $0x4b8] sm:$0xff] %vm217, %v3224
        %3481 = vst.msk [vmem:[#allocation2 + $0x4c0] sm:$0xff] %vm217, %v3225
        %3482 = vst.msk [vmem:[#allocation2 + $0x4c8] sm:$0xff] %vm217, %v3226
        %3483 = vst.msk [vmem:[#allocation2 + $0x4d0] sm:$0xff] %vm217, %v3227
        %3484 = vst.msk [vmem:[#allocation2 + $0x4d8] sm:$0xff] %vm217, %v3228
        %3485 = vst.msk [vmem:[#allocation2 + $0x4e0] sm:$0xff] %vm217, %v3229
        %3486 = vst.msk [vmem:[#allocation2 + $0x4e8] sm:$0xff] %vm217, %v3230
        %3487 = vst.msk [vmem:[#allocation2 + $0x4f0] sm:$0xff] %vm217, %v3231
        %3488 = vst.msk [vmem:[#allocation2 + $0x4f8] sm:$0xff] %vm217, %v3232
        %3489 = vst.msk [vmem:[#allocation2 + $0x500] sm:$0xff] %vm217, %v3233
        %3490 = vst.msk [vmem:[#allocation2 + $0x508] sm:$0xff] %vm217, %v3234
        %3491 = vst.msk [vmem:[#allocation2 + $0x510] sm:$0xff] %vm217, %v3235
        %3492 = vst.msk [vmem:[#allocation2 + $0x518] sm:$0xff] %vm217, %v3236
        %3493 = vst.msk [vmem:[#allocation2 + $0x520] sm:$0xff] %vm217, %v3237
        %3494 = vst.msk [vmem:[#allocation2 + $0x528] sm:$0xff] %vm217, %v3238
        %3495 = vst.msk [vmem:[#allocation2 + $0x530] sm:$0xff] %vm217, %v3239
        %3496 = vst.msk [vmem:[#allocation2 + $0x538] sm:$0xff] %vm217, %v3240
        %3497 = vst.msk [vmem:[#allocation2 + $0x540] sm:$0xff] %vm217, %v3241
        %3498 = vst.msk [vmem:[#allocation2 + $0x548] sm:$0xff] %vm217, %v3242
        %3499 = vst.msk [vmem:[#allocation2 + $0x550] sm:$0xff] %vm217, %v3243
        %3500 = vst.msk [vmem:[#allocation2 + $0x558] sm:$0xff] %vm217, %v3244
        %3501 = vst.msk [vmem:[#allocation2 + $0x560] sm:$0xff] %vm217, %v3245
        %3502 = vst.msk [vmem:[#allocation2 + $0x568] sm:$0xff] %vm217, %v3246
        %3503 = vst.msk [vmem:[#allocation2 + $0x570] sm:$0xff] %vm217, %v3247
        %3504 = vst.msk [vmem:[#allocation2 + $0x578] sm:$0xff] %vm217, %v3248
        %3505 = vst.msk [vmem:[#allocation2 + $0x580] sm:$0xff] %vm217, %v3249
        %3506 = vst.msk [vmem:[#allocation2 + $0x588] sm:$0xff] %vm217, %v3250
        %3507 = vst.msk [vmem:[#allocation2 + $0x590] sm:$0xff] %vm217, %v3251
        %3508 = vst.msk [vmem:[#allocation2 + $0x598] sm:$0xff] %vm217, %v3252
        %3509 = vst.msk [vmem:[#allocation2 + $0x5a0] sm:$0xff] %vm217, %v3253
        %3510 = vst.msk [vmem:[#allocation2 + $0x5a8] sm:$0xff] %vm217, %v3254
        %3511 = vst.msk [vmem:[#allocation2 + $0x5b0] sm:$0xff] %vm217, %v3255
        %3512 = vst.msk [vmem:[#allocation2 + $0x5b8] sm:$0xff] %vm217, %v3256
        %3513 = vst.msk [vmem:[#allocation2 + $0x5c0] sm:$0xff] %vm217, %v3257
        %3514 = vst.msk [vmem:[#allocation2 + $0x5c8] sm:$0xff] %vm217, %v3258
        %3515 = vst.msk [vmem:[#allocation2 + $0x5d0] sm:$0xff] %vm217, %v3259
        %3516 = vst.msk [vmem:[#allocation2 + $0x5d8] sm:$0xff] %vm217, %v3260
        %3517 = vst.msk [vmem:[#allocation2 + $0x5e0] sm:$0xff] %vm217, %v3261
        %3518 = vst.msk [vmem:[#allocation2 + $0x5e8] sm:$0xff] %vm217, %v3262
        %3519 = vst.msk [vmem:[#allocation2 + $0x5f0] sm:$0xff] %vm217, %v3263
        %3520 = vst.msk [vmem:[#allocation2 + $0x5f8] sm:$0xff] %vm217, %v3264
        %3521 = vst.msk [vmem:[#allocation2 + $0x600] sm:$0xff] %vm217, %v3265
        %3522 = vst.msk [vmem:[#allocation2 + $0x608] sm:$0xff] %vm217, %v3266
        %3523 = vst.msk [vmem:[#allocation2 + $0x610] sm:$0xff] %vm217, %v3267
        %3524 = vst.msk [vmem:[#allocation2 + $0x618] sm:$0xff] %vm217, %v3268
        %3525 = vst.msk [vmem:[#allocation2 + $0x620] sm:$0xff] %vm217, %v3269
        %3526 = vst.msk [vmem:[#allocation2 + $0x628] sm:$0xff] %vm217, %v3270
        %3527 = vst.msk [vmem:[#allocation2 + $0x630] sm:$0xff] %vm217, %v3271
        %3528 = vst.msk [vmem:[#allocation2 + $0x638] sm:$0xff] %vm217, %v3272
        %3529 = vst.msk [vmem:[#allocation2 + $0x640] sm:$0xff] %vm217, %v3273
        %3530 = vst.msk [vmem:[#allocation2 + $0x648] sm:$0xff] %vm217, %v3274
        %3531 = vst.msk [vmem:[#allocation2 + $0x650] sm:$0xff] %vm217, %v3275
        %3532 = vst.msk [vmem:[#allocation2 + $0x658] sm:$0xff] %vm217, %v3276
        %3533 = vst.msk [vmem:[#allocation2 + $0x660] sm:$0xff] %vm217, %v3277
        %3534 = vst.msk [vmem:[#allocation2 + $0x668] sm:$0xff] %vm217, %v3278
        %3535 = vst.msk [vmem:[#allocation2 + $0x670] sm:$0xff] %vm217, %v3279
        %3536 = vst.msk [vmem:[#allocation2 + $0x678] sm:$0xff] %vm217, %v3280
        %3537 = vst.msk [vmem:[#allocation2 + $0x680] sm:$0xff] %vm217, %v3281
        %3538 = vst.msk [vmem:[#allocation2 + $0x688] sm:$0xff] %vm217, %v3282
        %3539 = vst.msk [vmem:[#allocation2 + $0x690] sm:$0xff] %vm217, %v3283
        %3540 = vst.msk [vmem:[#allocation2 + $0x698] sm:$0xff] %vm217, %v3284
        %3541 = vst.msk [vmem:[#allocation2 + $0x6a0] sm:$0xff] %vm217, %v3285
        %3542 = vst.msk [vmem:[#allocation2 + $0x6a8] sm:$0xff] %vm217, %v3286
        %3543 = vst.msk [vmem:[#allocation2 + $0x6b0] sm:$0xff] %vm217, %v3287
        %3544 = vst.msk [vmem:[#allocation2 + $0x6b8] sm:$0xff] %vm217, %v3288
        %3545 = vst.msk [vmem:[#allocation2 + $0x6c0] sm:$0xff] %vm217, %v3289
        %3546 = vst.msk [vmem:[#allocation2 + $0x6c8] sm:$0xff] %vm217, %v3290
        %3547 = vst.msk [vmem:[#allocation2 + $0x6d0] sm:$0xff] %vm217, %v3291
        %3548 = vst.msk [vmem:[#allocation2 + $0x6d8] sm:$0xff] %vm217, %v3292
        %3549 = vst.msk [vmem:[#allocation2 + $0x6e0] sm:$0xff] %vm217, %v3293
        %3550 = vst.msk [vmem:[#allocation2 + $0x6e8] sm:$0xff] %vm217, %v3294
        %3551 = vst.msk [vmem:[#allocation2 + $0x6f0] sm:$0xff] %vm217, %v3295
        %3552 = vst.msk [vmem:[#allocation2 + $0x6f8] sm:$0xff] %vm217, %v3296
        %3553 = vst.msk [vmem:[#allocation2 + $0x700] sm:$0xff] %vm217, %v3297
        %3554 = vst.msk [vmem:[#allocation2 + $0x708] sm:$0xff] %vm217, %v3298
        %3555 = vst.msk [vmem:[#allocation2 + $0x710] sm:$0xff] %vm217, %v3299
        %3556 = vst.msk [vmem:[#allocation2 + $0x718] sm:$0xff] %vm217, %v3300
        %3557 = vst.msk [vmem:[#allocation2 + $0x720] sm:$0xff] %vm217, %v3301
        %3558 = vst.msk [vmem:[#allocation2 + $0x728] sm:$0xff] %vm217, %v3302
        %3559 = vst.msk [vmem:[#allocation2 + $0x730] sm:$0xff] %vm217, %v3303
        %3560 = vst.msk [vmem:[#allocation2 + $0x738] sm:$0xff] %vm217, %v3304
        %3561 = vst.msk [vmem:[#allocation2 + $0x740] sm:$0xff] %vm217, %v3305
        %3562 = vst.msk [vmem:[#allocation2 + $0x748] sm:$0xff] %vm217, %v3306
        %3563 = vst.msk [vmem:[#allocation2 + $0x750] sm:$0xff] %vm217, %v3307
        %3564 = vst.msk [vmem:[#allocation2 + $0x758] sm:$0xff] %vm217, %v3308
        %3565 = vst.msk [vmem:[#allocation2 + $0x760] sm:$0xff] %vm217, %v3309
        %3566 = vst.msk [vmem:[#allocation2 + $0x768] sm:$0xff] %vm217, %v3310
        %3567 = vst.msk [vmem:[#allocation2 + $0x770] sm:$0xff] %vm217, %v3311
        %3568 = vst.msk [vmem:[#allocation2 + $0x778] sm:$0xff] %vm217, %v3312
        %3569 = vst.msk [vmem:[#allocation2 + $0x780] sm:$0xff] %vm217, %v3313
        %3570 = vst.msk [vmem:[#allocation2 + $0x788] sm:$0xff] %vm217, %v3314
        %3571 = vst.msk [vmem:[#allocation2 + $0x790] sm:$0xff] %vm217, %v3315
        %3572 = vst.msk [vmem:[#allocation2 + $0x798] sm:$0xff] %vm217, %v3316
        %3573 = vst.msk [vmem:[#allocation2 + $0x7a0] sm:$0xff] %vm217, %v3317
        %3574 = vst.msk [vmem:[#allocation2 + $0x7a8] sm:$0xff] %vm217, %v3318
        %3575 = vst.msk [vmem:[#allocation2 + $0x7b0] sm:$0xff] %vm217, %v3319
        %3576 = vst.msk [vmem:[#allocation2 + $0x7b8] sm:$0xff] %vm217, %v3320
        %3577 = vst.msk [vmem:[#allocation2 + $0x7c0] sm:$0xff] %vm217, %v3321
        %3578 = vst.msk [vmem:[#allocation2 + $0x7c8] sm:$0xff] %vm217, %v3322
        %3579 = vst.msk [vmem:[#allocation2 + $0x7d0] sm:$0xff] %vm217, %v3323
        %3580 = vst.msk [vmem:[#allocation2 + $0x7d8] sm:$0xff] %vm217, %v3324
        %3581 = vst.msk [vmem:[#allocation2 + $0x7e0] sm:$0xff] %vm217, %v3325
        %3582 = vst.msk [vmem:[#allocation2 + $0x7e8] sm:$0xff] %vm217, %v3326
        %3583 = vst.msk [vmem:[#allocation2 + $0x7f0] sm:$0xff] %vm217, %v3327
        %3584 = vst.msk [vmem:[#allocation2 + $0x7f8] sm:$0xff] %vm217, %v3328
        %v3585 = vld [vmem:[#allocation2] sm:$0xff]
        %v3586 = vld [vmem:[#allocation2 + $0x8] sm:$0xff]
        %v3587 = vld [vmem:[#allocation2 + $0x10] sm:$0xff]
        %v3588 = vld [vmem:[#allocation2 + $0x18] sm:$0xff]
        %v3589 = vld [vmem:[#allocation2 + $0x20] sm:$0xff]
        %v3590 = vld [vmem:[#allocation2 + $0x28] sm:$0xff]
        %v3591 = vld [vmem:[#allocation2 + $0x30] sm:$0xff]
        %v3592 = vld [vmem:[#allocation2 + $0x38] sm:$0xff]
        %v3593 = vld [vmem:[#allocation2 + $0x40] sm:$0xff]
        %v3594 = vld [vmem:[#allocation2 + $0x48] sm:$0xff]
        %v3595 = vld [vmem:[#allocation2 + $0x50] sm:$0xff]
        %v3596 = vld [vmem:[#allocation2 + $0x58] sm:$0xff]
        %v3597 = vld [vmem:[#allocation2 + $0x60] sm:$0xff]
        %v3598 = vld [vmem:[#allocation2 + $0x68] sm:$0xff]
        %v3599 = vld [vmem:[#allocation2 + $0x70] sm:$0xff]
        %v3600 = vld [vmem:[#allocation2 + $0x78] sm:$0xff]
        %v3601 = vld [vmem:[#allocation2 + $0x80] sm:$0xff]
        %v3602 = vld [vmem:[#allocation2 + $0x88] sm:$0xff]
        %v3603 = vld [vmem:[#allocation2 + $0x90] sm:$0xff]
        %v3604 = vld [vmem:[#allocation2 + $0x98] sm:$0xff]
        %v3605 = vld [vmem:[#allocation2 + $0xa0] sm:$0xff]
        %v3606 = vld [vmem:[#allocation2 + $0xa8] sm:$0xff]
        %v3607 = vld [vmem:[#allocation2 + $0xb0] sm:$0xff]
        %v3608 = vld [vmem:[#allocation2 + $0xb8] sm:$0xff]
        %v3609 = vld [vmem:[#allocation2 + $0xc0] sm:$0xff]
        %v3610 = vld [vmem:[#allocation2 + $0xc8] sm:$0xff]
        %v3611 = vld [vmem:[#allocation2 + $0xd0] sm:$0xff]
        %v3612 = vld [vmem:[#allocation2 + $0xd8] sm:$0xff]
        %v3613 = vld [vmem:[#allocation2 + $0xe0] sm:$0xff]
        %v3614 = vld [vmem:[#allocation2 + $0xe8] sm:$0xff]
        %v3615 = vld [vmem:[#allocation2 + $0xf0] sm:$0xff]
        %v3616 = vld [vmem:[#allocation2 + $0xf8] sm:$0xff]
        %v3617 = vld [vmem:[#allocation2 + $0x100] sm:$0xff]
        %v3618 = vld [vmem:[#allocation2 + $0x108] sm:$0xff]
        %v3619 = vld [vmem:[#allocation2 + $0x110] sm:$0xff]
        %v3620 = vld [vmem:[#allocation2 + $0x118] sm:$0xff]
        %v3621 = vld [vmem:[#allocation2 + $0x120] sm:$0xff]
        %v3622 = vld [vmem:[#allocation2 + $0x128] sm:$0xff]
        %v3623 = vld [vmem:[#allocation2 + $0x130] sm:$0xff]
        %v3624 = vld [vmem:[#allocation2 + $0x138] sm:$0xff]
        %v3625 = vld [vmem:[#allocation2 + $0x140] sm:$0xff]
        %v3626 = vld [vmem:[#allocation2 + $0x148] sm:$0xff]
        %v3627 = vld [vmem:[#allocation2 + $0x150] sm:$0xff]
        %v3628 = vld [vmem:[#allocation2 + $0x158] sm:$0xff]
        %v3629 = vld [vmem:[#allocation2 + $0x160] sm:$0xff]
        %v3630 = vld [vmem:[#allocation2 + $0x168] sm:$0xff]
        %v3631 = vld [vmem:[#allocation2 + $0x170] sm:$0xff]
        %v3632 = vld [vmem:[#allocation2 + $0x178] sm:$0xff]
        %v3633 = vld [vmem:[#allocation2 + $0x180] sm:$0xff]
        %v3634 = vld [vmem:[#allocation2 + $0x188] sm:$0xff]
        %v3635 = vld [vmem:[#allocation2 + $0x190] sm:$0xff]
        %v3636 = vld [vmem:[#allocation2 + $0x198] sm:$0xff]
        %v3637 = vld [vmem:[#allocation2 + $0x1a0] sm:$0xff]
        %v3638 = vld [vmem:[#allocation2 + $0x1a8] sm:$0xff]
        %v3639 = vld [vmem:[#allocation2 + $0x1b0] sm:$0xff]
        %v3640 = vld [vmem:[#allocation2 + $0x1b8] sm:$0xff]
        %v3641 = vld [vmem:[#allocation2 + $0x1c0] sm:$0xff]
        %v3642 = vld [vmem:[#allocation2 + $0x1c8] sm:$0xff]
        %v3643 = vld [vmem:[#allocation2 + $0x1d0] sm:$0xff]
        %v3644 = vld [vmem:[#allocation2 + $0x1d8] sm:$0xff]
        %v3645 = vld [vmem:[#allocation2 + $0x1e0] sm:$0xff]
        %v3646 = vld [vmem:[#allocation2 + $0x1e8] sm:$0xff]
        %v3647 = vld [vmem:[#allocation2 + $0x1f0] sm:$0xff]
        %v3648 = vld [vmem:[#allocation2 + $0x1f8] sm:$0xff]
        %v3649 = vld [vmem:[#allocation2 + $0x200] sm:$0xff]
        %v3650 = vld [vmem:[#allocation2 + $0x208] sm:$0xff]
        %v3651 = vld [vmem:[#allocation2 + $0x210] sm:$0xff]
        %v3652 = vld [vmem:[#allocation2 + $0x218] sm:$0xff]
        %v3653 = vld [vmem:[#allocation2 + $0x220] sm:$0xff]
        %v3654 = vld [vmem:[#allocation2 + $0x228] sm:$0xff]
        %v3655 = vld [vmem:[#allocation2 + $0x230] sm:$0xff]
        %v3656 = vld [vmem:[#allocation2 + $0x238] sm:$0xff]
        %v3657 = vld [vmem:[#allocation2 + $0x240] sm:$0xff]
        %v3658 = vld [vmem:[#allocation2 + $0x248] sm:$0xff]
        %v3659 = vld [vmem:[#allocation2 + $0x250] sm:$0xff]
        %v3660 = vld [vmem:[#allocation2 + $0x258] sm:$0xff]
        %v3661 = vld [vmem:[#allocation2 + $0x260] sm:$0xff]
        %v3662 = vld [vmem:[#allocation2 + $0x268] sm:$0xff]
        %v3663 = vld [vmem:[#allocation2 + $0x270] sm:$0xff]
        %v3664 = vld [vmem:[#allocation2 + $0x278] sm:$0xff]
        %v3665 = vld [vmem:[#allocation2 + $0x280] sm:$0xff]
        %v3666 = vld [vmem:[#allocation2 + $0x288] sm:$0xff]
        %v3667 = vld [vmem:[#allocation2 + $0x290] sm:$0xff]
        %v3668 = vld [vmem:[#allocation2 + $0x298] sm:$0xff]
        %v3669 = vld [vmem:[#allocation2 + $0x2a0] sm:$0xff]
        %v3670 = vld [vmem:[#allocation2 + $0x2a8] sm:$0xff]
        %v3671 = vld [vmem:[#allocation2 + $0x2b0] sm:$0xff]
        %v3672 = vld [vmem:[#allocation2 + $0x2b8] sm:$0xff]
        %v3673 = vld [vmem:[#allocation2 + $0x2c0] sm:$0xff]
        %v3674 = vld [vmem:[#allocation2 + $0x2c8] sm:$0xff]
        %v3675 = vld [vmem:[#allocation2 + $0x2d0] sm:$0xff]
        %v3676 = vld [vmem:[#allocation2 + $0x2d8] sm:$0xff]
        %v3677 = vld [vmem:[#allocation2 + $0x2e0] sm:$0xff]
        %v3678 = vld [vmem:[#allocation2 + $0x2e8] sm:$0xff]
        %v3679 = vld [vmem:[#allocation2 + $0x2f0] sm:$0xff]
        %v3680 = vld [vmem:[#allocation2 + $0x2f8] sm:$0xff]
        %v3681 = vld [vmem:[#allocation2 + $0x300] sm:$0xff]
        %v3682 = vld [vmem:[#allocation2 + $0x308] sm:$0xff]
        %v3683 = vld [vmem:[#allocation2 + $0x310] sm:$0xff]
        %v3684 = vld [vmem:[#allocation2 + $0x318] sm:$0xff]
        %v3685 = vld [vmem:[#allocation2 + $0x320] sm:$0xff]
        %v3686 = vld [vmem:[#allocation2 + $0x328] sm:$0xff]
        %v3687 = vld [vmem:[#allocation2 + $0x330] sm:$0xff]
        %v3688 = vld [vmem:[#allocation2 + $0x338] sm:$0xff]
        %v3689 = vld [vmem:[#allocation2 + $0x340] sm:$0xff]
        %v3690 = vld [vmem:[#allocation2 + $0x348] sm:$0xff]
        %v3691 = vld [vmem:[#allocation2 + $0x350] sm:$0xff]
        %v3692 = vld [vmem:[#allocation2 + $0x358] sm:$0xff]
        %v3693 = vld [vmem:[#allocation2 + $0x360] sm:$0xff]
        %v3694 = vld [vmem:[#allocation2 + $0x368] sm:$0xff]
        %v3695 = vld [vmem:[#allocation2 + $0x370] sm:$0xff]
        %v3696 = vld [vmem:[#allocation2 + $0x378] sm:$0xff]
        %v3697 = vld [vmem:[#allocation2 + $0x380] sm:$0xff]
        %v3698 = vld [vmem:[#allocation2 + $0x388] sm:$0xff]
        %v3699 = vld [vmem:[#allocation2 + $0x390] sm:$0xff]
        %v3700 = vld [vmem:[#allocation2 + $0x398] sm:$0xff]
        %v3701 = vld [vmem:[#allocation2 + $0x3a0] sm:$0xff]
        %v3702 = vld [vmem:[#allocation2 + $0x3a8] sm:$0xff]
        %v3703 = vld [vmem:[#allocation2 + $0x3b0] sm:$0xff]
        %v3704 = vld [vmem:[#allocation2 + $0x3b8] sm:$0xff]
        %v3705 = vld [vmem:[#allocation2 + $0x3c0] sm:$0xff]
        %v3706 = vld [vmem:[#allocation2 + $0x3c8] sm:$0xff]
        %v3707 = vld [vmem:[#allocation2 + $0x3d0] sm:$0xff]
        %v3708 = vld [vmem:[#allocation2 + $0x3d8] sm:$0xff]
        %v3709 = vld [vmem:[#allocation2 + $0x3e0] sm:$0xff]
        %v3710 = vld [vmem:[#allocation2 + $0x3e8] sm:$0xff]
        %v3711 = vld [vmem:[#allocation2 + $0x3f0] sm:$0xff]
        %v3712 = vld [vmem:[#allocation2 + $0x3f8] sm:$0xff]
        %v3713 = vld [vmem:[#allocation2 + $0x400] sm:$0xff]
        %v3714 = vld [vmem:[#allocation2 + $0x408] sm:$0xff]
        %v3715 = vld [vmem:[#allocation2 + $0x410] sm:$0xff]
        %v3716 = vld [vmem:[#allocation2 + $0x418] sm:$0xff]
        %v3717 = vld [vmem:[#allocation2 + $0x420] sm:$0xff]
        %v3718 = vld [vmem:[#allocation2 + $0x428] sm:$0xff]
        %v3719 = vld [vmem:[#allocation2 + $0x430] sm:$0xff]
        %v3720 = vld [vmem:[#allocation2 + $0x438] sm:$0xff]
        %v3721 = vld [vmem:[#allocation2 + $0x440] sm:$0xff]
        %v3722 = vld [vmem:[#allocation2 + $0x448] sm:$0xff]
        %v3723 = vld [vmem:[#allocation2 + $0x450] sm:$0xff]
        %v3724 = vld [vmem:[#allocation2 + $0x458] sm:$0xff]
        %v3725 = vld [vmem:[#allocation2 + $0x460] sm:$0xff]
        %v3726 = vld [vmem:[#allocation2 + $0x468] sm:$0xff]
        %v3727 = vld [vmem:[#allocation2 + $0x470] sm:$0xff]
        %v3728 = vld [vmem:[#allocation2 + $0x478] sm:$0xff]
        %v3729 = vld [vmem:[#allocation2 + $0x480] sm:$0xff]
        %v3730 = vld [vmem:[#allocation2 + $0x488] sm:$0xff]
        %v3731 = vld [vmem:[#allocation2 + $0x490] sm:$0xff]
        %v3732 = vld [vmem:[#allocation2 + $0x498] sm:$0xff]
        %v3733 = vld [vmem:[#allocation2 + $0x4a0] sm:$0xff]
        %v3734 = vld [vmem:[#allocation2 + $0x4a8] sm:$0xff]
        %v3735 = vld [vmem:[#allocation2 + $0x4b0] sm:$0xff]
        %v3736 = vld [vmem:[#allocation2 + $0x4b8] sm:$0xff]
        %v3737 = vld [vmem:[#allocation2 + $0x4c0] sm:$0xff]
        %v3738 = vld [vmem:[#allocation2 + $0x4c8] sm:$0xff]
        %v3739 = vld [vmem:[#allocation2 + $0x4d0] sm:$0xff]
        %v3740 = vld [vmem:[#allocation2 + $0x4d8] sm:$0xff]
        %v3741 = vld [vmem:[#allocation2 + $0x4e0] sm:$0xff]
        %v3742 = vld [vmem:[#allocation2 + $0x4e8] sm:$0xff]
        %v3743 = vld [vmem:[#allocation2 + $0x4f0] sm:$0xff]
        %v3744 = vld [vmem:[#allocation2 + $0x4f8] sm:$0xff]
        %v3745 = vld [vmem:[#allocation2 + $0x500] sm:$0xff]
        %v3746 = vld [vmem:[#allocation2 + $0x508] sm:$0xff]
        %v3747 = vld [vmem:[#allocation2 + $0x510] sm:$0xff]
        %v3748 = vld [vmem:[#allocation2 + $0x518] sm:$0xff]
        %v3749 = vld [vmem:[#allocation2 + $0x520] sm:$0xff]
        %v3750 = vld [vmem:[#allocation2 + $0x528] sm:$0xff]
        %v3751 = vld [vmem:[#allocation2 + $0x530] sm:$0xff]
        %v3752 = vld [vmem:[#allocation2 + $0x538] sm:$0xff]
        %v3753 = vld [vmem:[#allocation2 + $0x540] sm:$0xff]
        %v3754 = vld [vmem:[#allocation2 + $0x548] sm:$0xff]
        %v3755 = vld [vmem:[#allocation2 + $0x550] sm:$0xff]
        %v3756 = vld [vmem:[#allocation2 + $0x558] sm:$0xff]
        %v3757 = vld [vmem:[#allocation2 + $0x560] sm:$0xff]
        %v3758 = vld [vmem:[#allocation2 + $0x568] sm:$0xff]
        %v3759 = vld [vmem:[#allocation2 + $0x570] sm:$0xff]
        %v3760 = vld [vmem:[#allocation2 + $0x578] sm:$0xff]
        %v3761 = vld [vmem:[#allocation2 + $0x580] sm:$0xff]
        %v3762 = vld [vmem:[#allocation2 + $0x588] sm:$0xff]
        %v3763 = vld [vmem:[#allocation2 + $0x590] sm:$0xff]
        %v3764 = vld [vmem:[#allocation2 + $0x598] sm:$0xff]
        %v3765 = vld [vmem:[#allocation2 + $0x5a0] sm:$0xff]
        %v3766 = vld [vmem:[#allocation2 + $0x5a8] sm:$0xff]
        %v3767 = vld [vmem:[#allocation2 + $0x5b0] sm:$0xff]
        %v3768 = vld [vmem:[#allocation2 + $0x5b8] sm:$0xff]
        %v3769 = vld [vmem:[#allocation2 + $0x5c0] sm:$0xff]
        %v3770 = vld [vmem:[#allocation2 + $0x5c8] sm:$0xff]
        %v3771 = vld [vmem:[#allocation2 + $0x5d0] sm:$0xff]
        %v3772 = vld [vmem:[#allocation2 + $0x5d8] sm:$0xff]
        %v3773 = vld [vmem:[#allocation2 + $0x5e0] sm:$0xff]
        %v3774 = vld [vmem:[#allocation2 + $0x5e8] sm:$0xff]
        %v3775 = vld [vmem:[#allocation2 + $0x5f0] sm:$0xff]
        %v3776 = vld [vmem:[#allocation2 + $0x5f8] sm:$0xff]
        %v3777 = vld [vmem:[#allocation2 + $0x600] sm:$0xff]
        %v3778 = vld [vmem:[#allocation2 + $0x608] sm:$0xff]
        %v3779 = vld [vmem:[#allocation2 + $0x610] sm:$0xff]
        %v3780 = vld [vmem:[#allocation2 + $0x618] sm:$0xff]
        %v3781 = vld [vmem:[#allocation2 + $0x620] sm:$0xff]
        %v3782 = vld [vmem:[#allocation2 + $0x628] sm:$0xff]
        %v3783 = vld [vmem:[#allocation2 + $0x630] sm:$0xff]
        %v3784 = vld [vmem:[#allocation2 + $0x638] sm:$0xff]
        %v3785 = vld [vmem:[#allocation2 + $0x640] sm:$0xff]
        %v3786 = vld [vmem:[#allocation2 + $0x648] sm:$0xff]
        %v3787 = vld [vmem:[#allocation2 + $0x650] sm:$0xff]
        %v3788 = vld [vmem:[#allocation2 + $0x658] sm:$0xff]
        %v3789 = vld [vmem:[#allocation2 + $0x660] sm:$0xff]
        %v3790 = vld [vmem:[#allocation2 + $0x668] sm:$0xff]
        %v3791 = vld [vmem:[#allocation2 + $0x670] sm:$0xff]
        %v3792 = vld [vmem:[#allocation2 + $0x678] sm:$0xff]
        %v3793 = vld [vmem:[#allocation2 + $0x680] sm:$0xff]
        %v3794 = vld [vmem:[#allocation2 + $0x688] sm:$0xff]
        %v3795 = vld [vmem:[#allocation2 + $0x690] sm:$0xff]
        %v3796 = vld [vmem:[#allocation2 + $0x698] sm:$0xff]
        %v3797 = vld [vmem:[#allocation2 + $0x6a0] sm:$0xff]
        %v3798 = vld [vmem:[#allocation2 + $0x6a8] sm:$0xff]
        %v3799 = vld [vmem:[#allocation2 + $0x6b0] sm:$0xff]
        %v3800 = vld [vmem:[#allocation2 + $0x6b8] sm:$0xff]
        %v3801 = vld [vmem:[#allocation2 + $0x6c0] sm:$0xff]
        %v3802 = vld [vmem:[#allocation2 + $0x6c8] sm:$0xff]
        %v3803 = vld [vmem:[#allocation2 + $0x6d0] sm:$0xff]
        %v3804 = vld [vmem:[#allocation2 + $0x6d8] sm:$0xff]
        %v3805 = vld [vmem:[#allocation2 + $0x6e0] sm:$0xff]
        %v3806 = vld [vmem:[#allocation2 + $0x6e8] sm:$0xff]
        %v3807 = vld [vmem:[#allocation2 + $0x6f0] sm:$0xff]
        %v3808 = vld [vmem:[#allocation2 + $0x6f8] sm:$0xff]
        %v3809 = vld [vmem:[#allocation2 + $0x700] sm:$0xff]
        %v3810 = vld [vmem:[#allocation2 + $0x708] sm:$0xff]
        %v3811 = vld [vmem:[#allocation2 + $0x710] sm:$0xff]
        %v3812 = vld [vmem:[#allocation2 + $0x718] sm:$0xff]
        %v3813 = vld [vmem:[#allocation2 + $0x720] sm:$0xff]
        %v3814 = vld [vmem:[#allocation2 + $0x728] sm:$0xff]
        %v3815 = vld [vmem:[#allocation2 + $0x730] sm:$0xff]
        %v3816 = vld [vmem:[#allocation2 + $0x738] sm:$0xff]
        %v3817 = vld [vmem:[#allocation2 + $0x740] sm:$0xff]
        %v3818 = vld [vmem:[#allocation2 + $0x748] sm:$0xff]
        %v3819 = vld [vmem:[#allocation2 + $0x750] sm:$0xff]
        %v3820 = vld [vmem:[#allocation2 + $0x758] sm:$0xff]
        %v3821 = vld [vmem:[#allocation2 + $0x760] sm:$0xff]
        %v3822 = vld [vmem:[#allocation2 + $0x768] sm:$0xff]
        %v3823 = vld [vmem:[#allocation2 + $0x770] sm:$0xff]
        %v3824 = vld [vmem:[#allocation2 + $0x778] sm:$0xff]
        %v3825 = vld [vmem:[#allocation2 + $0x780] sm:$0xff]
        %v3826 = vld [vmem:[#allocation2 + $0x788] sm:$0xff]
        %v3827 = vld [vmem:[#allocation2 + $0x790] sm:$0xff]
        %v3828 = vld [vmem:[#allocation2 + $0x798] sm:$0xff]
        %v3829 = vld [vmem:[#allocation2 + $0x7a0] sm:$0xff]
        %v3830 = vld [vmem:[#allocation2 + $0x7a8] sm:$0xff]
        %v3831 = vld [vmem:[#allocation2 + $0x7b0] sm:$0xff]
        %v3832 = vld [vmem:[#allocation2 + $0x7b8] sm:$0xff]
        %v3833 = vld [vmem:[#allocation2 + $0x7c0] sm:$0xff]
        %v3834 = vld [vmem:[#allocation2 + $0x7c8] sm:$0xff]
        %v3835 = vld [vmem:[#allocation2 + $0x7d0] sm:$0xff]
        %v3836 = vld [vmem:[#allocation2 + $0x7d8] sm:$0xff]
        %v3837 = vld [vmem:[#allocation2 + $0x7e0] sm:$0xff]
        %v3838 = vld [vmem:[#allocation2 + $0x7e8] sm:$0xff]
        %v3839 = vld [vmem:[#allocation2 + $0x7f0] sm:$0xff]
        %v3840 = vld [vmem:[#allocation2 + $0x7f8] sm:$0xff]
        %v3841 = vpack.c.bf16 %v3586, %v3585
        %v3842 = vpack.c.bf16 %v3588, %v3587
        %v3843 = vpack.c.bf16 %v3590, %v3589
        %v3844 = vpack.c.bf16 %v3592, %v3591
        %v3845 = vpack.c.bf16 %v3594, %v3593
        %v3846 = vpack.c.bf16 %v3596, %v3595
        %v3847 = vpack.c.bf16 %v3598, %v3597
        %v3848 = vpack.c.bf16 %v3600, %v3599
        %v3849 = vpack.c.bf16 %v3602, %v3601
        %v3850 = vpack.c.bf16 %v3604, %v3603
        %v3851 = vpack.c.bf16 %v3606, %v3605
        %v3852 = vpack.c.bf16 %v3608, %v3607
        %v3853 = vpack.c.bf16 %v3610, %v3609
        %v3854 = vpack.c.bf16 %v3612, %v3611
        %v3855 = vpack.c.bf16 %v3614, %v3613
        %v3856 = vpack.c.bf16 %v3616, %v3615
        %v3857 = vpack.c.bf16 %v3618, %v3617
        %v3858 = vpack.c.bf16 %v3620, %v3619
        %v3859 = vpack.c.bf16 %v3622, %v3621
        %v3860 = vpack.c.bf16 %v3624, %v3623
        %v3861 = vpack.c.bf16 %v3626, %v3625
        %v3862 = vpack.c.bf16 %v3628, %v3627
        %v3863 = vpack.c.bf16 %v3630, %v3629
        %v3864 = vpack.c.bf16 %v3632, %v3631
        %v3865 = vpack.c.bf16 %v3634, %v3633
        %v3866 = vpack.c.bf16 %v3636, %v3635
        %v3867 = vpack.c.bf16 %v3638, %v3637
        %v3868 = vpack.c.bf16 %v3640, %v3639
        %v3869 = vpack.c.bf16 %v3642, %v3641
        %v3870 = vpack.c.bf16 %v3644, %v3643
        %v3871 = vpack.c.bf16 %v3646, %v3645
        %v3872 = vpack.c.bf16 %v3648, %v3647
        %v3873 = vpack.c.bf16 %v3650, %v3649
        %v3874 = vpack.c.bf16 %v3652, %v3651
        %v3875 = vpack.c.bf16 %v3654, %v3653
        %v3876 = vpack.c.bf16 %v3656, %v3655
        %v3877 = vpack.c.bf16 %v3658, %v3657
        %v3878 = vpack.c.bf16 %v3660, %v3659
        %v3879 = vpack.c.bf16 %v3662, %v3661
        %v3880 = vpack.c.bf16 %v3664, %v3663
        %v3881 = vpack.c.bf16 %v3666, %v3665
        %v3882 = vpack.c.bf16 %v3668, %v3667
        %v3883 = vpack.c.bf16 %v3670, %v3669
        %v3884 = vpack.c.bf16 %v3672, %v3671
        %v3885 = vpack.c.bf16 %v3674, %v3673
        %v3886 = vpack.c.bf16 %v3676, %v3675
        %v3887 = vpack.c.bf16 %v3678, %v3677
        %v3888 = vpack.c.bf16 %v3680, %v3679
        %v3889 = vpack.c.bf16 %v3682, %v3681
        %v3890 = vpack.c.bf16 %v3684, %v3683
        %v3891 = vpack.c.bf16 %v3686, %v3685
        %v3892 = vpack.c.bf16 %v3688, %v3687
        %v3893 = vpack.c.bf16 %v3690, %v3689
        %v3894 = vpack.c.bf16 %v3692, %v3691
        %v3895 = vpack.c.bf16 %v3694, %v3693
        %v3896 = vpack.c.bf16 %v3696, %v3695
        %v3897 = vpack.c.bf16 %v3698, %v3697
        %v3898 = vpack.c.bf16 %v3700, %v3699
        %v3899 = vpack.c.bf16 %v3702, %v3701
        %v3900 = vpack.c.bf16 %v3704, %v3703
        %v3901 = vpack.c.bf16 %v3706, %v3705
        %v3902 = vpack.c.bf16 %v3708, %v3707
        %v3903 = vpack.c.bf16 %v3710, %v3709
        %v3904 = vpack.c.bf16 %v3712, %v3711
        %v3905 = vpack.c.bf16 %v3714, %v3713
        %v3906 = vpack.c.bf16 %v3716, %v3715
        %v3907 = vpack.c.bf16 %v3718, %v3717
        %v3908 = vpack.c.bf16 %v3720, %v3719
        %v3909 = vpack.c.bf16 %v3722, %v3721
        %v3910 = vpack.c.bf16 %v3724, %v3723
        %v3911 = vpack.c.bf16 %v3726, %v3725
        %v3912 = vpack.c.bf16 %v3728, %v3727
        %v3913 = vpack.c.bf16 %v3730, %v3729
        %v3914 = vpack.c.bf16 %v3732, %v3731
        %v3915 = vpack.c.bf16 %v3734, %v3733
        %v3916 = vpack.c.bf16 %v3736, %v3735
        %v3917 = vpack.c.bf16 %v3738, %v3737
        %v3918 = vpack.c.bf16 %v3740, %v3739
        %v3919 = vpack.c.bf16 %v3742, %v3741
        %v3920 = vpack.c.bf16 %v3744, %v3743
        %v3921 = vpack.c.bf16 %v3746, %v3745
        %v3922 = vpack.c.bf16 %v3748, %v3747
        %v3923 = vpack.c.bf16 %v3750, %v3749
        %v3924 = vpack.c.bf16 %v3752, %v3751
        %v3925 = vpack.c.bf16 %v3754, %v3753
        %v3926 = vpack.c.bf16 %v3756, %v3755
        %v3927 = vpack.c.bf16 %v3758, %v3757
        %v3928 = vpack.c.bf16 %v3760, %v3759
        %v3929 = vpack.c.bf16 %v3762, %v3761
        %v3930 = vpack.c.bf16 %v3764, %v3763
        %v3931 = vpack.c.bf16 %v3766, %v3765
        %v3932 = vpack.c.bf16 %v3768, %v3767
        %v3933 = vpack.c.bf16 %v3770, %v3769
        %v3934 = vpack.c.bf16 %v3772, %v3771
        %v3935 = vpack.c.bf16 %v3774, %v3773
        %v3936 = vpack.c.bf16 %v3776, %v3775
        %v3937 = vpack.c.bf16 %v3778, %v3777
        %v3938 = vpack.c.bf16 %v3780, %v3779
        %v3939 = vpack.c.bf16 %v3782, %v3781
        %v3940 = vpack.c.bf16 %v3784, %v3783
        %v3941 = vpack.c.bf16 %v3786, %v3785
        %v3942 = vpack.c.bf16 %v3788, %v3787
        %v3943 = vpack.c.bf16 %v3790, %v3789
        %v3944 = vpack.c.bf16 %v3792, %v3791
        %v3945 = vpack.c.bf16 %v3794, %v3793
        %v3946 = vpack.c.bf16 %v3796, %v3795
        %v3947 = vpack.c.bf16 %v3798, %v3797
        %v3948 = vpack.c.bf16 %v3800, %v3799
        %v3949 = vpack.c.bf16 %v3802, %v3801
        %v3950 = vpack.c.bf16 %v3804, %v3803
        %v3951 = vpack.c.bf16 %v3806, %v3805
        %v3952 = vpack.c.bf16 %v3808, %v3807
        %v3953 = vpack.c.bf16 %v3810, %v3809
        %v3954 = vpack.c.bf16 %v3812, %v3811
        %v3955 = vpack.c.bf16 %v3814, %v3813
        %v3956 = vpack.c.bf16 %v3816, %v3815
        %v3957 = vpack.c.bf16 %v3818, %v3817
        %v3958 = vpack.c.bf16 %v3820, %v3819
        %v3959 = vpack.c.bf16 %v3822, %v3821
        %v3960 = vpack.c.bf16 %v3824, %v3823
        %v3961 = vpack.c.bf16 %v3826, %v3825
        %v3962 = vpack.c.bf16 %v3828, %v3827
        %v3963 = vpack.c.bf16 %v3830, %v3829
        %v3964 = vpack.c.bf16 %v3832, %v3831
        %v3965 = vpack.c.bf16 %v3834, %v3833
        %v3966 = vpack.c.bf16 %v3836, %v3835
        %v3967 = vpack.c.bf16 %v3838, %v3837
        %v3968 = vpack.c.bf16 %v3840, %v3839
        %v4097 = vunpack.c.l.b16 %v3841
        %v4098 = vunpack.c.h.b16 %v3841
        %v4099 = vunpack.c.l.b16 %v3842
        %v4100 = vunpack.c.h.b16 %v3842
        %v4101 = vunpack.c.l.b16 %v3843
        %v4102 = vunpack.c.h.b16 %v3843
        %v4103 = vunpack.c.l.b16 %v3844
        %v4104 = vunpack.c.h.b16 %v3844
        %v4105 = vunpack.c.l.b16 %v3845
        %v4106 = vunpack.c.h.b16 %v3845
        %v4107 = vunpack.c.l.b16 %v3846
        %v4108 = vunpack.c.h.b16 %v3846
        %v4109 = vunpack.c.l.b16 %v3847
        %v4110 = vunpack.c.h.b16 %v3847
        %v4111 = vunpack.c.l.b16 %v3848
        %v4112 = vunpack.c.h.b16 %v3848
        %v4113 = vunpack.c.l.b16 %v3849
        %v4114 = vunpack.c.h.b16 %v3849
        %v4115 = vunpack.c.l.b16 %v3850
        %v4116 = vunpack.c.h.b16 %v3850
        %v4117 = vunpack.c.l.b16 %v3851
        %v4118 = vunpack.c.h.b16 %v3851
        %v4119 = vunpack.c.l.b16 %v3852
        %v4120 = vunpack.c.h.b16 %v3852
        %v4121 = vunpack.c.l.b16 %v3853
        %v4122 = vunpack.c.h.b16 %v3853
        %v4123 = vunpack.c.l.b16 %v3854
        %v4124 = vunpack.c.h.b16 %v3854
        %v4125 = vunpack.c.l.b16 %v3855
        %v4126 = vunpack.c.h.b16 %v3855
        %v4127 = vunpack.c.l.b16 %v3856
        %v4128 = vunpack.c.h.b16 %v3856
        %v4129 = vunpack.c.l.b16 %v3857
        %v4130 = vunpack.c.h.b16 %v3857
        %v4131 = vunpack.c.l.b16 %v3858
        %v4132 = vunpack.c.h.b16 %v3858
        %v4133 = vunpack.c.l.b16 %v3859
        %v4134 = vunpack.c.h.b16 %v3859
        %v4135 = vunpack.c.l.b16 %v3860
        %v4136 = vunpack.c.h.b16 %v3860
        %v4137 = vunpack.c.l.b16 %v3861
        %v4138 = vunpack.c.h.b16 %v3861
        %v4139 = vunpack.c.l.b16 %v3862
        %v4140 = vunpack.c.h.b16 %v3862
        %v4141 = vunpack.c.l.b16 %v3863
        %v4142 = vunpack.c.h.b16 %v3863
        %v4143 = vunpack.c.l.b16 %v3864
        %v4144 = vunpack.c.h.b16 %v3864
        %v4145 = vunpack.c.l.b16 %v3865
        %v4146 = vunpack.c.h.b16 %v3865
        %v4147 = vunpack.c.l.b16 %v3866
        %v4148 = vunpack.c.h.b16 %v3866
        %v4149 = vunpack.c.l.b16 %v3867
        %v4150 = vunpack.c.h.b16 %v3867
        %v4151 = vunpack.c.l.b16 %v3868
        %v4152 = vunpack.c.h.b16 %v3868
        %v4153 = vunpack.c.l.b16 %v3869
        %v4154 = vunpack.c.h.b16 %v3869
        %v4155 = vunpack.c.l.b16 %v3870
        %v4156 = vunpack.c.h.b16 %v3870
        %v4157 = vunpack.c.l.b16 %v3871
        %v4158 = vunpack.c.h.b16 %v3871
        %v4159 = vunpack.c.l.b16 %v3872
        %v4160 = vunpack.c.h.b16 %v3872
        %v4161 = vunpack.c.l.b16 %v3873
        %v4162 = vunpack.c.h.b16 %v3873
        %v4163 = vunpack.c.l.b16 %v3874
        %v4164 = vunpack.c.h.b16 %v3874
        %v4165 = vunpack.c.l.b16 %v3875
        %v4166 = vunpack.c.h.b16 %v3875
        %v4167 = vunpack.c.l.b16 %v3876
        %v4168 = vunpack.c.h.b16 %v3876
        %v4169 = vunpack.c.l.b16 %v3877
        %v4170 = vunpack.c.h.b16 %v3877
        %v4171 = vunpack.c.l.b16 %v3878
        %v4172 = vunpack.c.h.b16 %v3878
        %v4173 = vunpack.c.l.b16 %v3879
        %v4174 = vunpack.c.h.b16 %v3879
        %v4175 = vunpack.c.l.b16 %v3880
        %v4176 = vunpack.c.h.b16 %v3880
        %v4177 = vunpack.c.l.b16 %v3881
        %v4178 = vunpack.c.h.b16 %v3881
        %v4179 = vunpack.c.l.b16 %v3882
        %v4180 = vunpack.c.h.b16 %v3882
        %v4181 = vunpack.c.l.b16 %v3883
        %v4182 = vunpack.c.h.b16 %v3883
        %v4183 = vunpack.c.l.b16 %v3884
        %v4184 = vunpack.c.h.b16 %v3884
        %v4185 = vunpack.c.l.b16 %v3885
        %v4186 = vunpack.c.h.b16 %v3885
        %v4187 = vunpack.c.l.b16 %v3886
        %v4188 = vunpack.c.h.b16 %v3886
        %v4189 = vunpack.c.l.b16 %v3887
        %v4190 = vunpack.c.h.b16 %v3887
        %v4191 = vunpack.c.l.b16 %v3888
        %v4192 = vunpack.c.h.b16 %v3888
        %v4193 = vunpack.c.l.b16 %v3889
        %v4194 = vunpack.c.h.b16 %v3889
        %v4195 = vunpack.c.l.b16 %v3890
        %v4196 = vunpack.c.h.b16 %v3890
        %v4197 = vunpack.c.l.b16 %v3891
        %v4198 = vunpack.c.h.b16 %v3891
        %v4199 = vunpack.c.l.b16 %v3892
        %v4200 = vunpack.c.h.b16 %v3892
        %v4201 = vunpack.c.l.b16 %v3893
        %v4202 = vunpack.c.h.b16 %v3893
        %v4203 = vunpack.c.l.b16 %v3894
        %v4204 = vunpack.c.h.b16 %v3894
        %v4205 = vunpack.c.l.b16 %v3895
        %v4206 = vunpack.c.h.b16 %v3895
        %v4207 = vunpack.c.l.b16 %v3896
        %v4208 = vunpack.c.h.b16 %v3896
        %v4209 = vunpack.c.l.b16 %v3897
        %v4210 = vunpack.c.h.b16 %v3897
        %v4211 = vunpack.c.l.b16 %v3898
        %v4212 = vunpack.c.h.b16 %v3898
        %v4213 = vunpack.c.l.b16 %v3899
        %v4214 = vunpack.c.h.b16 %v3899
        %v4215 = vunpack.c.l.b16 %v3900
        %v4216 = vunpack.c.h.b16 %v3900
        %v4217 = vunpack.c.l.b16 %v3901
        %v4218 = vunpack.c.h.b16 %v3901
        %v4219 = vunpack.c.l.b16 %v3902
        %v4220 = vunpack.c.h.b16 %v3902
        %v4221 = vunpack.c.l.b16 %v3903
        %v4222 = vunpack.c.h.b16 %v3903
        %v4223 = vunpack.c.l.b16 %v3904
        %v4224 = vunpack.c.h.b16 %v3904
        %v4225 = vunpack.c.l.b16 %v3905
        %v4226 = vunpack.c.h.b16 %v3905
        %v4227 = vunpack.c.l.b16 %v3906
        %v4228 = vunpack.c.h.b16 %v3906
        %v4229 = vunpack.c.l.b16 %v3907
        %v4230 = vunpack.c.h.b16 %v3907
        %v4231 = vunpack.c.l.b16 %v3908
        %v4232 = vunpack.c.h.b16 %v3908
        %v4233 = vunpack.c.l.b16 %v3909
        %v4234 = vunpack.c.h.b16 %v3909
        %v4235 = vunpack.c.l.b16 %v3910
        %v4236 = vunpack.c.h.b16 %v3910
        %v4237 = vunpack.c.l.b16 %v3911
        %v4238 = vunpack.c.h.b16 %v3911
        %v4239 = vunpack.c.l.b16 %v3912
        %v4240 = vunpack.c.h.b16 %v3912
        %v4241 = vunpack.c.l.b16 %v3913
        %v4242 = vunpack.c.h.b16 %v3913
        %v4243 = vunpack.c.l.b16 %v3914
        %v4244 = vunpack.c.h.b16 %v3914
        %v4245 = vunpack.c.l.b16 %v3915
        %v4246 = vunpack.c.h.b16 %v3915
        %v4247 = vunpack.c.l.b16 %v3916
        %v4248 = vunpack.c.h.b16 %v3916
        %v4249 = vunpack.c.l.b16 %v3917
        %v4250 = vunpack.c.h.b16 %v3917
        %v4251 = vunpack.c.l.b16 %v3918
        %v4252 = vunpack.c.h.b16 %v3918
        %v4253 = vunpack.c.l.b16 %v3919
        %v4254 = vunpack.c.h.b16 %v3919
        %v4255 = vunpack.c.l.b16 %v3920
        %v4256 = vunpack.c.h.b16 %v3920
        %v4257 = vunpack.c.l.b16 %v3921
        %v4258 = vunpack.c.h.b16 %v3921
        %v4259 = vunpack.c.l.b16 %v3922
        %v4260 = vunpack.c.h.b16 %v3922
        %v4261 = vunpack.c.l.b16 %v3923
        %v4262 = vunpack.c.h.b16 %v3923
        %v4263 = vunpack.c.l.b16 %v3924
        %v4264 = vunpack.c.h.b16 %v3924
        %v4265 = vunpack.c.l.b16 %v3925
        %v4266 = vunpack.c.h.b16 %v3925
        %v4267 = vunpack.c.l.b16 %v3926
        %v4268 = vunpack.c.h.b16 %v3926
        %v4269 = vunpack.c.l.b16 %v3927
        %v4270 = vunpack.c.h.b16 %v3927
        %v4271 = vunpack.c.l.b16 %v3928
        %v4272 = vunpack.c.h.b16 %v3928
        %v4273 = vunpack.c.l.b16 %v3929
        %v4274 = vunpack.c.h.b16 %v3929
        %v4275 = vunpack.c.l.b16 %v3930
        %v4276 = vunpack.c.h.b16 %v3930
        %v4277 = vunpack.c.l.b16 %v3931
        %v4278 = vunpack.c.h.b16 %v3931
        %v4279 = vunpack.c.l.b16 %v3932
        %v4280 = vunpack.c.h.b16 %v3932
        %v4281 = vunpack.c.l.b16 %v3933
        %v4282 = vunpack.c.h.b16 %v3933
        %v4283 = vunpack.c.l.b16 %v3934
        %v4284 = vunpack.c.h.b16 %v3934
        %v4285 = vunpack.c.l.b16 %v3935
        %v4286 = vunpack.c.h.b16 %v3935
        %v4287 = vunpack.c.l.b16 %v3936
        %v4288 = vunpack.c.h.b16 %v3936
        %v4289 = vunpack.c.l.b16 %v3937
        %v4290 = vunpack.c.h.b16 %v3937
        %v4291 = vunpack.c.l.b16 %v3938
        %v4292 = vunpack.c.h.b16 %v3938
        %v4293 = vunpack.c.l.b16 %v3939
        %v4294 = vunpack.c.h.b16 %v3939
        %v4295 = vunpack.c.l.b16 %v3940
        %v4296 = vunpack.c.h.b16 %v3940
        %v4297 = vunpack.c.l.b16 %v3941
        %v4298 = vunpack.c.h.b16 %v3941
        %v4299 = vunpack.c.l.b16 %v3942
        %v4300 = vunpack.c.h.b16 %v3942
        %v4301 = vunpack.c.l.b16 %v3943
        %v4302 = vunpack.c.h.b16 %v3943
        %v4303 = vunpack.c.l.b16 %v3944
        %v4304 = vunpack.c.h.b16 %v3944
        %v4305 = vunpack.c.l.b16 %v3945
        %v4306 = vunpack.c.h.b16 %v3945
        %v4307 = vunpack.c.l.b16 %v3946
        %v4308 = vunpack.c.h.b16 %v3946
        %v4309 = vunpack.c.l.b16 %v3947
        %v4310 = vunpack.c.h.b16 %v3947
        %v4311 = vunpack.c.l.b16 %v3948
        %v4312 = vunpack.c.h.b16 %v3948
        %v4313 = vunpack.c.l.b16 %v3949
        %v4314 = vunpack.c.h.b16 %v3949
        %v4315 = vunpack.c.l.b16 %v3950
        %v4316 = vunpack.c.h.b16 %v3950
        %v4317 = vunpack.c.l.b16 %v3951
        %v4318 = vunpack.c.h.b16 %v3951
        %v4319 = vunpack.c.l.b16 %v3952
        %v4320 = vunpack.c.h.b16 %v3952
        %v4321 = vunpack.c.l.b16 %v3953
        %v4322 = vunpack.c.h.b16 %v3953
        %v4323 = vunpack.c.l.b16 %v3954
        %v4324 = vunpack.c.h.b16 %v3954
        %v4325 = vunpack.c.l.b16 %v3955
        %v4326 = vunpack.c.h.b16 %v3955
        %v4327 = vunpack.c.l.b16 %v3956
        %v4328 = vunpack.c.h.b16 %v3956
        %v4329 = vunpack.c.l.b16 %v3957
        %v4330 = vunpack.c.h.b16 %v3957
        %v4331 = vunpack.c.l.b16 %v3958
        %v4332 = vunpack.c.h.b16 %v3958
        %v4333 = vunpack.c.l.b16 %v3959
        %v4334 = vunpack.c.h.b16 %v3959
        %v4335 = vunpack.c.l.b16 %v3960
        %v4336 = vunpack.c.h.b16 %v3960
        %v4337 = vunpack.c.l.b16 %v3961
        %v4338 = vunpack.c.h.b16 %v3961
        %v4339 = vunpack.c.l.b16 %v3962
        %v4340 = vunpack.c.h.b16 %v3962
        %v4341 = vunpack.c.l.b16 %v3963
        %v4342 = vunpack.c.h.b16 %v3963
        %v4343 = vunpack.c.l.b16 %v3964
        %v4344 = vunpack.c.h.b16 %v3964
        %v4345 = vunpack.c.l.b16 %v3965
        %v4346 = vunpack.c.h.b16 %v3965
        %v4347 = vunpack.c.l.b16 %v3966
        %v4348 = vunpack.c.h.b16 %v3966
        %v4349 = vunpack.c.l.b16 %v3967
        %v4350 = vunpack.c.h.b16 %v3967
        %v4351 = vunpack.c.l.b16 %v3968
        %v4352 = vunpack.c.h.b16 %v3968
        %v4353 = vpack.c.b16 %v4097, %v4097
        %v4354 = vpack.c.b16 %v4098, %v4098
        %v4355 = vpack.c.b16 %v4099, %v4099
        %v4356 = vpack.c.b16 %v4100, %v4100
        %v4357 = vpack.c.b16 %v4101, %v4101
        %v4358 = vpack.c.b16 %v4102, %v4102
        %v4359 = vpack.c.b16 %v4103, %v4103
        %v4360 = vpack.c.b16 %v4104, %v4104
        %v4361 = vpack.c.b16 %v4105, %v4105
        %v4362 = vpack.c.b16 %v4106, %v4106
        %v4363 = vpack.c.b16 %v4107, %v4107
        %v4364 = vpack.c.b16 %v4108, %v4108
        %v4365 = vpack.c.b16 %v4109, %v4109
        %v4366 = vpack.c.b16 %v4110, %v4110
        %v4367 = vpack.c.b16 %v4111, %v4111
        %v4368 = vpack.c.b16 %v4112, %v4112
        %v4369 = vpack.c.b16 %v4113, %v4113
        %v4370 = vpack.c.b16 %v4114, %v4114
        %v4371 = vpack.c.b16 %v4115, %v4115
        %v4372 = vpack.c.b16 %v4116, %v4116
        %v4373 = vpack.c.b16 %v4117, %v4117
        %v4374 = vpack.c.b16 %v4118, %v4118
        %v4375 = vpack.c.b16 %v4119, %v4119
        %v4376 = vpack.c.b16 %v4120, %v4120
        %v4377 = vpack.c.b16 %v4121, %v4121
        %v4378 = vpack.c.b16 %v4122, %v4122
        %v4379 = vpack.c.b16 %v4123, %v4123
        %v4380 = vpack.c.b16 %v4124, %v4124
        %v4381 = vpack.c.b16 %v4125, %v4125
        %v4382 = vpack.c.b16 %v4126, %v4126
        %v4383 = vpack.c.b16 %v4127, %v4127
        %v4384 = vpack.c.b16 %v4128, %v4128
        %v4385 = vpack.c.b16 %v4129, %v4129
        %v4386 = vpack.c.b16 %v4130, %v4130
        %v4387 = vpack.c.b16 %v4131, %v4131
        %v4388 = vpack.c.b16 %v4132, %v4132
        %v4389 = vpack.c.b16 %v4133, %v4133
        %v4390 = vpack.c.b16 %v4134, %v4134
        %v4391 = vpack.c.b16 %v4135, %v4135
        %v4392 = vpack.c.b16 %v4136, %v4136
        %v4393 = vpack.c.b16 %v4137, %v4137
        %v4394 = vpack.c.b16 %v4138, %v4138
        %v4395 = vpack.c.b16 %v4139, %v4139
        %v4396 = vpack.c.b16 %v4140, %v4140
        %v4397 = vpack.c.b16 %v4141, %v4141
        %v4398 = vpack.c.b16 %v4142, %v4142
        %v4399 = vpack.c.b16 %v4143, %v4143
        %v4400 = vpack.c.b16 %v4144, %v4144
        %v4401 = vpack.c.b16 %v4145, %v4145
        %v4402 = vpack.c.b16 %v4146, %v4146
        %v4403 = vpack.c.b16 %v4147, %v4147
        %v4404 = vpack.c.b16 %v4148, %v4148
        %v4405 = vpack.c.b16 %v4149, %v4149
        %v4406 = vpack.c.b16 %v4150, %v4150
        %v4407 = vpack.c.b16 %v4151, %v4151
        %v4408 = vpack.c.b16 %v4152, %v4152
        %v4409 = vpack.c.b16 %v4153, %v4153
        %v4410 = vpack.c.b16 %v4154, %v4154
        %v4411 = vpack.c.b16 %v4155, %v4155
        %v4412 = vpack.c.b16 %v4156, %v4156
        %v4413 = vpack.c.b16 %v4157, %v4157
        %v4414 = vpack.c.b16 %v4158, %v4158
        %v4415 = vpack.c.b16 %v4159, %v4159
        %v4416 = vpack.c.b16 %v4160, %v4160
        %v4417 = vpack.c.b16 %v4161, %v4161
        %v4418 = vpack.c.b16 %v4162, %v4162
        %v4419 = vpack.c.b16 %v4163, %v4163
        %v4420 = vpack.c.b16 %v4164, %v4164
        %v4421 = vpack.c.b16 %v4165, %v4165
        %v4422 = vpack.c.b16 %v4166, %v4166
        %v4423 = vpack.c.b16 %v4167, %v4167
        %v4424 = vpack.c.b16 %v4168, %v4168
        %v4425 = vpack.c.b16 %v4169, %v4169
        %v4426 = vpack.c.b16 %v4170, %v4170
        %v4427 = vpack.c.b16 %v4171, %v4171
        %v4428 = vpack.c.b16 %v4172, %v4172
        %v4429 = vpack.c.b16 %v4173, %v4173
        %v4430 = vpack.c.b16 %v4174, %v4174
        %v4431 = vpack.c.b16 %v4175, %v4175
        %v4432 = vpack.c.b16 %v4176, %v4176
        %v4433 = vpack.c.b16 %v4177, %v4177
        %v4434 = vpack.c.b16 %v4178, %v4178
        %v4435 = vpack.c.b16 %v4179, %v4179
        %v4436 = vpack.c.b16 %v4180, %v4180
        %v4437 = vpack.c.b16 %v4181, %v4181
        %v4438 = vpack.c.b16 %v4182, %v4182
        %v4439 = vpack.c.b16 %v4183, %v4183
        %v4440 = vpack.c.b16 %v4184, %v4184
        %v4441 = vpack.c.b16 %v4185, %v4185
        %v4442 = vpack.c.b16 %v4186, %v4186
        %v4443 = vpack.c.b16 %v4187, %v4187
        %v4444 = vpack.c.b16 %v4188, %v4188
        %v4445 = vpack.c.b16 %v4189, %v4189
        %v4446 = vpack.c.b16 %v4190, %v4190
        %v4447 = vpack.c.b16 %v4191, %v4191
        %v4448 = vpack.c.b16 %v4192, %v4192
        %v4449 = vpack.c.b16 %v4193, %v4193
        %v4450 = vpack.c.b16 %v4194, %v4194
        %v4451 = vpack.c.b16 %v4195, %v4195
        %v4452 = vpack.c.b16 %v4196, %v4196
        %v4453 = vpack.c.b16 %v4197, %v4197
        %v4454 = vpack.c.b16 %v4198, %v4198
        %v4455 = vpack.c.b16 %v4199, %v4199
        %v4456 = vpack.c.b16 %v4200, %v4200
        %v4457 = vpack.c.b16 %v4201, %v4201
        %v4458 = vpack.c.b16 %v4202, %v4202
        %v4459 = vpack.c.b16 %v4203, %v4203
        %v4460 = vpack.c.b16 %v4204, %v4204
        %v4461 = vpack.c.b16 %v4205, %v4205
        %v4462 = vpack.c.b16 %v4206, %v4206
        %v4463 = vpack.c.b16 %v4207, %v4207
        %v4464 = vpack.c.b16 %v4208, %v4208
        %v4465 = vpack.c.b16 %v4209, %v4209
        %v4466 = vpack.c.b16 %v4210, %v4210
        %v4467 = vpack.c.b16 %v4211, %v4211
        %v4468 = vpack.c.b16 %v4212, %v4212
        %v4469 = vpack.c.b16 %v4213, %v4213
        %v4470 = vpack.c.b16 %v4214, %v4214
        %v4471 = vpack.c.b16 %v4215, %v4215
        %v4472 = vpack.c.b16 %v4216, %v4216
        %v4473 = vpack.c.b16 %v4217, %v4217
        %v4474 = vpack.c.b16 %v4218, %v4218
        %v4475 = vpack.c.b16 %v4219, %v4219
        %v4476 = vpack.c.b16 %v4220, %v4220
        %v4477 = vpack.c.b16 %v4221, %v4221
        %v4478 = vpack.c.b16 %v4222, %v4222
        %v4479 = vpack.c.b16 %v4223, %v4223
        %v4480 = vpack.c.b16 %v4224, %v4224
        %v4481 = vpack.c.b16 %v4225, %v4225
        %v4482 = vpack.c.b16 %v4226, %v4226
        %v4483 = vpack.c.b16 %v4227, %v4227
        %v4484 = vpack.c.b16 %v4228, %v4228
        %v4485 = vpack.c.b16 %v4229, %v4229
        %v4486 = vpack.c.b16 %v4230, %v4230
        %v4487 = vpack.c.b16 %v4231, %v4231
        %v4488 = vpack.c.b16 %v4232, %v4232
        %v4489 = vpack.c.b16 %v4233, %v4233
        %v4490 = vpack.c.b16 %v4234, %v4234
        %v4491 = vpack.c.b16 %v4235, %v4235
        %v4492 = vpack.c.b16 %v4236, %v4236
        %v4493 = vpack.c.b16 %v4237, %v4237
        %v4494 = vpack.c.b16 %v4238, %v4238
        %v4495 = vpack.c.b16 %v4239, %v4239
        %v4496 = vpack.c.b16 %v4240, %v4240
        %v4497 = vpack.c.b16 %v4241, %v4241
        %v4498 = vpack.c.b16 %v4242, %v4242
        %v4499 = vpack.c.b16 %v4243, %v4243
        %v4500 = vpack.c.b16 %v4244, %v4244
        %v4501 = vpack.c.b16 %v4245, %v4245
        %v4502 = vpack.c.b16 %v4246, %v4246
        %v4503 = vpack.c.b16 %v4247, %v4247
        %v4504 = vpack.c.b16 %v4248, %v4248
        %v4505 = vpack.c.b16 %v4249, %v4249
        %v4506 = vpack.c.b16 %v4250, %v4250
        %v4507 = vpack.c.b16 %v4251, %v4251
        %v4508 = vpack.c.b16 %v4252, %v4252
        %v4509 = vpack.c.b16 %v4253, %v4253
        %v4510 = vpack.c.b16 %v4254, %v4254
        %v4511 = vpack.c.b16 %v4255, %v4255
        %v4512 = vpack.c.b16 %v4256, %v4256
        %v4513 = vpack.c.b16 %v4257, %v4257
        %v4514 = vpack.c.b16 %v4258, %v4258
        %v4515 = vpack.c.b16 %v4259, %v4259
        %v4516 = vpack.c.b16 %v4260, %v4260
        %v4517 = vpack.c.b16 %v4261, %v4261
        %v4518 = vpack.c.b16 %v4262, %v4262
        %v4519 = vpack.c.b16 %v4263, %v4263
        %v4520 = vpack.c.b16 %v4264, %v4264
        %v4521 = vpack.c.b16 %v4265, %v4265
        %v4522 = vpack.c.b16 %v4266, %v4266
        %v4523 = vpack.c.b16 %v4267, %v4267
        %v4524 = vpack.c.b16 %v4268, %v4268
        %v4525 = vpack.c.b16 %v4269, %v4269
        %v4526 = vpack.c.b16 %v4270, %v4270
        %v4527 = vpack.c.b16 %v4271, %v4271
        %v4528 = vpack.c.b16 %v4272, %v4272
        %v4529 = vpack.c.b16 %v4273, %v4273
        %v4530 = vpack.c.b16 %v4274, %v4274
        %v4531 = vpack.c.b16 %v4275, %v4275
        %v4532 = vpack.c.b16 %v4276, %v4276
        %v4533 = vpack.c.b16 %v4277, %v4277
        %v4534 = vpack.c.b16 %v4278, %v4278
        %v4535 = vpack.c.b16 %v4279, %v4279
        %v4536 = vpack.c.b16 %v4280, %v4280
        %v4537 = vpack.c.b16 %v4281, %v4281
        %v4538 = vpack.c.b16 %v4282, %v4282
        %v4539 = vpack.c.b16 %v4283, %v4283
        %v4540 = vpack.c.b16 %v4284, %v4284
        %v4541 = vpack.c.b16 %v4285, %v4285
        %v4542 = vpack.c.b16 %v4286, %v4286
        %v4543 = vpack.c.b16 %v4287, %v4287
        %v4544 = vpack.c.b16 %v4288, %v4288
        %v4545 = vpack.c.b16 %v4289, %v4289
        %v4546 = vpack.c.b16 %v4290, %v4290
        %v4547 = vpack.c.b16 %v4291, %v4291
        %v4548 = vpack.c.b16 %v4292, %v4292
        %v4549 = vpack.c.b16 %v4293, %v4293
        %v4550 = vpack.c.b16 %v4294, %v4294
        %v4551 = vpack.c.b16 %v4295, %v4295
        %v4552 = vpack.c.b16 %v4296, %v4296
        %v4553 = vpack.c.b16 %v4297, %v4297
        %v4554 = vpack.c.b16 %v4298, %v4298
        %v4555 = vpack.c.b16 %v4299, %v4299
        %v4556 = vpack.c.b16 %v4300, %v4300
        %v4557 = vpack.c.b16 %v4301, %v4301
        %v4558 = vpack.c.b16 %v4302, %v4302
        %v4559 = vpack.c.b16 %v4303, %v4303
        %v4560 = vpack.c.b16 %v4304, %v4304
        %v4561 = vpack.c.b16 %v4305, %v4305
        %v4562 = vpack.c.b16 %v4306, %v4306
        %v4563 = vpack.c.b16 %v4307, %v4307
        %v4564 = vpack.c.b16 %v4308, %v4308
        %v4565 = vpack.c.b16 %v4309, %v4309
        %v4566 = vpack.c.b16 %v4310, %v4310
        %v4567 = vpack.c.b16 %v4311, %v4311
        %v4568 = vpack.c.b16 %v4312, %v4312
        %v4569 = vpack.c.b16 %v4313, %v4313
        %v4570 = vpack.c.b16 %v4314, %v4314
        %v4571 = vpack.c.b16 %v4315, %v4315
        %v4572 = vpack.c.b16 %v4316, %v4316
        %v4573 = vpack.c.b16 %v4317, %v4317
        %v4574 = vpack.c.b16 %v4318, %v4318
        %v4575 = vpack.c.b16 %v4319, %v4319
        %v4576 = vpack.c.b16 %v4320, %v4320
        %v4577 = vpack.c.b16 %v4321, %v4321
        %v4578 = vpack.c.b16 %v4322, %v4322
        %v4579 = vpack.c.b16 %v4323, %v4323
        %v4580 = vpack.c.b16 %v4324, %v4324
        %v4581 = vpack.c.b16 %v4325, %v4325
        %v4582 = vpack.c.b16 %v4326, %v4326
        %v4583 = vpack.c.b16 %v4327, %v4327
        %v4584 = vpack.c.b16 %v4328, %v4328
        %v4585 = vpack.c.b16 %v4329, %v4329
        %v4586 = vpack.c.b16 %v4330, %v4330
        %v4587 = vpack.c.b16 %v4331, %v4331
        %v4588 = vpack.c.b16 %v4332, %v4332
        %v4589 = vpack.c.b16 %v4333, %v4333
        %v4590 = vpack.c.b16 %v4334, %v4334
        %v4591 = vpack.c.b16 %v4335, %v4335
        %v4592 = vpack.c.b16 %v4336, %v4336
        %v4593 = vpack.c.b16 %v4337, %v4337
        %v4594 = vpack.c.b16 %v4338, %v4338
        %v4595 = vpack.c.b16 %v4339, %v4339
        %v4596 = vpack.c.b16 %v4340, %v4340
        %v4597 = vpack.c.b16 %v4341, %v4341
        %v4598 = vpack.c.b16 %v4342, %v4342
        %v4599 = vpack.c.b16 %v4343, %v4343
        %v4600 = vpack.c.b16 %v4344, %v4344
        %v4601 = vpack.c.b16 %v4345, %v4345
        %v4602 = vpack.c.b16 %v4346, %v4346
        %v4603 = vpack.c.b16 %v4347, %v4347
        %v4604 = vpack.c.b16 %v4348, %v4348
        %v4605 = vpack.c.b16 %v4349, %v4349
        %v4606 = vpack.c.b16 %v4350, %v4350
        %v4607 = vpack.c.b16 %v4351, %v4351
        %v4608 = vpack.c.b16 %v4352, %v4352
        %vm4865 = vcmask 60416
        %4866 = vst.msk [vmem:[%s208] sm:$0xf] %vm4865, %v4353
        %4867 = vst.msk [vmem:[%s208 + $0x4] sm:$0xf] %vm4865, %v4354
        %4868 = vst.msk [vmem:[%s208 + $0x8] sm:$0xf] %vm4865, %v4355
        %4869 = vst.msk [vmem:[%s208 + $0xc] sm:$0xf] %vm4865, %v4356
        %4870 = vst.msk [vmem:[%s208 + $0x10] sm:$0xf] %vm4865, %v4357
        %4871 = vst.msk [vmem:[%s208 + $0x14] sm:$0xf] %vm4865, %v4358
        %4872 = vst.msk [vmem:[%s208 + $0x18] sm:$0xf] %vm4865, %v4359
        %4873 = vst.msk [vmem:[%s208 + $0x1c] sm:$0xf] %vm4865, %v4360
        %4874 = vst.msk [vmem:[%s208 + $0x20] sm:$0xf] %vm4865, %v4361
        %4875 = vst.msk [vmem:[%s208 + $0x24] sm:$0xf] %vm4865, %v4362
        %4876 = vst.msk [vmem:[%s208 + $0x28] sm:$0xf] %vm4865, %v4363
        %4877 = vst.msk [vmem:[%s208 + $0x2c] sm:$0xf] %vm4865, %v4364
        %4878 = vst.msk [vmem:[%s208 + $0x30] sm:$0xf] %vm4865, %v4365
        %4879 = vst.msk [vmem:[%s208 + $0x34] sm:$0xf] %vm4865, %v4366
        %4880 = vst.msk [vmem:[%s208 + $0x38] sm:$0xf] %vm4865, %v4367
        %4881 = vst.msk [vmem:[%s208 + $0x3c] sm:$0xf] %vm4865, %v4368
        %4882 = vst.msk [vmem:[%s208 + $0x40] sm:$0xf] %vm4865, %v4369
        %4883 = vst.msk [vmem:[%s208 + $0x44] sm:$0xf] %vm4865, %v4370
        %4884 = vst.msk [vmem:[%s208 + $0x48] sm:$0xf] %vm4865, %v4371
        %4885 = vst.msk [vmem:[%s208 + $0x4c] sm:$0xf] %vm4865, %v4372
        %4886 = vst.msk [vmem:[%s208 + $0x50] sm:$0xf] %vm4865, %v4373
        %4887 = vst.msk [vmem:[%s208 + $0x54] sm:$0xf] %vm4865, %v4374
        %4888 = vst.msk [vmem:[%s208 + $0x58] sm:$0xf] %vm4865, %v4375
        %4889 = vst.msk [vmem:[%s208 + $0x5c] sm:$0xf] %vm4865, %v4376
        %4890 = vst.msk [vmem:[%s208 + $0x60] sm:$0xf] %vm4865, %v4377
        %4891 = vst.msk [vmem:[%s208 + $0x64] sm:$0xf] %vm4865, %v4378
        %4892 = vst.msk [vmem:[%s208 + $0x68] sm:$0xf] %vm4865, %v4379
        %4893 = vst.msk [vmem:[%s208 + $0x6c] sm:$0xf] %vm4865, %v4380
        %4894 = vst.msk [vmem:[%s208 + $0x70] sm:$0xf] %vm4865, %v4381
        %4895 = vst.msk [vmem:[%s208 + $0x74] sm:$0xf] %vm4865, %v4382
        %4896 = vst.msk [vmem:[%s208 + $0x78] sm:$0xf] %vm4865, %v4383
        %4897 = vst.msk [vmem:[%s208 + $0x7c] sm:$0xf] %vm4865, %v4384
        %4898 = vst.msk [vmem:[%s208 + $0x80] sm:$0xf] %vm4865, %v4385
        %4899 = vst.msk [vmem:[%s208 + $0x84] sm:$0xf] %vm4865, %v4386
        %4900 = vst.msk [vmem:[%s208 + $0x88] sm:$0xf] %vm4865, %v4387
        %4901 = vst.msk [vmem:[%s208 + $0x8c] sm:$0xf] %vm4865, %v4388
        %4902 = vst.msk [vmem:[%s208 + $0x90] sm:$0xf] %vm4865, %v4389
        %4903 = vst.msk [vmem:[%s208 + $0x94] sm:$0xf] %vm4865, %v4390
        %4904 = vst.msk [vmem:[%s208 + $0x98] sm:$0xf] %vm4865, %v4391
        %4905 = vst.msk [vmem:[%s208 + $0x9c] sm:$0xf] %vm4865, %v4392
        %4906 = vst.msk [vmem:[%s208 + $0xa0] sm:$0xf] %vm4865, %v4393
        %4907 = vst.msk [vmem:[%s208 + $0xa4] sm:$0xf] %vm4865, %v4394
        %4908 = vst.msk [vmem:[%s208 + $0xa8] sm:$0xf] %vm4865, %v4395
        %4909 = vst.msk [vmem:[%s208 + $0xac] sm:$0xf] %vm4865, %v4396
        %4910 = vst.msk [vmem:[%s208 + $0xb0] sm:$0xf] %vm4865, %v4397
        %4911 = vst.msk [vmem:[%s208 + $0xb4] sm:$0xf] %vm4865, %v4398
        %4912 = vst.msk [vmem:[%s208 + $0xb8] sm:$0xf] %vm4865, %v4399
        %4913 = vst.msk [vmem:[%s208 + $0xbc] sm:$0xf] %vm4865, %v4400
        %4914 = vst.msk [vmem:[%s208 + $0xc0] sm:$0xf] %vm4865, %v4401
        %4915 = vst.msk [vmem:[%s208 + $0xc4] sm:$0xf] %vm4865, %v4402
        %4916 = vst.msk [vmem:[%s208 + $0xc8] sm:$0xf] %vm4865, %v4403
        %4917 = vst.msk [vmem:[%s208 + $0xcc] sm:$0xf] %vm4865, %v4404
        %4918 = vst.msk [vmem:[%s208 + $0xd0] sm:$0xf] %vm4865, %v4405
        %4919 = vst.msk [vmem:[%s208 + $0xd4] sm:$0xf] %vm4865, %v4406
        %4920 = vst.msk [vmem:[%s208 + $0xd8] sm:$0xf] %vm4865, %v4407
        %4921 = vst.msk [vmem:[%s208 + $0xdc] sm:$0xf] %vm4865, %v4408
        %4922 = vst.msk [vmem:[%s208 + $0xe0] sm:$0xf] %vm4865, %v4409
        %4923 = vst.msk [vmem:[%s208 + $0xe4] sm:$0xf] %vm4865, %v4410
        %4924 = vst.msk [vmem:[%s208 + $0xe8] sm:$0xf] %vm4865, %v4411
        %4925 = vst.msk [vmem:[%s208 + $0xec] sm:$0xf] %vm4865, %v4412
        %4926 = vst.msk [vmem:[%s208 + $0xf0] sm:$0xf] %vm4865, %v4413
        %4927 = vst.msk [vmem:[%s208 + $0xf4] sm:$0xf] %vm4865, %v4414
        %4928 = vst.msk [vmem:[%s208 + $0xf8] sm:$0xf] %vm4865, %v4415
        %4929 = vst.msk [vmem:[%s208 + $0xfc] sm:$0xf] %vm4865, %v4416
        %4930 = vst.msk [vmem:[%s208 + $0x100] sm:$0xf] %vm4865, %v4417
        %4931 = vst.msk [vmem:[%s208 + $0x104] sm:$0xf] %vm4865, %v4418
        %4932 = vst.msk [vmem:[%s208 + $0x108] sm:$0xf] %vm4865, %v4419
        %4933 = vst.msk [vmem:[%s208 + $0x10c] sm:$0xf] %vm4865, %v4420
        %4934 = vst.msk [vmem:[%s208 + $0x110] sm:$0xf] %vm4865, %v4421
        %4935 = vst.msk [vmem:[%s208 + $0x114] sm:$0xf] %vm4865, %v4422
        %4936 = vst.msk [vmem:[%s208 + $0x118] sm:$0xf] %vm4865, %v4423
        %4937 = vst.msk [vmem:[%s208 + $0x11c] sm:$0xf] %vm4865, %v4424
        %4938 = vst.msk [vmem:[%s208 + $0x120] sm:$0xf] %vm4865, %v4425
        %4939 = vst.msk [vmem:[%s208 + $0x124] sm:$0xf] %vm4865, %v4426
        %4940 = vst.msk [vmem:[%s208 + $0x128] sm:$0xf] %vm4865, %v4427
        %4941 = vst.msk [vmem:[%s208 + $0x12c] sm:$0xf] %vm4865, %v4428
        %4942 = vst.msk [vmem:[%s208 + $0x130] sm:$0xf] %vm4865, %v4429
        %4943 = vst.msk [vmem:[%s208 + $0x134] sm:$0xf] %vm4865, %v4430
        %4944 = vst.msk [vmem:[%s208 + $0x138] sm:$0xf] %vm4865, %v4431
        %4945 = vst.msk [vmem:[%s208 + $0x13c] sm:$0xf] %vm4865, %v4432
        %4946 = vst.msk [vmem:[%s208 + $0x140] sm:$0xf] %vm4865, %v4433
        %4947 = vst.msk [vmem:[%s208 + $0x144] sm:$0xf] %vm4865, %v4434
        %4948 = vst.msk [vmem:[%s208 + $0x148] sm:$0xf] %vm4865, %v4435
        %4949 = vst.msk [vmem:[%s208 + $0x14c] sm:$0xf] %vm4865, %v4436
        %4950 = vst.msk [vmem:[%s208 + $0x150] sm:$0xf] %vm4865, %v4437
        %4951 = vst.msk [vmem:[%s208 + $0x154] sm:$0xf] %vm4865, %v4438
        %4952 = vst.msk [vmem:[%s208 + $0x158] sm:$0xf] %vm4865, %v4439
        %4953 = vst.msk [vmem:[%s208 + $0x15c] sm:$0xf] %vm4865, %v4440
        %4954 = vst.msk [vmem:[%s208 + $0x160] sm:$0xf] %vm4865, %v4441
        %4955 = vst.msk [vmem:[%s208 + $0x164] sm:$0xf] %vm4865, %v4442
        %4956 = vst.msk [vmem:[%s208 + $0x168] sm:$0xf] %vm4865, %v4443
        %4957 = vst.msk [vmem:[%s208 + $0x16c] sm:$0xf] %vm4865, %v4444
        %4958 = vst.msk [vmem:[%s208 + $0x170] sm:$0xf] %vm4865, %v4445
        %4959 = vst.msk [vmem:[%s208 + $0x174] sm:$0xf] %vm4865, %v4446
        %4960 = vst.msk [vmem:[%s208 + $0x178] sm:$0xf] %vm4865, %v4447
        %4961 = vst.msk [vmem:[%s208 + $0x17c] sm:$0xf] %vm4865, %v4448
        %4962 = vst.msk [vmem:[%s208 + $0x180] sm:$0xf] %vm4865, %v4449
        %4963 = vst.msk [vmem:[%s208 + $0x184] sm:$0xf] %vm4865, %v4450
        %4964 = vst.msk [vmem:[%s208 + $0x188] sm:$0xf] %vm4865, %v4451
        %4965 = vst.msk [vmem:[%s208 + $0x18c] sm:$0xf] %vm4865, %v4452
        %4966 = vst.msk [vmem:[%s208 + $0x190] sm:$0xf] %vm4865, %v4453
        %4967 = vst.msk [vmem:[%s208 + $0x194] sm:$0xf] %vm4865, %v4454
        %4968 = vst.msk [vmem:[%s208 + $0x198] sm:$0xf] %vm4865, %v4455
        %4969 = vst.msk [vmem:[%s208 + $0x19c] sm:$0xf] %vm4865, %v4456
        %4970 = vst.msk [vmem:[%s208 + $0x1a0] sm:$0xf] %vm4865, %v4457
        %4971 = vst.msk [vmem:[%s208 + $0x1a4] sm:$0xf] %vm4865, %v4458
        %4972 = vst.msk [vmem:[%s208 + $0x1a8] sm:$0xf] %vm4865, %v4459
        %4973 = vst.msk [vmem:[%s208 + $0x1ac] sm:$0xf] %vm4865, %v4460
        %4974 = vst.msk [vmem:[%s208 + $0x1b0] sm:$0xf] %vm4865, %v4461
        %4975 = vst.msk [vmem:[%s208 + $0x1b4] sm:$0xf] %vm4865, %v4462
        %4976 = vst.msk [vmem:[%s208 + $0x1b8] sm:$0xf] %vm4865, %v4463
        %4977 = vst.msk [vmem:[%s208 + $0x1bc] sm:$0xf] %vm4865, %v4464
        %4978 = vst.msk [vmem:[%s208 + $0x1c0] sm:$0xf] %vm4865, %v4465
        %4979 = vst.msk [vmem:[%s208 + $0x1c4] sm:$0xf] %vm4865, %v4466
        %4980 = vst.msk [vmem:[%s208 + $0x1c8] sm:$0xf] %vm4865, %v4467
        %4981 = vst.msk [vmem:[%s208 + $0x1cc] sm:$0xf] %vm4865, %v4468
        %4982 = vst.msk [vmem:[%s208 + $0x1d0] sm:$0xf] %vm4865, %v4469
        %4983 = vst.msk [vmem:[%s208 + $0x1d4] sm:$0xf] %vm4865, %v4470
        %4984 = vst.msk [vmem:[%s208 + $0x1d8] sm:$0xf] %vm4865, %v4471
        %4985 = vst.msk [vmem:[%s208 + $0x1dc] sm:$0xf] %vm4865, %v4472
        %4986 = vst.msk [vmem:[%s208 + $0x1e0] sm:$0xf] %vm4865, %v4473
        %4987 = vst.msk [vmem:[%s208 + $0x1e4] sm:$0xf] %vm4865, %v4474
        %4988 = vst.msk [vmem:[%s208 + $0x1e8] sm:$0xf] %vm4865, %v4475
        %4989 = vst.msk [vmem:[%s208 + $0x1ec] sm:$0xf] %vm4865, %v4476
        %4990 = vst.msk [vmem:[%s208 + $0x1f0] sm:$0xf] %vm4865, %v4477
        %4991 = vst.msk [vmem:[%s208 + $0x1f4] sm:$0xf] %vm4865, %v4478
        %4992 = vst.msk [vmem:[%s208 + $0x1f8] sm:$0xf] %vm4865, %v4479
        %4993 = vst.msk [vmem:[%s208 + $0x1fc] sm:$0xf] %vm4865, %v4480
        %4994 = vst.msk [vmem:[%s208 + $0x200] sm:$0xf] %vm4865, %v4481
        %4995 = vst.msk [vmem:[%s208 + $0x204] sm:$0xf] %vm4865, %v4482
        %4996 = vst.msk [vmem:[%s208 + $0x208] sm:$0xf] %vm4865, %v4483
        %4997 = vst.msk [vmem:[%s208 + $0x20c] sm:$0xf] %vm4865, %v4484
        %4998 = vst.msk [vmem:[%s208 + $0x210] sm:$0xf] %vm4865, %v4485
        %4999 = vst.msk [vmem:[%s208 + $0x214] sm:$0xf] %vm4865, %v4486
        %5000 = vst.msk [vmem:[%s208 + $0x218] sm:$0xf] %vm4865, %v4487
        %5001 = vst.msk [vmem:[%s208 + $0x21c] sm:$0xf] %vm4865, %v4488
        %5002 = vst.msk [vmem:[%s208 + $0x220] sm:$0xf] %vm4865, %v4489
        %5003 = vst.msk [vmem:[%s208 + $0x224] sm:$0xf] %vm4865, %v4490
        %5004 = vst.msk [vmem:[%s208 + $0x228] sm:$0xf] %vm4865, %v4491
        %5005 = vst.msk [vmem:[%s208 + $0x22c] sm:$0xf] %vm4865, %v4492
        %5006 = vst.msk [vmem:[%s208 + $0x230] sm:$0xf] %vm4865, %v4493
        %5007 = vst.msk [vmem:[%s208 + $0x234] sm:$0xf] %vm4865, %v4494
        %5008 = vst.msk [vmem:[%s208 + $0x238] sm:$0xf] %vm4865, %v4495
        %5009 = vst.msk [vmem:[%s208 + $0x23c] sm:$0xf] %vm4865, %v4496
        %5010 = vst.msk [vmem:[%s208 + $0x240] sm:$0xf] %vm4865, %v4497
        %5011 = vst.msk [vmem:[%s208 + $0x244] sm:$0xf] %vm4865, %v4498
        %5012 = vst.msk [vmem:[%s208 + $0x248] sm:$0xf] %vm4865, %v4499
        %5013 = vst.msk [vmem:[%s208 + $0x24c] sm:$0xf] %vm4865, %v4500
        %5014 = vst.msk [vmem:[%s208 + $0x250] sm:$0xf] %vm4865, %v4501
        %5015 = vst.msk [vmem:[%s208 + $0x254] sm:$0xf] %vm4865, %v4502
        %5016 = vst.msk [vmem:[%s208 + $0x258] sm:$0xf] %vm4865, %v4503
        %5017 = vst.msk [vmem:[%s208 + $0x25c] sm:$0xf] %vm4865, %v4504
        %5018 = vst.msk [vmem:[%s208 + $0x260] sm:$0xf] %vm4865, %v4505
        %5019 = vst.msk [vmem:[%s208 + $0x264] sm:$0xf] %vm4865, %v4506
        %5020 = vst.msk [vmem:[%s208 + $0x268] sm:$0xf] %vm4865, %v4507
        %5021 = vst.msk [vmem:[%s208 + $0x26c] sm:$0xf] %vm4865, %v4508
        %5022 = vst.msk [vmem:[%s208 + $0x270] sm:$0xf] %vm4865, %v4509
        %5023 = vst.msk [vmem:[%s208 + $0x274] sm:$0xf] %vm4865, %v4510
        %5024 = vst.msk [vmem:[%s208 + $0x278] sm:$0xf] %vm4865, %v4511
        %5025 = vst.msk [vmem:[%s208 + $0x27c] sm:$0xf] %vm4865, %v4512
        %5026 = vst.msk [vmem:[%s208 + $0x280] sm:$0xf] %vm4865, %v4513
        %5027 = vst.msk [vmem:[%s208 + $0x284] sm:$0xf] %vm4865, %v4514
        %5028 = vst.msk [vmem:[%s208 + $0x288] sm:$0xf] %vm4865, %v4515
        %5029 = vst.msk [vmem:[%s208 + $0x28c] sm:$0xf] %vm4865, %v4516
        %5030 = vst.msk [vmem:[%s208 + $0x290] sm:$0xf] %vm4865, %v4517
        %5031 = vst.msk [vmem:[%s208 + $0x294] sm:$0xf] %vm4865, %v4518
        %5032 = vst.msk [vmem:[%s208 + $0x298] sm:$0xf] %vm4865, %v4519
        %5033 = vst.msk [vmem:[%s208 + $0x29c] sm:$0xf] %vm4865, %v4520
        %5034 = vst.msk [vmem:[%s208 + $0x2a0] sm:$0xf] %vm4865, %v4521
        %5035 = vst.msk [vmem:[%s208 + $0x2a4] sm:$0xf] %vm4865, %v4522
        %5036 = vst.msk [vmem:[%s208 + $0x2a8] sm:$0xf] %vm4865, %v4523
        %5037 = vst.msk [vmem:[%s208 + $0x2ac] sm:$0xf] %vm4865, %v4524
        %5038 = vst.msk [vmem:[%s208 + $0x2b0] sm:$0xf] %vm4865, %v4525
        %5039 = vst.msk [vmem:[%s208 + $0x2b4] sm:$0xf] %vm4865, %v4526
        %5040 = vst.msk [vmem:[%s208 + $0x2b8] sm:$0xf] %vm4865, %v4527
        %5041 = vst.msk [vmem:[%s208 + $0x2bc] sm:$0xf] %vm4865, %v4528
        %5042 = vst.msk [vmem:[%s208 + $0x2c0] sm:$0xf] %vm4865, %v4529
        %5043 = vst.msk [vmem:[%s208 + $0x2c4] sm:$0xf] %vm4865, %v4530
        %5044 = vst.msk [vmem:[%s208 + $0x2c8] sm:$0xf] %vm4865, %v4531
        %5045 = vst.msk [vmem:[%s208 + $0x2cc] sm:$0xf] %vm4865, %v4532
        %5046 = vst.msk [vmem:[%s208 + $0x2d0] sm:$0xf] %vm4865, %v4533
        %5047 = vst.msk [vmem:[%s208 + $0x2d4] sm:$0xf] %vm4865, %v4534
        %5048 = vst.msk [vmem:[%s208 + $0x2d8] sm:$0xf] %vm4865, %v4535
        %5049 = vst.msk [vmem:[%s208 + $0x2dc] sm:$0xf] %vm4865, %v4536
        %5050 = vst.msk [vmem:[%s208 + $0x2e0] sm:$0xf] %vm4865, %v4537
        %5051 = vst.msk [vmem:[%s208 + $0x2e4] sm:$0xf] %vm4865, %v4538
        %5052 = vst.msk [vmem:[%s208 + $0x2e8] sm:$0xf] %vm4865, %v4539
        %5053 = vst.msk [vmem:[%s208 + $0x2ec] sm:$0xf] %vm4865, %v4540
        %5054 = vst.msk [vmem:[%s208 + $0x2f0] sm:$0xf] %vm4865, %v4541
        %5055 = vst.msk [vmem:[%s208 + $0x2f4] sm:$0xf] %vm4865, %v4542
        %5056 = vst.msk [vmem:[%s208 + $0x2f8] sm:$0xf] %vm4865, %v4543
        %5057 = vst.msk [vmem:[%s208 + $0x2fc] sm:$0xf] %vm4865, %v4544
        %5058 = vst.msk [vmem:[%s208 + $0x300] sm:$0xf] %vm4865, %v4545
        %5059 = vst.msk [vmem:[%s208 + $0x304] sm:$0xf] %vm4865, %v4546
        %5060 = vst.msk [vmem:[%s208 + $0x308] sm:$0xf] %vm4865, %v4547
        %5061 = vst.msk [vmem:[%s208 + $0x30c] sm:$0xf] %vm4865, %v4548
        %5062 = vst.msk [vmem:[%s208 + $0x310] sm:$0xf] %vm4865, %v4549
        %5063 = vst.msk [vmem:[%s208 + $0x314] sm:$0xf] %vm4865, %v4550
        %5064 = vst.msk [vmem:[%s208 + $0x318] sm:$0xf] %vm4865, %v4551
        %5065 = vst.msk [vmem:[%s208 + $0x31c] sm:$0xf] %vm4865, %v4552
        %5066 = vst.msk [vmem:[%s208 + $0x320] sm:$0xf] %vm4865, %v4553
        %5067 = vst.msk [vmem:[%s208 + $0x324] sm:$0xf] %vm4865, %v4554
        %5068 = vst.msk [vmem:[%s208 + $0x328] sm:$0xf] %vm4865, %v4555
        %5069 = vst.msk [vmem:[%s208 + $0x32c] sm:$0xf] %vm4865, %v4556
        %5070 = vst.msk [vmem:[%s208 + $0x330] sm:$0xf] %vm4865, %v4557
        %5071 = vst.msk [vmem:[%s208 + $0x334] sm:$0xf] %vm4865, %v4558
        %5072 = vst.msk [vmem:[%s208 + $0x338] sm:$0xf] %vm4865, %v4559
        %5073 = vst.msk [vmem:[%s208 + $0x33c] sm:$0xf] %vm4865, %v4560
        %5074 = vst.msk [vmem:[%s208 + $0x340] sm:$0xf] %vm4865, %v4561
        %5075 = vst.msk [vmem:[%s208 + $0x344] sm:$0xf] %vm4865, %v4562
        %5076 = vst.msk [vmem:[%s208 + $0x348] sm:$0xf] %vm4865, %v4563
        %5077 = vst.msk [vmem:[%s208 + $0x34c] sm:$0xf] %vm4865, %v4564
        %5078 = vst.msk [vmem:[%s208 + $0x350] sm:$0xf] %vm4865, %v4565
        %5079 = vst.msk [vmem:[%s208 + $0x354] sm:$0xf] %vm4865, %v4566
        %5080 = vst.msk [vmem:[%s208 + $0x358] sm:$0xf] %vm4865, %v4567
        %5081 = vst.msk [vmem:[%s208 + $0x35c] sm:$0xf] %vm4865, %v4568
        %5082 = vst.msk [vmem:[%s208 + $0x360] sm:$0xf] %vm4865, %v4569
        %5083 = vst.msk [vmem:[%s208 + $0x364] sm:$0xf] %vm4865, %v4570
        %5084 = vst.msk [vmem:[%s208 + $0x368] sm:$0xf] %vm4865, %v4571
        %5085 = vst.msk [vmem:[%s208 + $0x36c] sm:$0xf] %vm4865, %v4572
        %5086 = vst.msk [vmem:[%s208 + $0x370] sm:$0xf] %vm4865, %v4573
        %5087 = vst.msk [vmem:[%s208 + $0x374] sm:$0xf] %vm4865, %v4574
        %5088 = vst.msk [vmem:[%s208 + $0x378] sm:$0xf] %vm4865, %v4575
        %5089 = vst.msk [vmem:[%s208 + $0x37c] sm:$0xf] %vm4865, %v4576
        %5090 = vst.msk [vmem:[%s208 + $0x380] sm:$0xf] %vm4865, %v4577
        %5091 = vst.msk [vmem:[%s208 + $0x384] sm:$0xf] %vm4865, %v4578
        %5092 = vst.msk [vmem:[%s208 + $0x388] sm:$0xf] %vm4865, %v4579
        %5093 = vst.msk [vmem:[%s208 + $0x38c] sm:$0xf] %vm4865, %v4580
        %5094 = vst.msk [vmem:[%s208 + $0x390] sm:$0xf] %vm4865, %v4581
        %5095 = vst.msk [vmem:[%s208 + $0x394] sm:$0xf] %vm4865, %v4582
        %5096 = vst.msk [vmem:[%s208 + $0x398] sm:$0xf] %vm4865, %v4583
        %5097 = vst.msk [vmem:[%s208 + $0x39c] sm:$0xf] %vm4865, %v4584
        %5098 = vst.msk [vmem:[%s208 + $0x3a0] sm:$0xf] %vm4865, %v4585
        %5099 = vst.msk [vmem:[%s208 + $0x3a4] sm:$0xf] %vm4865, %v4586
        %5100 = vst.msk [vmem:[%s208 + $0x3a8] sm:$0xf] %vm4865, %v4587
        %5101 = vst.msk [vmem:[%s208 + $0x3ac] sm:$0xf] %vm4865, %v4588
        %5102 = vst.msk [vmem:[%s208 + $0x3b0] sm:$0xf] %vm4865, %v4589
        %5103 = vst.msk [vmem:[%s208 + $0x3b4] sm:$0xf] %vm4865, %v4590
        %5104 = vst.msk [vmem:[%s208 + $0x3b8] sm:$0xf] %vm4865, %v4591
        %5105 = vst.msk [vmem:[%s208 + $0x3bc] sm:$0xf] %vm4865, %v4592
        %5106 = vst.msk [vmem:[%s208 + $0x3c0] sm:$0xf] %vm4865, %v4593
        %5107 = vst.msk [vmem:[%s208 + $0x3c4] sm:$0xf] %vm4865, %v4594
        %5108 = vst.msk [vmem:[%s208 + $0x3c8] sm:$0xf] %vm4865, %v4595
        %5109 = vst.msk [vmem:[%s208 + $0x3cc] sm:$0xf] %vm4865, %v4596
        %5110 = vst.msk [vmem:[%s208 + $0x3d0] sm:$0xf] %vm4865, %v4597
        %5111 = vst.msk [vmem:[%s208 + $0x3d4] sm:$0xf] %vm4865, %v4598
        %5112 = vst.msk [vmem:[%s208 + $0x3d8] sm:$0xf] %vm4865, %v4599
        %5113 = vst.msk [vmem:[%s208 + $0x3dc] sm:$0xf] %vm4865, %v4600
        %5114 = vst.msk [vmem:[%s208 + $0x3e0] sm:$0xf] %vm4865, %v4601
        %5115 = vst.msk [vmem:[%s208 + $0x3e4] sm:$0xf] %vm4865, %v4602
        %5116 = vst.msk [vmem:[%s208 + $0x3e8] sm:$0xf] %vm4865, %v4603
        %5117 = vst.msk [vmem:[%s208 + $0x3ec] sm:$0xf] %vm4865, %v4604
        %5118 = vst.msk [vmem:[%s208 + $0x3f0] sm:$0xf] %vm4865, %v4605
        %5119 = vst.msk [vmem:[%s208 + $0x3f4] sm:$0xf] %vm4865, %v4606
        %5120 = vst.msk [vmem:[%s208 + $0x3f8] sm:$0xf] %vm4865, %v4607
        %5121 = vst.msk [vmem:[%s208 + $0x3fc] sm:$0xf] %vm4865, %v4608
        %v5122 = vsel %vm217, %v3585, 0.0
        %v5123 = vsel %vm217, %v3586, 0.0
        %v5124 = vadd.f32 %v5122, %v5123
        %v5125 = vsel %vm217, %v3587, 0.0
        %v5126 = vadd.f32 %v5124, %v5125
        %v5127 = vsel %vm217, %v3588, 0.0
        %v5128 = vadd.f32 %v5126, %v5127
        %v5129 = vsel %vm217, %v3589, 0.0
        %v5130 = vadd.f32 %v5128, %v5129
        %v5131 = vsel %vm217, %v3590, 0.0
        %v5132 = vadd.f32 %v5130, %v5131
        %v5133 = vsel %vm217, %v3591, 0.0
        %v5134 = vadd.f32 %v5132, %v5133
        %v5135 = vsel %vm217, %v3592, 0.0
        %v5136 = vadd.f32 %v5134, %v5135
        %v5137 = vsel %vm217, %v3593, 0.0
        %v5138 = vadd.f32 %v5136, %v5137
        %v5139 = vsel %vm217, %v3594, 0.0
        %v5140 = vadd.f32 %v5138, %v5139
        %v5141 = vsel %vm217, %v3595, 0.0
        %v5142 = vadd.f32 %v5140, %v5141
        %v5143 = vsel %vm217, %v3596, 0.0
        %v5144 = vadd.f32 %v5142, %v5143
        %v5145 = vsel %vm217, %v3597, 0.0
        %v5146 = vadd.f32 %v5144, %v5145
        %v5147 = vsel %vm217, %v3598, 0.0
        %v5148 = vadd.f32 %v5146, %v5147
        %v5149 = vsel %vm217, %v3599, 0.0
        %v5150 = vadd.f32 %v5148, %v5149
        %v5151 = vsel %vm217, %v3600, 0.0
        %v5152 = vadd.f32 %v5150, %v5151
        %v5153 = vsel %vm217, %v3601, 0.0
        %v5154 = vadd.f32 %v5152, %v5153
        %v5155 = vsel %vm217, %v3602, 0.0
        %v5156 = vadd.f32 %v5154, %v5155
        %v5157 = vsel %vm217, %v3603, 0.0
        %v5158 = vadd.f32 %v5156, %v5157
        %v5159 = vsel %vm217, %v3604, 0.0
        %v5160 = vadd.f32 %v5158, %v5159
        %v5161 = vsel %vm217, %v3605, 0.0
        %v5162 = vadd.f32 %v5160, %v5161
        %v5163 = vsel %vm217, %v3606, 0.0
        %v5164 = vadd.f32 %v5162, %v5163
        %v5165 = vsel %vm217, %v3607, 0.0
        %v5166 = vadd.f32 %v5164, %v5165
        %v5167 = vsel %vm217, %v3608, 0.0
        %v5168 = vadd.f32 %v5166, %v5167
        %v5169 = vsel %vm217, %v3609, 0.0
        %v5170 = vadd.f32 %v5168, %v5169
        %v5171 = vsel %vm217, %v3610, 0.0
        %v5172 = vadd.f32 %v5170, %v5171
        %v5173 = vsel %vm217, %v3611, 0.0
        %v5174 = vadd.f32 %v5172, %v5173
        %v5175 = vsel %vm217, %v3612, 0.0
        %v5176 = vadd.f32 %v5174, %v5175
        %v5177 = vsel %vm217, %v3613, 0.0
        %v5178 = vadd.f32 %v5176, %v5177
        %v5179 = vsel %vm217, %v3614, 0.0
        %v5180 = vadd.f32 %v5178, %v5179
        %v5181 = vsel %vm217, %v3615, 0.0
        %v5182 = vadd.f32 %v5180, %v5181
        %v5183 = vsel %vm217, %v3616, 0.0
        %v5184 = vadd.f32 %v5182, %v5183
        %v5185 = vsel %vm217, %v3617, 0.0
        %v5186 = vadd.f32 %v5184, %v5185
        %v5187 = vsel %vm217, %v3618, 0.0
        %v5188 = vadd.f32 %v5186, %v5187
        %v5189 = vsel %vm217, %v3619, 0.0
        %v5190 = vadd.f32 %v5188, %v5189
        %v5191 = vsel %vm217, %v3620, 0.0
        %v5192 = vadd.f32 %v5190, %v5191
        %v5193 = vsel %vm217, %v3621, 0.0
        %v5194 = vadd.f32 %v5192, %v5193
        %v5195 = vsel %vm217, %v3622, 0.0
        %v5196 = vadd.f32 %v5194, %v5195
        %v5197 = vsel %vm217, %v3623, 0.0
        %v5198 = vadd.f32 %v5196, %v5197
        %v5199 = vsel %vm217, %v3624, 0.0
        %v5200 = vadd.f32 %v5198, %v5199
        %v5201 = vsel %vm217, %v3625, 0.0
        %v5202 = vadd.f32 %v5200, %v5201
        %v5203 = vsel %vm217, %v3626, 0.0
        %v5204 = vadd.f32 %v5202, %v5203
        %v5205 = vsel %vm217, %v3627, 0.0
        %v5206 = vadd.f32 %v5204, %v5205
        %v5207 = vsel %vm217, %v3628, 0.0
        %v5208 = vadd.f32 %v5206, %v5207
        %v5209 = vsel %vm217, %v3629, 0.0
        %v5210 = vadd.f32 %v5208, %v5209
        %v5211 = vsel %vm217, %v3630, 0.0
        %v5212 = vadd.f32 %v5210, %v5211
        %v5213 = vsel %vm217, %v3631, 0.0
        %v5214 = vadd.f32 %v5212, %v5213
        %v5215 = vsel %vm217, %v3632, 0.0
        %v5216 = vadd.f32 %v5214, %v5215
        %v5217 = vsel %vm217, %v3633, 0.0
        %v5218 = vadd.f32 %v5216, %v5217
        %v5219 = vsel %vm217, %v3634, 0.0
        %v5220 = vadd.f32 %v5218, %v5219
        %v5221 = vsel %vm217, %v3635, 0.0
        %v5222 = vadd.f32 %v5220, %v5221
        %v5223 = vsel %vm217, %v3636, 0.0
        %v5224 = vadd.f32 %v5222, %v5223
        %v5225 = vsel %vm217, %v3637, 0.0
        %v5226 = vadd.f32 %v5224, %v5225
        %v5227 = vsel %vm217, %v3638, 0.0
        %v5228 = vadd.f32 %v5226, %v5227
        %v5229 = vsel %vm217, %v3639, 0.0
        %v5230 = vadd.f32 %v5228, %v5229
        %v5231 = vsel %vm217, %v3640, 0.0
        %v5232 = vadd.f32 %v5230, %v5231
        %v5233 = vsel %vm217, %v3641, 0.0
        %v5234 = vadd.f32 %v5232, %v5233
        %v5235 = vsel %vm217, %v3642, 0.0
        %v5236 = vadd.f32 %v5234, %v5235
        %v5237 = vsel %vm217, %v3643, 0.0
        %v5238 = vadd.f32 %v5236, %v5237
        %v5239 = vsel %vm217, %v3644, 0.0
        %v5240 = vadd.f32 %v5238, %v5239
        %v5241 = vsel %vm217, %v3645, 0.0
        %v5242 = vadd.f32 %v5240, %v5241
        %v5243 = vsel %vm217, %v3646, 0.0
        %v5244 = vadd.f32 %v5242, %v5243
        %v5245 = vsel %vm217, %v3647, 0.0
        %v5246 = vadd.f32 %v5244, %v5245
        %v5247 = vsel %vm217, %v3648, 0.0
        %v5248 = vadd.f32 %v5246, %v5247
        %v5249 = vsel %vm217, %v3649, 0.0
        %v5250 = vadd.f32 %v5248, %v5249
        %v5251 = vsel %vm217, %v3650, 0.0
        %v5252 = vadd.f32 %v5250, %v5251
        %v5253 = vsel %vm217, %v3651, 0.0
        %v5254 = vadd.f32 %v5252, %v5253
        %v5255 = vsel %vm217, %v3652, 0.0
        %v5256 = vadd.f32 %v5254, %v5255
        %v5257 = vsel %vm217, %v3653, 0.0
        %v5258 = vadd.f32 %v5256, %v5257
        %v5259 = vsel %vm217, %v3654, 0.0
        %v5260 = vadd.f32 %v5258, %v5259
        %v5261 = vsel %vm217, %v3655, 0.0
        %v5262 = vadd.f32 %v5260, %v5261
        %v5263 = vsel %vm217, %v3656, 0.0
        %v5264 = vadd.f32 %v5262, %v5263
        %v5265 = vsel %vm217, %v3657, 0.0
        %v5266 = vadd.f32 %v5264, %v5265
        %v5267 = vsel %vm217, %v3658, 0.0
        %v5268 = vadd.f32 %v5266, %v5267
        %v5269 = vsel %vm217, %v3659, 0.0
        %v5270 = vadd.f32 %v5268, %v5269
        %v5271 = vsel %vm217, %v3660, 0.0
        %v5272 = vadd.f32 %v5270, %v5271
        %v5273 = vsel %vm217, %v3661, 0.0
        %v5274 = vadd.f32 %v5272, %v5273
        %v5275 = vsel %vm217, %v3662, 0.0
        %v5276 = vadd.f32 %v5274, %v5275
        %v5277 = vsel %vm217, %v3663, 0.0
        %v5278 = vadd.f32 %v5276, %v5277
        %v5279 = vsel %vm217, %v3664, 0.0
        %v5280 = vadd.f32 %v5278, %v5279
        %v5281 = vsel %vm217, %v3665, 0.0
        %v5282 = vadd.f32 %v5280, %v5281
        %v5283 = vsel %vm217, %v3666, 0.0
        %v5284 = vadd.f32 %v5282, %v5283
        %v5285 = vsel %vm217, %v3667, 0.0
        %v5286 = vadd.f32 %v5284, %v5285
        %v5287 = vsel %vm217, %v3668, 0.0
        %v5288 = vadd.f32 %v5286, %v5287
        %v5289 = vsel %vm217, %v3669, 0.0
        %v5290 = vadd.f32 %v5288, %v5289
        %v5291 = vsel %vm217, %v3670, 0.0
        %v5292 = vadd.f32 %v5290, %v5291
        %v5293 = vsel %vm217, %v3671, 0.0
        %v5294 = vadd.f32 %v5292, %v5293
        %v5295 = vsel %vm217, %v3672, 0.0
        %v5296 = vadd.f32 %v5294, %v5295
        %v5297 = vsel %vm217, %v3673, 0.0
        %v5298 = vadd.f32 %v5296, %v5297
        %v5299 = vsel %vm217, %v3674, 0.0
        %v5300 = vadd.f32 %v5298, %v5299
        %v5301 = vsel %vm217, %v3675, 0.0
        %v5302 = vadd.f32 %v5300, %v5301
        %v5303 = vsel %vm217, %v3676, 0.0
        %v5304 = vadd.f32 %v5302, %v5303
        %v5305 = vsel %vm217, %v3677, 0.0
        %v5306 = vadd.f32 %v5304, %v5305
        %v5307 = vsel %vm217, %v3678, 0.0
        %v5308 = vadd.f32 %v5306, %v5307
        %v5309 = vsel %vm217, %v3679, 0.0
        %v5310 = vadd.f32 %v5308, %v5309
        %v5311 = vsel %vm217, %v3680, 0.0
        %v5312 = vadd.f32 %v5310, %v5311
        %v5313 = vsel %vm217, %v3681, 0.0
        %v5314 = vadd.f32 %v5312, %v5313
        %v5315 = vsel %vm217, %v3682, 0.0
        %v5316 = vadd.f32 %v5314, %v5315
        %v5317 = vsel %vm217, %v3683, 0.0
        %v5318 = vadd.f32 %v5316, %v5317
        %v5319 = vsel %vm217, %v3684, 0.0
        %v5320 = vadd.f32 %v5318, %v5319
        %v5321 = vsel %vm217, %v3685, 0.0
        %v5322 = vadd.f32 %v5320, %v5321
        %v5323 = vsel %vm217, %v3686, 0.0
        %v5324 = vadd.f32 %v5322, %v5323
        %v5325 = vsel %vm217, %v3687, 0.0
        %v5326 = vadd.f32 %v5324, %v5325
        %v5327 = vsel %vm217, %v3688, 0.0
        %v5328 = vadd.f32 %v5326, %v5327
        %v5329 = vsel %vm217, %v3689, 0.0
        %v5330 = vadd.f32 %v5328, %v5329
        %v5331 = vsel %vm217, %v3690, 0.0
        %v5332 = vadd.f32 %v5330, %v5331
        %v5333 = vsel %vm217, %v3691, 0.0
        %v5334 = vadd.f32 %v5332, %v5333
        %v5335 = vsel %vm217, %v3692, 0.0
        %v5336 = vadd.f32 %v5334, %v5335
        %v5337 = vsel %vm217, %v3693, 0.0
        %v5338 = vadd.f32 %v5336, %v5337
        %v5339 = vsel %vm217, %v3694, 0.0
        %v5340 = vadd.f32 %v5338, %v5339
        %v5341 = vsel %vm217, %v3695, 0.0
        %v5342 = vadd.f32 %v5340, %v5341
        %v5343 = vsel %vm217, %v3696, 0.0
        %v5344 = vadd.f32 %v5342, %v5343
        %v5345 = vsel %vm217, %v3697, 0.0
        %v5346 = vadd.f32 %v5344, %v5345
        %v5347 = vsel %vm217, %v3698, 0.0
        %v5348 = vadd.f32 %v5346, %v5347
        %v5349 = vsel %vm217, %v3699, 0.0
        %v5350 = vadd.f32 %v5348, %v5349
        %v5351 = vsel %vm217, %v3700, 0.0
        %v5352 = vadd.f32 %v5350, %v5351
        %v5353 = vsel %vm217, %v3701, 0.0
        %v5354 = vadd.f32 %v5352, %v5353
        %v5355 = vsel %vm217, %v3702, 0.0
        %v5356 = vadd.f32 %v5354, %v5355
        %v5357 = vsel %vm217, %v3703, 0.0
        %v5358 = vadd.f32 %v5356, %v5357
        %v5359 = vsel %vm217, %v3704, 0.0
        %v5360 = vadd.f32 %v5358, %v5359
        %v5361 = vsel %vm217, %v3705, 0.0
        %v5362 = vadd.f32 %v5360, %v5361
        %v5363 = vsel %vm217, %v3706, 0.0
        %v5364 = vadd.f32 %v5362, %v5363
        %v5365 = vsel %vm217, %v3707, 0.0
        %v5366 = vadd.f32 %v5364, %v5365
        %v5367 = vsel %vm217, %v3708, 0.0
        %v5368 = vadd.f32 %v5366, %v5367
        %v5369 = vsel %vm217, %v3709, 0.0
        %v5370 = vadd.f32 %v5368, %v5369
        %v5371 = vsel %vm217, %v3710, 0.0
        %v5372 = vadd.f32 %v5370, %v5371
        %v5373 = vsel %vm217, %v3711, 0.0
        %v5374 = vadd.f32 %v5372, %v5373
        %v5375 = vsel %vm217, %v3712, 0.0
        %v5376 = vadd.f32 %v5374, %v5375
        %v5377 = vsel %vm217, %v3713, 0.0
        %v5378 = vadd.f32 %v5376, %v5377
        %v5379 = vsel %vm217, %v3714, 0.0
        %v5380 = vadd.f32 %v5378, %v5379
        %v5381 = vsel %vm217, %v3715, 0.0
        %v5382 = vadd.f32 %v5380, %v5381
        %v5383 = vsel %vm217, %v3716, 0.0
        %v5384 = vadd.f32 %v5382, %v5383
        %v5385 = vsel %vm217, %v3717, 0.0
        %v5386 = vadd.f32 %v5384, %v5385
        %v5387 = vsel %vm217, %v3718, 0.0
        %v5388 = vadd.f32 %v5386, %v5387
        %v5389 = vsel %vm217, %v3719, 0.0
        %v5390 = vadd.f32 %v5388, %v5389
        %v5391 = vsel %vm217, %v3720, 0.0
        %v5392 = vadd.f32 %v5390, %v5391
        %v5393 = vsel %vm217, %v3721, 0.0
        %v5394 = vadd.f32 %v5392, %v5393
        %v5395 = vsel %vm217, %v3722, 0.0
        %v5396 = vadd.f32 %v5394, %v5395
        %v5397 = vsel %vm217, %v3723, 0.0
        %v5398 = vadd.f32 %v5396, %v5397
        %v5399 = vsel %vm217, %v3724, 0.0
        %v5400 = vadd.f32 %v5398, %v5399
        %v5401 = vsel %vm217, %v3725, 0.0
        %v5402 = vadd.f32 %v5400, %v5401
        %v5403 = vsel %vm217, %v3726, 0.0
        %v5404 = vadd.f32 %v5402, %v5403
        %v5405 = vsel %vm217, %v3727, 0.0
        %v5406 = vadd.f32 %v5404, %v5405
        %v5407 = vsel %vm217, %v3728, 0.0
        %v5408 = vadd.f32 %v5406, %v5407
        %v5409 = vsel %vm217, %v3729, 0.0
        %v5410 = vadd.f32 %v5408, %v5409
        %v5411 = vsel %vm217, %v3730, 0.0
        %v5412 = vadd.f32 %v5410, %v5411
        %v5413 = vsel %vm217, %v3731, 0.0
        %v5414 = vadd.f32 %v5412, %v5413
        %v5415 = vsel %vm217, %v3732, 0.0
        %v5416 = vadd.f32 %v5414, %v5415
        %v5417 = vsel %vm217, %v3733, 0.0
        %v5418 = vadd.f32 %v5416, %v5417
        %v5419 = vsel %vm217, %v3734, 0.0
        %v5420 = vadd.f32 %v5418, %v5419
        %v5421 = vsel %vm217, %v3735, 0.0
        %v5422 = vadd.f32 %v5420, %v5421
        %v5423 = vsel %vm217, %v3736, 0.0
        %v5424 = vadd.f32 %v5422, %v5423
        %v5425 = vsel %vm217, %v3737, 0.0
        %v5426 = vadd.f32 %v5424, %v5425
        %v5427 = vsel %vm217, %v3738, 0.0
        %v5428 = vadd.f32 %v5426, %v5427
        %v5429 = vsel %vm217, %v3739, 0.0
        %v5430 = vadd.f32 %v5428, %v5429
        %v5431 = vsel %vm217, %v3740, 0.0
        %v5432 = vadd.f32 %v5430, %v5431
        %v5433 = vsel %vm217, %v3741, 0.0
        %v5434 = vadd.f32 %v5432, %v5433
        %v5435 = vsel %vm217, %v3742, 0.0
        %v5436 = vadd.f32 %v5434, %v5435
        %v5437 = vsel %vm217, %v3743, 0.0
        %v5438 = vadd.f32 %v5436, %v5437
        %v5439 = vsel %vm217, %v3744, 0.0
        %v5440 = vadd.f32 %v5438, %v5439
        %v5441 = vsel %vm217, %v3745, 0.0
        %v5442 = vadd.f32 %v5440, %v5441
        %v5443 = vsel %vm217, %v3746, 0.0
        %v5444 = vadd.f32 %v5442, %v5443
        %v5445 = vsel %vm217, %v3747, 0.0
        %v5446 = vadd.f32 %v5444, %v5445
        %v5447 = vsel %vm217, %v3748, 0.0
        %v5448 = vadd.f32 %v5446, %v5447
        %v5449 = vsel %vm217, %v3749, 0.0
        %v5450 = vadd.f32 %v5448, %v5449
        %v5451 = vsel %vm217, %v3750, 0.0
        %v5452 = vadd.f32 %v5450, %v5451
        %v5453 = vsel %vm217, %v3751, 0.0
        %v5454 = vadd.f32 %v5452, %v5453
        %v5455 = vsel %vm217, %v3752, 0.0
        %v5456 = vadd.f32 %v5454, %v5455
        %v5457 = vsel %vm217, %v3753, 0.0
        %v5458 = vadd.f32 %v5456, %v5457
        %v5459 = vsel %vm217, %v3754, 0.0
        %v5460 = vadd.f32 %v5458, %v5459
        %v5461 = vsel %vm217, %v3755, 0.0
        %v5462 = vadd.f32 %v5460, %v5461
        %v5463 = vsel %vm217, %v3756, 0.0
        %v5464 = vadd.f32 %v5462, %v5463
        %v5465 = vsel %vm217, %v3757, 0.0
        %v5466 = vadd.f32 %v5464, %v5465
        %v5467 = vsel %vm217, %v3758, 0.0
        %v5468 = vadd.f32 %v5466, %v5467
        %v5469 = vsel %vm217, %v3759, 0.0
        %v5470 = vadd.f32 %v5468, %v5469
        %v5471 = vsel %vm217, %v3760, 0.0
        %v5472 = vadd.f32 %v5470, %v5471
        %v5473 = vsel %vm217, %v3761, 0.0
        %v5474 = vadd.f32 %v5472, %v5473
        %v5475 = vsel %vm217, %v3762, 0.0
        %v5476 = vadd.f32 %v5474, %v5475
        %v5477 = vsel %vm217, %v3763, 0.0
        %v5478 = vadd.f32 %v5476, %v5477
        %v5479 = vsel %vm217, %v3764, 0.0
        %v5480 = vadd.f32 %v5478, %v5479
        %v5481 = vsel %vm217, %v3765, 0.0
        %v5482 = vadd.f32 %v5480, %v5481
        %v5483 = vsel %vm217, %v3766, 0.0
        %v5484 = vadd.f32 %v5482, %v5483
        %v5485 = vsel %vm217, %v3767, 0.0
        %v5486 = vadd.f32 %v5484, %v5485
        %v5487 = vsel %vm217, %v3768, 0.0
        %v5488 = vadd.f32 %v5486, %v5487
        %v5489 = vsel %vm217, %v3769, 0.0
        %v5490 = vadd.f32 %v5488, %v5489
        %v5491 = vsel %vm217, %v3770, 0.0
        %v5492 = vadd.f32 %v5490, %v5491
        %v5493 = vsel %vm217, %v3771, 0.0
        %v5494 = vadd.f32 %v5492, %v5493
        %v5495 = vsel %vm217, %v3772, 0.0
        %v5496 = vadd.f32 %v5494, %v5495
        %v5497 = vsel %vm217, %v3773, 0.0
        %v5498 = vadd.f32 %v5496, %v5497
        %v5499 = vsel %vm217, %v3774, 0.0
        %v5500 = vadd.f32 %v5498, %v5499
        %v5501 = vsel %vm217, %v3775, 0.0
        %v5502 = vadd.f32 %v5500, %v5501
        %v5503 = vsel %vm217, %v3776, 0.0
        %v5504 = vadd.f32 %v5502, %v5503
        %v5505 = vsel %vm217, %v3777, 0.0
        %v5506 = vadd.f32 %v5504, %v5505
        %v5507 = vsel %vm217, %v3778, 0.0
        %v5508 = vadd.f32 %v5506, %v5507
        %v5509 = vsel %vm217, %v3779, 0.0
        %v5510 = vadd.f32 %v5508, %v5509
        %v5511 = vsel %vm217, %v3780, 0.0
        %v5512 = vadd.f32 %v5510, %v5511
        %v5513 = vsel %vm217, %v3781, 0.0
        %v5514 = vadd.f32 %v5512, %v5513
        %v5515 = vsel %vm217, %v3782, 0.0
        %v5516 = vadd.f32 %v5514, %v5515
        %v5517 = vsel %vm217, %v3783, 0.0
        %v5518 = vadd.f32 %v5516, %v5517
        %v5519 = vsel %vm217, %v3784, 0.0
        %v5520 = vadd.f32 %v5518, %v5519
        %v5521 = vsel %vm217, %v3785, 0.0
        %v5522 = vadd.f32 %v5520, %v5521
        %v5523 = vsel %vm217, %v3786, 0.0
        %v5524 = vadd.f32 %v5522, %v5523
        %v5525 = vsel %vm217, %v3787, 0.0
        %v5526 = vadd.f32 %v5524, %v5525
        %v5527 = vsel %vm217, %v3788, 0.0
        %v5528 = vadd.f32 %v5526, %v5527
        %v5529 = vsel %vm217, %v3789, 0.0
        %v5530 = vadd.f32 %v5528, %v5529
        %v5531 = vsel %vm217, %v3790, 0.0
        %v5532 = vadd.f32 %v5530, %v5531
        %v5533 = vsel %vm217, %v3791, 0.0
        %v5534 = vadd.f32 %v5532, %v5533
        %v5535 = vsel %vm217, %v3792, 0.0
        %v5536 = vadd.f32 %v5534, %v5535
        %v5537 = vsel %vm217, %v3793, 0.0
        %v5538 = vadd.f32 %v5536, %v5537
        %v5539 = vsel %vm217, %v3794, 0.0
        %v5540 = vadd.f32 %v5538, %v5539
        %v5541 = vsel %vm217, %v3795, 0.0
        %v5542 = vadd.f32 %v5540, %v5541
        %v5543 = vsel %vm217, %v3796, 0.0
        %v5544 = vadd.f32 %v5542, %v5543
        %v5545 = vsel %vm217, %v3797, 0.0
        %v5546 = vadd.f32 %v5544, %v5545
        %v5547 = vsel %vm217, %v3798, 0.0
        %v5548 = vadd.f32 %v5546, %v5547
        %v5549 = vsel %vm217, %v3799, 0.0
        %v5550 = vadd.f32 %v5548, %v5549
        %v5551 = vsel %vm217, %v3800, 0.0
        %v5552 = vadd.f32 %v5550, %v5551
        %v5553 = vsel %vm217, %v3801, 0.0
        %v5554 = vadd.f32 %v5552, %v5553
        %v5555 = vsel %vm217, %v3802, 0.0
        %v5556 = vadd.f32 %v5554, %v5555
        %v5557 = vsel %vm217, %v3803, 0.0
        %v5558 = vadd.f32 %v5556, %v5557
        %v5559 = vsel %vm217, %v3804, 0.0
        %v5560 = vadd.f32 %v5558, %v5559
        %v5561 = vsel %vm217, %v3805, 0.0
        %v5562 = vadd.f32 %v5560, %v5561
        %v5563 = vsel %vm217, %v3806, 0.0
        %v5564 = vadd.f32 %v5562, %v5563
        %v5565 = vsel %vm217, %v3807, 0.0
        %v5566 = vadd.f32 %v5564, %v5565
        %v5567 = vsel %vm217, %v3808, 0.0
        %v5568 = vadd.f32 %v5566, %v5567
        %v5569 = vsel %vm217, %v3809, 0.0
        %v5570 = vadd.f32 %v5568, %v5569
        %v5571 = vsel %vm217, %v3810, 0.0
        %v5572 = vadd.f32 %v5570, %v5571
        %v5573 = vsel %vm217, %v3811, 0.0
        %v5574 = vadd.f32 %v5572, %v5573
        %v5575 = vsel %vm217, %v3812, 0.0
        %v5576 = vadd.f32 %v5574, %v5575
        %v5577 = vsel %vm217, %v3813, 0.0
        %v5578 = vadd.f32 %v5576, %v5577
        %v5579 = vsel %vm217, %v3814, 0.0
        %v5580 = vadd.f32 %v5578, %v5579
        %v5581 = vsel %vm217, %v3815, 0.0
        %v5582 = vadd.f32 %v5580, %v5581
        %v5583 = vsel %vm217, %v3816, 0.0
        %v5584 = vadd.f32 %v5582, %v5583
        %v5585 = vsel %vm217, %v3817, 0.0
        %v5586 = vadd.f32 %v5584, %v5585
        %v5587 = vsel %vm217, %v3818, 0.0
        %v5588 = vadd.f32 %v5586, %v5587
        %v5589 = vsel %vm217, %v3819, 0.0
        %v5590 = vadd.f32 %v5588, %v5589
        %v5591 = vsel %vm217, %v3820, 0.0
        %v5592 = vadd.f32 %v5590, %v5591
        %v5593 = vsel %vm217, %v3821, 0.0
        %v5594 = vadd.f32 %v5592, %v5593
        %v5595 = vsel %vm217, %v3822, 0.0
        %v5596 = vadd.f32 %v5594, %v5595
        %v5597 = vsel %vm217, %v3823, 0.0
        %v5598 = vadd.f32 %v5596, %v5597
        %v5599 = vsel %vm217, %v3824, 0.0
        %v5600 = vadd.f32 %v5598, %v5599
        %v5601 = vsel %vm217, %v3825, 0.0
        %v5602 = vadd.f32 %v5600, %v5601
        %v5603 = vsel %vm217, %v3826, 0.0
        %v5604 = vadd.f32 %v5602, %v5603
        %v5605 = vsel %vm217, %v3827, 0.0
        %v5606 = vadd.f32 %v5604, %v5605
        %v5607 = vsel %vm217, %v3828, 0.0
        %v5608 = vadd.f32 %v5606, %v5607
        %v5609 = vsel %vm217, %v3829, 0.0
        %v5610 = vadd.f32 %v5608, %v5609
        %v5611 = vsel %vm217, %v3830, 0.0
        %v5612 = vadd.f32 %v5610, %v5611
        %v5613 = vsel %vm217, %v3831, 0.0
        %v5614 = vadd.f32 %v5612, %v5613
        %v5615 = vsel %vm217, %v3832, 0.0
        %v5616 = vadd.f32 %v5614, %v5615
        %v5617 = vsel %vm217, %v3833, 0.0
        %v5618 = vadd.f32 %v5616, %v5617
        %v5619 = vsel %vm217, %v3834, 0.0
        %v5620 = vadd.f32 %v5618, %v5619
        %v5621 = vsel %vm217, %v3835, 0.0
        %v5622 = vadd.f32 %v5620, %v5621
        %v5623 = vsel %vm217, %v3836, 0.0
        %v5624 = vadd.f32 %v5622, %v5623
        %v5625 = vsel %vm217, %v3837, 0.0
        %v5626 = vadd.f32 %v5624, %v5625
        %v5627 = vsel %vm217, %v3838, 0.0
        %v5628 = vadd.f32 %v5626, %v5627
        %v5629 = vsel %vm217, %v3839, 0.0
        %v5630 = vadd.f32 %v5628, %v5629
        %v5631 = vsel %vm217, %v3840, 0.0
        %v5632 = vadd.f32 %v5630, %v5631
        %v5633 = vrot.slane %v5632, 4
        %v5634 = vadd.f32 %v5632, %v5633
        %v5635 = vrot.slane %v5634, 2
        %v5636 = vadd.f32 %v5634, %v5635
        %v5637 = vrot.slane %v5636, 1
        %v5638 = vadd.f32 %v5636, %v5637
        %vm5639 = vcmask 57344
        %5640 = vst.msk [vmem:[%s198] sm:$0x1] %vm5639, %v5638
        %v5641 = vmul.f32 %v3585, %v3585
        %v5642 = vmul.f32 %v3586, %v3586
        %v5643 = vmul.f32 %v3587, %v3587
        %v5644 = vmul.f32 %v3588, %v3588
        %v5645 = vmul.f32 %v3589, %v3589
        %v5646 = vmul.f32 %v3590, %v3590
        %v5647 = vmul.f32 %v3591, %v3591
        %v5648 = vmul.f32 %v3592, %v3592
        %v5649 = vmul.f32 %v3593, %v3593
        %v5650 = vmul.f32 %v3594, %v3594
        %v5651 = vmul.f32 %v3595, %v3595
        %v5652 = vmul.f32 %v3596, %v3596
        %v5653 = vmul.f32 %v3597, %v3597
        %v5654 = vmul.f32 %v3598, %v3598
        %v5655 = vmul.f32 %v3599, %v3599
        %v5656 = vmul.f32 %v3600, %v3600
        %v5657 = vmul.f32 %v3601, %v3601
        %v5658 = vmul.f32 %v3602, %v3602
        %v5659 = vmul.f32 %v3603, %v3603
        %v5660 = vmul.f32 %v3604, %v3604
        %v5661 = vmul.f32 %v3605, %v3605
        %v5662 = vmul.f32 %v3606, %v3606
        %v5663 = vmul.f32 %v3607, %v3607
        %v5664 = vmul.f32 %v3608, %v3608
        %v5665 = vmul.f32 %v3609, %v3609
        %v5666 = vmul.f32 %v3610, %v3610
        %v5667 = vmul.f32 %v3611, %v3611
        %v5668 = vmul.f32 %v3612, %v3612
        %v5669 = vmul.f32 %v3613, %v3613
        %v5670 = vmul.f32 %v3614, %v3614
        %v5671 = vmul.f32 %v3615, %v3615
        %v5672 = vmul.f32 %v3616, %v3616
        %v5673 = vmul.f32 %v3617, %v3617
        %v5674 = vmul.f32 %v3618, %v3618
        %v5675 = vmul.f32 %v3619, %v3619
        %v5676 = vmul.f32 %v3620, %v3620
        %v5677 = vmul.f32 %v3621, %v3621
        %v5678 = vmul.f32 %v3622, %v3622
        %v5679 = vmul.f32 %v3623, %v3623
        %v5680 = vmul.f32 %v3624, %v3624
        %v5681 = vmul.f32 %v3625, %v3625
        %v5682 = vmul.f32 %v3626, %v3626
        %v5683 = vmul.f32 %v3627, %v3627
        %v5684 = vmul.f32 %v3628, %v3628
        %v5685 = vmul.f32 %v3629, %v3629
        %v5686 = vmul.f32 %v3630, %v3630
        %v5687 = vmul.f32 %v3631, %v3631
        %v5688 = vmul.f32 %v3632, %v3632
        %v5689 = vmul.f32 %v3633, %v3633
        %v5690 = vmul.f32 %v3634, %v3634
        %v5691 = vmul.f32 %v3635, %v3635
        %v5692 = vmul.f32 %v3636, %v3636
        %v5693 = vmul.f32 %v3637, %v3637
        %v5694 = vmul.f32 %v3638, %v3638
        %v5695 = vmul.f32 %v3639, %v3639
        %v5696 = vmul.f32 %v3640, %v3640
        %v5697 = vmul.f32 %v3641, %v3641
        %v5698 = vmul.f32 %v3642, %v3642
        %v5699 = vmul.f32 %v3643, %v3643
        %v5700 = vmul.f32 %v3644, %v3644
        %v5701 = vmul.f32 %v3645, %v3645
        %v5702 = vmul.f32 %v3646, %v3646
        %v5703 = vmul.f32 %v3647, %v3647
        %v5704 = vmul.f32 %v3648, %v3648
        %v5705 = vmul.f32 %v3649, %v3649
        %v5706 = vmul.f32 %v3650, %v3650
        %v5707 = vmul.f32 %v3651, %v3651
        %v5708 = vmul.f32 %v3652, %v3652
        %v5709 = vmul.f32 %v3653, %v3653
        %v5710 = vmul.f32 %v3654, %v3654
        %v5711 = vmul.f32 %v3655, %v3655
        %v5712 = vmul.f32 %v3656, %v3656
        %v5713 = vmul.f32 %v3657, %v3657
        %v5714 = vmul.f32 %v3658, %v3658
        %v5715 = vmul.f32 %v3659, %v3659
        %v5716 = vmul.f32 %v3660, %v3660
        %v5717 = vmul.f32 %v3661, %v3661
        %v5718 = vmul.f32 %v3662, %v3662
        %v5719 = vmul.f32 %v3663, %v3663
        %v5720 = vmul.f32 %v3664, %v3664
        %v5721 = vmul.f32 %v3665, %v3665
        %v5722 = vmul.f32 %v3666, %v3666
        %v5723 = vmul.f32 %v3667, %v3667
        %v5724 = vmul.f32 %v3668, %v3668
        %v5725 = vmul.f32 %v3669, %v3669
        %v5726 = vmul.f32 %v3670, %v3670
        %v5727 = vmul.f32 %v3671, %v3671
        %v5728 = vmul.f32 %v3672, %v3672
        %v5729 = vmul.f32 %v3673, %v3673
        %v5730 = vmul.f32 %v3674, %v3674
        %v5731 = vmul.f32 %v3675, %v3675
        %v5732 = vmul.f32 %v3676, %v3676
        %v5733 = vmul.f32 %v3677, %v3677
        %v5734 = vmul.f32 %v3678, %v3678
        %v5735 = vmul.f32 %v3679, %v3679
        %v5736 = vmul.f32 %v3680, %v3680
        %v5737 = vmul.f32 %v3681, %v3681
        %v5738 = vmul.f32 %v3682, %v3682
        %v5739 = vmul.f32 %v3683, %v3683
        %v5740 = vmul.f32 %v3684, %v3684
        %v5741 = vmul.f32 %v3685, %v3685
        %v5742 = vmul.f32 %v3686, %v3686
        %v5743 = vmul.f32 %v3687, %v3687
        %v5744 = vmul.f32 %v3688, %v3688
        %v5745 = vmul.f32 %v3689, %v3689
        %v5746 = vmul.f32 %v3690, %v3690
        %v5747 = vmul.f32 %v3691, %v3691
        %v5748 = vmul.f32 %v3692, %v3692
        %v5749 = vmul.f32 %v3693, %v3693
        %v5750 = vmul.f32 %v3694, %v3694
        %v5751 = vmul.f32 %v3695, %v3695
        %v5752 = vmul.f32 %v3696, %v3696
        %v5753 = vmul.f32 %v3697, %v3697
        %v5754 = vmul.f32 %v3698, %v3698
        %v5755 = vmul.f32 %v3699, %v3699
        %v5756 = vmul.f32 %v3700, %v3700
        %v5757 = vmul.f32 %v3701, %v3701
        %v5758 = vmul.f32 %v3702, %v3702
        %v5759 = vmul.f32 %v3703, %v3703
        %v5760 = vmul.f32 %v3704, %v3704
        %v5761 = vmul.f32 %v3705, %v3705
        %v5762 = vmul.f32 %v3706, %v3706
        %v5763 = vmul.f32 %v3707, %v3707
        %v5764 = vmul.f32 %v3708, %v3708
        %v5765 = vmul.f32 %v3709, %v3709
        %v5766 = vmul.f32 %v3710, %v3710
        %v5767 = vmul.f32 %v3711, %v3711
        %v5768 = vmul.f32 %v3712, %v3712
        %v5769 = vmul.f32 %v3713, %v3713
        %v5770 = vmul.f32 %v3714, %v3714
        %v5771 = vmul.f32 %v3715, %v3715
        %v5772 = vmul.f32 %v3716, %v3716
        %v5773 = vmul.f32 %v3717, %v3717
        %v5774 = vmul.f32 %v3718, %v3718
        %v5775 = vmul.f32 %v3719, %v3719
        %v5776 = vmul.f32 %v3720, %v3720
        %v5777 = vmul.f32 %v3721, %v3721
        %v5778 = vmul.f32 %v3722, %v3722
        %v5779 = vmul.f32 %v3723, %v3723
        %v5780 = vmul.f32 %v3724, %v3724
        %v5781 = vmul.f32 %v3725, %v3725
        %v5782 = vmul.f32 %v3726, %v3726
        %v5783 = vmul.f32 %v3727, %v3727
        %v5784 = vmul.f32 %v3728, %v3728
        %v5785 = vmul.f32 %v3729, %v3729
        %v5786 = vmul.f32 %v3730, %v3730
        %v5787 = vmul.f32 %v3731, %v3731
        %v5788 = vmul.f32 %v3732, %v3732
        %v5789 = vmul.f32 %v3733, %v3733
        %v5790 = vmul.f32 %v3734, %v3734
        %v5791 = vmul.f32 %v3735, %v3735
        %v5792 = vmul.f32 %v3736, %v3736
        %v5793 = vmul.f32 %v3737, %v3737
        %v5794 = vmul.f32 %v3738, %v3738
        %v5795 = vmul.f32 %v3739, %v3739
        %v5796 = vmul.f32 %v3740, %v3740
        %v5797 = vmul.f32 %v3741, %v3741
        %v5798 = vmul.f32 %v3742, %v3742
        %v5799 = vmul.f32 %v3743, %v3743
        %v5800 = vmul.f32 %v3744, %v3744
        %v5801 = vmul.f32 %v3745, %v3745
        %v5802 = vmul.f32 %v3746, %v3746
        %v5803 = vmul.f32 %v3747, %v3747
        %v5804 = vmul.f32 %v3748, %v3748
        %v5805 = vmul.f32 %v3749, %v3749
        %v5806 = vmul.f32 %v3750, %v3750
        %v5807 = vmul.f32 %v3751, %v3751
        %v5808 = vmul.f32 %v3752, %v3752
        %v5809 = vmul.f32 %v3753, %v3753
        %v5810 = vmul.f32 %v3754, %v3754
        %v5811 = vmul.f32 %v3755, %v3755
        %v5812 = vmul.f32 %v3756, %v3756
        %v5813 = vmul.f32 %v3757, %v3757
        %v5814 = vmul.f32 %v3758, %v3758
        %v5815 = vmul.f32 %v3759, %v3759
        %v5816 = vmul.f32 %v3760, %v3760
        %v5817 = vmul.f32 %v3761, %v3761
        %v5818 = vmul.f32 %v3762, %v3762
        %v5819 = vmul.f32 %v3763, %v3763
        %v5820 = vmul.f32 %v3764, %v3764
        %v5821 = vmul.f32 %v3765, %v3765
        %v5822 = vmul.f32 %v3766, %v3766
        %v5823 = vmul.f32 %v3767, %v3767
        %v5824 = vmul.f32 %v3768, %v3768
        %v5825 = vmul.f32 %v3769, %v3769
        %v5826 = vmul.f32 %v3770, %v3770
        %v5827 = vmul.f32 %v3771, %v3771
        %v5828 = vmul.f32 %v3772, %v3772
        %v5829 = vmul.f32 %v3773, %v3773
        %v5830 = vmul.f32 %v3774, %v3774
        %v5831 = vmul.f32 %v3775, %v3775
        %v5832 = vmul.f32 %v3776, %v3776
        %v5833 = vmul.f32 %v3777, %v3777
        %v5834 = vmul.f32 %v3778, %v3778
        %v5835 = vmul.f32 %v3779, %v3779
        %v5836 = vmul.f32 %v3780, %v3780
        %v5837 = vmul.f32 %v3781, %v3781
        %v5838 = vmul.f32 %v3782, %v3782
        %v5839 = vmul.f32 %v3783, %v3783
        %v5840 = vmul.f32 %v3784, %v3784
        %v5841 = vmul.f32 %v3785, %v3785
        %v5842 = vmul.f32 %v3786, %v3786
        %v5843 = vmul.f32 %v3787, %v3787
        %v5844 = vmul.f32 %v3788, %v3788
        %v5845 = vmul.f32 %v3789, %v3789
        %v5846 = vmul.f32 %v3790, %v3790
        %v5847 = vmul.f32 %v3791, %v3791
        %v5848 = vmul.f32 %v3792, %v3792
        %v5849 = vmul.f32 %v3793, %v3793
        %v5850 = vmul.f32 %v3794, %v3794
        %v5851 = vmul.f32 %v3795, %v3795
        %v5852 = vmul.f32 %v3796, %v3796
        %v5853 = vmul.f32 %v3797, %v3797
        %v5854 = vmul.f32 %v3798, %v3798
        %v5855 = vmul.f32 %v3799, %v3799
        %v5856 = vmul.f32 %v3800, %v3800
        %v5857 = vmul.f32 %v3801, %v3801
        %v5858 = vmul.f32 %v3802, %v3802
        %v5859 = vmul.f32 %v3803, %v3803
        %v5860 = vmul.f32 %v3804, %v3804
        %v5861 = vmul.f32 %v3805, %v3805
        %v5862 = vmul.f32 %v3806, %v3806
        %v5863 = vmul.f32 %v3807, %v3807
        %v5864 = vmul.f32 %v3808, %v3808
        %v5865 = vmul.f32 %v3809, %v3809
        %v5866 = vmul.f32 %v3810, %v3810
        %v5867 = vmul.f32 %v3811, %v3811
        %v5868 = vmul.f32 %v3812, %v3812
        %v5869 = vmul.f32 %v3813, %v3813
        %v5870 = vmul.f32 %v3814, %v3814
        %v5871 = vmul.f32 %v3815, %v3815
        %v5872 = vmul.f32 %v3816, %v3816
        %v5873 = vmul.f32 %v3817, %v3817
        %v5874 = vmul.f32 %v3818, %v3818
        %v5875 = vmul.f32 %v3819, %v3819
        %v5876 = vmul.f32 %v3820, %v3820
        %v5877 = vmul.f32 %v3821, %v3821
        %v5878 = vmul.f32 %v3822, %v3822
        %v5879 = vmul.f32 %v3823, %v3823
        %v5880 = vmul.f32 %v3824, %v3824
        %v5881 = vmul.f32 %v3825, %v3825
        %v5882 = vmul.f32 %v3826, %v3826
        %v5883 = vmul.f32 %v3827, %v3827
        %v5884 = vmul.f32 %v3828, %v3828
        %v5885 = vmul.f32 %v3829, %v3829
        %v5886 = vmul.f32 %v3830, %v3830
        %v5887 = vmul.f32 %v3831, %v3831
        %v5888 = vmul.f32 %v3832, %v3832
        %v5889 = vmul.f32 %v3833, %v3833
        %v5890 = vmul.f32 %v3834, %v3834
        %v5891 = vmul.f32 %v3835, %v3835
        %v5892 = vmul.f32 %v3836, %v3836
        %v5893 = vmul.f32 %v3837, %v3837
        %v5894 = vmul.f32 %v3838, %v3838
        %v5895 = vmul.f32 %v3839, %v3839
        %v5896 = vmul.f32 %v3840, %v3840
        %v5897 = vsel %vm217, %v5641, 0.0
        %v5898 = vsel %vm217, %v5642, 0.0
        %v5899 = vadd.f32 %v5897, %v5898
        %v5900 = vsel %vm217, %v5643, 0.0
        %v5901 = vadd.f32 %v5899, %v5900
        %v5902 = vsel %vm217, %v5644, 0.0
        %v5903 = vadd.f32 %v5901, %v5902
        %v5904 = vsel %vm217, %v5645, 0.0
        %v5905 = vadd.f32 %v5903, %v5904
        %v5906 = vsel %vm217, %v5646, 0.0
        %v5907 = vadd.f32 %v5905, %v5906
        %v5908 = vsel %vm217, %v5647, 0.0
        %v5909 = vadd.f32 %v5907, %v5908
        %v5910 = vsel %vm217, %v5648, 0.0
        %v5911 = vadd.f32 %v5909, %v5910
        %v5912 = vsel %vm217, %v5649, 0.0
        %v5913 = vadd.f32 %v5911, %v5912
        %v5914 = vsel %vm217, %v5650, 0.0
        %v5915 = vadd.f32 %v5913, %v5914
        %v5916 = vsel %vm217, %v5651, 0.0
        %v5917 = vadd.f32 %v5915, %v5916
        %v5918 = vsel %vm217, %v5652, 0.0
        %v5919 = vadd.f32 %v5917, %v5918
        %v5920 = vsel %vm217, %v5653, 0.0
        %v5921 = vadd.f32 %v5919, %v5920
        %v5922 = vsel %vm217, %v5654, 0.0
        %v5923 = vadd.f32 %v5921, %v5922
        %v5924 = vsel %vm217, %v5655, 0.0
        %v5925 = vadd.f32 %v5923, %v5924
        %v5926 = vsel %vm217, %v5656, 0.0
        %v5927 = vadd.f32 %v5925, %v5926
        %v5928 = vsel %vm217, %v5657, 0.0
        %v5929 = vadd.f32 %v5927, %v5928
        %v5930 = vsel %vm217, %v5658, 0.0
        %v5931 = vadd.f32 %v5929, %v5930
        %v5932 = vsel %vm217, %v5659, 0.0
        %v5933 = vadd.f32 %v5931, %v5932
        %v5934 = vsel %vm217, %v5660, 0.0
        %v5935 = vadd.f32 %v5933, %v5934
        %v5936 = vsel %vm217, %v5661, 0.0
        %v5937 = vadd.f32 %v5935, %v5936
        %v5938 = vsel %vm217, %v5662, 0.0
        %v5939 = vadd.f32 %v5937, %v5938
        %v5940 = vsel %vm217, %v5663, 0.0
        %v5941 = vadd.f32 %v5939, %v5940
        %v5942 = vsel %vm217, %v5664, 0.0
        %v5943 = vadd.f32 %v5941, %v5942
        %v5944 = vsel %vm217, %v5665, 0.0
        %v5945 = vadd.f32 %v5943, %v5944
        %v5946 = vsel %vm217, %v5666, 0.0
        %v5947 = vadd.f32 %v5945, %v5946
        %v5948 = vsel %vm217, %v5667, 0.0
        %v5949 = vadd.f32 %v5947, %v5948
        %v5950 = vsel %vm217, %v5668, 0.0
        %v5951 = vadd.f32 %v5949, %v5950
        %v5952 = vsel %vm217, %v5669, 0.0
        %v5953 = vadd.f32 %v5951, %v5952
        %v5954 = vsel %vm217, %v5670, 0.0
        %v5955 = vadd.f32 %v5953, %v5954
        %v5956 = vsel %vm217, %v5671, 0.0
        %v5957 = vadd.f32 %v5955, %v5956
        %v5958 = vsel %vm217, %v5672, 0.0
        %v5959 = vadd.f32 %v5957, %v5958
        %v5960 = vsel %vm217, %v5673, 0.0
        %v5961 = vadd.f32 %v5959, %v5960
        %v5962 = vsel %vm217, %v5674, 0.0
        %v5963 = vadd.f32 %v5961, %v5962
        %v5964 = vsel %vm217, %v5675, 0.0
        %v5965 = vadd.f32 %v5963, %v5964
        %v5966 = vsel %vm217, %v5676, 0.0
        %v5967 = vadd.f32 %v5965, %v5966
        %v5968 = vsel %vm217, %v5677, 0.0
        %v5969 = vadd.f32 %v5967, %v5968
        %v5970 = vsel %vm217, %v5678, 0.0
        %v5971 = vadd.f32 %v5969, %v5970
        %v5972 = vsel %vm217, %v5679, 0.0
        %v5973 = vadd.f32 %v5971, %v5972
        %v5974 = vsel %vm217, %v5680, 0.0
        %v5975 = vadd.f32 %v5973, %v5974
        %v5976 = vsel %vm217, %v5681, 0.0
        %v5977 = vadd.f32 %v5975, %v5976
        %v5978 = vsel %vm217, %v5682, 0.0
        %v5979 = vadd.f32 %v5977, %v5978
        %v5980 = vsel %vm217, %v5683, 0.0
        %v5981 = vadd.f32 %v5979, %v5980
        %v5982 = vsel %vm217, %v5684, 0.0
        %v5983 = vadd.f32 %v5981, %v5982
        %v5984 = vsel %vm217, %v5685, 0.0
        %v5985 = vadd.f32 %v5983, %v5984
        %v5986 = vsel %vm217, %v5686, 0.0
        %v5987 = vadd.f32 %v5985, %v5986
        %v5988 = vsel %vm217, %v5687, 0.0
        %v5989 = vadd.f32 %v5987, %v5988
        %v5990 = vsel %vm217, %v5688, 0.0
        %v5991 = vadd.f32 %v5989, %v5990
        %v5992 = vsel %vm217, %v5689, 0.0
        %v5993 = vadd.f32 %v5991, %v5992
        %v5994 = vsel %vm217, %v5690, 0.0
        %v5995 = vadd.f32 %v5993, %v5994
        %v5996 = vsel %vm217, %v5691, 0.0
        %v5997 = vadd.f32 %v5995, %v5996
        %v5998 = vsel %vm217, %v5692, 0.0
        %v5999 = vadd.f32 %v5997, %v5998
        %v6000 = vsel %vm217, %v5693, 0.0
        %v6001 = vadd.f32 %v5999, %v6000
        %v6002 = vsel %vm217, %v5694, 0.0
        %v6003 = vadd.f32 %v6001, %v6002
        %v6004 = vsel %vm217, %v5695, 0.0
        %v6005 = vadd.f32 %v6003, %v6004
        %v6006 = vsel %vm217, %v5696, 0.0
        %v6007 = vadd.f32 %v6005, %v6006
        %v6008 = vsel %vm217, %v5697, 0.0
        %v6009 = vadd.f32 %v6007, %v6008
        %v6010 = vsel %vm217, %v5698, 0.0
        %v6011 = vadd.f32 %v6009, %v6010
        %v6012 = vsel %vm217, %v5699, 0.0
        %v6013 = vadd.f32 %v6011, %v6012
        %v6014 = vsel %vm217, %v5700, 0.0
        %v6015 = vadd.f32 %v6013, %v6014
        %v6016 = vsel %vm217, %v5701, 0.0
        %v6017 = vadd.f32 %v6015, %v6016
        %v6018 = vsel %vm217, %v5702, 0.0
        %v6019 = vadd.f32 %v6017, %v6018
        %v6020 = vsel %vm217, %v5703, 0.0
        %v6021 = vadd.f32 %v6019, %v6020
        %v6022 = vsel %vm217, %v5704, 0.0
        %v6023 = vadd.f32 %v6021, %v6022
        %v6024 = vsel %vm217, %v5705, 0.0
        %v6025 = vadd.f32 %v6023, %v6024
        %v6026 = vsel %vm217, %v5706, 0.0
        %v6027 = vadd.f32 %v6025, %v6026
        %v6028 = vsel %vm217, %v5707, 0.0
        %v6029 = vadd.f32 %v6027, %v6028
        %v6030 = vsel %vm217, %v5708, 0.0
        %v6031 = vadd.f32 %v6029, %v6030
        %v6032 = vsel %vm217, %v5709, 0.0
        %v6033 = vadd.f32 %v6031, %v6032
        %v6034 = vsel %vm217, %v5710, 0.0
        %v6035 = vadd.f32 %v6033, %v6034
        %v6036 = vsel %vm217, %v5711, 0.0
        %v6037 = vadd.f32 %v6035, %v6036
        %v6038 = vsel %vm217, %v5712, 0.0
        %v6039 = vadd.f32 %v6037, %v6038
        %v6040 = vsel %vm217, %v5713, 0.0
        %v6041 = vadd.f32 %v6039, %v6040
        %v6042 = vsel %vm217, %v5714, 0.0
        %v6043 = vadd.f32 %v6041, %v6042
        %v6044 = vsel %vm217, %v5715, 0.0
        %v6045 = vadd.f32 %v6043, %v6044
        %v6046 = vsel %vm217, %v5716, 0.0
        %v6047 = vadd.f32 %v6045, %v6046
        %v6048 = vsel %vm217, %v5717, 0.0
        %v6049 = vadd.f32 %v6047, %v6048
        %v6050 = vsel %vm217, %v5718, 0.0
        %v6051 = vadd.f32 %v6049, %v6050
        %v6052 = vsel %vm217, %v5719, 0.0
        %v6053 = vadd.f32 %v6051, %v6052
        %v6054 = vsel %vm217, %v5720, 0.0
        %v6055 = vadd.f32 %v6053, %v6054
        %v6056 = vsel %vm217, %v5721, 0.0
        %v6057 = vadd.f32 %v6055, %v6056
        %v6058 = vsel %vm217, %v5722, 0.0
        %v6059 = vadd.f32 %v6057, %v6058
        %v6060 = vsel %vm217, %v5723, 0.0
        %v6061 = vadd.f32 %v6059, %v6060
        %v6062 = vsel %vm217, %v5724, 0.0
        %v6063 = vadd.f32 %v6061, %v6062
        %v6064 = vsel %vm217, %v5725, 0.0
        %v6065 = vadd.f32 %v6063, %v6064
        %v6066 = vsel %vm217, %v5726, 0.0
        %v6067 = vadd.f32 %v6065, %v6066
        %v6068 = vsel %vm217, %v5727, 0.0
        %v6069 = vadd.f32 %v6067, %v6068
        %v6070 = vsel %vm217, %v5728, 0.0
        %v6071 = vadd.f32 %v6069, %v6070
        %v6072 = vsel %vm217, %v5729, 0.0
        %v6073 = vadd.f32 %v6071, %v6072
        %v6074 = vsel %vm217, %v5730, 0.0
        %v6075 = vadd.f32 %v6073, %v6074
        %v6076 = vsel %vm217, %v5731, 0.0
        %v6077 = vadd.f32 %v6075, %v6076
        %v6078 = vsel %vm217, %v5732, 0.0
        %v6079 = vadd.f32 %v6077, %v6078
        %v6080 = vsel %vm217, %v5733, 0.0
        %v6081 = vadd.f32 %v6079, %v6080
        %v6082 = vsel %vm217, %v5734, 0.0
        %v6083 = vadd.f32 %v6081, %v6082
        %v6084 = vsel %vm217, %v5735, 0.0
        %v6085 = vadd.f32 %v6083, %v6084
        %v6086 = vsel %vm217, %v5736, 0.0
        %v6087 = vadd.f32 %v6085, %v6086
        %v6088 = vsel %vm217, %v5737, 0.0
        %v6089 = vadd.f32 %v6087, %v6088
        %v6090 = vsel %vm217, %v5738, 0.0
        %v6091 = vadd.f32 %v6089, %v6090
        %v6092 = vsel %vm217, %v5739, 0.0
        %v6093 = vadd.f32 %v6091, %v6092
        %v6094 = vsel %vm217, %v5740, 0.0
        %v6095 = vadd.f32 %v6093, %v6094
        %v6096 = vsel %vm217, %v5741, 0.0
        %v6097 = vadd.f32 %v6095, %v6096
        %v6098 = vsel %vm217, %v5742, 0.0
        %v6099 = vadd.f32 %v6097, %v6098
        %v6100 = vsel %vm217, %v5743, 0.0
        %v6101 = vadd.f32 %v6099, %v6100
        %v6102 = vsel %vm217, %v5744, 0.0
        %v6103 = vadd.f32 %v6101, %v6102
        %v6104 = vsel %vm217, %v5745, 0.0
        %v6105 = vadd.f32 %v6103, %v6104
        %v6106 = vsel %vm217, %v5746, 0.0
        %v6107 = vadd.f32 %v6105, %v6106
        %v6108 = vsel %vm217, %v5747, 0.0
        %v6109 = vadd.f32 %v6107, %v6108
        %v6110 = vsel %vm217, %v5748, 0.0
        %v6111 = vadd.f32 %v6109, %v6110
        %v6112 = vsel %vm217, %v5749, 0.0
        %v6113 = vadd.f32 %v6111, %v6112
        %v6114 = vsel %vm217, %v5750, 0.0
        %v6115 = vadd.f32 %v6113, %v6114
        %v6116 = vsel %vm217, %v5751, 0.0
        %v6117 = vadd.f32 %v6115, %v6116
        %v6118 = vsel %vm217, %v5752, 0.0
        %v6119 = vadd.f32 %v6117, %v6118
        %v6120 = vsel %vm217, %v5753, 0.0
        %v6121 = vadd.f32 %v6119, %v6120
        %v6122 = vsel %vm217, %v5754, 0.0
        %v6123 = vadd.f32 %v6121, %v6122
        %v6124 = vsel %vm217, %v5755, 0.0
        %v6125 = vadd.f32 %v6123, %v6124
        %v6126 = vsel %vm217, %v5756, 0.0
        %v6127 = vadd.f32 %v6125, %v6126
        %v6128 = vsel %vm217, %v5757, 0.0
        %v6129 = vadd.f32 %v6127, %v6128
        %v6130 = vsel %vm217, %v5758, 0.0
        %v6131 = vadd.f32 %v6129, %v6130
        %v6132 = vsel %vm217, %v5759, 0.0
        %v6133 = vadd.f32 %v6131, %v6132
        %v6134 = vsel %vm217, %v5760, 0.0
        %v6135 = vadd.f32 %v6133, %v6134
        %v6136 = vsel %vm217, %v5761, 0.0
        %v6137 = vadd.f32 %v6135, %v6136
        %v6138 = vsel %vm217, %v5762, 0.0
        %v6139 = vadd.f32 %v6137, %v6138
        %v6140 = vsel %vm217, %v5763, 0.0
        %v6141 = vadd.f32 %v6139, %v6140
        %v6142 = vsel %vm217, %v5764, 0.0
        %v6143 = vadd.f32 %v6141, %v6142
        %v6144 = vsel %vm217, %v5765, 0.0
        %v6145 = vadd.f32 %v6143, %v6144
        %v6146 = vsel %vm217, %v5766, 0.0
        %v6147 = vadd.f32 %v6145, %v6146
        %v6148 = vsel %vm217, %v5767, 0.0
        %v6149 = vadd.f32 %v6147, %v6148
        %v6150 = vsel %vm217, %v5768, 0.0
        %v6151 = vadd.f32 %v6149, %v6150
        %v6152 = vsel %vm217, %v5769, 0.0
        %v6153 = vadd.f32 %v6151, %v6152
        %v6154 = vsel %vm217, %v5770, 0.0
        %v6155 = vadd.f32 %v6153, %v6154
        %v6156 = vsel %vm217, %v5771, 0.0
        %v6157 = vadd.f32 %v6155, %v6156
        %v6158 = vsel %vm217, %v5772, 0.0
        %v6159 = vadd.f32 %v6157, %v6158
        %v6160 = vsel %vm217, %v5773, 0.0
        %v6161 = vadd.f32 %v6159, %v6160
        %v6162 = vsel %vm217, %v5774, 0.0
        %v6163 = vadd.f32 %v6161, %v6162
        %v6164 = vsel %vm217, %v5775, 0.0
        %v6165 = vadd.f32 %v6163, %v6164
        %v6166 = vsel %vm217, %v5776, 0.0
        %v6167 = vadd.f32 %v6165, %v6166
        %v6168 = vsel %vm217, %v5777, 0.0
        %v6169 = vadd.f32 %v6167, %v6168
        %v6170 = vsel %vm217, %v5778, 0.0
        %v6171 = vadd.f32 %v6169, %v6170
        %v6172 = vsel %vm217, %v5779, 0.0
        %v6173 = vadd.f32 %v6171, %v6172
        %v6174 = vsel %vm217, %v5780, 0.0
        %v6175 = vadd.f32 %v6173, %v6174
        %v6176 = vsel %vm217, %v5781, 0.0
        %v6177 = vadd.f32 %v6175, %v6176
        %v6178 = vsel %vm217, %v5782, 0.0
        %v6179 = vadd.f32 %v6177, %v6178
        %v6180 = vsel %vm217, %v5783, 0.0
        %v6181 = vadd.f32 %v6179, %v6180
        %v6182 = vsel %vm217, %v5784, 0.0
        %v6183 = vadd.f32 %v6181, %v6182
        %v6184 = vsel %vm217, %v5785, 0.0
        %v6185 = vadd.f32 %v6183, %v6184
        %v6186 = vsel %vm217, %v5786, 0.0
        %v6187 = vadd.f32 %v6185, %v6186
        %v6188 = vsel %vm217, %v5787, 0.0
        %v6189 = vadd.f32 %v6187, %v6188
        %v6190 = vsel %vm217, %v5788, 0.0
        %v6191 = vadd.f32 %v6189, %v6190
        %v6192 = vsel %vm217, %v5789, 0.0
        %v6193 = vadd.f32 %v6191, %v6192
        %v6194 = vsel %vm217, %v5790, 0.0
        %v6195 = vadd.f32 %v6193, %v6194
        %v6196 = vsel %vm217, %v5791, 0.0
        %v6197 = vadd.f32 %v6195, %v6196
        %v6198 = vsel %vm217, %v5792, 0.0
        %v6199 = vadd.f32 %v6197, %v6198
        %v6200 = vsel %vm217, %v5793, 0.0
        %v6201 = vadd.f32 %v6199, %v6200
        %v6202 = vsel %vm217, %v5794, 0.0
        %v6203 = vadd.f32 %v6201, %v6202
        %v6204 = vsel %vm217, %v5795, 0.0
        %v6205 = vadd.f32 %v6203, %v6204
        %v6206 = vsel %vm217, %v5796, 0.0
        %v6207 = vadd.f32 %v6205, %v6206
        %v6208 = vsel %vm217, %v5797, 0.0
        %v6209 = vadd.f32 %v6207, %v6208
        %v6210 = vsel %vm217, %v5798, 0.0
        %v6211 = vadd.f32 %v6209, %v6210
        %v6212 = vsel %vm217, %v5799, 0.0
        %v6213 = vadd.f32 %v6211, %v6212
        %v6214 = vsel %vm217, %v5800, 0.0
        %v6215 = vadd.f32 %v6213, %v6214
        %v6216 = vsel %vm217, %v5801, 0.0
        %v6217 = vadd.f32 %v6215, %v6216
        %v6218 = vsel %vm217, %v5802, 0.0
        %v6219 = vadd.f32 %v6217, %v6218
        %v6220 = vsel %vm217, %v5803, 0.0
        %v6221 = vadd.f32 %v6219, %v6220
        %v6222 = vsel %vm217, %v5804, 0.0
        %v6223 = vadd.f32 %v6221, %v6222
        %v6224 = vsel %vm217, %v5805, 0.0
        %v6225 = vadd.f32 %v6223, %v6224
        %v6226 = vsel %vm217, %v5806, 0.0
        %v6227 = vadd.f32 %v6225, %v6226
        %v6228 = vsel %vm217, %v5807, 0.0
        %v6229 = vadd.f32 %v6227, %v6228
        %v6230 = vsel %vm217, %v5808, 0.0
        %v6231 = vadd.f32 %v6229, %v6230
        %v6232 = vsel %vm217, %v5809, 0.0
        %v6233 = vadd.f32 %v6231, %v6232
        %v6234 = vsel %vm217, %v5810, 0.0
        %v6235 = vadd.f32 %v6233, %v6234
        %v6236 = vsel %vm217, %v5811, 0.0
        %v6237 = vadd.f32 %v6235, %v6236
        %v6238 = vsel %vm217, %v5812, 0.0
        %v6239 = vadd.f32 %v6237, %v6238
        %v6240 = vsel %vm217, %v5813, 0.0
        %v6241 = vadd.f32 %v6239, %v6240
        %v6242 = vsel %vm217, %v5814, 0.0
        %v6243 = vadd.f32 %v6241, %v6242
        %v6244 = vsel %vm217, %v5815, 0.0
        %v6245 = vadd.f32 %v6243, %v6244
        %v6246 = vsel %vm217, %v5816, 0.0
        %v6247 = vadd.f32 %v6245, %v6246
        %v6248 = vsel %vm217, %v5817, 0.0
        %v6249 = vadd.f32 %v6247, %v6248
        %v6250 = vsel %vm217, %v5818, 0.0
        %v6251 = vadd.f32 %v6249, %v6250
        %v6252 = vsel %vm217, %v5819, 0.0
        %v6253 = vadd.f32 %v6251, %v6252
        %v6254 = vsel %vm217, %v5820, 0.0
        %v6255 = vadd.f32 %v6253, %v6254
        %v6256 = vsel %vm217, %v5821, 0.0
        %v6257 = vadd.f32 %v6255, %v6256
        %v6258 = vsel %vm217, %v5822, 0.0
        %v6259 = vadd.f32 %v6257, %v6258
        %v6260 = vsel %vm217, %v5823, 0.0
        %v6261 = vadd.f32 %v6259, %v6260
        %v6262 = vsel %vm217, %v5824, 0.0
        %v6263 = vadd.f32 %v6261, %v6262
        %v6264 = vsel %vm217, %v5825, 0.0
        %v6265 = vadd.f32 %v6263, %v6264
        %v6266 = vsel %vm217, %v5826, 0.0
        %v6267 = vadd.f32 %v6265, %v6266
        %v6268 = vsel %vm217, %v5827, 0.0
        %v6269 = vadd.f32 %v6267, %v6268
        %v6270 = vsel %vm217, %v5828, 0.0
        %v6271 = vadd.f32 %v6269, %v6270
        %v6272 = vsel %vm217, %v5829, 0.0
        %v6273 = vadd.f32 %v6271, %v6272
        %v6274 = vsel %vm217, %v5830, 0.0
        %v6275 = vadd.f32 %v6273, %v6274
        %v6276 = vsel %vm217, %v5831, 0.0
        %v6277 = vadd.f32 %v6275, %v6276
        %v6278 = vsel %vm217, %v5832, 0.0
        %v6279 = vadd.f32 %v6277, %v6278
        %v6280 = vsel %vm217, %v5833, 0.0
        %v6281 = vadd.f32 %v6279, %v6280
        %v6282 = vsel %vm217, %v5834, 0.0
        %v6283 = vadd.f32 %v6281, %v6282
        %v6284 = vsel %vm217, %v5835, 0.0
        %v6285 = vadd.f32 %v6283, %v6284
        %v6286 = vsel %vm217, %v5836, 0.0
        %v6287 = vadd.f32 %v6285, %v6286
        %v6288 = vsel %vm217, %v5837, 0.0
        %v6289 = vadd.f32 %v6287, %v6288
        %v6290 = vsel %vm217, %v5838, 0.0
        %v6291 = vadd.f32 %v6289, %v6290
        %v6292 = vsel %vm217, %v5839, 0.0
        %v6293 = vadd.f32 %v6291, %v6292
        %v6294 = vsel %vm217, %v5840, 0.0
        %v6295 = vadd.f32 %v6293, %v6294
        %v6296 = vsel %vm217, %v5841, 0.0
        %v6297 = vadd.f32 %v6295, %v6296
        %v6298 = vsel %vm217, %v5842, 0.0
        %v6299 = vadd.f32 %v6297, %v6298
        %v6300 = vsel %vm217, %v5843, 0.0
        %v6301 = vadd.f32 %v6299, %v6300
        %v6302 = vsel %vm217, %v5844, 0.0
        %v6303 = vadd.f32 %v6301, %v6302
        %v6304 = vsel %vm217, %v5845, 0.0
        %v6305 = vadd.f32 %v6303, %v6304
        %v6306 = vsel %vm217, %v5846, 0.0
        %v6307 = vadd.f32 %v6305, %v6306
        %v6308 = vsel %vm217, %v5847, 0.0
        %v6309 = vadd.f32 %v6307, %v6308
        %v6310 = vsel %vm217, %v5848, 0.0
        %v6311 = vadd.f32 %v6309, %v6310
        %v6312 = vsel %vm217, %v5849, 0.0
        %v6313 = vadd.f32 %v6311, %v6312
        %v6314 = vsel %vm217, %v5850, 0.0
        %v6315 = vadd.f32 %v6313, %v6314
        %v6316 = vsel %vm217, %v5851, 0.0
        %v6317 = vadd.f32 %v6315, %v6316
        %v6318 = vsel %vm217, %v5852, 0.0
        %v6319 = vadd.f32 %v6317, %v6318
        %v6320 = vsel %vm217, %v5853, 0.0
        %v6321 = vadd.f32 %v6319, %v6320
        %v6322 = vsel %vm217, %v5854, 0.0
        %v6323 = vadd.f32 %v6321, %v6322
        %v6324 = vsel %vm217, %v5855, 0.0
        %v6325 = vadd.f32 %v6323, %v6324
        %v6326 = vsel %vm217, %v5856, 0.0
        %v6327 = vadd.f32 %v6325, %v6326
        %v6328 = vsel %vm217, %v5857, 0.0
        %v6329 = vadd.f32 %v6327, %v6328
        %v6330 = vsel %vm217, %v5858, 0.0
        %v6331 = vadd.f32 %v6329, %v6330
        %v6332 = vsel %vm217, %v5859, 0.0
        %v6333 = vadd.f32 %v6331, %v6332
        %v6334 = vsel %vm217, %v5860, 0.0
        %v6335 = vadd.f32 %v6333, %v6334
        %v6336 = vsel %vm217, %v5861, 0.0
        %v6337 = vadd.f32 %v6335, %v6336
        %v6338 = vsel %vm217, %v5862, 0.0
        %v6339 = vadd.f32 %v6337, %v6338
        %v6340 = vsel %vm217, %v5863, 0.0
        %v6341 = vadd.f32 %v6339, %v6340
        %v6342 = vsel %vm217, %v5864, 0.0
        %v6343 = vadd.f32 %v6341, %v6342
        %v6344 = vsel %vm217, %v5865, 0.0
        %v6345 = vadd.f32 %v6343, %v6344
        %v6346 = vsel %vm217, %v5866, 0.0
        %v6347 = vadd.f32 %v6345, %v6346
        %v6348 = vsel %vm217, %v5867, 0.0
        %v6349 = vadd.f32 %v6347, %v6348
        %v6350 = vsel %vm217, %v5868, 0.0
        %v6351 = vadd.f32 %v6349, %v6350
        %v6352 = vsel %vm217, %v5869, 0.0
        %v6353 = vadd.f32 %v6351, %v6352
        %v6354 = vsel %vm217, %v5870, 0.0
        %v6355 = vadd.f32 %v6353, %v6354
        %v6356 = vsel %vm217, %v5871, 0.0
        %v6357 = vadd.f32 %v6355, %v6356
        %v6358 = vsel %vm217, %v5872, 0.0
        %v6359 = vadd.f32 %v6357, %v6358
        %v6360 = vsel %vm217, %v5873, 0.0
        %v6361 = vadd.f32 %v6359, %v6360
        %v6362 = vsel %vm217, %v5874, 0.0
        %v6363 = vadd.f32 %v6361, %v6362
        %v6364 = vsel %vm217, %v5875, 0.0
        %v6365 = vadd.f32 %v6363, %v6364
        %v6366 = vsel %vm217, %v5876, 0.0
        %v6367 = vadd.f32 %v6365, %v6366
        %v6368 = vsel %vm217, %v5877, 0.0
        %v6369 = vadd.f32 %v6367, %v6368
        %v6370 = vsel %vm217, %v5878, 0.0
        %v6371 = vadd.f32 %v6369, %v6370
        %v6372 = vsel %vm217, %v5879, 0.0
        %v6373 = vadd.f32 %v6371, %v6372
        %v6374 = vsel %vm217, %v5880, 0.0
        %v6375 = vadd.f32 %v6373, %v6374
        %v6376 = vsel %vm217, %v5881, 0.0
        %v6377 = vadd.f32 %v6375, %v6376
        %v6378 = vsel %vm217, %v5882, 0.0
        %v6379 = vadd.f32 %v6377, %v6378
        %v6380 = vsel %vm217, %v5883, 0.0
        %v6381 = vadd.f32 %v6379, %v6380
        %v6382 = vsel %vm217, %v5884, 0.0
        %v6383 = vadd.f32 %v6381, %v6382
        %v6384 = vsel %vm217, %v5885, 0.0
        %v6385 = vadd.f32 %v6383, %v6384
        %v6386 = vsel %vm217, %v5886, 0.0
        %v6387 = vadd.f32 %v6385, %v6386
        %v6388 = vsel %vm217, %v5887, 0.0
        %v6389 = vadd.f32 %v6387, %v6388
        %v6390 = vsel %vm217, %v5888, 0.0
        %v6391 = vadd.f32 %v6389, %v6390
        %v6392 = vsel %vm217, %v5889, 0.0
        %v6393 = vadd.f32 %v6391, %v6392
        %v6394 = vsel %vm217, %v5890, 0.0
        %v6395 = vadd.f32 %v6393, %v6394
        %v6396 = vsel %vm217, %v5891, 0.0
        %v6397 = vadd.f32 %v6395, %v6396
        %v6398 = vsel %vm217, %v5892, 0.0
        %v6399 = vadd.f32 %v6397, %v6398
        %v6400 = vsel %vm217, %v5893, 0.0
        %v6401 = vadd.f32 %v6399, %v6400
        %v6402 = vsel %vm217, %v5894, 0.0
        %v6403 = vadd.f32 %v6401, %v6402
        %v6404 = vsel %vm217, %v5895, 0.0
        %v6405 = vadd.f32 %v6403, %v6404
        %v6406 = vsel %vm217, %v5896, 0.0
        %v6407 = vadd.f32 %v6405, %v6406
        %v6408 = vrot.slane %v6407, 4
        %v6409 = vadd.f32 %v6407, %v6408
        %v6410 = vrot.slane %v6409, 2
        %v6411 = vadd.f32 %v6409, %v6410
        %v6412 = vrot.slane %v6411, 1
        %v6413 = vadd.f32 %v6411, %v6412
        %6414 = vst.msk [vmem:[%s198 + $0x1] sm:$0x1] %vm5639, %v6413
        %p6415 = scmp.lt.s32.totalorder %s19, 1
        %s6416 = scalar_select %p6415, %s19, 1
        %s6417 = smul.addr %s6416, 256
        %s6418 = smul.addr %s6417, 4
        %s6419 = scalar_lea.vmem %s3, %s6418
        %s6420 = sand.u32 %s121, 1
        %s6421 = scalar_lea.sflag [#allocation4], %s6420
        %s6422 = sand.u32 %s121, 1
        %s6423 = smul.addr %s6422, 2
        %s6424 = scalar_lea.vmem [#allocation3], %s6423
        // Predicated region
        $region33: #{tpu_custom_call.1} parent=31 // pred_check
          %p6425 = pneg %p105
        $region34: #{tpu_custom_call.1} parent=31 // pred_check_branch
          %6427 = sbr.rel (%p6425) target = $region36
        $region35: #{tpu_custom_call.1} parent=31 // pred_region
          _
        $region36: #{tpu_custom_call.1} parent=31 // pred_fallthru
          _
        // Predicated region
        $region37: #{tpu_custom_call.1} parent=31 // pred_check
          %p6428 = pneg %p131
        $region38: #{tpu_custom_call.1} parent=31 // pred_check_branch
          %6430 = sbr.rel (%p6428) target = $region40
        $region39: #{tpu_custom_call.1} parent=31 // pred_region
          %s6432 = ssub.s32 32, 32
          %6433 = vsyncadd %s6421, %s6432
          %s6434 = smul.addr %s19, 32
          %s6435 = scalar_lea.hbm %s4, %s6434
          %s6437 = sshll.u32 %s6424, 4
          %s6438 = int_to_ptr.vmem [resolvable:$true] %s6437
          %6440 = dma.vmem_to_hbm [thread:$0]  %s6438, 32, %s6435, %s6421
        $region40: #{tpu_custom_call.1} parent=31 // pred_fallthru
          _
      $region32: #{tpu_custom_call.1} parent=5 // pred_fallthru
        _
      %p6441 = scmp.le.s32.totalorder 2, %s14
      // Predicated region
      $region41: #{tpu_custom_call.1} parent=5 // pred_check
        %p6442 = pneg %p6441
      $region42: #{tpu_custom_call.1} parent=5 // pred_check_branch
        %6444 = sbr.rel (%p6442) target = $region44
      $region43: #{tpu_custom_call.1} parent=5 // pred_region
        %s6445 = ssub.s32 %s14, 2
        // Predicated region
        $region45: #{tpu_custom_call.1} parent=43 // pred_check
          %p6446 = pneg %p111
        $region46: #{tpu_custom_call.1} parent=43 // pred_check_branch
          %6448 = sbr.rel (%p6446) target = $region48
        $region47: #{tpu_custom_call.1} parent=43 // pred_region
          %p6449 = scmp.lt.s32.totalorder %s20, 1
          %s6450 = scalar_select %p6449, %s20, 1
          %s6451 = smul.addr %s6450, 256
          %s6452 = smul.addr %s6451, 4
          %s6453 = scalar_lea.vmem %s3, %s6452
        $region48: #{tpu_custom_call.1} parent=43 // pred_fallthru
          _
        // Predicated region
        $region49: #{tpu_custom_call.1} parent=43 // pred_check
          %p6454 = pneg %p137
        $region50: #{tpu_custom_call.1} parent=43 // pred_check_branch
          %6456 = sbr.rel (%p6454) target = $region52
        $region51: #{tpu_custom_call.1} parent=43 // pred_region
          %s6457 = sand.u32 %s122, 1
          %s6458 = scalar_lea.sflag [#allocation4], %s6457
          %s6459 = sand.u32 %s122, 1
          %s6460 = smul.addr %s6459, 2
          %s6461 = scalar_lea.vmem [#allocation3], %s6460
          %6462 = dma.done %s6458, 32
        $region52: #{tpu_custom_call.1} parent=43 // pred_fallthru
          _
      $region44: #{tpu_custom_call.1} parent=5 // pred_fallthru
        _
    $region6: #{tpu_custom_call.1} parent=1 // loop_footer
      %s18 = sadd.s32 1, %s14
    $region7: #{tpu_custom_call.1} parent=1 // loop_footer_branch
      %13 = sbr.rel target = $region3
    $region8: #{tpu_custom_call.1} parent=1 // loop_exit
      _
    %6463 = vsyncpa [#allocation4], 1
    %s6464 = scalar_lea.sflag [#allocation4], 1
    %6465 = vsyncpa %s6464, 1

</llo_original>
